<compile_context>
chip_gen: v7x
topology: tpu7x:2x2x1
jax: 0.10.0
libtpu: 0.0.40
codegen_flags: <defaults>
</compile_context>

<pallas_src>
import jax
import jax.numpy as jnp
from jax import lax
from jax.experimental import pallas as pl
from jax.experimental.pallas import tpu as pltpu

NEG = -3.0e38   # Python float sentinel for -inf pool padding (safe: pooled values are post-SiLU)
HALO = 6        # 3 chained 5x5 stride-1 pools -> 3 * (5 // 2) halo rows per side
WL = 8          # left  NEG column band (8 -> sublane-aligned interior column offset)
WR = 8          # right NEG column band


def _silu(y):
    # y in f32; the reciprocal goes to the EUP slot (otherwise idle here).
    return y * pl.reciprocal(1.0 + jnp.exp(-y), approx=True)


def _maxpool5(pad_ref, HB, W):
    """5x5 stride-1 max pool of the interior of pad_ref.

    pad_ref: (HB + 4, PW, C_) f32, NEG border (2 rows top/bottom, WL cols left,
    WR cols right), current activations in [2:HB+2, WL:WL+W).
    Returns the pooled interior, shape (HB, W, C_).

    H direction: 5 overlapping leading-axis slices (untiled axis -> cheap).
    W direction: 4 XLU sublane rotations + maxes; the rotation window only ever
    touches columns [WL-2, WL+W+2) so no wrap-around reaches the valid slice and
    the NEG bands supply the -inf padding.
    """
    PW = pad_ref.shape[1]
    r = pad_ref[0:HB, :, :]
    for i in range(1, 5):
        r = jnp.maximum(r, pad_ref[i:i + HB, :, :])
    acc = r
    for j in (1, 2):
        acc = jnp.maximum(acc, pltpu.roll(r, j, axis=1))
        acc = jnp.maximum(acc, pltpu.roll(r, PW - j, axis=1))
    return acc[:, WL:WL + W, :]


def sppf_kernel(x_ref, w1_ref, b1_ref, w2_ref, b2_ref, o_ref, pad_ref, cat_ref):
    # x_ref:  (H, W, C1) f32    full-height input for this batch element (revisited
    #                           across the h axis -> DMA'd once per n)
    # w1_ref: (C1, C_)   bf16   cv1 weight (BN folded)
    # b1_ref: (1, C_)    f32    cv1 bias   (BN folded)
    # w2_ref: (4*C_, C2) bf16   cv2 weight (BN folded)
    # b2_ref: (1, C2)    f32    cv2 bias   (BN folded)
    # o_ref:  (TH, W, C2) f32   output rows for this (batch, h-tile) grid step
    # pad_ref: VMEM (HB+4, W+WL+WR, C_) f32   NEG-bordered pool scratch
    # cat_ref: VMEM (TH, W, 4*C_) bf16        staged cv2 input (the "concat")
    H, W, C1 = x_ref.shape
    TH = o_ref.shape[0]
    C2 = o_ref.shape[2]
    HB = pad_ref.shape[0] - 4
    PW = pad_ref.shape[1]
    C_ = pad_ref.shape[2]

    # Halo'd window: image rows [start, start + HB), clamped inside the image.
    # Target output rows sit at [loc, loc + TH) inside the window; the <= 6 rows per
    # side that are polluted by the NEG border (where the image really continues)
    # never reach the target rows.
    r0 = pl.program_id(1) * TH
    start = jnp.clip(r0 - HALO, 0, H - HB)
    loc = r0 - start

    # cv1: 1x1 conv == per-pixel channel matmul (BN folded) + SiLU.
    # bf16 MXU operands, f32 accumulation; bias + SiLU in f32.
    xw = x_ref[pl.ds(start, HB), :, :]                                  # (HB, W, C1)
    y = jnp.dot(xw.reshape(HB * W, C1).astype(jnp.bfloat16), w1_ref[...],
                preferred_element_type=jnp.float32) + b1_ref[...]
    y = _silu(y).reshape(HB, W, C_)                                     # f32

    # NEG border strips only (interior is overwritten below; border is never touched
    # by the interior writes, so rewriting the cheap strips each step is enough and
    # is megacore-safe).
    neg_rows = jnp.full((2, PW, C_), NEG, dtype=pad_ref.dtype)
    neg_cols = jnp.full((HB, WL, C_), NEG, dtype=pad_ref.dtype)         # WL == WR
    pad_ref[0:2, :, :] = neg_rows
    pad_ref[HB + 2:HB + 4, :, :] = neg_rows
    pad_ref[2:HB + 2, 0:WL, :] = neg_cols
    pad_ref[2:HB + 2, PW - WR:PW, :] = neg_cols

    # Stage the 4 pool stages' target rows into the cat buffer (channel slots),
    # reusing one working activation buffer between pool stages.  Order matches
    # torch.cat((x, y1, y2, y3), 1).
    for s in range(4):
        pad_ref[2:HB + 2, WL:WL + W, :] = y                             # aligned interior write
        yt = pad_ref[pl.ds(loc + 2, TH), WL:WL + W, :]                  # (TH, W, C_)
        cat_ref[:, :, s * C_:(s + 1) * C_] = yt.astype(cat_ref.dtype)
        if s < 3:
            y = _maxpool5(pad_ref, HB, W)

    # cv2: one fused K = 4*C_ matmul (bf16 operands, f32 accumulation) + bias + SiLU.
    z = jnp.dot(cat_ref[...].reshape(TH * W, 4 * C_), w2_ref[...],
                preferred_element_type=jnp.float32) + b2_ref[...]
    z = _silu(z)
    o_ref[...] = z.reshape(TH, W, C2).astype(o_ref.dtype)


def _default_tile_h(H):
    # Large tiles amortize the 2*HALO-row halo recompute (overhead = 12 / tile_h).
    if H <= 128:
        return H                      # single tile, no halo recompute at all
    for cand in (256, 128, 64, 32, 16, 8):
        if H % cand == 0 and cand + 2 * HALO <= H:
            return cand
    return H


def sppf_pallas(x_nhwc, w1, b1, w2, b2, *, tile_h=None):
    """SPPF forward in NHWC.  x: (N, H, W, C1) f32 -> (N, H, W, C2) f32.

    w1: (C1, C_), b1: (1, C_), w2: (4*C_, C2), b2: (1, C2)  -- BN already folded.
    """
    N, H, W, C1 = x_nhwc.shape
    C_ = w1.shape[1]
    C2 = w2.shape[1]
    assert w2.shape[0] == 4 * C_

    TH = _default_tile_h(H) if tile_h is None else tile_h
    assert H % TH == 0, "tile_h must divide H"
    assert TH == H or TH % 8 == 0, "tile_h must be H or a multiple of 8"
    n_h = H // TH
    HB = H if n_h == 1 else TH + 2 * HALO
    assert HB <= H, "tile_h + 12 halo rows must fit inside H (pick a larger tile_h)"

    # MXU operands in bf16 (f32 accumulation in-kernel); biases stay f32.
    w1b = w1.astype(jnp.bfloat16)
    w2b = w2.astype(jnp.bfloat16)
    b1f = b1.astype(jnp.float32)
    b2f = b2.astype(jnp.float32)

    return pl.pallas_call(
        sppf_kernel,
        out_shape=jax.ShapeDtypeStruct((N, H, W, C2), jnp.float32),
        grid_spec=pltpu.PrefetchScalarGridSpec(
            num_scalar_prefetch=0,
            grid=(N, n_h),
            in_specs=[
                # Full-height image per batch element; same block revisited across h
                # (fetched once per n).  The kernel slices its halo window via pl.ds.
                pl.BlockSpec((None, H, W, C1), lambda n, h: (n, 0, 0, 0)),
                pl.BlockSpec((C1, C_), lambda n, h: (0, 0)),
                pl.BlockSpec((1, C_), lambda n, h: (0, 0)),
                pl.BlockSpec((4 * C_, C2), lambda n, h: (0, 0)),
                pl.BlockSpec((1, C2), lambda n, h: (0, 0)),
            ],
            out_specs=pl.BlockSpec((None, TH, W, C2), lambda n, h: (n, h, 0, 0)),
            scratch_shapes=[
                pltpu.VMEM((HB + 4, W + WL + WR, C_), jnp.float32),   # pool scratch
                pltpu.VMEM((TH, W, 4 * C_), jnp.bfloat16),            # staged cv2 input
            ],
        ),
        compiler_params=pltpu.CompilerParams(
            dimension_semantics=("parallel", "parallel"),
            vmem_limit_bytes=64 * 1024 * 1024),
    )(x_nhwc, w1b, b1f, w2b, b2f)


def sppf_pallas_nchw(x_nchw, w1, b1, w2, b2, *, tile_h=None):
    """PyTorch-layout convenience wrapper.  Prefer staying NHWC end-to-end: each
    transpose here is an extra full HBM round trip for a memory-bound op."""
    x = jnp.transpose(x_nchw, (0, 2, 3, 1))
    out = sppf_pallas(x, w1, b1, w2, b2, tile_h=tile_h)
    return jnp.transpose(out, (0, 3, 1, 2))


def fold_bn(w, gamma, beta, mean, var, eps=1e-5):
    """Fold BatchNorm (inference) into a 1x1 conv weight (Cin, Cout) + bias."""
    scale = gamma / jnp.sqrt(var + eps)           # (Cout,)
    w_eff = w * scale[None, :]
    b_eff = beta - mean * scale
    return w_eff, b_eff[None, :]


def sppf_ref(x_nhwc, w1, b1, w2, b2):
    """Pure-JAX NHWC reference (f32, exact SiLU) for verification."""
    y = jax.nn.silu(jnp.einsum('nhwc,cd->nhwd', x_nhwc, w1) + b1[0])

    def mp(t):
        return lax.reduce_window(t, -jnp.inf, lax.max,
                                 (1, 5, 5, 1), (1, 1, 1, 1),
                                 [(0, 0), (2, 2), (2, 2), (0, 0)])

    y1 = mp(y)
    y2 = mp(y1)
    y3 = mp(y2)
    cat = jnp.concatenate([y, y1, y2, y3], axis=-1)
    return jax.nn.silu(jnp.einsum('nhwc,cd->nhwd', cat, w2) + b2[0])


if __name__ == "__main__":
    # SPPF(c1=8, c2=8, k=5) on a (2, 32, 16, 8) NHWC input.
    # Run 1: default tile (single tile, no halo).
    # Run 2: tile_h=8 -> grid (2, 4): covers clamped-top, interior, and clamped-bottom
    #        halo windows.
    N, H, W, C1 = 2, 32, 16, 8
    C2 = 8
    C_ = C1 // 2

    key = jax.random.PRNGKey(0)
    ks = jax.random.split(key, 11)

    x = jax.random.normal(ks[0], (N, H, W, C1), jnp.float32)

    # cv1: Conv2d(C1, C_, 1, bias=False) weight as (Cin, Cout) + BN params
    w1_raw = jax.random.normal(ks[1], (C1, C_), jnp.float32) * 0.2
    g1 = 1.0 + 0.1 * jax.random.normal(ks[2], (C_,), jnp.float32)
    be1 = 0.1 * jax.random.normal(ks[3], (C_,), jnp.float32)
    mu1 = 0.1 * jax.random.normal(ks[4], (C_,), jnp.float32)
    var1 = jnp.abs(jax.random.normal(ks[5], (C_,), jnp.float32)) + 0.5

    # cv2: Conv2d(4*C_, C2, 1, bias=False) weight + BN params
    w2_raw = jax.random.normal(ks[6], (4 * C_, C2), jnp.float32) * 0.2
    g2 = 1.0 + 0.1 * jax.random.normal(ks[7], (C2,), jnp.float32)
    be2 = 0.1 * jax.random.normal(ks[8], (C2,), jnp.float32)
    mu2 = 0.1 * jax.random.normal(ks[9], (C2,), jnp.float32)
    var2 = jnp.abs(jax.random.normal(ks[10], (C2,), jnp.float32)) + 0.5

    w1, b1 = fold_bn(w1_raw, g1, be1, mu1, var1)
    w2, b2 = fold_bn(w2_raw, g2, be2, mu2, var2)

    ref = sppf_ref(x, w1, b1, w2, b2)

    out_a = jax.block_until_ready(sppf_pallas(x, w1, b1, w2, b2))            # single tile
    out_b = jax.block_until_ready(sppf_pallas(x, w1, b1, w2, b2, tile_h=8))  # halo-tiled

    assert out_a.shape == (N, H, W, C2)
    assert out_b.shape == (N, H, W, C2)
    # Tolerance covers bf16 MXU operands (f32 accumulation), the EUP approx
    # reciprocal in SiLU, and op-ordering differences vs the unfused f32 reference.
    # Structural bugs (pool window, halo clamp, channel slotting) produce O(0.1-1) diffs.
    assert jnp.allclose(out_a, ref, atol=5e-2, rtol=5e-2), "mismatch vs reference (single tile)"
    assert jnp.allclose(out_b, ref, atol=5e-2, rtol=5e-2), "mismatch vs reference (halo tiles)"

    print("KERNEL_OK")
</pallas_src>

<mosaic_0001>
module attributes {stable_mosaic.version = 11 : i64} {
  func.func @sppf_kernel(%arg0: i32, %arg1: i32, %arg2: memref<1x32x16x8xf32, #tpu.memory_space<vmem>>, %arg3: memref<8x4xbf16, #tpu.memory_space<vmem>>, %arg4: memref<1x4xf32, #tpu.memory_space<vmem>>, %arg5: memref<16x8xbf16, #tpu.memory_space<vmem>>, %arg6: memref<1x8xf32, #tpu.memory_space<vmem>>, %arg7: memref<1x32x16x8xf32, #tpu.memory_space<vmem>>, %arg8: memref<36x32x4xf32, #tpu.memory_space<vmem>>, %arg9: memref<32x16x16xbf16, #tpu.memory_space<vmem>>) attributes {dimension_semantics = [#tpu.dimension_semantics<parallel>, #tpu.dimension_semantics<parallel>], iteration_bounds = array<i64: 2, 1>, scalar_prefetch = 0 : i64, scratch_operands = 2 : i64, tpu.core_type = #tpu.core_type<tc>, window_params = [{transform_indices = @transform_0, window_bounds = array<i64: 1, 32, 16, 8>}, {pipeline_mode = #tpu.pipeline_mode<synchronous>, transform_indices = @transform_1, window_bounds = array<i64: 8, 4>}, {pipeline_mode = #tpu.pipeline_mode<synchronous>, transform_indices = @transform_2, window_bounds = array<i64: 1, 4>}, {pipeline_mode = #tpu.pipeline_mode<synchronous>, transform_indices = @transform_3, window_bounds = array<i64: 16, 8>}, {pipeline_mode = #tpu.pipeline_mode<synchronous>, transform_indices = @transform_4, window_bounds = array<i64: 1, 8>}, {transform_indices = @transform_5, window_bounds = array<i64: 1, 32, 16, 8>}]} {
    %c32_i32 = arith.constant 32 : i32
    %0 = arith.muli %arg1, %c32_i32 : i32
    %c6_i32 = arith.constant 6 : i32
    %1 = arith.subi %0, %c6_i32 : i32
    %c0_i32 = arith.constant 0 : i32
    %c0_i32_0 = arith.constant 0 : i32
    %2 = arith.maxsi %c0_i32, %1 : i32
    %3 = arith.minsi %c0_i32_0, %2 : i32
    %4 = arith.subi %0, %3 : i32
    %c0 = arith.constant 0 : index
    %5 = arith.index_cast %3 : i32 to index
    %c0_1 = arith.constant 0 : index
    %c0_2 = arith.constant 0 : index
    %6 = vector.load %arg2[%c0, %5, %c0_1, %c0_2] : memref<1x32x16x8xf32, #tpu.memory_space<vmem>>, vector<1x32x16x8xf32>
    %7 = vector.shape_cast %6 : vector<1x32x16x8xf32> to vector<32x16x8xf32>
    %8 = vector.shape_cast %7 : vector<32x16x8xf32> to vector<512x8xf32>
    %9 = arith.truncf %8 : vector<512x8xf32> to vector<512x8xbf16>
    %c0_3 = arith.constant 0 : index
    %c0_4 = arith.constant 0 : index
    %10 = vector.load %arg3[%c0_3, %c0_4] : memref<8x4xbf16, #tpu.memory_space<vmem>>, vector<8x4xbf16>
    %cst = arith.constant dense<0.000000e+00> : vector<512x4xf32>
    %11 = tpu.matmul %9, %10, %cst {dimension_numbers = #tpu.dot_dimension_numbers<[1], [0], [0], [1], [0, 0, 1, 1], [], []>} : vector<512x8xbf16>, vector<8x4xbf16>, vector<512x4xf32> -> vector<512x4xf32>
    %c0_5 = arith.constant 0 : index
    %c0_6 = arith.constant 0 : index
    %12 = vector.load %arg4[%c0_5, %c0_6] : memref<1x4xf32, #tpu.memory_space<vmem>>, vector<1x4xf32>
    %13 = vector.broadcast %12 : vector<1x4xf32> to vector<512x4xf32>
    %14 = arith.addf %11, %13 : vector<512x4xf32>
    %cst_7 = arith.constant 0.000000e+00 : f32
    %15 = vector.broadcast %cst_7 : f32 to vector<512x4xf32>
    %16 = arith.subf %15, %14 : vector<512x4xf32>
    %17 = math.exp %16 : vector<512x4xf32>
    %cst_8 = arith.constant 1.000000e+00 : f32
    %18 = vector.broadcast %cst_8 : f32 to vector<512x4xf32>
    %19 = arith.addf %18, %17 : vector<512x4xf32>
    %20 = tpu.reciprocal %19 {approx = true} : vector<512x4xf32> -> vector<512x4xf32>
    %21 = arith.mulf %14, %20 : vector<512x4xf32>
    %22 = vector.shape_cast %21 : vector<512x4xf32> to vector<32x16x4xf32>
    %cst_9 = arith.constant -3.000000e+38 : f32
    %23 = vector.broadcast %cst_9 : f32 to vector<2x32x4xf32>
    %cst_10 = arith.constant -3.000000e+38 : f32
    %24 = vector.broadcast %cst_10 : f32 to vector<32x8x4xf32>
    %c0_11 = arith.constant 0 : index
    %c0_12 = arith.constant 0 : index
    %c0_13 = arith.constant 0 : index
    %25 = vector.load %arg8[%c0_11, %c0_12, %c0_13] : memref<36x32x4xf32, #tpu.memory_space<vmem>>, vector<2x32x4xf32>
    tpu.vector_store %arg8[%c0_11, %c0_12, %c0_13], %23 {strides = array<i32>} : memref<36x32x4xf32, #tpu.memory_space<vmem>>, vector<2x32x4xf32>,
    %c34 = arith.constant 34 : index
    %c0_14 = arith.constant 0 : index
    %c0_15 = arith.constant 0 : index
    %26 = vector.load %arg8[%c34, %c0_14, %c0_15] : memref<36x32x4xf32, #tpu.memory_space<vmem>>, vector<2x32x4xf32>
    tpu.vector_store %arg8[%c34, %c0_14, %c0_15], %23 {strides = array<i32>} : memref<36x32x4xf32, #tpu.memory_space<vmem>>, vector<2x32x4xf32>,
    %c2 = arith.constant 2 : index
    %c0_16 = arith.constant 0 : index
    %c0_17 = arith.constant 0 : index
    %27 = vector.load %arg8[%c2, %c0_16, %c0_17] : memref<36x32x4xf32, #tpu.memory_space<vmem>>, vector<32x8x4xf32>
    tpu.vector_store %arg8[%c2, %c0_16, %c0_17], %24 {strides = array<i32>} : memref<36x32x4xf32, #tpu.memory_space<vmem>>, vector<32x8x4xf32>,
    %c2_18 = arith.constant 2 : index
    %c24 = arith.constant 24 : index
    %c0_19 = arith.constant 0 : index
    %28 = vector.load %arg8[%c2_18, %c24, %c0_19] : memref<36x32x4xf32, #tpu.memory_space<vmem>>, vector<32x8x4xf32>
    tpu.vector_store %arg8[%c2_18, %c24, %c0_19], %24 {strides = array<i32>} : memref<36x32x4xf32, #tpu.memory_space<vmem>>, vector<32x8x4xf32>,
    %c2_20 = arith.constant 2 : index
    %c8 = arith.constant 8 : index
    %c0_21 = arith.constant 0 : index
    %29 = vector.load %arg8[%c2_20, %c8, %c0_21] : memref<36x32x4xf32, #tpu.memory_space<vmem>>, vector<32x16x4xf32>
    tpu.vector_store %arg8[%c2_20, %c8, %c0_21], %22 {strides = array<i32>} : memref<36x32x4xf32, #tpu.memory_space<vmem>>, vector<32x16x4xf32>,
    %c2_i32 = arith.constant 2 : i32
    %30 = arith.addi %4, %c2_i32 : i32
    %31 = arith.index_cast %30 : i32 to index
    %c8_22 = arith.constant 8 : index
    %c0_23 = arith.constant 0 : index
    %32 = vector.load %arg8[%31, %c8_22, %c0_23] : memref<36x32x4xf32, #tpu.memory_space<vmem>>, vector<32x16x4xf32>
    %33 = arith.truncf %32 : vector<32x16x4xf32> to vector<32x16x4xbf16>
    %c0_24 = arith.constant 0 : index
    %c0_25 = arith.constant 0 : index
    %c0_26 = arith.constant 0 : index
    %34 = vector.load %arg9[%c0_24, %c0_25, %c0_26] : memref<32x16x16xbf16, #tpu.memory_space<vmem>>, vector<32x16x4xbf16>
    tpu.vector_store %arg9[%c0_24, %c0_25, %c0_26], %33 {strides = array<i32>} : memref<32x16x16xbf16, #tpu.memory_space<vmem>>, vector<32x16x4xbf16>,
    %c0_27 = arith.constant 0 : index
    %c0_28 = arith.constant 0 : index
    %c0_29 = arith.constant 0 : index
    %35 = vector.load %arg8[%c0_27, %c0_28, %c0_29] : memref<36x32x4xf32, #tpu.memory_space<vmem>>, vector<32x32x4xf32>
    %c1 = arith.constant 1 : index
    %c0_30 = arith.constant 0 : index
    %c0_31 = arith.constant 0 : index
    %36 = vector.load %arg8[%c1, %c0_30, %c0_31] : memref<36x32x4xf32, #tpu.memory_space<vmem>>, vector<32x32x4xf32>
    %37 = arith.maximumf %35, %36 : vector<32x32x4xf32>
    %c2_32 = arith.constant 2 : index
    %c0_33 = arith.constant 0 : index
    %c0_34 = arith.constant 0 : index
    %38 = vector.load %arg8[%c2_32, %c0_33, %c0_34] : memref<36x32x4xf32, #tpu.memory_space<vmem>>, vector<32x32x4xf32>
    %39 = arith.maximumf %37, %38 : vector<32x32x4xf32>
    %c3 = arith.constant 3 : index
    %c0_35 = arith.constant 0 : index
    %c0_36 = arith.constant 0 : index
    %40 = vector.load %arg8[%c3, %c0_35, %c0_36] : memref<36x32x4xf32, #tpu.memory_space<vmem>>, vector<32x32x4xf32>
    %41 = arith.maximumf %39, %40 : vector<32x32x4xf32>
    %c4 = arith.constant 4 : index
    %c0_37 = arith.constant 0 : index
    %c0_38 = arith.constant 0 : index
    %42 = vector.load %arg8[%c4, %c0_37, %c0_38] : memref<36x32x4xf32, #tpu.memory_space<vmem>>, vector<32x32x4xf32>
    %43 = arith.maximumf %41, %42 : vector<32x32x4xf32>
    %c1_i32 = arith.constant 1 : i32
    %44 = tpu.dynamic_rotate %43 by %c1_i32 dim 1 : vector<32x32x4xf32>, i32 -> vector<32x32x4xf32>
    %45 = arith.maximumf %43, %44 : vector<32x32x4xf32>
    %c31_i32 = arith.constant 31 : i32
    %46 = tpu.dynamic_rotate %43 by %c31_i32 dim 1 : vector<32x32x4xf32>, i32 -> vector<32x32x4xf32>
    %47 = arith.maximumf %45, %46 : vector<32x32x4xf32>
    %c2_i32_39 = arith.constant 2 : i32
    %48 = tpu.dynamic_rotate %43 by %c2_i32_39 dim 1 : vector<32x32x4xf32>, i32 -> vector<32x32x4xf32>
    %49 = arith.maximumf %47, %48 : vector<32x32x4xf32>
    %c30_i32 = arith.constant 30 : i32
    %50 = tpu.dynamic_rotate %43 by %c30_i32 dim 1 : vector<32x32x4xf32>, i32 -> vector<32x32x4xf32>
    %51 = arith.maximumf %49, %50 : vector<32x32x4xf32>
    %52 = vector.extract_strided_slice %51 {offsets = [0, 8, 0], sizes = [32, 16, 4], strides = [1, 1, 1]} : vector<32x32x4xf32> to vector<32x16x4xf32>
    %c2_40 = arith.constant 2 : index
    %c8_41 = arith.constant 8 : index
    %c0_42 = arith.constant 0 : index
    %53 = vector.load %arg8[%c2_40, %c8_41, %c0_42] : memref<36x32x4xf32, #tpu.memory_space<vmem>>, vector<32x16x4xf32>
    tpu.vector_store %arg8[%c2_40, %c8_41, %c0_42], %52 {strides = array<i32>} : memref<36x32x4xf32, #tpu.memory_space<vmem>>, vector<32x16x4xf32>,
    %c2_i32_43 = arith.constant 2 : i32
    %54 = arith.addi %4, %c2_i32_43 : i32
    %55 = arith.index_cast %54 : i32 to index
    %c8_44 = arith.constant 8 : index
    %c0_45 = arith.constant 0 : index
    %56 = vector.load %arg8[%55, %c8_44, %c0_45] : memref<36x32x4xf32, #tpu.memory_space<vmem>>, vector<32x16x4xf32>
    %57 = arith.truncf %56 : vector<32x16x4xf32> to vector<32x16x4xbf16>
    %c0_46 = arith.constant 0 : index
    %c0_47 = arith.constant 0 : index
    %c4_48 = arith.constant 4 : index
    %58 = vector.load %arg9[%c0_46, %c0_47, %c4_48] : memref<32x16x16xbf16, #tpu.memory_space<vmem>>, vector<32x16x4xbf16>
    tpu.vector_store %arg9[%c0_46, %c0_47, %c4_48], %57 {strides = array<i32>} : memref<32x16x16xbf16, #tpu.memory_space<vmem>>, vector<32x16x4xbf16>,
    %c0_49 = arith.constant 0 : index
    %c0_50 = arith.constant 0 : index
    %c0_51 = arith.constant 0 : index
    %59 = vector.load %arg8[%c0_49, %c0_50, %c0_51] : memref<36x32x4xf32, #tpu.memory_space<vmem>>, vector<32x32x4xf32>
    %c1_52 = arith.constant 1 : index
    %c0_53 = arith.constant 0 : index
    %c0_54 = arith.constant 0 : index
    %60 = vector.load %arg8[%c1_52, %c0_53, %c0_54] : memref<36x32x4xf32, #tpu.memory_space<vmem>>, vector<32x32x4xf32>
    %61 = arith.maximumf %59, %60 : vector<32x32x4xf32>
    %c2_55 = arith.constant 2 : index
    %c0_56 = arith.constant 0 : index
    %c0_57 = arith.constant 0 : index
    %62 = vector.load %arg8[%c2_55, %c0_56, %c0_57] : memref<36x32x4xf32, #tpu.memory_space<vmem>>, vector<32x32x4xf32>
    %63 = arith.maximumf %61, %62 : vector<32x32x4xf32>
    %c3_58 = arith.constant 3 : index
    %c0_59 = arith.constant 0 : index
    %c0_60 = arith.constant 0 : index
    %64 = vector.load %arg8[%c3_58, %c0_59, %c0_60] : memref<36x32x4xf32, #tpu.memory_space<vmem>>, vector<32x32x4xf32>
    %65 = arith.maximumf %63, %64 : vector<32x32x4xf32>
    %c4_61 = arith.constant 4 : index
    %c0_62 = arith.constant 0 : index
    %c0_63 = arith.constant 0 : index
    %66 = vector.load %arg8[%c4_61, %c0_62, %c0_63] : memref<36x32x4xf32, #tpu.memory_space<vmem>>, vector<32x32x4xf32>
    %67 = arith.maximumf %65, %66 : vector<32x32x4xf32>
    %c1_i32_64 = arith.constant 1 : i32
    %68 = tpu.dynamic_rotate %67 by %c1_i32_64 dim 1 : vector<32x32x4xf32>, i32 -> vector<32x32x4xf32>
    %69 = arith.maximumf %67, %68 : vector<32x32x4xf32>
    %c31_i32_65 = arith.constant 31 : i32
    %70 = tpu.dynamic_rotate %67 by %c31_i32_65 dim 1 : vector<32x32x4xf32>, i32 -> vector<32x32x4xf32>
    %71 = arith.maximumf %69, %70 : vector<32x32x4xf32>
    %c2_i32_66 = arith.constant 2 : i32
    %72 = tpu.dynamic_rotate %67 by %c2_i32_66 dim 1 : vector<32x32x4xf32>, i32 -> vector<32x32x4xf32>
    %73 = arith.maximumf %71, %72 : vector<32x32x4xf32>
    %c30_i32_67 = arith.constant 30 : i32
    %74 = tpu.dynamic_rotate %67 by %c30_i32_67 dim 1 : vector<32x32x4xf32>, i32 -> vector<32x32x4xf32>
    %75 = arith.maximumf %73, %74 : vector<32x32x4xf32>
    %76 = vector.extract_strided_slice %75 {offsets = [0, 8, 0], sizes = [32, 16, 4], strides = [1, 1, 1]} : vector<32x32x4xf32> to vector<32x16x4xf32>
    %c2_68 = arith.constant 2 : index
    %c8_69 = arith.constant 8 : index
    %c0_70 = arith.constant 0 : index
    %77 = vector.load %arg8[%c2_68, %c8_69, %c0_70] : memref<36x32x4xf32, #tpu.memory_space<vmem>>, vector<32x16x4xf32>
    tpu.vector_store %arg8[%c2_68, %c8_69, %c0_70], %76 {strides = array<i32>} : memref<36x32x4xf32, #tpu.memory_space<vmem>>, vector<32x16x4xf32>,
    %c2_i32_71 = arith.constant 2 : i32
    %78 = arith.addi %4, %c2_i32_71 : i32
    %79 = arith.index_cast %78 : i32 to index
    %c8_72 = arith.constant 8 : index
    %c0_73 = arith.constant 0 : index
    %80 = vector.load %arg8[%79, %c8_72, %c0_73] : memref<36x32x4xf32, #tpu.memory_space<vmem>>, vector<32x16x4xf32>
    %81 = arith.truncf %80 : vector<32x16x4xf32> to vector<32x16x4xbf16>
    %c0_74 = arith.constant 0 : index
    %c0_75 = arith.constant 0 : index
    %c8_76 = arith.constant 8 : index
    %82 = vector.load %arg9[%c0_74, %c0_75, %c8_76] : memref<32x16x16xbf16, #tpu.memory_space<vmem>>, vector<32x16x4xbf16>
    tpu.vector_store %arg9[%c0_74, %c0_75, %c8_76], %81 {strides = array<i32>} : memref<32x16x16xbf16, #tpu.memory_space<vmem>>, vector<32x16x4xbf16>,
    %c0_77 = arith.constant 0 : index
    %c0_78 = arith.constant 0 : index
    %c0_79 = arith.constant 0 : index
    %83 = vector.load %arg8[%c0_77, %c0_78, %c0_79] : memref<36x32x4xf32, #tpu.memory_space<vmem>>, vector<32x32x4xf32>
    %c1_80 = arith.constant 1 : index
    %c0_81 = arith.constant 0 : index
    %c0_82 = arith.constant 0 : index
    %84 = vector.load %arg8[%c1_80, %c0_81, %c0_82] : memref<36x32x4xf32, #tpu.memory_space<vmem>>, vector<32x32x4xf32>
    %85 = arith.maximumf %83, %84 : vector<32x32x4xf32>
    %c2_83 = arith.constant 2 : index
    %c0_84 = arith.constant 0 : index
    %c0_85 = arith.constant 0 : index
    %86 = vector.load %arg8[%c2_83, %c0_84, %c0_85] : memref<36x32x4xf32, #tpu.memory_space<vmem>>, vector<32x32x4xf32>
    %87 = arith.maximumf %85, %86 : vector<32x32x4xf32>
    %c3_86 = arith.constant 3 : index
    %c0_87 = arith.constant 0 : index
    %c0_88 = arith.constant 0 : index
    %88 = vector.load %arg8[%c3_86, %c0_87, %c0_88] : memref<36x32x4xf32, #tpu.memory_space<vmem>>, vector<32x32x4xf32>
    %89 = arith.maximumf %87, %88 : vector<32x32x4xf32>
    %c4_89 = arith.constant 4 : index
    %c0_90 = arith.constant 0 : index
    %c0_91 = arith.constant 0 : index
    %90 = vector.load %arg8[%c4_89, %c0_90, %c0_91] : memref<36x32x4xf32, #tpu.memory_space<vmem>>, vector<32x32x4xf32>
    %91 = arith.maximumf %89, %90 : vector<32x32x4xf32>
    %c1_i32_92 = arith.constant 1 : i32
    %92 = tpu.dynamic_rotate %91 by %c1_i32_92 dim 1 : vector<32x32x4xf32>, i32 -> vector<32x32x4xf32>
    %93 = arith.maximumf %91, %92 : vector<32x32x4xf32>
    %c31_i32_93 = arith.constant 31 : i32
    %94 = tpu.dynamic_rotate %91 by %c31_i32_93 dim 1 : vector<32x32x4xf32>, i32 -> vector<32x32x4xf32>
    %95 = arith.maximumf %93, %94 : vector<32x32x4xf32>
    %c2_i32_94 = arith.constant 2 : i32
    %96 = tpu.dynamic_rotate %91 by %c2_i32_94 dim 1 : vector<32x32x4xf32>, i32 -> vector<32x32x4xf32>
    %97 = arith.maximumf %95, %96 : vector<32x32x4xf32>
    %c30_i32_95 = arith.constant 30 : i32
    %98 = tpu.dynamic_rotate %91 by %c30_i32_95 dim 1 : vector<32x32x4xf32>, i32 -> vector<32x32x4xf32>
    %99 = arith.maximumf %97, %98 : vector<32x32x4xf32>
    %100 = vector.extract_strided_slice %99 {offsets = [0, 8, 0], sizes = [32, 16, 4], strides = [1, 1, 1]} : vector<32x32x4xf32> to vector<32x16x4xf32>
    %c2_96 = arith.constant 2 : index
    %c8_97 = arith.constant 8 : index
    %c0_98 = arith.constant 0 : index
    %101 = vector.load %arg8[%c2_96, %c8_97, %c0_98] : memref<36x32x4xf32, #tpu.memory_space<vmem>>, vector<32x16x4xf32>
    tpu.vector_store %arg8[%c2_96, %c8_97, %c0_98], %100 {strides = array<i32>} : memref<36x32x4xf32, #tpu.memory_space<vmem>>, vector<32x16x4xf32>,
    %c2_i32_99 = arith.constant 2 : i32
    %102 = arith.addi %4, %c2_i32_99 : i32
    %103 = arith.index_cast %102 : i32 to index
    %c8_100 = arith.constant 8 : index
    %c0_101 = arith.constant 0 : index
    %104 = vector.load %arg8[%103, %c8_100, %c0_101] : memref<36x32x4xf32, #tpu.memory_space<vmem>>, vector<32x16x4xf32>
    %105 = arith.truncf %104 : vector<32x16x4xf32> to vector<32x16x4xbf16>
    %c0_102 = arith.constant 0 : index
    %c0_103 = arith.constant 0 : index
    %c12 = arith.constant 12 : index
    %106 = vector.load %arg9[%c0_102, %c0_103, %c12] : memref<32x16x16xbf16, #tpu.memory_space<vmem>>, vector<32x16x4xbf16>
    tpu.vector_store %arg9[%c0_102, %c0_103, %c12], %105 {strides = array<i32>} : memref<32x16x16xbf16, #tpu.memory_space<vmem>>, vector<32x16x4xbf16>,
    %c0_104 = arith.constant 0 : index
    %c0_105 = arith.constant 0 : index
    %c0_106 = arith.constant 0 : index
    %107 = vector.load %arg9[%c0_104, %c0_105, %c0_106] : memref<32x16x16xbf16, #tpu.memory_space<vmem>>, vector<32x16x16xbf16>
    %108 = vector.shape_cast %107 : vector<32x16x16xbf16> to vector<512x16xbf16>
    %c0_107 = arith.constant 0 : index
    %c0_108 = arith.constant 0 : index
    %109 = vector.load %arg5[%c0_107, %c0_108] : memref<16x8xbf16, #tpu.memory_space<vmem>>, vector<16x8xbf16>
    %cst_109 = arith.constant dense<0.000000e+00> : vector<512x8xf32>
    %110 = tpu.matmul %108, %109, %cst_109 {dimension_numbers = #tpu.dot_dimension_numbers<[1], [0], [0], [1], [0, 0, 1, 1], [], []>} : vector<512x16xbf16>, vector<16x8xbf16>, vector<512x8xf32> -> vector<512x8xf32>
    %c0_110 = arith.constant 0 : index
    %c0_111 = arith.constant 0 : index
    %111 = vector.load %arg6[%c0_110, %c0_111] : memref<1x8xf32, #tpu.memory_space<vmem>>, vector<1x8xf32>
    %112 = vector.broadcast %111 : vector<1x8xf32> to vector<512x8xf32>
    %113 = arith.addf %110, %112 : vector<512x8xf32>
    %cst_112 = arith.constant 0.000000e+00 : f32
    %114 = vector.broadcast %cst_112 : f32 to vector<512x8xf32>
    %115 = arith.subf %114, %113 : vector<512x8xf32>
    %116 = math.exp %115 : vector<512x8xf32>
    %cst_113 = arith.constant 1.000000e+00 : f32
    %117 = vector.broadcast %cst_113 : f32 to vector<512x8xf32>
    %118 = arith.addf %117, %116 : vector<512x8xf32>
    %119 = tpu.reciprocal %118 {approx = true} : vector<512x8xf32> -> vector<512x8xf32>
    %120 = arith.mulf %113, %119 : vector<512x8xf32>
    %121 = vector.shape_cast %120 : vector<512x8xf32> to vector<32x16x8xf32>
    %c0_114 = arith.constant 0 : index
    %c0_115 = arith.constant 0 : index
    %c0_116 = arith.constant 0 : index
    %c0_117 = arith.constant 0 : index
    %122 = vector.load %arg7[%c0_114, %c0_115, %c0_116, %c0_117] : memref<1x32x16x8xf32, #tpu.memory_space<vmem>>, vector<1x32x16x8xf32>
    %123 = vector.shape_cast %122 : vector<1x32x16x8xf32> to vector<32x16x8xf32>
    %124 = vector.shape_cast %121 : vector<32x16x8xf32> to vector<1x32x16x8xf32>
    tpu.vector_store %arg7[%c0_114, %c0_115, %c0_116, %c0_117], %124 {strides = array<i32>} : memref<1x32x16x8xf32, #tpu.memory_space<vmem>>, vector<1x32x16x8xf32>,
    return
  }
  func.func @transform_0(%arg0: i32, %arg1: i32) -> (i32, i32, i32, i32) {
    %c0_i32 = arith.constant 0 : i32
    %c0_i32_0 = arith.constant 0 : i32
    %c0_i32_1 = arith.constant 0 : i32
    %c0_i32_2 = arith.constant 0 : i32
    return %arg0, %c0_i32, %c0_i32_0, %c0_i32_1 : i32, i32, i32, i32
  }
  func.func @transform_1(%arg0: i32, %arg1: i32) -> (i32, i32) {
    %c0_i32 = arith.constant 0 : i32
    %c0_i32_0 = arith.constant 0 : i32
    %c0_i32_1 = arith.constant 0 : i32
    return %c0_i32, %c0_i32_0 : i32, i32
  }
  func.func @transform_2(%arg0: i32, %arg1: i32) -> (i32, i32) {
    %c0_i32 = arith.constant 0 : i32
    %c0_i32_0 = arith.constant 0 : i32
    %c0_i32_1 = arith.constant 0 : i32
    return %c0_i32, %c0_i32_0 : i32, i32
  }
  func.func @transform_3(%arg0: i32, %arg1: i32) -> (i32, i32) {
    %c0_i32 = arith.constant 0 : i32
    %c0_i32_0 = arith.constant 0 : i32
    %c0_i32_1 = arith.constant 0 : i32
    return %c0_i32, %c0_i32_0 : i32, i32
  }
  func.func @transform_4(%arg0: i32, %arg1: i32) -> (i32, i32) {
    %c0_i32 = arith.constant 0 : i32
    %c0_i32_0 = arith.constant 0 : i32
    %c0_i32_1 = arith.constant 0 : i32
    return %c0_i32, %c0_i32_0 : i32, i32
  }
  func.func @transform_5(%arg0: i32, %arg1: i32) -> (i32, i32, i32, i32) {
    %c0_i32 = arith.constant 0 : i32
    %c0_i32_0 = arith.constant 0 : i32
    %c0_i32_1 = arith.constant 0 : i32
    return %arg0, %arg1, %c0_i32, %c0_i32_0 : i32, i32, i32, i32
  }
}

</mosaic_0001>

<llo_original>
// kernel: tpu_custom_call.1
$region0: #{tpu_custom_call.1}
  #allocation0 [shape = 'u32[]', space=smem, size = 0x4, offset = 0x4, fixed_abs, tag = 'smem constant byte address 0x4 - core index']
  #allocation1 [shape = 'u32[144,128]{1,0:T(1,128)}', space=vmem, size = 0x12000, scoped, tag = 'internal scratch']
  #allocation2 [shape = 'f32[36,32,4]{2,1,0:T(8,128)}', space=vmem, size = 0x90000, scoped, tag = 'scratch operand']
  #allocation3 [shape = 'bf16[32,16,16]{2,1,0:T(16,128)(2,1)}', space=vmem, size = 0x20000, scoped, tag = 'scratch operand']
  %s0 = inlined_call_operand.hbm [shape: f32[2,32,16,8], index: 0, kind: input, shape index: {}]
  %s1 = inlined_call_operand.hbm [shape: bf16[8,4], index: 1, kind: input, shape index: {}]
  %s2 = inlined_call_operand.hbm [shape: f32[1,4], index: 2, kind: input, shape index: {}]
  %s3 = inlined_call_operand.hbm [shape: bf16[16,8], index: 3, kind: input, shape index: {}]
  %s4 = inlined_call_operand.hbm [shape: f32[1,8], index: 4, kind: input, shape index: {}]
  %s5 = inlined_call_operand.hbm [shape: f32[2,32,16,8], index: 5, kind: output, shape index: {}]
  %s6 = sld [smem:[#allocation0]]
  $region73: #{tpu_custom_call.1} parent=0
    _
  %s8 = ssub.s32 1, %s6
  %s9 = scalar_select 0, %s8, %s6
  $region1: #{tpu_custom_call.1} parent=0
    #allocation4 [shape = 'u8[524288]{0}', space=vmem, size = 0x80000, scoped, tag = 'input window, operand 0']
    #allocation5 [shape = 's32[2]{0}', space=sflag, size = 0x8, scoped, tag = 'scoped memory for tpu_custom_call.1']
    #allocation6 [shape = 's32[2]{0}', space=sflag, size = 0x8, scoped, tag = 'scoped memory for tpu_custom_call.1']
    #allocation7 [shape = 'u8[2048]{0}', space=vmem, size = 0x800, scoped, tag = 'input window, operand 1, single buffered']
    #allocation8 [shape = 's32[1]{0}', space=sflag, size = 0x4, scoped, tag = 'scoped memory for tpu_custom_call.1']
    #allocation9 [shape = 'u8[512]{0}', space=vmem, size = 0x400, scoped, tag = 'input window, operand 2, single buffered']
    #allocation10 [shape = 'u8[4096]{0}', space=vmem, size = 0x1000, scoped, tag = 'input window, operand 3, single buffered']
    #allocation11 [shape = 's32[1]{0}', space=sflag, size = 0x4, scoped, tag = 'scoped memory for tpu_custom_call.1']
    #allocation12 [shape = 'u8[512]{0}', space=vmem, size = 0x400, scoped, tag = 'input window, operand 4, single buffered']
    #allocation13 [shape = 'u8[524288]{0}', space=vmem, size = 0x80000, scoped, tag = 'output window, operand 0']
    %10 = vsyncpa [#allocation5], 0
    %s11 = scalar_lea.sflag [#allocation5], 1
    %12 = vsyncpa %s11, 0
    %13 = vsyncpa [#allocation8], 0
    %14 = vsyncpa [#allocation11], 0
    %15 = vsyncpa [#allocation6], 0
    %s16 = scalar_lea.sflag [#allocation6], 1
    %17 = vsyncpa %s16, 0
    loop: start=0, step=1, limit=4
    $region2: #{tpu_custom_call.1} parent=1 // loop_pre_header
      _
    $region3: #{tpu_custom_call.1} parent=1 // loop_header
      %s19 = sphi 0, %s23
      %p20 = scmp.ge.s32.totalorder %s19, 4
      %s26 = sphi 0, %s38
      %s27 = sphi 0, %s34
      %s28 = sphi 0, %s26
      %s29 = sphi 0, %s27
      %s30 = sphi 0, %s28
      %s31 = sphi 0, %s29
      %s41 = sphi 0, %s43
      %s44 = sphi 0, %s41
      %s45 = sphi 0, %s44
      %s61 = sphi 0, %s45
      %s65 = sphi 0, %s65
      %s67 = sphi 0, %s65
      %s68 = sphi 0, %s67
      %s82 = sphi 0, %s68
      %s86 = sphi 0, %s86
      %s88 = sphi 0, %s86
      %s89 = sphi 0, %s88
      %s103 = sphi 0, %s89
      %s107 = sphi 0, %s107
      %s109 = sphi 0, %s107
      %s110 = sphi 0, %s109
      %s124 = sphi 0, %s110
      %s128 = sphi 0, %s128
      %s130 = sphi 0, %s128
      %s131 = sphi 0, %s130
      %s145 = sphi 0, %s131
      %s153 = sphi 0, %s155
      %s156 = sphi 0, %s153
      %s157 = sphi 0, %s156
      %s173 = sphi 0, %s157
    $region4: #{tpu_custom_call.1} parent=1 // loop_header_branch
      %22 = sbr.rel (%p20) target = $region8
    $region5: #{tpu_custom_call.1} parent=1 // loop_body
      %s24 = ssub.s32 %s19, 1
      %s25 = ssub.s32 %s19, 2
      %s32 = sadd.s32 1, %s27
      %p33 = scmp.ge.s32.totalorder %s32, 1
      %s34 = scalar_select %p33, 0, %s32
      %s35 = sadd.s32 1, %s26
      %s36 = scalar_select %p33, %s35, %s26
      %p37 = scmp.ge.s32.totalorder %s36, 2
      %s38 = scalar_select %p37, 0, %s36
      %s39 = ssub.s32 %s26, %s38
      %p40 = scmp.eq.s32.totalorder %s39, 0
      %s42 = sadd.s32 %s41, 1
      %s43 = scalar_select %p40, %s41, %s42
      %p46 = pneg %p40
      %p47 = scmp.eq.s32.totalorder %s19, 1
      %p48 = por %p46, %p47
      %p49 = scmp.ne.s32.totalorder %s41, %s44
      %p50 = scmp.eq.s32.totalorder %s19, 0
      %p51 = por %p49, %p50
      %p52 = scmp.ne.s32.totalorder %s41, %s44
      %p53 = scmp.eq.s32.totalorder %s24, 1
      %p54 = por %p52, %p53
      %p55 = scmp.ne.s32.totalorder %s44, %s45
      %p56 = scmp.eq.s32.totalorder %s24, 0
      %p57 = por %p55, %p56
      %p58 = scmp.ne.s32.totalorder %s44, %s45
      %p59 = scmp.eq.s32.totalorder %s25, 1
      %p60 = por %p58, %p59
      %p62 = scmp.ne.s32.totalorder %s45, %s61
      %p63 = scmp.eq.s32.totalorder %s25, 0
      %p64 = por %p62, %p63
      %s66 = sadd.s32 %s65, 1
      %p69 = scmp.eq.s32.totalorder %s19, 1
      %p70 = scmp.ne.s32.totalorder %s65, %s67
      %p71 = scmp.eq.s32.totalorder %s19, 0
      %p72 = por %p70, %p71
      %p73 = scmp.ne.s32.totalorder %s65, %s67
      %p74 = scmp.eq.s32.totalorder %s24, 1
      %p75 = por %p73, %p74
      %p76 = scmp.ne.s32.totalorder %s67, %s68
      %p77 = scmp.eq.s32.totalorder %s24, 0
      %p78 = por %p76, %p77
      %p79 = scmp.ne.s32.totalorder %s67, %s68
      %p80 = scmp.eq.s32.totalorder %s25, 1
      %p81 = por %p79, %p80
      %p83 = scmp.ne.s32.totalorder %s68, %s82
      %p84 = scmp.eq.s32.totalorder %s25, 0
      %p85 = por %p83, %p84
      %s87 = sadd.s32 %s86, 1
      %p90 = scmp.eq.s32.totalorder %s19, 1
      %p91 = scmp.ne.s32.totalorder %s86, %s88
      %p92 = scmp.eq.s32.totalorder %s19, 0
      %p93 = por %p91, %p92
      %p94 = scmp.ne.s32.totalorder %s86, %s88
      %p95 = scmp.eq.s32.totalorder %s24, 1
      %p96 = por %p94, %p95
      %p97 = scmp.ne.s32.totalorder %s88, %s89
      %p98 = scmp.eq.s32.totalorder %s24, 0
      %p99 = por %p97, %p98
      %p100 = scmp.ne.s32.totalorder %s88, %s89
      %p101 = scmp.eq.s32.totalorder %s25, 1
      %p102 = por %p100, %p101
      %p104 = scmp.ne.s32.totalorder %s89, %s103
      %p105 = scmp.eq.s32.totalorder %s25, 0
      %p106 = por %p104, %p105
      %s108 = sadd.s32 %s107, 1
      %p111 = scmp.eq.s32.totalorder %s19, 1
      %p112 = scmp.ne.s32.totalorder %s107, %s109
      %p113 = scmp.eq.s32.totalorder %s19, 0
      %p114 = por %p112, %p113
      %p115 = scmp.ne.s32.totalorder %s107, %s109
      %p116 = scmp.eq.s32.totalorder %s24, 1
      %p117 = por %p115, %p116
      %p118 = scmp.ne.s32.totalorder %s109, %s110
      %p119 = scmp.eq.s32.totalorder %s24, 0
      %p120 = por %p118, %p119
      %p121 = scmp.ne.s32.totalorder %s109, %s110
      %p122 = scmp.eq.s32.totalorder %s25, 1
      %p123 = por %p121, %p122
      %p125 = scmp.ne.s32.totalorder %s110, %s124
      %p126 = scmp.eq.s32.totalorder %s25, 0
      %p127 = por %p125, %p126
      %s129 = sadd.s32 %s128, 1
      %p132 = scmp.eq.s32.totalorder %s19, 1
      %p133 = scmp.ne.s32.totalorder %s128, %s130
      %p134 = scmp.eq.s32.totalorder %s19, 0
      %p135 = por %p133, %p134
      %p136 = scmp.ne.s32.totalorder %s128, %s130
      %p137 = scmp.eq.s32.totalorder %s24, 1
      %p138 = por %p136, %p137
      %p139 = scmp.ne.s32.totalorder %s130, %s131
      %p140 = scmp.eq.s32.totalorder %s24, 0
      %p141 = por %p139, %p140
      %p142 = scmp.ne.s32.totalorder %s130, %s131
      %p143 = scmp.eq.s32.totalorder %s25, 1
      %p144 = por %p142, %p143
      %p146 = scmp.ne.s32.totalorder %s131, %s145
      %p147 = scmp.eq.s32.totalorder %s25, 0
      %p148 = por %p146, %p147
      %s149 = ssub.s32 %s26, %s38
      %s150 = ssub.s32 %s27, %s34
      %s151 = sor.u32 %s149, %s150
      %p152 = scmp.eq.s32.totalorder %s151, 0
      %s154 = sadd.s32 %s153, 1
      %s155 = scalar_select %p152, %s153, %s154
      %p158 = pneg %p152
      %p159 = scmp.eq.s32.totalorder %s19, 1
      %p160 = por %p158, %p159
      %p161 = scmp.ne.s32.totalorder %s153, %s156
      %p162 = scmp.eq.s32.totalorder %s19, 0
      %p163 = por %p161, %p162
      %p164 = scmp.ne.s32.totalorder %s153, %s156
      %p165 = scmp.eq.s32.totalorder %s24, 1
      %p166 = por %p164, %p165
      %p167 = scmp.ne.s32.totalorder %s156, %s157
      %p168 = scmp.eq.s32.totalorder %s24, 0
      %p169 = por %p167, %p168
      %p170 = scmp.ne.s32.totalorder %s156, %s157
      %p171 = scmp.eq.s32.totalorder %s25, 1
      %p172 = por %p170, %p171
      %p174 = scmp.ne.s32.totalorder %s157, %s173
      %p175 = scmp.eq.s32.totalorder %s25, 0
      %p176 = por %p174, %p175
      %p177 = scmp.le.s32.totalorder 1, %s19
      %p178 = scmp.lt.s32.totalorder %s19, 3
      %p179 = pnand %p177, %p178
      %p180 = pneg %p179
      // Predicated region
      $region9: #{tpu_custom_call.1} parent=5 // pred_check
        _
      $region10: #{tpu_custom_call.1} parent=5 // pred_check_branch
        %182 = sbr.rel (%p179) target = $region12
      $region11: #{tpu_custom_call.1} parent=5 // pred_region
        %s183 = ssub.s32 %s19, 1
        // Predicated region
        $region13: #{tpu_custom_call.1} parent=11 // pred_check
          %p184 = pneg %p78
        $region14: #{tpu_custom_call.1} parent=11 // pred_check_branch
          %186 = sbr.rel (%p184) target = $region16
        $region15: #{tpu_custom_call.1} parent=11 // pred_region
          %s188 = ssub.s32 64, 64
          %189 = vsyncadd [#allocation8], %s188
          %s191 = sshll.u32 [#allocation7], 4
          %s192 = int_to_ptr.vmem [resolvable:$true] %s191
          %194 = dma.hbm_to_vmem [thread:$0]  %s1, 64, %s192, [#allocation8]
        $region16: #{tpu_custom_call.1} parent=11 // pred_fallthru
          _
        // Predicated region
        $region17: #{tpu_custom_call.1} parent=11 // pred_check
          %p195 = pneg %p99
        $region18: #{tpu_custom_call.1} parent=11 // pred_check_branch
          %197 = sbr.rel (%p195) target = $region20
        $region19: #{tpu_custom_call.1} parent=11 // pred_region
          %s199 = ssub.s32 16, 16
          %200 = vsyncadd [#allocation8], %s199
          %s202 = sshll.u32 [#allocation9], 4
          %s203 = int_to_ptr.vmem [resolvable:$true] %s202
          %205 = dma.hbm_to_vmem [thread:$0]  %s2, 16, %s203, [#allocation8]
        $region20: #{tpu_custom_call.1} parent=11 // pred_fallthru
          _
        // Predicated region
        $region21: #{tpu_custom_call.1} parent=11 // pred_check
          %p206 = pneg %p120
        $region22: #{tpu_custom_call.1} parent=11 // pred_check_branch
          %208 = sbr.rel (%p206) target = $region24
        $region23: #{tpu_custom_call.1} parent=11 // pred_region
          %s210 = ssub.s32 128, 128
          %211 = vsyncadd [#allocation11], %s210
          %s212 = sshll.u32 [#allocation10], 4
          %s213 = int_to_ptr.vmem [resolvable:$true] %s212
          %218 = dma.hbm_to_vmem [thread:$0]  %s3, 128, %s213, [#allocation11], 64, 64, 4
        $region24: #{tpu_custom_call.1} parent=11 // pred_fallthru
          _
        // Predicated region
        $region25: #{tpu_custom_call.1} parent=11 // pred_check
          %p219 = pneg %p141
        $region26: #{tpu_custom_call.1} parent=11 // pred_check_branch
          %221 = sbr.rel (%p219) target = $region28
        $region27: #{tpu_custom_call.1} parent=11 // pred_region
          %s223 = ssub.s32 16, 16
          %224 = vsyncadd [#allocation11], %s223
          %s226 = sshll.u32 [#allocation12], 4
          %s227 = int_to_ptr.vmem [resolvable:$true] %s226
          %229 = dma.hbm_to_vmem [thread:$0]  %s4, 16, %s227, [#allocation11]
        $region28: #{tpu_custom_call.1} parent=11 // pred_fallthru
          _
      $region12: #{tpu_custom_call.1} parent=5 // pred_fallthru
        _
      %p230 = scmp.lt.s32.totalorder %s19, 2
      // Predicated region
      $region29: #{tpu_custom_call.1} parent=5 // pred_check
        %p231 = pneg %p230
      $region30: #{tpu_custom_call.1} parent=5 // pred_check_branch
        %233 = sbr.rel (%p231) target = $region32
      $region31: #{tpu_custom_call.1} parent=5 // pred_region
        // Predicated region
        $region33: #{tpu_custom_call.1} parent=31 // pred_check
          %p234 = pneg %p51
        $region34: #{tpu_custom_call.1} parent=31 // pred_check_branch
          %236 = sbr.rel (%p234) target = $region36
        $region35: #{tpu_custom_call.1} parent=31 // pred_region
          %s237 = sand.u32 %s41, 1
          %s238 = scalar_lea.sflag [#allocation5], %s237
          %s239 = sand.u32 %s41, 1
          %s240 = smul.addr %s239, 512
          %s241 = scalar_lea.vmem [#allocation4], %s240
          %s243 = ssub.s32 8192, 8192
          %244 = vsyncadd %s238, %s243
          %s245 = smul.addr %s26, 64
          %s246 = smul.addr %s245, 128
          %s247 = scalar_lea.hbm %s0, %s246
          %s248 = sshll.u32 %s241, 4
          %s249 = int_to_ptr.vmem [resolvable:$true] %s248
          %254 = dma.hbm_to_vmem [thread:$0]  %s247, 8192, %s249, %s238, 128, 128, 8
        $region36: #{tpu_custom_call.1} parent=31 // pred_fallthru
          _
      $region32: #{tpu_custom_call.1} parent=5 // pred_fallthru
        _
      %p255 = scmp.le.s32.totalorder 1, %s19
      %p256 = scmp.lt.s32.totalorder %s19, 3
      %p257 = pnand %p255, %p256
      %p258 = pneg %p257
      // Predicated region
      $region37: #{tpu_custom_call.1} parent=5 // pred_check
        _
      $region38: #{tpu_custom_call.1} parent=5 // pred_check_branch
        %260 = sbr.rel (%p257) target = $region40
      $region39: #{tpu_custom_call.1} parent=5 // pred_region
        %s261 = ssub.s32 %s19, 1
        %s262 = sand.u32 %s44, 1
        %s263 = scalar_lea.sflag [#allocation5], %s262
        %s264 = sand.u32 %s44, 1
        %s265 = smul.addr %s264, 512
        %s266 = scalar_lea.vmem [#allocation4], %s265
        // Predicated region
        $region41: #{tpu_custom_call.1} parent=39 // pred_check
          %p267 = pneg %p57
        $region42: #{tpu_custom_call.1} parent=39 // pred_check_branch
          %269 = sbr.rel (%p267) target = $region44
        $region43: #{tpu_custom_call.1} parent=39 // pred_region
          %270 = dma.done %s263, 8192
        $region44: #{tpu_custom_call.1} parent=39 // pred_fallthru
          _
        // Predicated region
        $region45: #{tpu_custom_call.1} parent=39 // pred_check
          %p271 = pneg %p78
        $region46: #{tpu_custom_call.1} parent=39 // pred_check_branch
          %273 = sbr.rel (%p271) target = $region48
        $region47: #{tpu_custom_call.1} parent=39 // pred_region
          %274 = dma.done [#allocation8], 64
        $region48: #{tpu_custom_call.1} parent=39 // pred_fallthru
          _
        // Predicated region
        $region49: #{tpu_custom_call.1} parent=39 // pred_check
          %p275 = pneg %p99
        $region50: #{tpu_custom_call.1} parent=39 // pred_check_branch
          %277 = sbr.rel (%p275) target = $region52
        $region51: #{tpu_custom_call.1} parent=39 // pred_region
          %278 = dma.done [#allocation8], 16
        $region52: #{tpu_custom_call.1} parent=39 // pred_fallthru
          _
        // Predicated region
        $region53: #{tpu_custom_call.1} parent=39 // pred_check
          %p279 = pneg %p120
        $region54: #{tpu_custom_call.1} parent=39 // pred_check_branch
          %281 = sbr.rel (%p279) target = $region56
        $region55: #{tpu_custom_call.1} parent=39 // pred_region
          %282 = dma.done [#allocation11], 128
        $region56: #{tpu_custom_call.1} parent=39 // pred_fallthru
          _
        // Predicated region
        $region57: #{tpu_custom_call.1} parent=39 // pred_check
          %p283 = pneg %p141
        $region58: #{tpu_custom_call.1} parent=39 // pred_check_branch
          %285 = sbr.rel (%p283) target = $region60
        $region59: #{tpu_custom_call.1} parent=39 // pred_region
          %286 = dma.done [#allocation11], 16
        $region60: #{tpu_custom_call.1} parent=39 // pred_fallthru
          _
        %s287 = sand.u32 %s44, 1
        %s288 = scalar_lea.sflag [#allocation5], %s287
        %s289 = sand.u32 %s44, 1
        %s290 = smul.addr %s289, 512
        %s291 = scalar_lea.vmem [#allocation4], %s290
        %p292 = pneg %p57
        %p293 = pneg %p54
        %p294 = pneg %p78
        %p295 = pneg %p75
        %p296 = pneg %p99
        %p297 = pneg %p96
        %p298 = pneg %p120
        %p299 = pneg %p117
        %p300 = pneg %p141
        %p301 = pneg %p138
        %p302 = pneg %p169
        %p303 = pneg %p166
        %s304 = sand.u32 %s156, 1
        %s305 = scalar_lea.sflag [#allocation6], %s304
        %s306 = sand.u32 %s156, 1
        %s307 = smul.addr %s306, 512
        %s308 = scalar_lea.vmem [#allocation13], %s307
        %s309 = smul.u32 32, %s29
        %s311 = smul.u32 %s29, 32
        %s312 = ssub.s32 %s311, 6
        %p313 = scmp.gt.s32.totalorder %s312, 0
        %s314 = scalar_select %p313, %s312, 0
        %p315 = scmp.lt.s32.totalorder %s314, 0
        %s316 = scalar_select %p315, %s314, 0
        %s317 = ssub.s32 %s311, %s316
        %s318 = smul.u32 %s316, 16
        %s319 = scalar_lea.vmem %s266, %s318 [#allocation4]
        %v320 = vld [vmem:[%s319] sm:$0xff]
        %v321 = vld [vmem:[%s319 + $0x8] sm:$0xff]
        %v322 = vld [vmem:[%s319 + $0x10] sm:$0xff]
        %v323 = vld [vmem:[%s319 + $0x18] sm:$0xff]
        %v324 = vld [vmem:[%s319 + $0x20] sm:$0xff]
        %v325 = vld [vmem:[%s319 + $0x28] sm:$0xff]
        %v326 = vld [vmem:[%s319 + $0x30] sm:$0xff]
        %v327 = vld [vmem:[%s319 + $0x38] sm:$0xff]
        %v328 = vld [vmem:[%s319 + $0x40] sm:$0xff]
        %v329 = vld [vmem:[%s319 + $0x48] sm:$0xff]
        %v330 = vld [vmem:[%s319 + $0x50] sm:$0xff]
        %v331 = vld [vmem:[%s319 + $0x58] sm:$0xff]
        %v332 = vld [vmem:[%s319 + $0x60] sm:$0xff]
        %v333 = vld [vmem:[%s319 + $0x68] sm:$0xff]
        %v334 = vld [vmem:[%s319 + $0x70] sm:$0xff]
        %v335 = vld [vmem:[%s319 + $0x78] sm:$0xff]
        %v336 = vld [vmem:[%s319 + $0x80] sm:$0xff]
        %v337 = vld [vmem:[%s319 + $0x88] sm:$0xff]
        %v338 = vld [vmem:[%s319 + $0x90] sm:$0xff]
        %v339 = vld [vmem:[%s319 + $0x98] sm:$0xff]
        %v340 = vld [vmem:[%s319 + $0xa0] sm:$0xff]
        %v341 = vld [vmem:[%s319 + $0xa8] sm:$0xff]
        %v342 = vld [vmem:[%s319 + $0xb0] sm:$0xff]
        %v343 = vld [vmem:[%s319 + $0xb8] sm:$0xff]
        %v344 = vld [vmem:[%s319 + $0xc0] sm:$0xff]
        %v345 = vld [vmem:[%s319 + $0xc8] sm:$0xff]
        %v346 = vld [vmem:[%s319 + $0xd0] sm:$0xff]
        %v347 = vld [vmem:[%s319 + $0xd8] sm:$0xff]
        %v348 = vld [vmem:[%s319 + $0xe0] sm:$0xff]
        %v349 = vld [vmem:[%s319 + $0xe8] sm:$0xff]
        %v350 = vld [vmem:[%s319 + $0xf0] sm:$0xff]
        %v351 = vld [vmem:[%s319 + $0xf8] sm:$0xff]
        %v352 = vld [vmem:[%s319 + $0x100] sm:$0xff]
        %v353 = vld [vmem:[%s319 + $0x108] sm:$0xff]
        %v354 = vld [vmem:[%s319 + $0x110] sm:$0xff]
        %v355 = vld [vmem:[%s319 + $0x118] sm:$0xff]
        %v356 = vld [vmem:[%s319 + $0x120] sm:$0xff]
        %v357 = vld [vmem:[%s319 + $0x128] sm:$0xff]
        %v358 = vld [vmem:[%s319 + $0x130] sm:$0xff]
        %v359 = vld [vmem:[%s319 + $0x138] sm:$0xff]
        %v360 = vld [vmem:[%s319 + $0x140] sm:$0xff]
        %v361 = vld [vmem:[%s319 + $0x148] sm:$0xff]
        %v362 = vld [vmem:[%s319 + $0x150] sm:$0xff]
        %v363 = vld [vmem:[%s319 + $0x158] sm:$0xff]
        %v364 = vld [vmem:[%s319 + $0x160] sm:$0xff]
        %v365 = vld [vmem:[%s319 + $0x168] sm:$0xff]
        %v366 = vld [vmem:[%s319 + $0x170] sm:$0xff]
        %v367 = vld [vmem:[%s319 + $0x178] sm:$0xff]
        %v368 = vld [vmem:[%s319 + $0x180] sm:$0xff]
        %v369 = vld [vmem:[%s319 + $0x188] sm:$0xff]
        %v370 = vld [vmem:[%s319 + $0x190] sm:$0xff]
        %v371 = vld [vmem:[%s319 + $0x198] sm:$0xff]
        %v372 = vld [vmem:[%s319 + $0x1a0] sm:$0xff]
        %v373 = vld [vmem:[%s319 + $0x1a8] sm:$0xff]
        %v374 = vld [vmem:[%s319 + $0x1b0] sm:$0xff]
        %v375 = vld [vmem:[%s319 + $0x1b8] sm:$0xff]
        %v376 = vld [vmem:[%s319 + $0x1c0] sm:$0xff]
        %v377 = vld [vmem:[%s319 + $0x1c8] sm:$0xff]
        %v378 = vld [vmem:[%s319 + $0x1d0] sm:$0xff]
        %v379 = vld [vmem:[%s319 + $0x1d8] sm:$0xff]
        %v380 = vld [vmem:[%s319 + $0x1e0] sm:$0xff]
        %v381 = vld [vmem:[%s319 + $0x1e8] sm:$0xff]
        %v382 = vld [vmem:[%s319 + $0x1f0] sm:$0xff]
        %v383 = vld [vmem:[%s319 + $0x1f8] sm:$0xff]
        %v384 = vpack.c.bf16 %v321, %v320
        %v385 = vpack.c.bf16 %v323, %v322
        %v386 = vpack.c.bf16 %v325, %v324
        %v387 = vpack.c.bf16 %v327, %v326
        %v388 = vpack.c.bf16 %v329, %v328
        %v389 = vpack.c.bf16 %v331, %v330
        %v390 = vpack.c.bf16 %v333, %v332
        %v391 = vpack.c.bf16 %v335, %v334
        %v392 = vpack.c.bf16 %v337, %v336
        %v393 = vpack.c.bf16 %v339, %v338
        %v394 = vpack.c.bf16 %v341, %v340
        %v395 = vpack.c.bf16 %v343, %v342
        %v396 = vpack.c.bf16 %v345, %v344
        %v397 = vpack.c.bf16 %v347, %v346
        %v398 = vpack.c.bf16 %v349, %v348
        %v399 = vpack.c.bf16 %v351, %v350
        %v400 = vpack.c.bf16 %v353, %v352
        %v401 = vpack.c.bf16 %v355, %v354
        %v402 = vpack.c.bf16 %v357, %v356
        %v403 = vpack.c.bf16 %v359, %v358
        %v404 = vpack.c.bf16 %v361, %v360
        %v405 = vpack.c.bf16 %v363, %v362
        %v406 = vpack.c.bf16 %v365, %v364
        %v407 = vpack.c.bf16 %v367, %v366
        %v408 = vpack.c.bf16 %v369, %v368
        %v409 = vpack.c.bf16 %v371, %v370
        %v410 = vpack.c.bf16 %v373, %v372
        %v411 = vpack.c.bf16 %v375, %v374
        %v412 = vpack.c.bf16 %v377, %v376
        %v413 = vpack.c.bf16 %v379, %v378
        %v414 = vpack.c.bf16 %v381, %v380
        %v415 = vpack.c.bf16 %v383, %v382
        %v416 = vld [vmem:[#allocation7] sm:$0xf]
        %v417 = vld [vmem:[#allocation9] sm:$0x1]
        %v419 = vlaneseq
        %v420 = vshrl.u32 %v419, 7
        %v421 = vsub.s32 0, %v420
        %v422 = vrot.slane %v417, %v421
        %vm424 = vcmask 64512
        %v426 = vsel %vm424, %v384, 0
        %v429 = vsel %vm424, %v385, 0
        %v432 = vsel %vm424, %v386, 0
        %v435 = vsel %vm424, %v387, 0
        %v438 = vsel %vm424, %v388, 0
        %v441 = vsel %vm424, %v389, 0
        %v444 = vsel %vm424, %v390, 0
        %v447 = vsel %vm424, %v391, 0
        %v450 = vsel %vm424, %v392, 0
        %v453 = vsel %vm424, %v393, 0
        %v456 = vsel %vm424, %v394, 0
        %v459 = vsel %vm424, %v395, 0
        %v462 = vsel %vm424, %v396, 0
        %v465 = vsel %vm424, %v397, 0
        %v468 = vsel %vm424, %v398, 0
        %v471 = vsel %vm424, %v399, 0
        %v474 = vsel %vm424, %v400, 0
        %v477 = vsel %vm424, %v401, 0
        %v480 = vsel %vm424, %v402, 0
        %v483 = vsel %vm424, %v403, 0
        %v486 = vsel %vm424, %v404, 0
        %v489 = vsel %vm424, %v405, 0
        %v492 = vsel %vm424, %v406, 0
        %v495 = vsel %vm424, %v407, 0
        %v498 = vsel %vm424, %v408, 0
        %v501 = vsel %vm424, %v409, 0
        %v504 = vsel %vm424, %v410, 0
        %v507 = vsel %vm424, %v411, 0
        %v510 = vsel %vm424, %v412, 0
        %v513 = vsel %vm424, %v413, 0
        %v516 = vsel %vm424, %v414, 0
        %v519 = vsel %vm424, %v415, 0
        %vm521 = vcmask 1043456
        %v523 = vsel %vm521, %v416, 0
        %525 = vmatprep.subr.bf16.mxu0 0
        %526 = vmatpush1.bf16.msra.mxu0 %v523
        %527 = vmatprep.subr.bf16.mxu0 0
        %528 = vmatpush1.bf16.msra.mxu0 0
        %529 = vmatprep.subr.bf16.mxu0 0
        %530 = vmatpush1.bf16.msra.mxu0 0
        %531 = vmatprep.subr.bf16.mxu0 0
        %532 = vmatpush1.bf16.msra.mxu0 0
        %533 = vmatprep.subr.bf16.mxu0 0
        %534 = vmatpush1.bf16.msra.mxu0 0
        %535 = vmatprep.subr.bf16.mxu0 0
        %536 = vmatpush1.bf16.msra.mxu0 0
        %537 = vmatprep.subr.bf16.mxu0 0
        %538 = vmatpush1.bf16.msra.mxu0 0
        %539 = vmatprep.subr.bf16.mxu0 0
        %540 = vmatpush1.bf16.msra.mxu0 0
        %541 = vmatprep.subr.bf16.mxu0 0
        %542 = vmatpush1.bf16.msra.mxu0 0
        %543 = vmatprep.subr.bf16.mxu0 0
        %544 = vmatpush1.bf16.msra.mxu0 0
        %545 = vmatprep.subr.bf16.mxu0 0
        %546 = vmatpush1.bf16.msra.mxu0 0
        %547 = vmatprep.subr.bf16.mxu0 0
        %548 = vmatpush1.bf16.msra.mxu0 0
        %549 = vmatprep.subr.bf16.mxu0 0
        %550 = vmatpush1.bf16.msra.mxu0 0
        %551 = vmatprep.subr.bf16.mxu0 0
        %552 = vmatpush1.bf16.msra.mxu0 0
        %553 = vmatprep.subr.bf16.mxu0 0
        %554 = vmatpush1.bf16.msra.mxu0 0
        %555 = vmatprep.subr.bf16.mxu0 0
        %556 = vmatpush1.bf16.msra.mxu0 0
        %557 = vmatprep.mubr.bf16.mxu0 0
        %558 = vmatmul.mubr.bf16.gmra.mrb[0].mxu0 %v426
        %v559 = vpop.f32.mrb[0].mxu0
        %v560 = vadd.f32 %v422, %v559
        %v561 = vpop.f32.mrb[0].mxu0
        %v562 = vpop.f32.mrb[0].mxu0
        %v563 = vadd.f32 %v422, %v562
        %v564 = vpop.f32.mrb[0].mxu0
        %565 = vmatprep.mubr.bf16.mxu0 0
        %566 = vmatmul.mubr.bf16.gmra.mrb[0].mxu0 %v429
        %v567 = vpop.f32.mrb[0].mxu0
        %v568 = vadd.f32 %v422, %v567
        %v569 = vpop.f32.mrb[0].mxu0
        %v570 = vpop.f32.mrb[0].mxu0
        %v571 = vadd.f32 %v422, %v570
        %v572 = vpop.f32.mrb[0].mxu0
        %573 = vmatprep.mubr.bf16.mxu0 0
        %574 = vmatmul.mubr.bf16.gmra.mrb[0].mxu0 %v432
        %v575 = vpop.f32.mrb[0].mxu0
        %v576 = vadd.f32 %v422, %v575
        %v577 = vpop.f32.mrb[0].mxu0
        %v578 = vpop.f32.mrb[0].mxu0
        %v579 = vadd.f32 %v422, %v578
        %v580 = vpop.f32.mrb[0].mxu0
        %581 = vmatprep.mubr.bf16.mxu0 0
        %582 = vmatmul.mubr.bf16.gmra.mrb[0].mxu0 %v435
        %v583 = vpop.f32.mrb[0].mxu0
        %v584 = vadd.f32 %v422, %v583
        %v585 = vpop.f32.mrb[0].mxu0
        %v586 = vpop.f32.mrb[0].mxu0
        %v587 = vadd.f32 %v422, %v586
        %v588 = vpop.f32.mrb[0].mxu0
        %589 = vmatprep.mubr.bf16.mxu0 0
        %590 = vmatmul.mubr.bf16.gmra.mrb[0].mxu0 %v438
        %v591 = vpop.f32.mrb[0].mxu0
        %v592 = vadd.f32 %v422, %v591
        %v593 = vpop.f32.mrb[0].mxu0
        %v594 = vpop.f32.mrb[0].mxu0
        %v595 = vadd.f32 %v422, %v594
        %v596 = vpop.f32.mrb[0].mxu0
        %597 = vmatprep.mubr.bf16.mxu0 0
        %598 = vmatmul.mubr.bf16.gmra.mrb[0].mxu0 %v441
        %v599 = vpop.f32.mrb[0].mxu0
        %v600 = vadd.f32 %v422, %v599
        %v601 = vpop.f32.mrb[0].mxu0
        %v602 = vpop.f32.mrb[0].mxu0
        %v603 = vadd.f32 %v422, %v602
        %v604 = vpop.f32.mrb[0].mxu0
        %605 = vmatprep.mubr.bf16.mxu0 0
        %606 = vmatmul.mubr.bf16.gmra.mrb[0].mxu0 %v444
        %v607 = vpop.f32.mrb[0].mxu0
        %v608 = vadd.f32 %v422, %v607
        %v609 = vpop.f32.mrb[0].mxu0
        %v610 = vpop.f32.mrb[0].mxu0
        %v611 = vadd.f32 %v422, %v610
        %v612 = vpop.f32.mrb[0].mxu0
        %613 = vmatprep.mubr.bf16.mxu0 0
        %614 = vmatmul.mubr.bf16.gmra.mrb[0].mxu0 %v447
        %v615 = vpop.f32.mrb[0].mxu0
        %v616 = vadd.f32 %v422, %v615
        %v617 = vpop.f32.mrb[0].mxu0
        %v618 = vpop.f32.mrb[0].mxu0
        %v619 = vadd.f32 %v422, %v618
        %v620 = vpop.f32.mrb[0].mxu0
        %621 = vmatprep.mubr.bf16.mxu0 0
        %622 = vmatmul.mubr.bf16.gmra.mrb[0].mxu0 %v450
        %v623 = vpop.f32.mrb[0].mxu0
        %v624 = vadd.f32 %v422, %v623
        %v625 = vpop.f32.mrb[0].mxu0
        %v626 = vpop.f32.mrb[0].mxu0
        %v627 = vadd.f32 %v422, %v626
        %v628 = vpop.f32.mrb[0].mxu0
        %629 = vmatprep.mubr.bf16.mxu0 0
        %630 = vmatmul.mubr.bf16.gmra.mrb[0].mxu0 %v453
        %v631 = vpop.f32.mrb[0].mxu0
        %v632 = vadd.f32 %v422, %v631
        %v633 = vpop.f32.mrb[0].mxu0
        %v634 = vpop.f32.mrb[0].mxu0
        %v635 = vadd.f32 %v422, %v634
        %v636 = vpop.f32.mrb[0].mxu0
        %637 = vmatprep.mubr.bf16.mxu0 0
        %638 = vmatmul.mubr.bf16.gmra.mrb[0].mxu0 %v456
        %v639 = vpop.f32.mrb[0].mxu0
        %v640 = vadd.f32 %v422, %v639
        %v641 = vpop.f32.mrb[0].mxu0
        %v642 = vpop.f32.mrb[0].mxu0
        %v643 = vadd.f32 %v422, %v642
        %v644 = vpop.f32.mrb[0].mxu0
        %645 = vmatprep.mubr.bf16.mxu0 0
        %646 = vmatmul.mubr.bf16.gmra.mrb[0].mxu0 %v459
        %v647 = vpop.f32.mrb[0].mxu0
        %v648 = vadd.f32 %v422, %v647
        %v649 = vpop.f32.mrb[0].mxu0
        %v650 = vpop.f32.mrb[0].mxu0
        %v651 = vadd.f32 %v422, %v650
        %v652 = vpop.f32.mrb[0].mxu0
        %653 = vmatprep.mubr.bf16.mxu0 0
        %654 = vmatmul.mubr.bf16.gmra.mrb[0].mxu0 %v462
        %v655 = vpop.f32.mrb[0].mxu0
        %v656 = vadd.f32 %v422, %v655
        %v657 = vpop.f32.mrb[0].mxu0
        %v658 = vpop.f32.mrb[0].mxu0
        %v659 = vadd.f32 %v422, %v658
        %v660 = vpop.f32.mrb[0].mxu0
        %661 = vmatprep.mubr.bf16.mxu0 0
        %662 = vmatmul.mubr.bf16.gmra.mrb[0].mxu0 %v465
        %v663 = vpop.f32.mrb[0].mxu0
        %v664 = vadd.f32 %v422, %v663
        %v665 = vpop.f32.mrb[0].mxu0
        %v666 = vpop.f32.mrb[0].mxu0
        %v667 = vadd.f32 %v422, %v666
        %v668 = vpop.f32.mrb[0].mxu0
        %669 = vmatprep.mubr.bf16.mxu0 0
        %670 = vmatmul.mubr.bf16.gmra.mrb[0].mxu0 %v468
        %v671 = vpop.f32.mrb[0].mxu0
        %v672 = vadd.f32 %v422, %v671
        %v673 = vpop.f32.mrb[0].mxu0
        %v674 = vpop.f32.mrb[0].mxu0
        %v675 = vadd.f32 %v422, %v674
        %v676 = vpop.f32.mrb[0].mxu0
        %677 = vmatprep.mubr.bf16.mxu0 0
        %678 = vmatmul.mubr.bf16.gmra.mrb[0].mxu0 %v471
        %v679 = vpop.f32.mrb[0].mxu0
        %v680 = vadd.f32 %v422, %v679
        %v681 = vpop.f32.mrb[0].mxu0
        %v682 = vpop.f32.mrb[0].mxu0
        %v683 = vadd.f32 %v422, %v682
        %v684 = vpop.f32.mrb[0].mxu0
        %685 = vmatprep.mubr.bf16.mxu0 0
        %686 = vmatmul.mubr.bf16.gmra.mrb[0].mxu0 %v474
        %v687 = vpop.f32.mrb[0].mxu0
        %v688 = vadd.f32 %v422, %v687
        %v689 = vpop.f32.mrb[0].mxu0
        %v690 = vpop.f32.mrb[0].mxu0
        %v691 = vadd.f32 %v422, %v690
        %v692 = vpop.f32.mrb[0].mxu0
        %693 = vmatprep.mubr.bf16.mxu0 0
        %694 = vmatmul.mubr.bf16.gmra.mrb[0].mxu0 %v477
        %v695 = vpop.f32.mrb[0].mxu0
        %v696 = vadd.f32 %v422, %v695
        %v697 = vpop.f32.mrb[0].mxu0
        %v698 = vpop.f32.mrb[0].mxu0
        %v699 = vadd.f32 %v422, %v698
        %v700 = vpop.f32.mrb[0].mxu0
        %701 = vmatprep.mubr.bf16.mxu0 0
        %702 = vmatmul.mubr.bf16.gmra.mrb[0].mxu0 %v480
        %v703 = vpop.f32.mrb[0].mxu0
        %v704 = vadd.f32 %v422, %v703
        %v705 = vpop.f32.mrb[0].mxu0
        %v706 = vpop.f32.mrb[0].mxu0
        %v707 = vadd.f32 %v422, %v706
        %v708 = vpop.f32.mrb[0].mxu0
        %709 = vmatprep.mubr.bf16.mxu0 0
        %710 = vmatmul.mubr.bf16.gmra.mrb[0].mxu0 %v483
        %v711 = vpop.f32.mrb[0].mxu0
        %v712 = vadd.f32 %v422, %v711
        %v713 = vpop.f32.mrb[0].mxu0
        %v714 = vpop.f32.mrb[0].mxu0
        %v715 = vadd.f32 %v422, %v714
        %v716 = vpop.f32.mrb[0].mxu0
        %717 = vmatprep.mubr.bf16.mxu0 0
        %718 = vmatmul.mubr.bf16.gmra.mrb[0].mxu0 %v486
        %v719 = vpop.f32.mrb[0].mxu0
        %v720 = vadd.f32 %v422, %v719
        %v721 = vpop.f32.mrb[0].mxu0
        %v722 = vpop.f32.mrb[0].mxu0
        %v723 = vadd.f32 %v422, %v722
        %v724 = vpop.f32.mrb[0].mxu0
        %725 = vmatprep.mubr.bf16.mxu0 0
        %726 = vmatmul.mubr.bf16.gmra.mrb[0].mxu0 %v489
        %v727 = vpop.f32.mrb[0].mxu0
        %v728 = vadd.f32 %v422, %v727
        %v729 = vpop.f32.mrb[0].mxu0
        %v730 = vpop.f32.mrb[0].mxu0
        %v731 = vadd.f32 %v422, %v730
        %v732 = vpop.f32.mrb[0].mxu0
        %733 = vmatprep.mubr.bf16.mxu0 0
        %734 = vmatmul.mubr.bf16.gmra.mrb[0].mxu0 %v492
        %v735 = vpop.f32.mrb[0].mxu0
        %v736 = vadd.f32 %v422, %v735
        %v737 = vpop.f32.mrb[0].mxu0
        %v738 = vpop.f32.mrb[0].mxu0
        %v739 = vadd.f32 %v422, %v738
        %v740 = vpop.f32.mrb[0].mxu0
        %741 = vmatprep.mubr.bf16.mxu0 0
        %742 = vmatmul.mubr.bf16.gmra.mrb[0].mxu0 %v495
        %v743 = vpop.f32.mrb[0].mxu0
        %v744 = vadd.f32 %v422, %v743
        %v745 = vpop.f32.mrb[0].mxu0
        %v746 = vpop.f32.mrb[0].mxu0
        %v747 = vadd.f32 %v422, %v746
        %v748 = vpop.f32.mrb[0].mxu0
        %749 = vmatprep.mubr.bf16.mxu0 0
        %750 = vmatmul.mubr.bf16.gmra.mrb[0].mxu0 %v498
        %v751 = vpop.f32.mrb[0].mxu0
        %v752 = vadd.f32 %v422, %v751
        %v753 = vpop.f32.mrb[0].mxu0
        %v754 = vpop.f32.mrb[0].mxu0
        %v755 = vadd.f32 %v422, %v754
        %v756 = vpop.f32.mrb[0].mxu0
        %757 = vmatprep.mubr.bf16.mxu0 0
        %758 = vmatmul.mubr.bf16.gmra.mrb[0].mxu0 %v501
        %v759 = vpop.f32.mrb[0].mxu0
        %v760 = vadd.f32 %v422, %v759
        %v761 = vpop.f32.mrb[0].mxu0
        %v762 = vpop.f32.mrb[0].mxu0
        %v763 = vadd.f32 %v422, %v762
        %v764 = vpop.f32.mrb[0].mxu0
        %765 = vmatprep.mubr.bf16.mxu0 0
        %766 = vmatmul.mubr.bf16.gmra.mrb[0].mxu0 %v504
        %v767 = vpop.f32.mrb[0].mxu0
        %v768 = vadd.f32 %v422, %v767
        %v769 = vpop.f32.mrb[0].mxu0
        %v770 = vpop.f32.mrb[0].mxu0
        %v771 = vadd.f32 %v422, %v770
        %v772 = vpop.f32.mrb[0].mxu0
        %773 = vmatprep.mubr.bf16.mxu0 0
        %774 = vmatmul.mubr.bf16.gmra.mrb[0].mxu0 %v507
        %v775 = vpop.f32.mrb[0].mxu0
        %v776 = vadd.f32 %v422, %v775
        %v777 = vpop.f32.mrb[0].mxu0
        %v778 = vpop.f32.mrb[0].mxu0
        %v779 = vadd.f32 %v422, %v778
        %v780 = vpop.f32.mrb[0].mxu0
        %781 = vmatprep.mubr.bf16.mxu0 0
        %782 = vmatmul.mubr.bf16.gmra.mrb[0].mxu0 %v510
        %v783 = vpop.f32.mrb[0].mxu0
        %v784 = vadd.f32 %v422, %v783
        %v785 = vpop.f32.mrb[0].mxu0
        %v786 = vpop.f32.mrb[0].mxu0
        %v787 = vadd.f32 %v422, %v786
        %v788 = vpop.f32.mrb[0].mxu0
        %789 = vmatprep.mubr.bf16.mxu0 0
        %790 = vmatmul.mubr.bf16.gmra.mrb[0].mxu0 %v513
        %v791 = vpop.f32.mrb[0].mxu0
        %v792 = vadd.f32 %v422, %v791
        %v793 = vpop.f32.mrb[0].mxu0
        %v794 = vpop.f32.mrb[0].mxu0
        %v795 = vadd.f32 %v422, %v794
        %v796 = vpop.f32.mrb[0].mxu0
        %797 = vmatprep.mubr.bf16.mxu0 0
        %798 = vmatmul.mubr.bf16.gmra.mrb[0].mxu0 %v516
        %v799 = vpop.f32.mrb[0].mxu0
        %v800 = vadd.f32 %v422, %v799
        %v801 = vpop.f32.mrb[0].mxu0
        %v802 = vpop.f32.mrb[0].mxu0
        %v803 = vadd.f32 %v422, %v802
        %v804 = vpop.f32.mrb[0].mxu0
        %805 = vmatprep.mubr.bf16.mxu0 0
        %806 = vmatmul.mubr.bf16.gmra.mrb[0].mxu0 %v519
        %v807 = vpop.f32.mrb[0].mxu0
        %v808 = vadd.f32 %v422, %v807
        %v809 = vpop.f32.mrb[0].mxu0
        %v810 = vpop.f32.mrb[0].mxu0
        %v811 = vadd.f32 %v422, %v810
        %v812 = vpop.f32.mrb[0].mxu0
        %813 = vdwg.mxu0
        %v814 = vsub.f32 0.0, %v560
        %v815 = vsub.f32 0.0, %v563
        %v816 = vsub.f32 0.0, %v568
        %v817 = vsub.f32 0.0, %v571
        %v818 = vsub.f32 0.0, %v576
        %v819 = vsub.f32 0.0, %v579
        %v820 = vsub.f32 0.0, %v584
        %v821 = vsub.f32 0.0, %v587
        %v822 = vsub.f32 0.0, %v592
        %v823 = vsub.f32 0.0, %v595
        %v824 = vsub.f32 0.0, %v600
        %v825 = vsub.f32 0.0, %v603
        %v826 = vsub.f32 0.0, %v608
        %v827 = vsub.f32 0.0, %v611
        %v828 = vsub.f32 0.0, %v616
        %v829 = vsub.f32 0.0, %v619
        %v830 = vsub.f32 0.0, %v624
        %v831 = vsub.f32 0.0, %v627
        %v832 = vsub.f32 0.0, %v632
        %v833 = vsub.f32 0.0, %v635
        %v834 = vsub.f32 0.0, %v640
        %v835 = vsub.f32 0.0, %v643
        %v836 = vsub.f32 0.0, %v648
        %v837 = vsub.f32 0.0, %v651
        %v838 = vsub.f32 0.0, %v656
        %v839 = vsub.f32 0.0, %v659
        %v840 = vsub.f32 0.0, %v664
        %v841 = vsub.f32 0.0, %v667
        %v842 = vsub.f32 0.0, %v672
        %v843 = vsub.f32 0.0, %v675
        %v844 = vsub.f32 0.0, %v680
        %v845 = vsub.f32 0.0, %v683
        %v846 = vsub.f32 0.0, %v688
        %v847 = vsub.f32 0.0, %v691
        %v848 = vsub.f32 0.0, %v696
        %v849 = vsub.f32 0.0, %v699
        %v850 = vsub.f32 0.0, %v704
        %v851 = vsub.f32 0.0, %v707
        %v852 = vsub.f32 0.0, %v712
        %v853 = vsub.f32 0.0, %v715
        %v854 = vsub.f32 0.0, %v720
        %v855 = vsub.f32 0.0, %v723
        %v856 = vsub.f32 0.0, %v728
        %v857 = vsub.f32 0.0, %v731
        %v858 = vsub.f32 0.0, %v736
        %v859 = vsub.f32 0.0, %v739
        %v860 = vsub.f32 0.0, %v744
        %v861 = vsub.f32 0.0, %v747
        %v862 = vsub.f32 0.0, %v752
        %v863 = vsub.f32 0.0, %v755
        %v864 = vsub.f32 0.0, %v760
        %v865 = vsub.f32 0.0, %v763
        %v866 = vsub.f32 0.0, %v768
        %v867 = vsub.f32 0.0, %v771
        %v868 = vsub.f32 0.0, %v776
        %v869 = vsub.f32 0.0, %v779
        %v870 = vsub.f32 0.0, %v784
        %v871 = vsub.f32 0.0, %v787
        %v872 = vsub.f32 0.0, %v792
        %v873 = vsub.f32 0.0, %v795
        %v874 = vsub.f32 0.0, %v800
        %v875 = vsub.f32 0.0, %v803
        %v876 = vsub.f32 0.0, %v808
        %v877 = vsub.f32 0.0, %v811
        %v878 = vmul.f32 %v814, 1.442695
        %v879 = vpow.pop %v878
        %v880 = vmul.f32 %v815, 1.442695
        %v881 = vpow.pop %v880
        %v882 = vmul.f32 %v816, 1.442695
        %v883 = vpow.pop %v882
        %v884 = vmul.f32 %v817, 1.442695
        %v885 = vpow.pop %v884
        %v886 = vmul.f32 %v818, 1.442695
        %v887 = vpow.pop %v886
        %v888 = vmul.f32 %v819, 1.442695
        %v889 = vpow.pop %v888
        %v890 = vmul.f32 %v820, 1.442695
        %v891 = vpow.pop %v890
        %v892 = vmul.f32 %v821, 1.442695
        %v893 = vpow.pop %v892
        %v894 = vmul.f32 %v822, 1.442695
        %v895 = vpow.pop %v894
        %v896 = vmul.f32 %v823, 1.442695
        %v897 = vpow.pop %v896
        %v898 = vmul.f32 %v824, 1.442695
        %v899 = vpow.pop %v898
        %v900 = vmul.f32 %v825, 1.442695
        %v901 = vpow.pop %v900
        %v902 = vmul.f32 %v826, 1.442695
        %v903 = vpow.pop %v902
        %v904 = vmul.f32 %v827, 1.442695
        %v905 = vpow.pop %v904
        %v906 = vmul.f32 %v828, 1.442695
        %v907 = vpow.pop %v906
        %v908 = vmul.f32 %v829, 1.442695
        %v909 = vpow.pop %v908
        %v910 = vmul.f32 %v830, 1.442695
        %v911 = vpow.pop %v910
        %v912 = vmul.f32 %v831, 1.442695
        %v913 = vpow.pop %v912
        %v914 = vmul.f32 %v832, 1.442695
        %v915 = vpow.pop %v914
        %v916 = vmul.f32 %v833, 1.442695
        %v917 = vpow.pop %v916
        %v918 = vmul.f32 %v834, 1.442695
        %v919 = vpow.pop %v918
        %v920 = vmul.f32 %v835, 1.442695
        %v921 = vpow.pop %v920
        %v922 = vmul.f32 %v836, 1.442695
        %v923 = vpow.pop %v922
        %v924 = vmul.f32 %v837, 1.442695
        %v925 = vpow.pop %v924
        %v926 = vmul.f32 %v838, 1.442695
        %v927 = vpow.pop %v926
        %v928 = vmul.f32 %v839, 1.442695
        %v929 = vpow.pop %v928
        %v930 = vmul.f32 %v840, 1.442695
        %v931 = vpow.pop %v930
        %v932 = vmul.f32 %v841, 1.442695
        %v933 = vpow.pop %v932
        %v934 = vmul.f32 %v842, 1.442695
        %v935 = vpow.pop %v934
        %v936 = vmul.f32 %v843, 1.442695
        %v937 = vpow.pop %v936
        %v938 = vmul.f32 %v844, 1.442695
        %v939 = vpow.pop %v938
        %v940 = vmul.f32 %v845, 1.442695
        %v941 = vpow.pop %v940
        %v942 = vmul.f32 %v846, 1.442695
        %v943 = vpow.pop %v942
        %v944 = vmul.f32 %v847, 1.442695
        %v945 = vpow.pop %v944
        %v946 = vmul.f32 %v848, 1.442695
        %v947 = vpow.pop %v946
        %v948 = vmul.f32 %v849, 1.442695
        %v949 = vpow.pop %v948
        %v950 = vmul.f32 %v850, 1.442695
        %v951 = vpow.pop %v950
        %v952 = vmul.f32 %v851, 1.442695
        %v953 = vpow.pop %v952
        %v954 = vmul.f32 %v852, 1.442695
        %v955 = vpow.pop %v954
        %v956 = vmul.f32 %v853, 1.442695
        %v957 = vpow.pop %v956
        %v958 = vmul.f32 %v854, 1.442695
        %v959 = vpow.pop %v958
        %v960 = vmul.f32 %v855, 1.442695
        %v961 = vpow.pop %v960
        %v962 = vmul.f32 %v856, 1.442695
        %v963 = vpow.pop %v962
        %v964 = vmul.f32 %v857, 1.442695
        %v965 = vpow.pop %v964
        %v966 = vmul.f32 %v858, 1.442695
        %v967 = vpow.pop %v966
        %v968 = vmul.f32 %v859, 1.442695
        %v969 = vpow.pop %v968
        %v970 = vmul.f32 %v860, 1.442695
        %v971 = vpow.pop %v970
        %v972 = vmul.f32 %v861, 1.442695
        %v973 = vpow.pop %v972
        %v974 = vmul.f32 %v862, 1.442695
        %v975 = vpow.pop %v974
        %v976 = vmul.f32 %v863, 1.442695
        %v977 = vpow.pop %v976
        %v978 = vmul.f32 %v864, 1.442695
        %v979 = vpow.pop %v978
        %v980 = vmul.f32 %v865, 1.442695
        %v981 = vpow.pop %v980
        %v982 = vmul.f32 %v866, 1.442695
        %v983 = vpow.pop %v982
        %v984 = vmul.f32 %v867, 1.442695
        %v985 = vpow.pop %v984
        %v986 = vmul.f32 %v868, 1.442695
        %v987 = vpow.pop %v986
        %v988 = vmul.f32 %v869, 1.442695
        %v989 = vpow.pop %v988
        %v990 = vmul.f32 %v870, 1.442695
        %v991 = vpow.pop %v990
        %v992 = vmul.f32 %v871, 1.442695
        %v993 = vpow.pop %v992
        %v994 = vmul.f32 %v872, 1.442695
        %v995 = vpow.pop %v994
        %v996 = vmul.f32 %v873, 1.442695
        %v997 = vpow.pop %v996
        %v998 = vmul.f32 %v874, 1.442695
        %v999 = vpow.pop %v998
        %v1000 = vmul.f32 %v875, 1.442695
        %v1001 = vpow.pop %v1000
        %v1002 = vmul.f32 %v876, 1.442695
        %v1003 = vpow.pop %v1002
        %v1004 = vmul.f32 %v877, 1.442695
        %v1005 = vpow.pop %v1004
        %v1006 = vadd.f32 %v879, 1.0
        %v1007 = vadd.f32 %v881, 1.0
        %v1008 = vadd.f32 %v883, 1.0
        %v1009 = vadd.f32 %v885, 1.0
        %v1010 = vadd.f32 %v887, 1.0
        %v1011 = vadd.f32 %v889, 1.0
        %v1012 = vadd.f32 %v891, 1.0
        %v1013 = vadd.f32 %v893, 1.0
        %v1014 = vadd.f32 %v895, 1.0
        %v1015 = vadd.f32 %v897, 1.0
        %v1016 = vadd.f32 %v899, 1.0
        %v1017 = vadd.f32 %v901, 1.0
        %v1018 = vadd.f32 %v903, 1.0
        %v1019 = vadd.f32 %v905, 1.0
        %v1020 = vadd.f32 %v907, 1.0
        %v1021 = vadd.f32 %v909, 1.0
        %v1022 = vadd.f32 %v911, 1.0
        %v1023 = vadd.f32 %v913, 1.0
        %v1024 = vadd.f32 %v915, 1.0
        %v1025 = vadd.f32 %v917, 1.0
        %v1026 = vadd.f32 %v919, 1.0
        %v1027 = vadd.f32 %v921, 1.0
        %v1028 = vadd.f32 %v923, 1.0
        %v1029 = vadd.f32 %v925, 1.0
        %v1030 = vadd.f32 %v927, 1.0
        %v1031 = vadd.f32 %v929, 1.0
        %v1032 = vadd.f32 %v931, 1.0
        %v1033 = vadd.f32 %v933, 1.0
        %v1034 = vadd.f32 %v935, 1.0
        %v1035 = vadd.f32 %v937, 1.0
        %v1036 = vadd.f32 %v939, 1.0
        %v1037 = vadd.f32 %v941, 1.0
        %v1038 = vadd.f32 %v943, 1.0
        %v1039 = vadd.f32 %v945, 1.0
        %v1040 = vadd.f32 %v947, 1.0
        %v1041 = vadd.f32 %v949, 1.0
        %v1042 = vadd.f32 %v951, 1.0
        %v1043 = vadd.f32 %v953, 1.0
        %v1044 = vadd.f32 %v955, 1.0
        %v1045 = vadd.f32 %v957, 1.0
        %v1046 = vadd.f32 %v959, 1.0
        %v1047 = vadd.f32 %v961, 1.0
        %v1048 = vadd.f32 %v963, 1.0
        %v1049 = vadd.f32 %v965, 1.0
        %v1050 = vadd.f32 %v967, 1.0
        %v1051 = vadd.f32 %v969, 1.0
        %v1052 = vadd.f32 %v971, 1.0
        %v1053 = vadd.f32 %v973, 1.0
        %v1054 = vadd.f32 %v975, 1.0
        %v1055 = vadd.f32 %v977, 1.0
        %v1056 = vadd.f32 %v979, 1.0
        %v1057 = vadd.f32 %v981, 1.0
        %v1058 = vadd.f32 %v983, 1.0
        %v1059 = vadd.f32 %v985, 1.0
        %v1060 = vadd.f32 %v987, 1.0
        %v1061 = vadd.f32 %v989, 1.0
        %v1062 = vadd.f32 %v991, 1.0
        %v1063 = vadd.f32 %v993, 1.0
        %v1064 = vadd.f32 %v995, 1.0
        %v1065 = vadd.f32 %v997, 1.0
        %v1066 = vadd.f32 %v999, 1.0
        %v1067 = vadd.f32 %v1001, 1.0
        %v1068 = vadd.f32 %v1003, 1.0
        %v1069 = vadd.f32 %v1005, 1.0
        %v1070 = vrcp.pop %v1006
        %v1071 = vrcp.pop %v1007
        %v1072 = vrcp.pop %v1008
        %v1073 = vrcp.pop %v1009
        %v1074 = vrcp.pop %v1010
        %v1075 = vrcp.pop %v1011
        %v1076 = vrcp.pop %v1012
        %v1077 = vrcp.pop %v1013
        %v1078 = vrcp.pop %v1014
        %v1079 = vrcp.pop %v1015
        %v1080 = vrcp.pop %v1016
        %v1081 = vrcp.pop %v1017
        %v1082 = vrcp.pop %v1018
        %v1083 = vrcp.pop %v1019
        %v1084 = vrcp.pop %v1020
        %v1085 = vrcp.pop %v1021
        %v1086 = vrcp.pop %v1022
        %v1087 = vrcp.pop %v1023
        %v1088 = vrcp.pop %v1024
        %v1089 = vrcp.pop %v1025
        %v1090 = vrcp.pop %v1026
        %v1091 = vrcp.pop %v1027
        %v1092 = vrcp.pop %v1028
        %v1093 = vrcp.pop %v1029
        %v1094 = vrcp.pop %v1030
        %v1095 = vrcp.pop %v1031
        %v1096 = vrcp.pop %v1032
        %v1097 = vrcp.pop %v1033
        %v1098 = vrcp.pop %v1034
        %v1099 = vrcp.pop %v1035
        %v1100 = vrcp.pop %v1036
        %v1101 = vrcp.pop %v1037
        %v1102 = vrcp.pop %v1038
        %v1103 = vrcp.pop %v1039
        %v1104 = vrcp.pop %v1040
        %v1105 = vrcp.pop %v1041
        %v1106 = vrcp.pop %v1042
        %v1107 = vrcp.pop %v1043
        %v1108 = vrcp.pop %v1044
        %v1109 = vrcp.pop %v1045
        %v1110 = vrcp.pop %v1046
        %v1111 = vrcp.pop %v1047
        %v1112 = vrcp.pop %v1048
        %v1113 = vrcp.pop %v1049
        %v1114 = vrcp.pop %v1050
        %v1115 = vrcp.pop %v1051
        %v1116 = vrcp.pop %v1052
        %v1117 = vrcp.pop %v1053
        %v1118 = vrcp.pop %v1054
        %v1119 = vrcp.pop %v1055
        %v1120 = vrcp.pop %v1056
        %v1121 = vrcp.pop %v1057
        %v1122 = vrcp.pop %v1058
        %v1123 = vrcp.pop %v1059
        %v1124 = vrcp.pop %v1060
        %v1125 = vrcp.pop %v1061
        %v1126 = vrcp.pop %v1062
        %v1127 = vrcp.pop %v1063
        %v1128 = vrcp.pop %v1064
        %v1129 = vrcp.pop %v1065
        %v1130 = vrcp.pop %v1066
        %v1131 = vrcp.pop %v1067
        %v1132 = vrcp.pop %v1068
        %v1133 = vrcp.pop %v1069
        %v1134 = vmul.f32 %v560, %v1070
        %v1135 = vmul.f32 %v563, %v1071
        %v1136 = vmul.f32 %v568, %v1072
        %v1137 = vmul.f32 %v571, %v1073
        %v1138 = vmul.f32 %v576, %v1074
        %v1139 = vmul.f32 %v579, %v1075
        %v1140 = vmul.f32 %v584, %v1076
        %v1141 = vmul.f32 %v587, %v1077
        %v1142 = vmul.f32 %v592, %v1078
        %v1143 = vmul.f32 %v595, %v1079
        %v1144 = vmul.f32 %v600, %v1080
        %v1145 = vmul.f32 %v603, %v1081
        %v1146 = vmul.f32 %v608, %v1082
        %v1147 = vmul.f32 %v611, %v1083
        %v1148 = vmul.f32 %v616, %v1084
        %v1149 = vmul.f32 %v619, %v1085
        %v1150 = vmul.f32 %v624, %v1086
        %v1151 = vmul.f32 %v627, %v1087
        %v1152 = vmul.f32 %v632, %v1088
        %v1153 = vmul.f32 %v635, %v1089
        %v1154 = vmul.f32 %v640, %v1090
        %v1155 = vmul.f32 %v643, %v1091
        %v1156 = vmul.f32 %v648, %v1092
        %v1157 = vmul.f32 %v651, %v1093
        %v1158 = vmul.f32 %v656, %v1094
        %v1159 = vmul.f32 %v659, %v1095
        %v1160 = vmul.f32 %v664, %v1096
        %v1161 = vmul.f32 %v667, %v1097
        %v1162 = vmul.f32 %v672, %v1098
        %v1163 = vmul.f32 %v675, %v1099
        %v1164 = vmul.f32 %v680, %v1100
        %v1165 = vmul.f32 %v683, %v1101
        %v1166 = vmul.f32 %v688, %v1102
        %v1167 = vmul.f32 %v691, %v1103
        %v1168 = vmul.f32 %v696, %v1104
        %v1169 = vmul.f32 %v699, %v1105
        %v1170 = vmul.f32 %v704, %v1106
        %v1171 = vmul.f32 %v707, %v1107
        %v1172 = vmul.f32 %v712, %v1108
        %v1173 = vmul.f32 %v715, %v1109
        %v1174 = vmul.f32 %v720, %v1110
        %v1175 = vmul.f32 %v723, %v1111
        %v1176 = vmul.f32 %v728, %v1112
        %v1177 = vmul.f32 %v731, %v1113
        %v1178 = vmul.f32 %v736, %v1114
        %v1179 = vmul.f32 %v739, %v1115
        %v1180 = vmul.f32 %v744, %v1116
        %v1181 = vmul.f32 %v747, %v1117
        %v1182 = vmul.f32 %v752, %v1118
        %v1183 = vmul.f32 %v755, %v1119
        %v1184 = vmul.f32 %v760, %v1120
        %v1185 = vmul.f32 %v763, %v1121
        %v1186 = vmul.f32 %v768, %v1122
        %v1187 = vmul.f32 %v771, %v1123
        %v1188 = vmul.f32 %v776, %v1124
        %v1189 = vmul.f32 %v779, %v1125
        %v1190 = vmul.f32 %v784, %v1126
        %v1191 = vmul.f32 %v787, %v1127
        %v1192 = vmul.f32 %v792, %v1128
        %v1193 = vmul.f32 %v795, %v1129
        %v1194 = vmul.f32 %v800, %v1130
        %v1195 = vmul.f32 %v803, %v1131
        %v1196 = vmul.f32 %v808, %v1132
        %v1197 = vmul.f32 %v811, %v1133
        %vm1198 = vcmask 31744
        %1199 = vst.msk [vmem:[#allocation2] sm:$0xff] %vm1198, -3e+38
        %1200 = vst.msk [vmem:[#allocation2 + $0x8] sm:$0xff] %vm1198, -3e+38
        %1201 = vst.msk [vmem:[#allocation2 + $0x10] sm:$0xff] %vm1198, -3e+38
        %1202 = vst.msk [vmem:[#allocation2 + $0x18] sm:$0xff] %vm1198, -3e+38
        %1203 = vst.msk [vmem:[#allocation2 + $0x20] sm:$0xff] %vm1198, -3e+38
        %1204 = vst.msk [vmem:[#allocation2 + $0x28] sm:$0xff] %vm1198, -3e+38
        %1205 = vst.msk [vmem:[#allocation2 + $0x30] sm:$0xff] %vm1198, -3e+38
        %1206 = vst.msk [vmem:[#allocation2 + $0x38] sm:$0xff] %vm1198, -3e+38
        %s1207 = scalar_lea.vmem [#allocation2], 1088
        %1208 = vst.msk [vmem:[%s1207] sm:$0xff] %vm1198, -3e+38
        %1209 = vst.msk [vmem:[%s1207 + $0x8] sm:$0xff] %vm1198, -3e+38
        %1210 = vst.msk [vmem:[%s1207 + $0x10] sm:$0xff] %vm1198, -3e+38
        %1211 = vst.msk [vmem:[%s1207 + $0x18] sm:$0xff] %vm1198, -3e+38
        %1212 = vst.msk [vmem:[%s1207 + $0x20] sm:$0xff] %vm1198, -3e+38
        %1213 = vst.msk [vmem:[%s1207 + $0x28] sm:$0xff] %vm1198, -3e+38
        %1214 = vst.msk [vmem:[%s1207 + $0x30] sm:$0xff] %vm1198, -3e+38
        %1215 = vst.msk [vmem:[%s1207 + $0x38] sm:$0xff] %vm1198, -3e+38
        %s1216 = scalar_lea.vmem [#allocation2], 64
        %1217 = vst.msk [vmem:[%s1216] sm:$0xff] %vm1198, -3e+38
        %1218 = vst.msk [vmem:[%s1216 + $0x20] sm:$0xff] %vm1198, -3e+38
        %1219 = vst.msk [vmem:[%s1216 + $0x40] sm:$0xff] %vm1198, -3e+38
        %1220 = vst.msk [vmem:[%s1216 + $0x60] sm:$0xff] %vm1198, -3e+38
        %1221 = vst.msk [vmem:[%s1216 + $0x80] sm:$0xff] %vm1198, -3e+38
        %1222 = vst.msk [vmem:[%s1216 + $0xa0] sm:$0xff] %vm1198, -3e+38
        %1223 = vst.msk [vmem:[%s1216 + $0xc0] sm:$0xff] %vm1198, -3e+38
        %1224 = vst.msk [vmem:[%s1216 + $0xe0] sm:$0xff] %vm1198, -3e+38
        %1225 = vst.msk [vmem:[%s1216 + $0x100] sm:$0xff] %vm1198, -3e+38
        %1226 = vst.msk [vmem:[%s1216 + $0x120] sm:$0xff] %vm1198, -3e+38
        %1227 = vst.msk [vmem:[%s1216 + $0x140] sm:$0xff] %vm1198, -3e+38
        %1228 = vst.msk [vmem:[%s1216 + $0x160] sm:$0xff] %vm1198, -3e+38
        %1229 = vst.msk [vmem:[%s1216 + $0x180] sm:$0xff] %vm1198, -3e+38
        %1230 = vst.msk [vmem:[%s1216 + $0x1a0] sm:$0xff] %vm1198, -3e+38
        %1231 = vst.msk [vmem:[%s1216 + $0x1c0] sm:$0xff] %vm1198, -3e+38
        %1232 = vst.msk [vmem:[%s1216 + $0x1e0] sm:$0xff] %vm1198, -3e+38
        %1233 = vst.msk [vmem:[%s1216 + $0x200] sm:$0xff] %vm1198, -3e+38
        %1234 = vst.msk [vmem:[%s1216 + $0x220] sm:$0xff] %vm1198, -3e+38
        %1235 = vst.msk [vmem:[%s1216 + $0x240] sm:$0xff] %vm1198, -3e+38
        %1236 = vst.msk [vmem:[%s1216 + $0x260] sm:$0xff] %vm1198, -3e+38
        %1237 = vst.msk [vmem:[%s1216 + $0x280] sm:$0xff] %vm1198, -3e+38
        %1238 = vst.msk [vmem:[%s1216 + $0x2a0] sm:$0xff] %vm1198, -3e+38
        %1239 = vst.msk [vmem:[%s1216 + $0x2c0] sm:$0xff] %vm1198, -3e+38
        %1240 = vst.msk [vmem:[%s1216 + $0x2e0] sm:$0xff] %vm1198, -3e+38
        %1241 = vst.msk [vmem:[%s1216 + $0x300] sm:$0xff] %vm1198, -3e+38
        %1242 = vst.msk [vmem:[%s1216 + $0x320] sm:$0xff] %vm1198, -3e+38
        %1243 = vst.msk [vmem:[%s1216 + $0x340] sm:$0xff] %vm1198, -3e+38
        %1244 = vst.msk [vmem:[%s1216 + $0x360] sm:$0xff] %vm1198, -3e+38
        %1245 = vst.msk [vmem:[%s1216 + $0x380] sm:$0xff] %vm1198, -3e+38
        %1246 = vst.msk [vmem:[%s1216 + $0x3a0] sm:$0xff] %vm1198, -3e+38
        %1247 = vst.msk [vmem:[%s1216 + $0x3c0] sm:$0xff] %vm1198, -3e+38
        %1248 = vst.msk [vmem:[%s1216 + $0x3e0] sm:$0xff] %vm1198, -3e+38
        %1249 = vst.msk [vmem:[%s1216 + $0x18] sm:$0xff] %vm1198, -3e+38
        %1250 = vst.msk [vmem:[%s1216 + $0x38] sm:$0xff] %vm1198, -3e+38
        %1251 = vst.msk [vmem:[%s1216 + $0x58] sm:$0xff] %vm1198, -3e+38
        %1252 = vst.msk [vmem:[%s1216 + $0x78] sm:$0xff] %vm1198, -3e+38
        %1253 = vst.msk [vmem:[%s1216 + $0x98] sm:$0xff] %vm1198, -3e+38
        %1254 = vst.msk [vmem:[%s1216 + $0xb8] sm:$0xff] %vm1198, -3e+38
        %1255 = vst.msk [vmem:[%s1216 + $0xd8] sm:$0xff] %vm1198, -3e+38
        %1256 = vst.msk [vmem:[%s1216 + $0xf8] sm:$0xff] %vm1198, -3e+38
        %1257 = vst.msk [vmem:[%s1216 + $0x118] sm:$0xff] %vm1198, -3e+38
        %1258 = vst.msk [vmem:[%s1216 + $0x138] sm:$0xff] %vm1198, -3e+38
        %1259 = vst.msk [vmem:[%s1216 + $0x158] sm:$0xff] %vm1198, -3e+38
        %1260 = vst.msk [vmem:[%s1216 + $0x178] sm:$0xff] %vm1198, -3e+38
        %1261 = vst.msk [vmem:[%s1216 + $0x198] sm:$0xff] %vm1198, -3e+38
        %1262 = vst.msk [vmem:[%s1216 + $0x1b8] sm:$0xff] %vm1198, -3e+38
        %1263 = vst.msk [vmem:[%s1216 + $0x1d8] sm:$0xff] %vm1198, -3e+38
        %1264 = vst.msk [vmem:[%s1216 + $0x1f8] sm:$0xff] %vm1198, -3e+38
        %1265 = vst.msk [vmem:[%s1216 + $0x218] sm:$0xff] %vm1198, -3e+38
        %1266 = vst.msk [vmem:[%s1216 + $0x238] sm:$0xff] %vm1198, -3e+38
        %1267 = vst.msk [vmem:[%s1216 + $0x258] sm:$0xff] %vm1198, -3e+38
        %1268 = vst.msk [vmem:[%s1216 + $0x278] sm:$0xff] %vm1198, -3e+38
        %1269 = vst.msk [vmem:[%s1216 + $0x298] sm:$0xff] %vm1198, -3e+38
        %1270 = vst.msk [vmem:[%s1216 + $0x2b8] sm:$0xff] %vm1198, -3e+38
        %1271 = vst.msk [vmem:[%s1216 + $0x2d8] sm:$0xff] %vm1198, -3e+38
        %1272 = vst.msk [vmem:[%s1216 + $0x2f8] sm:$0xff] %vm1198, -3e+38
        %1273 = vst.msk [vmem:[%s1216 + $0x318] sm:$0xff] %vm1198, -3e+38
        %1274 = vst.msk [vmem:[%s1216 + $0x338] sm:$0xff] %vm1198, -3e+38
        %1275 = vst.msk [vmem:[%s1216 + $0x358] sm:$0xff] %vm1198, -3e+38
        %1276 = vst.msk [vmem:[%s1216 + $0x378] sm:$0xff] %vm1198, -3e+38
        %1277 = vst.msk [vmem:[%s1216 + $0x398] sm:$0xff] %vm1198, -3e+38
        %1278 = vst.msk [vmem:[%s1216 + $0x3b8] sm:$0xff] %vm1198, -3e+38
        %1279 = vst.msk [vmem:[%s1216 + $0x3d8] sm:$0xff] %vm1198, -3e+38
        %1280 = vst.msk [vmem:[%s1216 + $0x3f8] sm:$0xff] %vm1198, -3e+38
        %1281 = vst.msk [vmem:[%s1216 + $0x8] sm:$0xff] %vm1198, %v1134
        %1282 = vst.msk [vmem:[%s1216 + $0x10] sm:$0xff] %vm1198, %v1135
        %1283 = vst.msk [vmem:[%s1216 + $0x28] sm:$0xff] %vm1198, %v1136
        %1284 = vst.msk [vmem:[%s1216 + $0x30] sm:$0xff] %vm1198, %v1137
        %1285 = vst.msk [vmem:[%s1216 + $0x48] sm:$0xff] %vm1198, %v1138
        %1286 = vst.msk [vmem:[%s1216 + $0x50] sm:$0xff] %vm1198, %v1139
        %1287 = vst.msk [vmem:[%s1216 + $0x68] sm:$0xff] %vm1198, %v1140
        %1288 = vst.msk [vmem:[%s1216 + $0x70] sm:$0xff] %vm1198, %v1141
        %1289 = vst.msk [vmem:[%s1216 + $0x88] sm:$0xff] %vm1198, %v1142
        %1290 = vst.msk [vmem:[%s1216 + $0x90] sm:$0xff] %vm1198, %v1143
        %1291 = vst.msk [vmem:[%s1216 + $0xa8] sm:$0xff] %vm1198, %v1144
        %1292 = vst.msk [vmem:[%s1216 + $0xb0] sm:$0xff] %vm1198, %v1145
        %1293 = vst.msk [vmem:[%s1216 + $0xc8] sm:$0xff] %vm1198, %v1146
        %1294 = vst.msk [vmem:[%s1216 + $0xd0] sm:$0xff] %vm1198, %v1147
        %1295 = vst.msk [vmem:[%s1216 + $0xe8] sm:$0xff] %vm1198, %v1148
        %1296 = vst.msk [vmem:[%s1216 + $0xf0] sm:$0xff] %vm1198, %v1149
        %1297 = vst.msk [vmem:[%s1216 + $0x108] sm:$0xff] %vm1198, %v1150
        %1298 = vst.msk [vmem:[%s1216 + $0x110] sm:$0xff] %vm1198, %v1151
        %1299 = vst.msk [vmem:[%s1216 + $0x128] sm:$0xff] %vm1198, %v1152
        %1300 = vst.msk [vmem:[%s1216 + $0x130] sm:$0xff] %vm1198, %v1153
        %1301 = vst.msk [vmem:[%s1216 + $0x148] sm:$0xff] %vm1198, %v1154
        %1302 = vst.msk [vmem:[%s1216 + $0x150] sm:$0xff] %vm1198, %v1155
        %1303 = vst.msk [vmem:[%s1216 + $0x168] sm:$0xff] %vm1198, %v1156
        %1304 = vst.msk [vmem:[%s1216 + $0x170] sm:$0xff] %vm1198, %v1157
        %1305 = vst.msk [vmem:[%s1216 + $0x188] sm:$0xff] %vm1198, %v1158
        %1306 = vst.msk [vmem:[%s1216 + $0x190] sm:$0xff] %vm1198, %v1159
        %1307 = vst.msk [vmem:[%s1216 + $0x1a8] sm:$0xff] %vm1198, %v1160
        %1308 = vst.msk [vmem:[%s1216 + $0x1b0] sm:$0xff] %vm1198, %v1161
        %1309 = vst.msk [vmem:[%s1216 + $0x1c8] sm:$0xff] %vm1198, %v1162
        %1310 = vst.msk [vmem:[%s1216 + $0x1d0] sm:$0xff] %vm1198, %v1163
        %1311 = vst.msk [vmem:[%s1216 + $0x1e8] sm:$0xff] %vm1198, %v1164
        %1312 = vst.msk [vmem:[%s1216 + $0x1f0] sm:$0xff] %vm1198, %v1165
        %1313 = vst.msk [vmem:[%s1216 + $0x208] sm:$0xff] %vm1198, %v1166
        %1314 = vst.msk [vmem:[%s1216 + $0x210] sm:$0xff] %vm1198, %v1167
        %1315 = vst.msk [vmem:[%s1216 + $0x228] sm:$0xff] %vm1198, %v1168
        %1316 = vst.msk [vmem:[%s1216 + $0x230] sm:$0xff] %vm1198, %v1169
        %1317 = vst.msk [vmem:[%s1216 + $0x248] sm:$0xff] %vm1198, %v1170
        %1318 = vst.msk [vmem:[%s1216 + $0x250] sm:$0xff] %vm1198, %v1171
        %1319 = vst.msk [vmem:[%s1216 + $0x268] sm:$0xff] %vm1198, %v1172
        %1320 = vst.msk [vmem:[%s1216 + $0x270] sm:$0xff] %vm1198, %v1173
        %1321 = vst.msk [vmem:[%s1216 + $0x288] sm:$0xff] %vm1198, %v1174
        %1322 = vst.msk [vmem:[%s1216 + $0x290] sm:$0xff] %vm1198, %v1175
        %1323 = vst.msk [vmem:[%s1216 + $0x2a8] sm:$0xff] %vm1198, %v1176
        %1324 = vst.msk [vmem:[%s1216 + $0x2b0] sm:$0xff] %vm1198, %v1177
        %1325 = vst.msk [vmem:[%s1216 + $0x2c8] sm:$0xff] %vm1198, %v1178
        %1326 = vst.msk [vmem:[%s1216 + $0x2d0] sm:$0xff] %vm1198, %v1179
        %1327 = vst.msk [vmem:[%s1216 + $0x2e8] sm:$0xff] %vm1198, %v1180
        %1328 = vst.msk [vmem:[%s1216 + $0x2f0] sm:$0xff] %vm1198, %v1181
        %1329 = vst.msk [vmem:[%s1216 + $0x308] sm:$0xff] %vm1198, %v1182
        %1330 = vst.msk [vmem:[%s1216 + $0x310] sm:$0xff] %vm1198, %v1183
        %1331 = vst.msk [vmem:[%s1216 + $0x328] sm:$0xff] %vm1198, %v1184
        %1332 = vst.msk [vmem:[%s1216 + $0x330] sm:$0xff] %vm1198, %v1185
        %1333 = vst.msk [vmem:[%s1216 + $0x348] sm:$0xff] %vm1198, %v1186
        %1334 = vst.msk [vmem:[%s1216 + $0x350] sm:$0xff] %vm1198, %v1187
        %1335 = vst.msk [vmem:[%s1216 + $0x368] sm:$0xff] %vm1198, %v1188
        %1336 = vst.msk [vmem:[%s1216 + $0x370] sm:$0xff] %vm1198, %v1189
        %1337 = vst.msk [vmem:[%s1216 + $0x388] sm:$0xff] %vm1198, %v1190
        %1338 = vst.msk [vmem:[%s1216 + $0x390] sm:$0xff] %vm1198, %v1191
        %1339 = vst.msk [vmem:[%s1216 + $0x3a8] sm:$0xff] %vm1198, %v1192
        %1340 = vst.msk [vmem:[%s1216 + $0x3b0] sm:$0xff] %vm1198, %v1193
        %1341 = vst.msk [vmem:[%s1216 + $0x3c8] sm:$0xff] %vm1198, %v1194
        %1342 = vst.msk [vmem:[%s1216 + $0x3d0] sm:$0xff] %vm1198, %v1195
        %1343 = vst.msk [vmem:[%s1216 + $0x3e8] sm:$0xff] %vm1198, %v1196
        %1344 = vst.msk [vmem:[%s1216 + $0x3f0] sm:$0xff] %vm1198, %v1197
        %s1345 = sadd.s32 %s317, 2
        %s1346 = smul.u32 %s1345, 32
        %s1347 = scalar_lea.vmem [#allocation2], %s1346
        %v1348 = vld [vmem:[%s1347 + $0x8] sm:$0xff]
        %v1349 = vld [vmem:[%s1347 + $0x10] sm:$0xff]
        %v1350 = vld [vmem:[%s1347 + $0x28] sm:$0xff]
        %v1351 = vld [vmem:[%s1347 + $0x30] sm:$0xff]
        %v1352 = vld [vmem:[%s1347 + $0x48] sm:$0xff]
        %v1353 = vld [vmem:[%s1347 + $0x50] sm:$0xff]
        %v1354 = vld [vmem:[%s1347 + $0x68] sm:$0xff]
        %v1355 = vld [vmem:[%s1347 + $0x70] sm:$0xff]
        %v1356 = vld [vmem:[%s1347 + $0x88] sm:$0xff]
        %v1357 = vld [vmem:[%s1347 + $0x90] sm:$0xff]
        %v1358 = vld [vmem:[%s1347 + $0xa8] sm:$0xff]
        %v1359 = vld [vmem:[%s1347 + $0xb0] sm:$0xff]
        %v1360 = vld [vmem:[%s1347 + $0xc8] sm:$0xff]
        %v1361 = vld [vmem:[%s1347 + $0xd0] sm:$0xff]
        %v1362 = vld [vmem:[%s1347 + $0xe8] sm:$0xff]
        %v1363 = vld [vmem:[%s1347 + $0xf0] sm:$0xff]
        %v1364 = vld [vmem:[%s1347 + $0x108] sm:$0xff]
        %v1365 = vld [vmem:[%s1347 + $0x110] sm:$0xff]
        %v1366 = vld [vmem:[%s1347 + $0x128] sm:$0xff]
        %v1367 = vld [vmem:[%s1347 + $0x130] sm:$0xff]
        %v1368 = vld [vmem:[%s1347 + $0x148] sm:$0xff]
        %v1369 = vld [vmem:[%s1347 + $0x150] sm:$0xff]
        %v1370 = vld [vmem:[%s1347 + $0x168] sm:$0xff]
        %v1371 = vld [vmem:[%s1347 + $0x170] sm:$0xff]
        %v1372 = vld [vmem:[%s1347 + $0x188] sm:$0xff]
        %v1373 = vld [vmem:[%s1347 + $0x190] sm:$0xff]
        %v1374 = vld [vmem:[%s1347 + $0x1a8] sm:$0xff]
        %v1375 = vld [vmem:[%s1347 + $0x1b0] sm:$0xff]
        %v1376 = vld [vmem:[%s1347 + $0x1c8] sm:$0xff]
        %v1377 = vld [vmem:[%s1347 + $0x1d0] sm:$0xff]
        %v1378 = vld [vmem:[%s1347 + $0x1e8] sm:$0xff]
        %v1379 = vld [vmem:[%s1347 + $0x1f0] sm:$0xff]
        %v1380 = vld [vmem:[%s1347 + $0x208] sm:$0xff]
        %v1381 = vld [vmem:[%s1347 + $0x210] sm:$0xff]
        %v1382 = vld [vmem:[%s1347 + $0x228] sm:$0xff]
        %v1383 = vld [vmem:[%s1347 + $0x230] sm:$0xff]
        %v1384 = vld [vmem:[%s1347 + $0x248] sm:$0xff]
        %v1385 = vld [vmem:[%s1347 + $0x250] sm:$0xff]
        %v1386 = vld [vmem:[%s1347 + $0x268] sm:$0xff]
        %v1387 = vld [vmem:[%s1347 + $0x270] sm:$0xff]
        %v1388 = vld [vmem:[%s1347 + $0x288] sm:$0xff]
        %v1389 = vld [vmem:[%s1347 + $0x290] sm:$0xff]
        %v1390 = vld [vmem:[%s1347 + $0x2a8] sm:$0xff]
        %v1391 = vld [vmem:[%s1347 + $0x2b0] sm:$0xff]
        %v1392 = vld [vmem:[%s1347 + $0x2c8] sm:$0xff]
        %v1393 = vld [vmem:[%s1347 + $0x2d0] sm:$0xff]
        %v1394 = vld [vmem:[%s1347 + $0x2e8] sm:$0xff]
        %v1395 = vld [vmem:[%s1347 + $0x2f0] sm:$0xff]
        %v1396 = vld [vmem:[%s1347 + $0x308] sm:$0xff]
        %v1397 = vld [vmem:[%s1347 + $0x310] sm:$0xff]
        %v1398 = vld [vmem:[%s1347 + $0x328] sm:$0xff]
        %v1399 = vld [vmem:[%s1347 + $0x330] sm:$0xff]
        %v1400 = vld [vmem:[%s1347 + $0x348] sm:$0xff]
        %v1401 = vld [vmem:[%s1347 + $0x350] sm:$0xff]
        %v1402 = vld [vmem:[%s1347 + $0x368] sm:$0xff]
        %v1403 = vld [vmem:[%s1347 + $0x370] sm:$0xff]
        %v1404 = vld [vmem:[%s1347 + $0x388] sm:$0xff]
        %v1405 = vld [vmem:[%s1347 + $0x390] sm:$0xff]
        %v1406 = vld [vmem:[%s1347 + $0x3a8] sm:$0xff]
        %v1407 = vld [vmem:[%s1347 + $0x3b0] sm:$0xff]
        %v1408 = vld [vmem:[%s1347 + $0x3c8] sm:$0xff]
        %v1409 = vld [vmem:[%s1347 + $0x3d0] sm:$0xff]
        %v1410 = vld [vmem:[%s1347 + $0x3e8] sm:$0xff]
        %v1411 = vld [vmem:[%s1347 + $0x3f0] sm:$0xff]
        %v1412 = vpack.c.bf16 %v1349, %v1348
        %v1413 = vpack.c.bf16 %v1351, %v1350
        %v1414 = vpack.c.bf16 %v1353, %v1352
        %v1415 = vpack.c.bf16 %v1355, %v1354
        %v1416 = vpack.c.bf16 %v1357, %v1356
        %v1417 = vpack.c.bf16 %v1359, %v1358
        %v1418 = vpack.c.bf16 %v1361, %v1360
        %v1419 = vpack.c.bf16 %v1363, %v1362
        %v1420 = vpack.c.bf16 %v1365, %v1364
        %v1421 = vpack.c.bf16 %v1367, %v1366
        %v1422 = vpack.c.bf16 %v1369, %v1368
        %v1423 = vpack.c.bf16 %v1371, %v1370
        %v1424 = vpack.c.bf16 %v1373, %v1372
        %v1425 = vpack.c.bf16 %v1375, %v1374
        %v1426 = vpack.c.bf16 %v1377, %v1376
        %v1427 = vpack.c.bf16 %v1379, %v1378
        %v1428 = vpack.c.bf16 %v1381, %v1380
        %v1429 = vpack.c.bf16 %v1383, %v1382
        %v1430 = vpack.c.bf16 %v1385, %v1384
        %v1431 = vpack.c.bf16 %v1387, %v1386
        %v1432 = vpack.c.bf16 %v1389, %v1388
        %v1433 = vpack.c.bf16 %v1391, %v1390
        %v1434 = vpack.c.bf16 %v1393, %v1392
        %v1435 = vpack.c.bf16 %v1395, %v1394
        %v1436 = vpack.c.bf16 %v1397, %v1396
        %v1437 = vpack.c.bf16 %v1399, %v1398
        %v1438 = vpack.c.bf16 %v1401, %v1400
        %v1439 = vpack.c.bf16 %v1403, %v1402
        %v1440 = vpack.c.bf16 %v1405, %v1404
        %v1441 = vpack.c.bf16 %v1407, %v1406
        %v1442 = vpack.c.bf16 %v1409, %v1408
        %v1443 = vpack.c.bf16 %v1411, %v1410
        %1444 = vst.msk [vmem:[#allocation3] sm:$0xff] %vm1198, %v1412
        %1445 = vst.msk [vmem:[#allocation3 + $0x8] sm:$0xff] %vm1198, %v1413
        %1446 = vst.msk [vmem:[#allocation3 + $0x10] sm:$0xff] %vm1198, %v1414
        %1447 = vst.msk [vmem:[#allocation3 + $0x18] sm:$0xff] %vm1198, %v1415
        %1448 = vst.msk [vmem:[#allocation3 + $0x20] sm:$0xff] %vm1198, %v1416
        %1449 = vst.msk [vmem:[#allocation3 + $0x28] sm:$0xff] %vm1198, %v1417
        %1450 = vst.msk [vmem:[#allocation3 + $0x30] sm:$0xff] %vm1198, %v1418
        %1451 = vst.msk [vmem:[#allocation3 + $0x38] sm:$0xff] %vm1198, %v1419
        %1452 = vst.msk [vmem:[#allocation3 + $0x40] sm:$0xff] %vm1198, %v1420
        %1453 = vst.msk [vmem:[#allocation3 + $0x48] sm:$0xff] %vm1198, %v1421
        %1454 = vst.msk [vmem:[#allocation3 + $0x50] sm:$0xff] %vm1198, %v1422
        %1455 = vst.msk [vmem:[#allocation3 + $0x58] sm:$0xff] %vm1198, %v1423
        %1456 = vst.msk [vmem:[#allocation3 + $0x60] sm:$0xff] %vm1198, %v1424
        %1457 = vst.msk [vmem:[#allocation3 + $0x68] sm:$0xff] %vm1198, %v1425
        %1458 = vst.msk [vmem:[#allocation3 + $0x70] sm:$0xff] %vm1198, %v1426
        %1459 = vst.msk [vmem:[#allocation3 + $0x78] sm:$0xff] %vm1198, %v1427
        %1460 = vst.msk [vmem:[#allocation3 + $0x80] sm:$0xff] %vm1198, %v1428
        %1461 = vst.msk [vmem:[#allocation3 + $0x88] sm:$0xff] %vm1198, %v1429
        %1462 = vst.msk [vmem:[#allocation3 + $0x90] sm:$0xff] %vm1198, %v1430
        %1463 = vst.msk [vmem:[#allocation3 + $0x98] sm:$0xff] %vm1198, %v1431
        %1464 = vst.msk [vmem:[#allocation3 + $0xa0] sm:$0xff] %vm1198, %v1432
        %1465 = vst.msk [vmem:[#allocation3 + $0xa8] sm:$0xff] %vm1198, %v1433
        %1466 = vst.msk [vmem:[#allocation3 + $0xb0] sm:$0xff] %vm1198, %v1434
        %1467 = vst.msk [vmem:[#allocation3 + $0xb8] sm:$0xff] %vm1198, %v1435
        %1468 = vst.msk [vmem:[#allocation3 + $0xc0] sm:$0xff] %vm1198, %v1436
        %1469 = vst.msk [vmem:[#allocation3 + $0xc8] sm:$0xff] %vm1198, %v1437
        %1470 = vst.msk [vmem:[#allocation3 + $0xd0] sm:$0xff] %vm1198, %v1438
        %1471 = vst.msk [vmem:[#allocation3 + $0xd8] sm:$0xff] %vm1198, %v1439
        %1472 = vst.msk [vmem:[#allocation3 + $0xe0] sm:$0xff] %vm1198, %v1440
        %1473 = vst.msk [vmem:[#allocation3 + $0xe8] sm:$0xff] %vm1198, %v1441
        %1474 = vst.msk [vmem:[#allocation3 + $0xf0] sm:$0xff] %vm1198, %v1442
        %1475 = vst.msk [vmem:[#allocation3 + $0xf8] sm:$0xff] %vm1198, %v1443
        %v1476 = vld [vmem:[#allocation2] sm:$0xff]
        %v1477 = vld [vmem:[#allocation2 + $0x8] sm:$0xff]
        %v1478 = vld [vmem:[#allocation2 + $0x10] sm:$0xff]
        %v1479 = vld [vmem:[#allocation2 + $0x18] sm:$0xff]
        %v1480 = vld [vmem:[#allocation2 + $0x20] sm:$0xff]
        %v1481 = vld [vmem:[#allocation2 + $0x28] sm:$0xff]
        %v1482 = vld [vmem:[#allocation2 + $0x30] sm:$0xff]
        %v1483 = vld [vmem:[#allocation2 + $0x38] sm:$0xff]
        %v1484 = vld [vmem:[#allocation2 + $0x40] sm:$0xff]
        %v1485 = vld [vmem:[#allocation2 + $0x48] sm:$0xff]
        %v1486 = vld [vmem:[#allocation2 + $0x50] sm:$0xff]
        %v1487 = vld [vmem:[#allocation2 + $0x58] sm:$0xff]
        %v1488 = vld [vmem:[#allocation2 + $0x60] sm:$0xff]
        %v1489 = vld [vmem:[#allocation2 + $0x68] sm:$0xff]
        %v1490 = vld [vmem:[#allocation2 + $0x70] sm:$0xff]
        %v1491 = vld [vmem:[#allocation2 + $0x78] sm:$0xff]
        %v1492 = vld [vmem:[#allocation2 + $0x80] sm:$0xff]
        %v1493 = vld [vmem:[#allocation2 + $0x88] sm:$0xff]
        %v1494 = vld [vmem:[#allocation2 + $0x90] sm:$0xff]
        %v1495 = vld [vmem:[#allocation2 + $0x98] sm:$0xff]
        %v1496 = vld [vmem:[#allocation2 + $0xa0] sm:$0xff]
        %v1497 = vld [vmem:[#allocation2 + $0xa8] sm:$0xff]
        %v1498 = vld [vmem:[#allocation2 + $0xb0] sm:$0xff]
        %v1499 = vld [vmem:[#allocation2 + $0xb8] sm:$0xff]
        %v1500 = vld [vmem:[#allocation2 + $0xc0] sm:$0xff]
        %v1501 = vld [vmem:[#allocation2 + $0xc8] sm:$0xff]
        %v1502 = vld [vmem:[#allocation2 + $0xd0] sm:$0xff]
        %v1503 = vld [vmem:[#allocation2 + $0xd8] sm:$0xff]
        %v1504 = vld [vmem:[#allocation2 + $0xe0] sm:$0xff]
        %v1505 = vld [vmem:[#allocation2 + $0xe8] sm:$0xff]
        %v1506 = vld [vmem:[#allocation2 + $0xf0] sm:$0xff]
        %v1507 = vld [vmem:[#allocation2 + $0xf8] sm:$0xff]
        %v1508 = vld [vmem:[#allocation2 + $0x100] sm:$0xff]
        %v1509 = vld [vmem:[#allocation2 + $0x108] sm:$0xff]
        %v1510 = vld [vmem:[#allocation2 + $0x110] sm:$0xff]
        %v1511 = vld [vmem:[#allocation2 + $0x118] sm:$0xff]
        %v1512 = vld [vmem:[#allocation2 + $0x120] sm:$0xff]
        %v1513 = vld [vmem:[#allocation2 + $0x128] sm:$0xff]
        %v1514 = vld [vmem:[#allocation2 + $0x130] sm:$0xff]
        %v1515 = vld [vmem:[#allocation2 + $0x138] sm:$0xff]
        %v1516 = vld [vmem:[#allocation2 + $0x140] sm:$0xff]
        %v1517 = vld [vmem:[#allocation2 + $0x148] sm:$0xff]
        %v1518 = vld [vmem:[#allocation2 + $0x150] sm:$0xff]
        %v1519 = vld [vmem:[#allocation2 + $0x158] sm:$0xff]
        %v1520 = vld [vmem:[#allocation2 + $0x160] sm:$0xff]
        %v1521 = vld [vmem:[#allocation2 + $0x168] sm:$0xff]
        %v1522 = vld [vmem:[#allocation2 + $0x170] sm:$0xff]
        %v1523 = vld [vmem:[#allocation2 + $0x178] sm:$0xff]
        %v1524 = vld [vmem:[#allocation2 + $0x180] sm:$0xff]
        %v1525 = vld [vmem:[#allocation2 + $0x188] sm:$0xff]
        %v1526 = vld [vmem:[#allocation2 + $0x190] sm:$0xff]
        %v1527 = vld [vmem:[#allocation2 + $0x198] sm:$0xff]
        %v1528 = vld [vmem:[#allocation2 + $0x1a0] sm:$0xff]
        %v1529 = vld [vmem:[#allocation2 + $0x1a8] sm:$0xff]
        %v1530 = vld [vmem:[#allocation2 + $0x1b0] sm:$0xff]
        %v1531 = vld [vmem:[#allocation2 + $0x1b8] sm:$0xff]
        %v1532 = vld [vmem:[#allocation2 + $0x1c0] sm:$0xff]
        %v1533 = vld [vmem:[#allocation2 + $0x1c8] sm:$0xff]
        %v1534 = vld [vmem:[#allocation2 + $0x1d0] sm:$0xff]
        %v1535 = vld [vmem:[#allocation2 + $0x1d8] sm:$0xff]
        %v1536 = vld [vmem:[#allocation2 + $0x1e0] sm:$0xff]
        %v1537 = vld [vmem:[#allocation2 + $0x1e8] sm:$0xff]
        %v1538 = vld [vmem:[#allocation2 + $0x1f0] sm:$0xff]
        %v1539 = vld [vmem:[#allocation2 + $0x1f8] sm:$0xff]
        %v1540 = vld [vmem:[#allocation2 + $0x200] sm:$0xff]
        %v1541 = vld [vmem:[#allocation2 + $0x208] sm:$0xff]
        %v1542 = vld [vmem:[#allocation2 + $0x210] sm:$0xff]
        %v1543 = vld [vmem:[#allocation2 + $0x218] sm:$0xff]
        %v1544 = vld [vmem:[#allocation2 + $0x220] sm:$0xff]
        %v1545 = vld [vmem:[#allocation2 + $0x228] sm:$0xff]
        %v1546 = vld [vmem:[#allocation2 + $0x230] sm:$0xff]
        %v1547 = vld [vmem:[#allocation2 + $0x238] sm:$0xff]
        %v1548 = vld [vmem:[#allocation2 + $0x240] sm:$0xff]
        %v1549 = vld [vmem:[#allocation2 + $0x248] sm:$0xff]
        %v1550 = vld [vmem:[#allocation2 + $0x250] sm:$0xff]
        %v1551 = vld [vmem:[#allocation2 + $0x258] sm:$0xff]
        %v1552 = vld [vmem:[#allocation2 + $0x260] sm:$0xff]
        %v1553 = vld [vmem:[#allocation2 + $0x268] sm:$0xff]
        %v1554 = vld [vmem:[#allocation2 + $0x270] sm:$0xff]
        %v1555 = vld [vmem:[#allocation2 + $0x278] sm:$0xff]
        %v1556 = vld [vmem:[#allocation2 + $0x280] sm:$0xff]
        %v1557 = vld [vmem:[#allocation2 + $0x288] sm:$0xff]
        %v1558 = vld [vmem:[#allocation2 + $0x290] sm:$0xff]
        %v1559 = vld [vmem:[#allocation2 + $0x298] sm:$0xff]
        %v1560 = vld [vmem:[#allocation2 + $0x2a0] sm:$0xff]
        %v1561 = vld [vmem:[#allocation2 + $0x2a8] sm:$0xff]
        %v1562 = vld [vmem:[#allocation2 + $0x2b0] sm:$0xff]
        %v1563 = vld [vmem:[#allocation2 + $0x2b8] sm:$0xff]
        %v1564 = vld [vmem:[#allocation2 + $0x2c0] sm:$0xff]
        %v1565 = vld [vmem:[#allocation2 + $0x2c8] sm:$0xff]
        %v1566 = vld [vmem:[#allocation2 + $0x2d0] sm:$0xff]
        %v1567 = vld [vmem:[#allocation2 + $0x2d8] sm:$0xff]
        %v1568 = vld [vmem:[#allocation2 + $0x2e0] sm:$0xff]
        %v1569 = vld [vmem:[#allocation2 + $0x2e8] sm:$0xff]
        %v1570 = vld [vmem:[#allocation2 + $0x2f0] sm:$0xff]
        %v1571 = vld [vmem:[#allocation2 + $0x2f8] sm:$0xff]
        %v1572 = vld [vmem:[#allocation2 + $0x300] sm:$0xff]
        %v1573 = vld [vmem:[#allocation2 + $0x308] sm:$0xff]
        %v1574 = vld [vmem:[#allocation2 + $0x310] sm:$0xff]
        %v1575 = vld [vmem:[#allocation2 + $0x318] sm:$0xff]
        %v1576 = vld [vmem:[#allocation2 + $0x320] sm:$0xff]
        %v1577 = vld [vmem:[#allocation2 + $0x328] sm:$0xff]
        %v1578 = vld [vmem:[#allocation2 + $0x330] sm:$0xff]
        %v1579 = vld [vmem:[#allocation2 + $0x338] sm:$0xff]
        %v1580 = vld [vmem:[#allocation2 + $0x340] sm:$0xff]
        %v1581 = vld [vmem:[#allocation2 + $0x348] sm:$0xff]
        %v1582 = vld [vmem:[#allocation2 + $0x350] sm:$0xff]
        %v1583 = vld [vmem:[#allocation2 + $0x358] sm:$0xff]
        %v1584 = vld [vmem:[#allocation2 + $0x360] sm:$0xff]
        %v1585 = vld [vmem:[#allocation2 + $0x368] sm:$0xff]
        %v1586 = vld [vmem:[#allocation2 + $0x370] sm:$0xff]
        %v1587 = vld [vmem:[#allocation2 + $0x378] sm:$0xff]
        %v1588 = vld [vmem:[#allocation2 + $0x380] sm:$0xff]
        %v1589 = vld [vmem:[#allocation2 + $0x388] sm:$0xff]
        %v1590 = vld [vmem:[#allocation2 + $0x390] sm:$0xff]
        %v1591 = vld [vmem:[#allocation2 + $0x398] sm:$0xff]
        %v1592 = vld [vmem:[#allocation2 + $0x3a0] sm:$0xff]
        %v1593 = vld [vmem:[#allocation2 + $0x3a8] sm:$0xff]
        %v1594 = vld [vmem:[#allocation2 + $0x3b0] sm:$0xff]
        %v1595 = vld [vmem:[#allocation2 + $0x3b8] sm:$0xff]
        %v1596 = vld [vmem:[#allocation2 + $0x3c0] sm:$0xff]
        %v1597 = vld [vmem:[#allocation2 + $0x3c8] sm:$0xff]
        %v1598 = vld [vmem:[#allocation2 + $0x3d0] sm:$0xff]
        %v1599 = vld [vmem:[#allocation2 + $0x3d8] sm:$0xff]
        %v1600 = vld [vmem:[#allocation2 + $0x3e0] sm:$0xff]
        %v1601 = vld [vmem:[#allocation2 + $0x3e8] sm:$0xff]
        %v1602 = vld [vmem:[#allocation2 + $0x3f0] sm:$0xff]
        %v1603 = vld [vmem:[#allocation2 + $0x3f8] sm:$0xff]
        %s1604 = scalar_lea.vmem [#allocation2], 32
        %v1605 = vld [vmem:[%s1604] sm:$0xff]
        %v1606 = vld [vmem:[%s1604 + $0x8] sm:$0xff]
        %v1607 = vld [vmem:[%s1604 + $0x10] sm:$0xff]
        %v1608 = vld [vmem:[%s1604 + $0x18] sm:$0xff]
        %v1609 = vld [vmem:[%s1604 + $0x20] sm:$0xff]
        %v1610 = vld [vmem:[%s1604 + $0x28] sm:$0xff]
        %v1611 = vld [vmem:[%s1604 + $0x30] sm:$0xff]
        %v1612 = vld [vmem:[%s1604 + $0x38] sm:$0xff]
        %v1613 = vld [vmem:[%s1604 + $0x40] sm:$0xff]
        %v1614 = vld [vmem:[%s1604 + $0x48] sm:$0xff]
        %v1615 = vld [vmem:[%s1604 + $0x50] sm:$0xff]
        %v1616 = vld [vmem:[%s1604 + $0x58] sm:$0xff]
        %v1617 = vld [vmem:[%s1604 + $0x60] sm:$0xff]
        %v1618 = vld [vmem:[%s1604 + $0x68] sm:$0xff]
        %v1619 = vld [vmem:[%s1604 + $0x70] sm:$0xff]
        %v1620 = vld [vmem:[%s1604 + $0x78] sm:$0xff]
        %v1621 = vld [vmem:[%s1604 + $0x80] sm:$0xff]
        %v1622 = vld [vmem:[%s1604 + $0x88] sm:$0xff]
        %v1623 = vld [vmem:[%s1604 + $0x90] sm:$0xff]
        %v1624 = vld [vmem:[%s1604 + $0x98] sm:$0xff]
        %v1625 = vld [vmem:[%s1604 + $0xa0] sm:$0xff]
        %v1626 = vld [vmem:[%s1604 + $0xa8] sm:$0xff]
        %v1627 = vld [vmem:[%s1604 + $0xb0] sm:$0xff]
        %v1628 = vld [vmem:[%s1604 + $0xb8] sm:$0xff]
        %v1629 = vld [vmem:[%s1604 + $0xc0] sm:$0xff]
        %v1630 = vld [vmem:[%s1604 + $0xc8] sm:$0xff]
        %v1631 = vld [vmem:[%s1604 + $0xd0] sm:$0xff]
        %v1632 = vld [vmem:[%s1604 + $0xd8] sm:$0xff]
        %v1633 = vld [vmem:[%s1604 + $0xe0] sm:$0xff]
        %v1634 = vld [vmem:[%s1604 + $0xe8] sm:$0xff]
        %v1635 = vld [vmem:[%s1604 + $0xf0] sm:$0xff]
        %v1636 = vld [vmem:[%s1604 + $0xf8] sm:$0xff]
        %v1637 = vld [vmem:[%s1604 + $0x100] sm:$0xff]
        %v1638 = vld [vmem:[%s1604 + $0x108] sm:$0xff]
        %v1639 = vld [vmem:[%s1604 + $0x110] sm:$0xff]
        %v1640 = vld [vmem:[%s1604 + $0x118] sm:$0xff]
        %v1641 = vld [vmem:[%s1604 + $0x120] sm:$0xff]
        %v1642 = vld [vmem:[%s1604 + $0x128] sm:$0xff]
        %v1643 = vld [vmem:[%s1604 + $0x130] sm:$0xff]
        %v1644 = vld [vmem:[%s1604 + $0x138] sm:$0xff]
        %v1645 = vld [vmem:[%s1604 + $0x140] sm:$0xff]
        %v1646 = vld [vmem:[%s1604 + $0x148] sm:$0xff]
        %v1647 = vld [vmem:[%s1604 + $0x150] sm:$0xff]
        %v1648 = vld [vmem:[%s1604 + $0x158] sm:$0xff]
        %v1649 = vld [vmem:[%s1604 + $0x160] sm:$0xff]
        %v1650 = vld [vmem:[%s1604 + $0x168] sm:$0xff]
        %v1651 = vld [vmem:[%s1604 + $0x170] sm:$0xff]
        %v1652 = vld [vmem:[%s1604 + $0x178] sm:$0xff]
        %v1653 = vld [vmem:[%s1604 + $0x180] sm:$0xff]
        %v1654 = vld [vmem:[%s1604 + $0x188] sm:$0xff]
        %v1655 = vld [vmem:[%s1604 + $0x190] sm:$0xff]
        %v1656 = vld [vmem:[%s1604 + $0x198] sm:$0xff]
        %v1657 = vld [vmem:[%s1604 + $0x1a0] sm:$0xff]
        %v1658 = vld [vmem:[%s1604 + $0x1a8] sm:$0xff]
        %v1659 = vld [vmem:[%s1604 + $0x1b0] sm:$0xff]
        %v1660 = vld [vmem:[%s1604 + $0x1b8] sm:$0xff]
        %v1661 = vld [vmem:[%s1604 + $0x1c0] sm:$0xff]
        %v1662 = vld [vmem:[%s1604 + $0x1c8] sm:$0xff]
        %v1663 = vld [vmem:[%s1604 + $0x1d0] sm:$0xff]
        %v1664 = vld [vmem:[%s1604 + $0x1d8] sm:$0xff]
        %v1665 = vld [vmem:[%s1604 + $0x1e0] sm:$0xff]
        %v1666 = vld [vmem:[%s1604 + $0x1e8] sm:$0xff]
        %v1667 = vld [vmem:[%s1604 + $0x1f0] sm:$0xff]
        %v1668 = vld [vmem:[%s1604 + $0x1f8] sm:$0xff]
        %v1669 = vld [vmem:[%s1604 + $0x200] sm:$0xff]
        %v1670 = vld [vmem:[%s1604 + $0x208] sm:$0xff]
        %v1671 = vld [vmem:[%s1604 + $0x210] sm:$0xff]
        %v1672 = vld [vmem:[%s1604 + $0x218] sm:$0xff]
        %v1673 = vld [vmem:[%s1604 + $0x220] sm:$0xff]
        %v1674 = vld [vmem:[%s1604 + $0x228] sm:$0xff]
        %v1675 = vld [vmem:[%s1604 + $0x230] sm:$0xff]
        %v1676 = vld [vmem:[%s1604 + $0x238] sm:$0xff]
        %v1677 = vld [vmem:[%s1604 + $0x240] sm:$0xff]
        %v1678 = vld [vmem:[%s1604 + $0x248] sm:$0xff]
        %v1679 = vld [vmem:[%s1604 + $0x250] sm:$0xff]
        %v1680 = vld [vmem:[%s1604 + $0x258] sm:$0xff]
        %v1681 = vld [vmem:[%s1604 + $0x260] sm:$0xff]
        %v1682 = vld [vmem:[%s1604 + $0x268] sm:$0xff]
        %v1683 = vld [vmem:[%s1604 + $0x270] sm:$0xff]
        %v1684 = vld [vmem:[%s1604 + $0x278] sm:$0xff]
        %v1685 = vld [vmem:[%s1604 + $0x280] sm:$0xff]
        %v1686 = vld [vmem:[%s1604 + $0x288] sm:$0xff]
        %v1687 = vld [vmem:[%s1604 + $0x290] sm:$0xff]
        %v1688 = vld [vmem:[%s1604 + $0x298] sm:$0xff]
        %v1689 = vld [vmem:[%s1604 + $0x2a0] sm:$0xff]
        %v1690 = vld [vmem:[%s1604 + $0x2a8] sm:$0xff]
        %v1691 = vld [vmem:[%s1604 + $0x2b0] sm:$0xff]
        %v1692 = vld [vmem:[%s1604 + $0x2b8] sm:$0xff]
        %v1693 = vld [vmem:[%s1604 + $0x2c0] sm:$0xff]
        %v1694 = vld [vmem:[%s1604 + $0x2c8] sm:$0xff]
        %v1695 = vld [vmem:[%s1604 + $0x2d0] sm:$0xff]
        %v1696 = vld [vmem:[%s1604 + $0x2d8] sm:$0xff]
        %v1697 = vld [vmem:[%s1604 + $0x2e0] sm:$0xff]
        %v1698 = vld [vmem:[%s1604 + $0x2e8] sm:$0xff]
        %v1699 = vld [vmem:[%s1604 + $0x2f0] sm:$0xff]
        %v1700 = vld [vmem:[%s1604 + $0x2f8] sm:$0xff]
        %v1701 = vld [vmem:[%s1604 + $0x300] sm:$0xff]
        %v1702 = vld [vmem:[%s1604 + $0x308] sm:$0xff]
        %v1703 = vld [vmem:[%s1604 + $0x310] sm:$0xff]
        %v1704 = vld [vmem:[%s1604 + $0x318] sm:$0xff]
        %v1705 = vld [vmem:[%s1604 + $0x320] sm:$0xff]
        %v1706 = vld [vmem:[%s1604 + $0x328] sm:$0xff]
        %v1707 = vld [vmem:[%s1604 + $0x330] sm:$0xff]
        %v1708 = vld [vmem:[%s1604 + $0x338] sm:$0xff]
        %v1709 = vld [vmem:[%s1604 + $0x340] sm:$0xff]
        %v1710 = vld [vmem:[%s1604 + $0x348] sm:$0xff]
        %v1711 = vld [vmem:[%s1604 + $0x350] sm:$0xff]
        %v1712 = vld [vmem:[%s1604 + $0x358] sm:$0xff]
        %v1713 = vld [vmem:[%s1604 + $0x360] sm:$0xff]
        %v1714 = vld [vmem:[%s1604 + $0x368] sm:$0xff]
        %v1715 = vld [vmem:[%s1604 + $0x370] sm:$0xff]
        %v1716 = vld [vmem:[%s1604 + $0x378] sm:$0xff]
        %v1717 = vld [vmem:[%s1604 + $0x380] sm:$0xff]
        %v1718 = vld [vmem:[%s1604 + $0x388] sm:$0xff]
        %v1719 = vld [vmem:[%s1604 + $0x390] sm:$0xff]
        %v1720 = vld [vmem:[%s1604 + $0x398] sm:$0xff]
        %v1721 = vld [vmem:[%s1604 + $0x3a0] sm:$0xff]
        %v1722 = vld [vmem:[%s1604 + $0x3a8] sm:$0xff]
        %v1723 = vld [vmem:[%s1604 + $0x3b0] sm:$0xff]
        %v1724 = vld [vmem:[%s1604 + $0x3b8] sm:$0xff]
        %v1725 = vld [vmem:[%s1604 + $0x3c0] sm:$0xff]
        %v1726 = vld [vmem:[%s1604 + $0x3c8] sm:$0xff]
        %v1727 = vld [vmem:[%s1604 + $0x3d0] sm:$0xff]
        %v1728 = vld [vmem:[%s1604 + $0x3d8] sm:$0xff]
        %v1729 = vld [vmem:[%s1604 + $0x3e0] sm:$0xff]
        %v1730 = vld [vmem:[%s1604 + $0x3e8] sm:$0xff]
        %v1731 = vld [vmem:[%s1604 + $0x3f0] sm:$0xff]
        %v1732 = vld [vmem:[%s1604 + $0x3f8] sm:$0xff]
        %v1733 = vmax.f32 %v1476, %v1605
        %v1734 = vmax.f32 %v1477, %v1606
        %v1735 = vmax.f32 %v1478, %v1607
        %v1736 = vmax.f32 %v1479, %v1608
        %v1737 = vmax.f32 %v1480, %v1609
        %v1738 = vmax.f32 %v1481, %v1610
        %v1739 = vmax.f32 %v1482, %v1611
        %v1740 = vmax.f32 %v1483, %v1612
        %v1741 = vmax.f32 %v1484, %v1613
        %v1742 = vmax.f32 %v1485, %v1614
        %v1743 = vmax.f32 %v1486, %v1615
        %v1744 = vmax.f32 %v1487, %v1616
        %v1745 = vmax.f32 %v1488, %v1617
        %v1746 = vmax.f32 %v1489, %v1618
        %v1747 = vmax.f32 %v1490, %v1619
        %v1748 = vmax.f32 %v1491, %v1620
        %v1749 = vmax.f32 %v1492, %v1621
        %v1750 = vmax.f32 %v1493, %v1622
        %v1751 = vmax.f32 %v1494, %v1623
        %v1752 = vmax.f32 %v1495, %v1624
        %v1753 = vmax.f32 %v1496, %v1625
        %v1754 = vmax.f32 %v1497, %v1626
        %v1755 = vmax.f32 %v1498, %v1627
        %v1756 = vmax.f32 %v1499, %v1628
        %v1757 = vmax.f32 %v1500, %v1629
        %v1758 = vmax.f32 %v1501, %v1630
        %v1759 = vmax.f32 %v1502, %v1631
        %v1760 = vmax.f32 %v1503, %v1632
        %v1761 = vmax.f32 %v1504, %v1633
        %v1762 = vmax.f32 %v1505, %v1634
        %v1763 = vmax.f32 %v1506, %v1635
        %v1764 = vmax.f32 %v1507, %v1636
        %v1765 = vmax.f32 %v1508, %v1637
        %v1766 = vmax.f32 %v1509, %v1638
        %v1767 = vmax.f32 %v1510, %v1639
        %v1768 = vmax.f32 %v1511, %v1640
        %v1769 = vmax.f32 %v1512, %v1641
        %v1770 = vmax.f32 %v1513, %v1642
        %v1771 = vmax.f32 %v1514, %v1643
        %v1772 = vmax.f32 %v1515, %v1644
        %v1773 = vmax.f32 %v1516, %v1645
        %v1774 = vmax.f32 %v1517, %v1646
        %v1775 = vmax.f32 %v1518, %v1647
        %v1776 = vmax.f32 %v1519, %v1648
        %v1777 = vmax.f32 %v1520, %v1649
        %v1778 = vmax.f32 %v1521, %v1650
        %v1779 = vmax.f32 %v1522, %v1651
        %v1780 = vmax.f32 %v1523, %v1652
        %v1781 = vmax.f32 %v1524, %v1653
        %v1782 = vmax.f32 %v1525, %v1654
        %v1783 = vmax.f32 %v1526, %v1655
        %v1784 = vmax.f32 %v1527, %v1656
        %v1785 = vmax.f32 %v1528, %v1657
        %v1786 = vmax.f32 %v1529, %v1658
        %v1787 = vmax.f32 %v1530, %v1659
        %v1788 = vmax.f32 %v1531, %v1660
        %v1789 = vmax.f32 %v1532, %v1661
        %v1790 = vmax.f32 %v1533, %v1662
        %v1791 = vmax.f32 %v1534, %v1663
        %v1792 = vmax.f32 %v1535, %v1664
        %v1793 = vmax.f32 %v1536, %v1665
        %v1794 = vmax.f32 %v1537, %v1666
        %v1795 = vmax.f32 %v1538, %v1667
        %v1796 = vmax.f32 %v1539, %v1668
        %v1797 = vmax.f32 %v1540, %v1669
        %v1798 = vmax.f32 %v1541, %v1670
        %v1799 = vmax.f32 %v1542, %v1671
        %v1800 = vmax.f32 %v1543, %v1672
        %v1801 = vmax.f32 %v1544, %v1673
        %v1802 = vmax.f32 %v1545, %v1674
        %v1803 = vmax.f32 %v1546, %v1675
        %v1804 = vmax.f32 %v1547, %v1676
        %v1805 = vmax.f32 %v1548, %v1677
        %v1806 = vmax.f32 %v1549, %v1678
        %v1807 = vmax.f32 %v1550, %v1679
        %v1808 = vmax.f32 %v1551, %v1680
        %v1809 = vmax.f32 %v1552, %v1681
        %v1810 = vmax.f32 %v1553, %v1682
        %v1811 = vmax.f32 %v1554, %v1683
        %v1812 = vmax.f32 %v1555, %v1684
        %v1813 = vmax.f32 %v1556, %v1685
        %v1814 = vmax.f32 %v1557, %v1686
        %v1815 = vmax.f32 %v1558, %v1687
        %v1816 = vmax.f32 %v1559, %v1688
        %v1817 = vmax.f32 %v1560, %v1689
        %v1818 = vmax.f32 %v1561, %v1690
        %v1819 = vmax.f32 %v1562, %v1691
        %v1820 = vmax.f32 %v1563, %v1692
        %v1821 = vmax.f32 %v1564, %v1693
        %v1822 = vmax.f32 %v1565, %v1694
        %v1823 = vmax.f32 %v1566, %v1695
        %v1824 = vmax.f32 %v1567, %v1696
        %v1825 = vmax.f32 %v1568, %v1697
        %v1826 = vmax.f32 %v1569, %v1698
        %v1827 = vmax.f32 %v1570, %v1699
        %v1828 = vmax.f32 %v1571, %v1700
        %v1829 = vmax.f32 %v1572, %v1701
        %v1830 = vmax.f32 %v1573, %v1702
        %v1831 = vmax.f32 %v1574, %v1703
        %v1832 = vmax.f32 %v1575, %v1704
        %v1833 = vmax.f32 %v1576, %v1705
        %v1834 = vmax.f32 %v1577, %v1706
        %v1835 = vmax.f32 %v1578, %v1707
        %v1836 = vmax.f32 %v1579, %v1708
        %v1837 = vmax.f32 %v1580, %v1709
        %v1838 = vmax.f32 %v1581, %v1710
        %v1839 = vmax.f32 %v1582, %v1711
        %v1840 = vmax.f32 %v1583, %v1712
        %v1841 = vmax.f32 %v1584, %v1713
        %v1842 = vmax.f32 %v1585, %v1714
        %v1843 = vmax.f32 %v1586, %v1715
        %v1844 = vmax.f32 %v1587, %v1716
        %v1845 = vmax.f32 %v1588, %v1717
        %v1846 = vmax.f32 %v1589, %v1718
        %v1847 = vmax.f32 %v1590, %v1719
        %v1848 = vmax.f32 %v1591, %v1720
        %v1849 = vmax.f32 %v1592, %v1721
        %v1850 = vmax.f32 %v1593, %v1722
        %v1851 = vmax.f32 %v1594, %v1723
        %v1852 = vmax.f32 %v1595, %v1724
        %v1853 = vmax.f32 %v1596, %v1725
        %v1854 = vmax.f32 %v1597, %v1726
        %v1855 = vmax.f32 %v1598, %v1727
        %v1856 = vmax.f32 %v1599, %v1728
        %v1857 = vmax.f32 %v1600, %v1729
        %v1858 = vmax.f32 %v1601, %v1730
        %v1859 = vmax.f32 %v1602, %v1731
        %v1860 = vmax.f32 %v1603, %v1732
        %v1861 = vld [vmem:[%s1216] sm:$0xff]
        %v1862 = vld [vmem:[%s1216 + $0x8] sm:$0xff]
        %v1863 = vld [vmem:[%s1216 + $0x10] sm:$0xff]
        %v1864 = vld [vmem:[%s1216 + $0x18] sm:$0xff]
        %v1865 = vld [vmem:[%s1216 + $0x20] sm:$0xff]
        %v1866 = vld [vmem:[%s1216 + $0x28] sm:$0xff]
        %v1867 = vld [vmem:[%s1216 + $0x30] sm:$0xff]
        %v1868 = vld [vmem:[%s1216 + $0x38] sm:$0xff]
        %v1869 = vld [vmem:[%s1216 + $0x40] sm:$0xff]
        %v1870 = vld [vmem:[%s1216 + $0x48] sm:$0xff]
        %v1871 = vld [vmem:[%s1216 + $0x50] sm:$0xff]
        %v1872 = vld [vmem:[%s1216 + $0x58] sm:$0xff]
        %v1873 = vld [vmem:[%s1216 + $0x60] sm:$0xff]
        %v1874 = vld [vmem:[%s1216 + $0x68] sm:$0xff]
        %v1875 = vld [vmem:[%s1216 + $0x70] sm:$0xff]
        %v1876 = vld [vmem:[%s1216 + $0x78] sm:$0xff]
        %v1877 = vld [vmem:[%s1216 + $0x80] sm:$0xff]
        %v1878 = vld [vmem:[%s1216 + $0x88] sm:$0xff]
        %v1879 = vld [vmem:[%s1216 + $0x90] sm:$0xff]
        %v1880 = vld [vmem:[%s1216 + $0x98] sm:$0xff]
        %v1881 = vld [vmem:[%s1216 + $0xa0] sm:$0xff]
        %v1882 = vld [vmem:[%s1216 + $0xa8] sm:$0xff]
        %v1883 = vld [vmem:[%s1216 + $0xb0] sm:$0xff]
        %v1884 = vld [vmem:[%s1216 + $0xb8] sm:$0xff]
        %v1885 = vld [vmem:[%s1216 + $0xc0] sm:$0xff]
        %v1886 = vld [vmem:[%s1216 + $0xc8] sm:$0xff]
        %v1887 = vld [vmem:[%s1216 + $0xd0] sm:$0xff]
        %v1888 = vld [vmem:[%s1216 + $0xd8] sm:$0xff]
        %v1889 = vld [vmem:[%s1216 + $0xe0] sm:$0xff]
        %v1890 = vld [vmem:[%s1216 + $0xe8] sm:$0xff]
        %v1891 = vld [vmem:[%s1216 + $0xf0] sm:$0xff]
        %v1892 = vld [vmem:[%s1216 + $0xf8] sm:$0xff]
        %v1893 = vld [vmem:[%s1216 + $0x100] sm:$0xff]
        %v1894 = vld [vmem:[%s1216 + $0x108] sm:$0xff]
        %v1895 = vld [vmem:[%s1216 + $0x110] sm:$0xff]
        %v1896 = vld [vmem:[%s1216 + $0x118] sm:$0xff]
        %v1897 = vld [vmem:[%s1216 + $0x120] sm:$0xff]
        %v1898 = vld [vmem:[%s1216 + $0x128] sm:$0xff]
        %v1899 = vld [vmem:[%s1216 + $0x130] sm:$0xff]
        %v1900 = vld [vmem:[%s1216 + $0x138] sm:$0xff]
        %v1901 = vld [vmem:[%s1216 + $0x140] sm:$0xff]
        %v1902 = vld [vmem:[%s1216 + $0x148] sm:$0xff]
        %v1903 = vld [vmem:[%s1216 + $0x150] sm:$0xff]
        %v1904 = vld [vmem:[%s1216 + $0x158] sm:$0xff]
        %v1905 = vld [vmem:[%s1216 + $0x160] sm:$0xff]
        %v1906 = vld [vmem:[%s1216 + $0x168] sm:$0xff]
        %v1907 = vld [vmem:[%s1216 + $0x170] sm:$0xff]
        %v1908 = vld [vmem:[%s1216 + $0x178] sm:$0xff]
        %v1909 = vld [vmem:[%s1216 + $0x180] sm:$0xff]
        %v1910 = vld [vmem:[%s1216 + $0x188] sm:$0xff]
        %v1911 = vld [vmem:[%s1216 + $0x190] sm:$0xff]
        %v1912 = vld [vmem:[%s1216 + $0x198] sm:$0xff]
        %v1913 = vld [vmem:[%s1216 + $0x1a0] sm:$0xff]
        %v1914 = vld [vmem:[%s1216 + $0x1a8] sm:$0xff]
        %v1915 = vld [vmem:[%s1216 + $0x1b0] sm:$0xff]
        %v1916 = vld [vmem:[%s1216 + $0x1b8] sm:$0xff]
        %v1917 = vld [vmem:[%s1216 + $0x1c0] sm:$0xff]
        %v1918 = vld [vmem:[%s1216 + $0x1c8] sm:$0xff]
        %v1919 = vld [vmem:[%s1216 + $0x1d0] sm:$0xff]
        %v1920 = vld [vmem:[%s1216 + $0x1d8] sm:$0xff]
        %v1921 = vld [vmem:[%s1216 + $0x1e0] sm:$0xff]
        %v1922 = vld [vmem:[%s1216 + $0x1e8] sm:$0xff]
        %v1923 = vld [vmem:[%s1216 + $0x1f0] sm:$0xff]
        %v1924 = vld [vmem:[%s1216 + $0x1f8] sm:$0xff]
        %v1925 = vld [vmem:[%s1216 + $0x200] sm:$0xff]
        %v1926 = vld [vmem:[%s1216 + $0x208] sm:$0xff]
        %v1927 = vld [vmem:[%s1216 + $0x210] sm:$0xff]
        %v1928 = vld [vmem:[%s1216 + $0x218] sm:$0xff]
        %v1929 = vld [vmem:[%s1216 + $0x220] sm:$0xff]
        %v1930 = vld [vmem:[%s1216 + $0x228] sm:$0xff]
        %v1931 = vld [vmem:[%s1216 + $0x230] sm:$0xff]
        %v1932 = vld [vmem:[%s1216 + $0x238] sm:$0xff]
        %v1933 = vld [vmem:[%s1216 + $0x240] sm:$0xff]
        %v1934 = vld [vmem:[%s1216 + $0x248] sm:$0xff]
        %v1935 = vld [vmem:[%s1216 + $0x250] sm:$0xff]
        %v1936 = vld [vmem:[%s1216 + $0x258] sm:$0xff]
        %v1937 = vld [vmem:[%s1216 + $0x260] sm:$0xff]
        %v1938 = vld [vmem:[%s1216 + $0x268] sm:$0xff]
        %v1939 = vld [vmem:[%s1216 + $0x270] sm:$0xff]
        %v1940 = vld [vmem:[%s1216 + $0x278] sm:$0xff]
        %v1941 = vld [vmem:[%s1216 + $0x280] sm:$0xff]
        %v1942 = vld [vmem:[%s1216 + $0x288] sm:$0xff]
        %v1943 = vld [vmem:[%s1216 + $0x290] sm:$0xff]
        %v1944 = vld [vmem:[%s1216 + $0x298] sm:$0xff]
        %v1945 = vld [vmem:[%s1216 + $0x2a0] sm:$0xff]
        %v1946 = vld [vmem:[%s1216 + $0x2a8] sm:$0xff]
        %v1947 = vld [vmem:[%s1216 + $0x2b0] sm:$0xff]
        %v1948 = vld [vmem:[%s1216 + $0x2b8] sm:$0xff]
        %v1949 = vld [vmem:[%s1216 + $0x2c0] sm:$0xff]
        %v1950 = vld [vmem:[%s1216 + $0x2c8] sm:$0xff]
        %v1951 = vld [vmem:[%s1216 + $0x2d0] sm:$0xff]
        %v1952 = vld [vmem:[%s1216 + $0x2d8] sm:$0xff]
        %v1953 = vld [vmem:[%s1216 + $0x2e0] sm:$0xff]
        %v1954 = vld [vmem:[%s1216 + $0x2e8] sm:$0xff]
        %v1955 = vld [vmem:[%s1216 + $0x2f0] sm:$0xff]
        %v1956 = vld [vmem:[%s1216 + $0x2f8] sm:$0xff]
        %v1957 = vld [vmem:[%s1216 + $0x300] sm:$0xff]
        %v1958 = vld [vmem:[%s1216 + $0x308] sm:$0xff]
        %v1959 = vld [vmem:[%s1216 + $0x310] sm:$0xff]
        %v1960 = vld [vmem:[%s1216 + $0x318] sm:$0xff]
        %v1961 = vld [vmem:[%s1216 + $0x320] sm:$0xff]
        %v1962 = vld [vmem:[%s1216 + $0x328] sm:$0xff]
        %v1963 = vld [vmem:[%s1216 + $0x330] sm:$0xff]
        %v1964 = vld [vmem:[%s1216 + $0x338] sm:$0xff]
        %v1965 = vld [vmem:[%s1216 + $0x340] sm:$0xff]
        %v1966 = vld [vmem:[%s1216 + $0x348] sm:$0xff]
        %v1967 = vld [vmem:[%s1216 + $0x350] sm:$0xff]
        %v1968 = vld [vmem:[%s1216 + $0x358] sm:$0xff]
        %v1969 = vld [vmem:[%s1216 + $0x360] sm:$0xff]
        %v1970 = vld [vmem:[%s1216 + $0x368] sm:$0xff]
        %v1971 = vld [vmem:[%s1216 + $0x370] sm:$0xff]
        %v1972 = vld [vmem:[%s1216 + $0x378] sm:$0xff]
        %v1973 = vld [vmem:[%s1216 + $0x380] sm:$0xff]
        %v1974 = vld [vmem:[%s1216 + $0x388] sm:$0xff]
        %v1975 = vld [vmem:[%s1216 + $0x390] sm:$0xff]
        %v1976 = vld [vmem:[%s1216 + $0x398] sm:$0xff]
        %v1977 = vld [vmem:[%s1216 + $0x3a0] sm:$0xff]
        %v1978 = vld [vmem:[%s1216 + $0x3a8] sm:$0xff]
        %v1979 = vld [vmem:[%s1216 + $0x3b0] sm:$0xff]
        %v1980 = vld [vmem:[%s1216 + $0x3b8] sm:$0xff]
        %v1981 = vld [vmem:[%s1216 + $0x3c0] sm:$0xff]
        %v1982 = vld [vmem:[%s1216 + $0x3c8] sm:$0xff]
        %v1983 = vld [vmem:[%s1216 + $0x3d0] sm:$0xff]
        %v1984 = vld [vmem:[%s1216 + $0x3d8] sm:$0xff]
        %v1985 = vld [vmem:[%s1216 + $0x3e0] sm:$0xff]
        %v1986 = vld [vmem:[%s1216 + $0x3e8] sm:$0xff]
        %v1987 = vld [vmem:[%s1216 + $0x3f0] sm:$0xff]
        %v1988 = vld [vmem:[%s1216 + $0x3f8] sm:$0xff]
        %v1989 = vmax.f32 %v1733, %v1861
        %v1990 = vmax.f32 %v1734, %v1862
        %v1991 = vmax.f32 %v1735, %v1863
        %v1992 = vmax.f32 %v1736, %v1864
        %v1993 = vmax.f32 %v1737, %v1865
        %v1994 = vmax.f32 %v1738, %v1866
        %v1995 = vmax.f32 %v1739, %v1867
        %v1996 = vmax.f32 %v1740, %v1868
        %v1997 = vmax.f32 %v1741, %v1869
        %v1998 = vmax.f32 %v1742, %v1870
        %v1999 = vmax.f32 %v1743, %v1871
        %v2000 = vmax.f32 %v1744, %v1872
        %v2001 = vmax.f32 %v1745, %v1873
        %v2002 = vmax.f32 %v1746, %v1874
        %v2003 = vmax.f32 %v1747, %v1875
        %v2004 = vmax.f32 %v1748, %v1876
        %v2005 = vmax.f32 %v1749, %v1877
        %v2006 = vmax.f32 %v1750, %v1878
        %v2007 = vmax.f32 %v1751, %v1879
        %v2008 = vmax.f32 %v1752, %v1880
        %v2009 = vmax.f32 %v1753, %v1881
        %v2010 = vmax.f32 %v1754, %v1882
        %v2011 = vmax.f32 %v1755, %v1883
        %v2012 = vmax.f32 %v1756, %v1884
        %v2013 = vmax.f32 %v1757, %v1885
        %v2014 = vmax.f32 %v1758, %v1886
        %v2015 = vmax.f32 %v1759, %v1887
        %v2016 = vmax.f32 %v1760, %v1888
        %v2017 = vmax.f32 %v1761, %v1889
        %v2018 = vmax.f32 %v1762, %v1890
        %v2019 = vmax.f32 %v1763, %v1891
        %v2020 = vmax.f32 %v1764, %v1892
        %v2021 = vmax.f32 %v1765, %v1893
        %v2022 = vmax.f32 %v1766, %v1894
        %v2023 = vmax.f32 %v1767, %v1895
        %v2024 = vmax.f32 %v1768, %v1896
        %v2025 = vmax.f32 %v1769, %v1897
        %v2026 = vmax.f32 %v1770, %v1898
        %v2027 = vmax.f32 %v1771, %v1899
        %v2028 = vmax.f32 %v1772, %v1900
        %v2029 = vmax.f32 %v1773, %v1901
        %v2030 = vmax.f32 %v1774, %v1902
        %v2031 = vmax.f32 %v1775, %v1903
        %v2032 = vmax.f32 %v1776, %v1904
        %v2033 = vmax.f32 %v1777, %v1905
        %v2034 = vmax.f32 %v1778, %v1906
        %v2035 = vmax.f32 %v1779, %v1907
        %v2036 = vmax.f32 %v1780, %v1908
        %v2037 = vmax.f32 %v1781, %v1909
        %v2038 = vmax.f32 %v1782, %v1910
        %v2039 = vmax.f32 %v1783, %v1911
        %v2040 = vmax.f32 %v1784, %v1912
        %v2041 = vmax.f32 %v1785, %v1913
        %v2042 = vmax.f32 %v1786, %v1914
        %v2043 = vmax.f32 %v1787, %v1915
        %v2044 = vmax.f32 %v1788, %v1916
        %v2045 = vmax.f32 %v1789, %v1917
        %v2046 = vmax.f32 %v1790, %v1918
        %v2047 = vmax.f32 %v1791, %v1919
        %v2048 = vmax.f32 %v1792, %v1920
        %v2049 = vmax.f32 %v1793, %v1921
        %v2050 = vmax.f32 %v1794, %v1922
        %v2051 = vmax.f32 %v1795, %v1923
        %v2052 = vmax.f32 %v1796, %v1924
        %v2053 = vmax.f32 %v1797, %v1925
        %v2054 = vmax.f32 %v1798, %v1926
        %v2055 = vmax.f32 %v1799, %v1927
        %v2056 = vmax.f32 %v1800, %v1928
        %v2057 = vmax.f32 %v1801, %v1929
        %v2058 = vmax.f32 %v1802, %v1930
        %v2059 = vmax.f32 %v1803, %v1931
        %v2060 = vmax.f32 %v1804, %v1932
        %v2061 = vmax.f32 %v1805, %v1933
        %v2062 = vmax.f32 %v1806, %v1934
        %v2063 = vmax.f32 %v1807, %v1935
        %v2064 = vmax.f32 %v1808, %v1936
        %v2065 = vmax.f32 %v1809, %v1937
        %v2066 = vmax.f32 %v1810, %v1938
        %v2067 = vmax.f32 %v1811, %v1939
        %v2068 = vmax.f32 %v1812, %v1940
        %v2069 = vmax.f32 %v1813, %v1941
        %v2070 = vmax.f32 %v1814, %v1942
        %v2071 = vmax.f32 %v1815, %v1943
        %v2072 = vmax.f32 %v1816, %v1944
        %v2073 = vmax.f32 %v1817, %v1945
        %v2074 = vmax.f32 %v1818, %v1946
        %v2075 = vmax.f32 %v1819, %v1947
        %v2076 = vmax.f32 %v1820, %v1948
        %v2077 = vmax.f32 %v1821, %v1949
        %v2078 = vmax.f32 %v1822, %v1950
        %v2079 = vmax.f32 %v1823, %v1951
        %v2080 = vmax.f32 %v1824, %v1952
        %v2081 = vmax.f32 %v1825, %v1953
        %v2082 = vmax.f32 %v1826, %v1954
        %v2083 = vmax.f32 %v1827, %v1955
        %v2084 = vmax.f32 %v1828, %v1956
        %v2085 = vmax.f32 %v1829, %v1957
        %v2086 = vmax.f32 %v1830, %v1958
        %v2087 = vmax.f32 %v1831, %v1959
        %v2088 = vmax.f32 %v1832, %v1960
        %v2089 = vmax.f32 %v1833, %v1961
        %v2090 = vmax.f32 %v1834, %v1962
        %v2091 = vmax.f32 %v1835, %v1963
        %v2092 = vmax.f32 %v1836, %v1964
        %v2093 = vmax.f32 %v1837, %v1965
        %v2094 = vmax.f32 %v1838, %v1966
        %v2095 = vmax.f32 %v1839, %v1967
        %v2096 = vmax.f32 %v1840, %v1968
        %v2097 = vmax.f32 %v1841, %v1969
        %v2098 = vmax.f32 %v1842, %v1970
        %v2099 = vmax.f32 %v1843, %v1971
        %v2100 = vmax.f32 %v1844, %v1972
        %v2101 = vmax.f32 %v1845, %v1973
        %v2102 = vmax.f32 %v1846, %v1974
        %v2103 = vmax.f32 %v1847, %v1975
        %v2104 = vmax.f32 %v1848, %v1976
        %v2105 = vmax.f32 %v1849, %v1977
        %v2106 = vmax.f32 %v1850, %v1978
        %v2107 = vmax.f32 %v1851, %v1979
        %v2108 = vmax.f32 %v1852, %v1980
        %v2109 = vmax.f32 %v1853, %v1981
        %v2110 = vmax.f32 %v1854, %v1982
        %v2111 = vmax.f32 %v1855, %v1983
        %v2112 = vmax.f32 %v1856, %v1984
        %v2113 = vmax.f32 %v1857, %v1985
        %v2114 = vmax.f32 %v1858, %v1986
        %v2115 = vmax.f32 %v1859, %v1987
        %v2116 = vmax.f32 %v1860, %v1988
        %s2117 = scalar_lea.vmem [#allocation2], 96
        %v2118 = vld [vmem:[%s2117] sm:$0xff]
        %v2119 = vld [vmem:[%s2117 + $0x8] sm:$0xff]
        %v2120 = vld [vmem:[%s2117 + $0x10] sm:$0xff]
        %v2121 = vld [vmem:[%s2117 + $0x18] sm:$0xff]
        %v2122 = vld [vmem:[%s2117 + $0x20] sm:$0xff]
        %v2123 = vld [vmem:[%s2117 + $0x28] sm:$0xff]
        %v2124 = vld [vmem:[%s2117 + $0x30] sm:$0xff]
        %v2125 = vld [vmem:[%s2117 + $0x38] sm:$0xff]
        %v2126 = vld [vmem:[%s2117 + $0x40] sm:$0xff]
        %v2127 = vld [vmem:[%s2117 + $0x48] sm:$0xff]
        %v2128 = vld [vmem:[%s2117 + $0x50] sm:$0xff]
        %v2129 = vld [vmem:[%s2117 + $0x58] sm:$0xff]
        %v2130 = vld [vmem:[%s2117 + $0x60] sm:$0xff]
        %v2131 = vld [vmem:[%s2117 + $0x68] sm:$0xff]
        %v2132 = vld [vmem:[%s2117 + $0x70] sm:$0xff]
        %v2133 = vld [vmem:[%s2117 + $0x78] sm:$0xff]
        %v2134 = vld [vmem:[%s2117 + $0x80] sm:$0xff]
        %v2135 = vld [vmem:[%s2117 + $0x88] sm:$0xff]
        %v2136 = vld [vmem:[%s2117 + $0x90] sm:$0xff]
        %v2137 = vld [vmem:[%s2117 + $0x98] sm:$0xff]
        %v2138 = vld [vmem:[%s2117 + $0xa0] sm:$0xff]
        %v2139 = vld [vmem:[%s2117 + $0xa8] sm:$0xff]
        %v2140 = vld [vmem:[%s2117 + $0xb0] sm:$0xff]
        %v2141 = vld [vmem:[%s2117 + $0xb8] sm:$0xff]
        %v2142 = vld [vmem:[%s2117 + $0xc0] sm:$0xff]
        %v2143 = vld [vmem:[%s2117 + $0xc8] sm:$0xff]
        %v2144 = vld [vmem:[%s2117 + $0xd0] sm:$0xff]
        %v2145 = vld [vmem:[%s2117 + $0xd8] sm:$0xff]
        %v2146 = vld [vmem:[%s2117 + $0xe0] sm:$0xff]
        %v2147 = vld [vmem:[%s2117 + $0xe8] sm:$0xff]
        %v2148 = vld [vmem:[%s2117 + $0xf0] sm:$0xff]
        %v2149 = vld [vmem:[%s2117 + $0xf8] sm:$0xff]
        %v2150 = vld [vmem:[%s2117 + $0x100] sm:$0xff]
        %v2151 = vld [vmem:[%s2117 + $0x108] sm:$0xff]
        %v2152 = vld [vmem:[%s2117 + $0x110] sm:$0xff]
        %v2153 = vld [vmem:[%s2117 + $0x118] sm:$0xff]
        %v2154 = vld [vmem:[%s2117 + $0x120] sm:$0xff]
        %v2155 = vld [vmem:[%s2117 + $0x128] sm:$0xff]
        %v2156 = vld [vmem:[%s2117 + $0x130] sm:$0xff]
        %v2157 = vld [vmem:[%s2117 + $0x138] sm:$0xff]
        %v2158 = vld [vmem:[%s2117 + $0x140] sm:$0xff]
        %v2159 = vld [vmem:[%s2117 + $0x148] sm:$0xff]
        %v2160 = vld [vmem:[%s2117 + $0x150] sm:$0xff]
        %v2161 = vld [vmem:[%s2117 + $0x158] sm:$0xff]
        %v2162 = vld [vmem:[%s2117 + $0x160] sm:$0xff]
        %v2163 = vld [vmem:[%s2117 + $0x168] sm:$0xff]
        %v2164 = vld [vmem:[%s2117 + $0x170] sm:$0xff]
        %v2165 = vld [vmem:[%s2117 + $0x178] sm:$0xff]
        %v2166 = vld [vmem:[%s2117 + $0x180] sm:$0xff]
        %v2167 = vld [vmem:[%s2117 + $0x188] sm:$0xff]
        %v2168 = vld [vmem:[%s2117 + $0x190] sm:$0xff]
        %v2169 = vld [vmem:[%s2117 + $0x198] sm:$0xff]
        %v2170 = vld [vmem:[%s2117 + $0x1a0] sm:$0xff]
        %v2171 = vld [vmem:[%s2117 + $0x1a8] sm:$0xff]
        %v2172 = vld [vmem:[%s2117 + $0x1b0] sm:$0xff]
        %v2173 = vld [vmem:[%s2117 + $0x1b8] sm:$0xff]
        %v2174 = vld [vmem:[%s2117 + $0x1c0] sm:$0xff]
        %v2175 = vld [vmem:[%s2117 + $0x1c8] sm:$0xff]
        %v2176 = vld [vmem:[%s2117 + $0x1d0] sm:$0xff]
        %v2177 = vld [vmem:[%s2117 + $0x1d8] sm:$0xff]
        %v2178 = vld [vmem:[%s2117 + $0x1e0] sm:$0xff]
        %v2179 = vld [vmem:[%s2117 + $0x1e8] sm:$0xff]
        %v2180 = vld [vmem:[%s2117 + $0x1f0] sm:$0xff]
        %v2181 = vld [vmem:[%s2117 + $0x1f8] sm:$0xff]
        %v2182 = vld [vmem:[%s2117 + $0x200] sm:$0xff]
        %v2183 = vld [vmem:[%s2117 + $0x208] sm:$0xff]
        %v2184 = vld [vmem:[%s2117 + $0x210] sm:$0xff]
        %v2185 = vld [vmem:[%s2117 + $0x218] sm:$0xff]
        %v2186 = vld [vmem:[%s2117 + $0x220] sm:$0xff]
        %v2187 = vld [vmem:[%s2117 + $0x228] sm:$0xff]
        %v2188 = vld [vmem:[%s2117 + $0x230] sm:$0xff]
        %v2189 = vld [vmem:[%s2117 + $0x238] sm:$0xff]
        %v2190 = vld [vmem:[%s2117 + $0x240] sm:$0xff]
        %v2191 = vld [vmem:[%s2117 + $0x248] sm:$0xff]
        %v2192 = vld [vmem:[%s2117 + $0x250] sm:$0xff]
        %v2193 = vld [vmem:[%s2117 + $0x258] sm:$0xff]
        %v2194 = vld [vmem:[%s2117 + $0x260] sm:$0xff]
        %v2195 = vld [vmem:[%s2117 + $0x268] sm:$0xff]
        %v2196 = vld [vmem:[%s2117 + $0x270] sm:$0xff]
        %v2197 = vld [vmem:[%s2117 + $0x278] sm:$0xff]
        %v2198 = vld [vmem:[%s2117 + $0x280] sm:$0xff]
        %v2199 = vld [vmem:[%s2117 + $0x288] sm:$0xff]
        %v2200 = vld [vmem:[%s2117 + $0x290] sm:$0xff]
        %v2201 = vld [vmem:[%s2117 + $0x298] sm:$0xff]
        %v2202 = vld [vmem:[%s2117 + $0x2a0] sm:$0xff]
        %v2203 = vld [vmem:[%s2117 + $0x2a8] sm:$0xff]
        %v2204 = vld [vmem:[%s2117 + $0x2b0] sm:$0xff]
        %v2205 = vld [vmem:[%s2117 + $0x2b8] sm:$0xff]
        %v2206 = vld [vmem:[%s2117 + $0x2c0] sm:$0xff]
        %v2207 = vld [vmem:[%s2117 + $0x2c8] sm:$0xff]
        %v2208 = vld [vmem:[%s2117 + $0x2d0] sm:$0xff]
        %v2209 = vld [vmem:[%s2117 + $0x2d8] sm:$0xff]
        %v2210 = vld [vmem:[%s2117 + $0x2e0] sm:$0xff]
        %v2211 = vld [vmem:[%s2117 + $0x2e8] sm:$0xff]
        %v2212 = vld [vmem:[%s2117 + $0x2f0] sm:$0xff]
        %v2213 = vld [vmem:[%s2117 + $0x2f8] sm:$0xff]
        %v2214 = vld [vmem:[%s2117 + $0x300] sm:$0xff]
        %v2215 = vld [vmem:[%s2117 + $0x308] sm:$0xff]
        %v2216 = vld [vmem:[%s2117 + $0x310] sm:$0xff]
        %v2217 = vld [vmem:[%s2117 + $0x318] sm:$0xff]
        %v2218 = vld [vmem:[%s2117 + $0x320] sm:$0xff]
        %v2219 = vld [vmem:[%s2117 + $0x328] sm:$0xff]
        %v2220 = vld [vmem:[%s2117 + $0x330] sm:$0xff]
        %v2221 = vld [vmem:[%s2117 + $0x338] sm:$0xff]
        %v2222 = vld [vmem:[%s2117 + $0x340] sm:$0xff]
        %v2223 = vld [vmem:[%s2117 + $0x348] sm:$0xff]
        %v2224 = vld [vmem:[%s2117 + $0x350] sm:$0xff]
        %v2225 = vld [vmem:[%s2117 + $0x358] sm:$0xff]
        %v2226 = vld [vmem:[%s2117 + $0x360] sm:$0xff]
        %v2227 = vld [vmem:[%s2117 + $0x368] sm:$0xff]
        %v2228 = vld [vmem:[%s2117 + $0x370] sm:$0xff]
        %v2229 = vld [vmem:[%s2117 + $0x378] sm:$0xff]
        %v2230 = vld [vmem:[%s2117 + $0x380] sm:$0xff]
        %v2231 = vld [vmem:[%s2117 + $0x388] sm:$0xff]
        %v2232 = vld [vmem:[%s2117 + $0x390] sm:$0xff]
        %v2233 = vld [vmem:[%s2117 + $0x398] sm:$0xff]
        %v2234 = vld [vmem:[%s2117 + $0x3a0] sm:$0xff]
        %v2235 = vld [vmem:[%s2117 + $0x3a8] sm:$0xff]
        %v2236 = vld [vmem:[%s2117 + $0x3b0] sm:$0xff]
        %v2237 = vld [vmem:[%s2117 + $0x3b8] sm:$0xff]
        %v2238 = vld [vmem:[%s2117 + $0x3c0] sm:$0xff]
        %v2239 = vld [vmem:[%s2117 + $0x3c8] sm:$0xff]
        %v2240 = vld [vmem:[%s2117 + $0x3d0] sm:$0xff]
        %v2241 = vld [vmem:[%s2117 + $0x3d8] sm:$0xff]
        %v2242 = vld [vmem:[%s2117 + $0x3e0] sm:$0xff]
        %v2243 = vld [vmem:[%s2117 + $0x3e8] sm:$0xff]
        %v2244 = vld [vmem:[%s2117 + $0x3f0] sm:$0xff]
        %v2245 = vld [vmem:[%s2117 + $0x3f8] sm:$0xff]
        %v2246 = vmax.f32 %v1989, %v2118
        %v2247 = vmax.f32 %v1990, %v2119
        %v2248 = vmax.f32 %v1991, %v2120
        %v2249 = vmax.f32 %v1992, %v2121
        %v2250 = vmax.f32 %v1993, %v2122
        %v2251 = vmax.f32 %v1994, %v2123
        %v2252 = vmax.f32 %v1995, %v2124
        %v2253 = vmax.f32 %v1996, %v2125
        %v2254 = vmax.f32 %v1997, %v2126
        %v2255 = vmax.f32 %v1998, %v2127
        %v2256 = vmax.f32 %v1999, %v2128
        %v2257 = vmax.f32 %v2000, %v2129
        %v2258 = vmax.f32 %v2001, %v2130
        %v2259 = vmax.f32 %v2002, %v2131
        %v2260 = vmax.f32 %v2003, %v2132
        %v2261 = vmax.f32 %v2004, %v2133
        %v2262 = vmax.f32 %v2005, %v2134
        %v2263 = vmax.f32 %v2006, %v2135
        %v2264 = vmax.f32 %v2007, %v2136
        %v2265 = vmax.f32 %v2008, %v2137
        %v2266 = vmax.f32 %v2009, %v2138
        %v2267 = vmax.f32 %v2010, %v2139
        %v2268 = vmax.f32 %v2011, %v2140
        %v2269 = vmax.f32 %v2012, %v2141
        %v2270 = vmax.f32 %v2013, %v2142
        %v2271 = vmax.f32 %v2014, %v2143
        %v2272 = vmax.f32 %v2015, %v2144
        %v2273 = vmax.f32 %v2016, %v2145
        %v2274 = vmax.f32 %v2017, %v2146
        %v2275 = vmax.f32 %v2018, %v2147
        %v2276 = vmax.f32 %v2019, %v2148
        %v2277 = vmax.f32 %v2020, %v2149
        %v2278 = vmax.f32 %v2021, %v2150
        %v2279 = vmax.f32 %v2022, %v2151
        %v2280 = vmax.f32 %v2023, %v2152
        %v2281 = vmax.f32 %v2024, %v2153
        %v2282 = vmax.f32 %v2025, %v2154
        %v2283 = vmax.f32 %v2026, %v2155
        %v2284 = vmax.f32 %v2027, %v2156
        %v2285 = vmax.f32 %v2028, %v2157
        %v2286 = vmax.f32 %v2029, %v2158
        %v2287 = vmax.f32 %v2030, %v2159
        %v2288 = vmax.f32 %v2031, %v2160
        %v2289 = vmax.f32 %v2032, %v2161
        %v2290 = vmax.f32 %v2033, %v2162
        %v2291 = vmax.f32 %v2034, %v2163
        %v2292 = vmax.f32 %v2035, %v2164
        %v2293 = vmax.f32 %v2036, %v2165
        %v2294 = vmax.f32 %v2037, %v2166
        %v2295 = vmax.f32 %v2038, %v2167
        %v2296 = vmax.f32 %v2039, %v2168
        %v2297 = vmax.f32 %v2040, %v2169
        %v2298 = vmax.f32 %v2041, %v2170
        %v2299 = vmax.f32 %v2042, %v2171
        %v2300 = vmax.f32 %v2043, %v2172
        %v2301 = vmax.f32 %v2044, %v2173
        %v2302 = vmax.f32 %v2045, %v2174
        %v2303 = vmax.f32 %v2046, %v2175
        %v2304 = vmax.f32 %v2047, %v2176
        %v2305 = vmax.f32 %v2048, %v2177
        %v2306 = vmax.f32 %v2049, %v2178
        %v2307 = vmax.f32 %v2050, %v2179
        %v2308 = vmax.f32 %v2051, %v2180
        %v2309 = vmax.f32 %v2052, %v2181
        %v2310 = vmax.f32 %v2053, %v2182
        %v2311 = vmax.f32 %v2054, %v2183
        %v2312 = vmax.f32 %v2055, %v2184
        %v2313 = vmax.f32 %v2056, %v2185
        %v2314 = vmax.f32 %v2057, %v2186
        %v2315 = vmax.f32 %v2058, %v2187
        %v2316 = vmax.f32 %v2059, %v2188
        %v2317 = vmax.f32 %v2060, %v2189
        %v2318 = vmax.f32 %v2061, %v2190
        %v2319 = vmax.f32 %v2062, %v2191
        %v2320 = vmax.f32 %v2063, %v2192
        %v2321 = vmax.f32 %v2064, %v2193
        %v2322 = vmax.f32 %v2065, %v2194
        %v2323 = vmax.f32 %v2066, %v2195
        %v2324 = vmax.f32 %v2067, %v2196
        %v2325 = vmax.f32 %v2068, %v2197
        %v2326 = vmax.f32 %v2069, %v2198
        %v2327 = vmax.f32 %v2070, %v2199
        %v2328 = vmax.f32 %v2071, %v2200
        %v2329 = vmax.f32 %v2072, %v2201
        %v2330 = vmax.f32 %v2073, %v2202
        %v2331 = vmax.f32 %v2074, %v2203
        %v2332 = vmax.f32 %v2075, %v2204
        %v2333 = vmax.f32 %v2076, %v2205
        %v2334 = vmax.f32 %v2077, %v2206
        %v2335 = vmax.f32 %v2078, %v2207
        %v2336 = vmax.f32 %v2079, %v2208
        %v2337 = vmax.f32 %v2080, %v2209
        %v2338 = vmax.f32 %v2081, %v2210
        %v2339 = vmax.f32 %v2082, %v2211
        %v2340 = vmax.f32 %v2083, %v2212
        %v2341 = vmax.f32 %v2084, %v2213
        %v2342 = vmax.f32 %v2085, %v2214
        %v2343 = vmax.f32 %v2086, %v2215
        %v2344 = vmax.f32 %v2087, %v2216
        %v2345 = vmax.f32 %v2088, %v2217
        %v2346 = vmax.f32 %v2089, %v2218
        %v2347 = vmax.f32 %v2090, %v2219
        %v2348 = vmax.f32 %v2091, %v2220
        %v2349 = vmax.f32 %v2092, %v2221
        %v2350 = vmax.f32 %v2093, %v2222
        %v2351 = vmax.f32 %v2094, %v2223
        %v2352 = vmax.f32 %v2095, %v2224
        %v2353 = vmax.f32 %v2096, %v2225
        %v2354 = vmax.f32 %v2097, %v2226
        %v2355 = vmax.f32 %v2098, %v2227
        %v2356 = vmax.f32 %v2099, %v2228
        %v2357 = vmax.f32 %v2100, %v2229
        %v2358 = vmax.f32 %v2101, %v2230
        %v2359 = vmax.f32 %v2102, %v2231
        %v2360 = vmax.f32 %v2103, %v2232
        %v2361 = vmax.f32 %v2104, %v2233
        %v2362 = vmax.f32 %v2105, %v2234
        %v2363 = vmax.f32 %v2106, %v2235
        %v2364 = vmax.f32 %v2107, %v2236
        %v2365 = vmax.f32 %v2108, %v2237
        %v2366 = vmax.f32 %v2109, %v2238
        %v2367 = vmax.f32 %v2110, %v2239
        %v2368 = vmax.f32 %v2111, %v2240
        %v2369 = vmax.f32 %v2112, %v2241
        %v2370 = vmax.f32 %v2113, %v2242
        %v2371 = vmax.f32 %v2114, %v2243
        %v2372 = vmax.f32 %v2115, %v2244
        %v2373 = vmax.f32 %v2116, %v2245
        %s2374 = scalar_lea.vmem [#allocation2], 128
        %v2375 = vld [vmem:[%s2374] sm:$0xff]
        %v2376 = vld [vmem:[%s2374 + $0x8] sm:$0xff]
        %v2377 = vld [vmem:[%s2374 + $0x10] sm:$0xff]
        %v2378 = vld [vmem:[%s2374 + $0x18] sm:$0xff]
        %v2379 = vld [vmem:[%s2374 + $0x20] sm:$0xff]
        %v2380 = vld [vmem:[%s2374 + $0x28] sm:$0xff]
        %v2381 = vld [vmem:[%s2374 + $0x30] sm:$0xff]
        %v2382 = vld [vmem:[%s2374 + $0x38] sm:$0xff]
        %v2383 = vld [vmem:[%s2374 + $0x40] sm:$0xff]
        %v2384 = vld [vmem:[%s2374 + $0x48] sm:$0xff]
        %v2385 = vld [vmem:[%s2374 + $0x50] sm:$0xff]
        %v2386 = vld [vmem:[%s2374 + $0x58] sm:$0xff]
        %v2387 = vld [vmem:[%s2374 + $0x60] sm:$0xff]
        %v2388 = vld [vmem:[%s2374 + $0x68] sm:$0xff]
        %v2389 = vld [vmem:[%s2374 + $0x70] sm:$0xff]
        %v2390 = vld [vmem:[%s2374 + $0x78] sm:$0xff]
        %v2391 = vld [vmem:[%s2374 + $0x80] sm:$0xff]
        %v2392 = vld [vmem:[%s2374 + $0x88] sm:$0xff]
        %v2393 = vld [vmem:[%s2374 + $0x90] sm:$0xff]
        %v2394 = vld [vmem:[%s2374 + $0x98] sm:$0xff]
        %v2395 = vld [vmem:[%s2374 + $0xa0] sm:$0xff]
        %v2396 = vld [vmem:[%s2374 + $0xa8] sm:$0xff]
        %v2397 = vld [vmem:[%s2374 + $0xb0] sm:$0xff]
        %v2398 = vld [vmem:[%s2374 + $0xb8] sm:$0xff]
        %v2399 = vld [vmem:[%s2374 + $0xc0] sm:$0xff]
        %v2400 = vld [vmem:[%s2374 + $0xc8] sm:$0xff]
        %v2401 = vld [vmem:[%s2374 + $0xd0] sm:$0xff]
        %v2402 = vld [vmem:[%s2374 + $0xd8] sm:$0xff]
        %v2403 = vld [vmem:[%s2374 + $0xe0] sm:$0xff]
        %v2404 = vld [vmem:[%s2374 + $0xe8] sm:$0xff]
        %v2405 = vld [vmem:[%s2374 + $0xf0] sm:$0xff]
        %v2406 = vld [vmem:[%s2374 + $0xf8] sm:$0xff]
        %v2407 = vld [vmem:[%s2374 + $0x100] sm:$0xff]
        %v2408 = vld [vmem:[%s2374 + $0x108] sm:$0xff]
        %v2409 = vld [vmem:[%s2374 + $0x110] sm:$0xff]
        %v2410 = vld [vmem:[%s2374 + $0x118] sm:$0xff]
        %v2411 = vld [vmem:[%s2374 + $0x120] sm:$0xff]
        %v2412 = vld [vmem:[%s2374 + $0x128] sm:$0xff]
        %v2413 = vld [vmem:[%s2374 + $0x130] sm:$0xff]
        %v2414 = vld [vmem:[%s2374 + $0x138] sm:$0xff]
        %v2415 = vld [vmem:[%s2374 + $0x140] sm:$0xff]
        %v2416 = vld [vmem:[%s2374 + $0x148] sm:$0xff]
        %v2417 = vld [vmem:[%s2374 + $0x150] sm:$0xff]
        %v2418 = vld [vmem:[%s2374 + $0x158] sm:$0xff]
        %v2419 = vld [vmem:[%s2374 + $0x160] sm:$0xff]
        %v2420 = vld [vmem:[%s2374 + $0x168] sm:$0xff]
        %v2421 = vld [vmem:[%s2374 + $0x170] sm:$0xff]
        %v2422 = vld [vmem:[%s2374 + $0x178] sm:$0xff]
        %v2423 = vld [vmem:[%s2374 + $0x180] sm:$0xff]
        %v2424 = vld [vmem:[%s2374 + $0x188] sm:$0xff]
        %v2425 = vld [vmem:[%s2374 + $0x190] sm:$0xff]
        %v2426 = vld [vmem:[%s2374 + $0x198] sm:$0xff]
        %v2427 = vld [vmem:[%s2374 + $0x1a0] sm:$0xff]
        %v2428 = vld [vmem:[%s2374 + $0x1a8] sm:$0xff]
        %v2429 = vld [vmem:[%s2374 + $0x1b0] sm:$0xff]
        %v2430 = vld [vmem:[%s2374 + $0x1b8] sm:$0xff]
        %v2431 = vld [vmem:[%s2374 + $0x1c0] sm:$0xff]
        %v2432 = vld [vmem:[%s2374 + $0x1c8] sm:$0xff]
        %v2433 = vld [vmem:[%s2374 + $0x1d0] sm:$0xff]
        %v2434 = vld [vmem:[%s2374 + $0x1d8] sm:$0xff]
        %v2435 = vld [vmem:[%s2374 + $0x1e0] sm:$0xff]
        %v2436 = vld [vmem:[%s2374 + $0x1e8] sm:$0xff]
        %v2437 = vld [vmem:[%s2374 + $0x1f0] sm:$0xff]
        %v2438 = vld [vmem:[%s2374 + $0x1f8] sm:$0xff]
        %v2439 = vld [vmem:[%s2374 + $0x200] sm:$0xff]
        %v2440 = vld [vmem:[%s2374 + $0x208] sm:$0xff]
        %v2441 = vld [vmem:[%s2374 + $0x210] sm:$0xff]
        %v2442 = vld [vmem:[%s2374 + $0x218] sm:$0xff]
        %v2443 = vld [vmem:[%s2374 + $0x220] sm:$0xff]
        %v2444 = vld [vmem:[%s2374 + $0x228] sm:$0xff]
        %v2445 = vld [vmem:[%s2374 + $0x230] sm:$0xff]
        %v2446 = vld [vmem:[%s2374 + $0x238] sm:$0xff]
        %v2447 = vld [vmem:[%s2374 + $0x240] sm:$0xff]
        %v2448 = vld [vmem:[%s2374 + $0x248] sm:$0xff]
        %v2449 = vld [vmem:[%s2374 + $0x250] sm:$0xff]
        %v2450 = vld [vmem:[%s2374 + $0x258] sm:$0xff]
        %v2451 = vld [vmem:[%s2374 + $0x260] sm:$0xff]
        %v2452 = vld [vmem:[%s2374 + $0x268] sm:$0xff]
        %v2453 = vld [vmem:[%s2374 + $0x270] sm:$0xff]
        %v2454 = vld [vmem:[%s2374 + $0x278] sm:$0xff]
        %v2455 = vld [vmem:[%s2374 + $0x280] sm:$0xff]
        %v2456 = vld [vmem:[%s2374 + $0x288] sm:$0xff]
        %v2457 = vld [vmem:[%s2374 + $0x290] sm:$0xff]
        %v2458 = vld [vmem:[%s2374 + $0x298] sm:$0xff]
        %v2459 = vld [vmem:[%s2374 + $0x2a0] sm:$0xff]
        %v2460 = vld [vmem:[%s2374 + $0x2a8] sm:$0xff]
        %v2461 = vld [vmem:[%s2374 + $0x2b0] sm:$0xff]
        %v2462 = vld [vmem:[%s2374 + $0x2b8] sm:$0xff]
        %v2463 = vld [vmem:[%s2374 + $0x2c0] sm:$0xff]
        %v2464 = vld [vmem:[%s2374 + $0x2c8] sm:$0xff]
        %v2465 = vld [vmem:[%s2374 + $0x2d0] sm:$0xff]
        %v2466 = vld [vmem:[%s2374 + $0x2d8] sm:$0xff]
        %v2467 = vld [vmem:[%s2374 + $0x2e0] sm:$0xff]
        %v2468 = vld [vmem:[%s2374 + $0x2e8] sm:$0xff]
        %v2469 = vld [vmem:[%s2374 + $0x2f0] sm:$0xff]
        %v2470 = vld [vmem:[%s2374 + $0x2f8] sm:$0xff]
        %v2471 = vld [vmem:[%s2374 + $0x300] sm:$0xff]
        %v2472 = vld [vmem:[%s2374 + $0x308] sm:$0xff]
        %v2473 = vld [vmem:[%s2374 + $0x310] sm:$0xff]
        %v2474 = vld [vmem:[%s2374 + $0x318] sm:$0xff]
        %v2475 = vld [vmem:[%s2374 + $0x320] sm:$0xff]
        %v2476 = vld [vmem:[%s2374 + $0x328] sm:$0xff]
        %v2477 = vld [vmem:[%s2374 + $0x330] sm:$0xff]
        %v2478 = vld [vmem:[%s2374 + $0x338] sm:$0xff]
        %v2479 = vld [vmem:[%s2374 + $0x340] sm:$0xff]
        %v2480 = vld [vmem:[%s2374 + $0x348] sm:$0xff]
        %v2481 = vld [vmem:[%s2374 + $0x350] sm:$0xff]
        %v2482 = vld [vmem:[%s2374 + $0x358] sm:$0xff]
        %v2483 = vld [vmem:[%s2374 + $0x360] sm:$0xff]
        %v2484 = vld [vmem:[%s2374 + $0x368] sm:$0xff]
        %v2485 = vld [vmem:[%s2374 + $0x370] sm:$0xff]
        %v2486 = vld [vmem:[%s2374 + $0x378] sm:$0xff]
        %v2487 = vld [vmem:[%s2374 + $0x380] sm:$0xff]
        %v2488 = vld [vmem:[%s2374 + $0x388] sm:$0xff]
        %v2489 = vld [vmem:[%s2374 + $0x390] sm:$0xff]
        %v2490 = vld [vmem:[%s2374 + $0x398] sm:$0xff]
        %v2491 = vld [vmem:[%s2374 + $0x3a0] sm:$0xff]
        %v2492 = vld [vmem:[%s2374 + $0x3a8] sm:$0xff]
        %v2493 = vld [vmem:[%s2374 + $0x3b0] sm:$0xff]
        %v2494 = vld [vmem:[%s2374 + $0x3b8] sm:$0xff]
        %v2495 = vld [vmem:[%s2374 + $0x3c0] sm:$0xff]
        %v2496 = vld [vmem:[%s2374 + $0x3c8] sm:$0xff]
        %v2497 = vld [vmem:[%s2374 + $0x3d0] sm:$0xff]
        %v2498 = vld [vmem:[%s2374 + $0x3d8] sm:$0xff]
        %v2499 = vld [vmem:[%s2374 + $0x3e0] sm:$0xff]
        %v2500 = vld [vmem:[%s2374 + $0x3e8] sm:$0xff]
        %v2501 = vld [vmem:[%s2374 + $0x3f0] sm:$0xff]
        %v2502 = vld [vmem:[%s2374 + $0x3f8] sm:$0xff]
        %v2503 = vmax.f32 %v2246, %v2375
        %v2504 = vmax.f32 %v2247, %v2376
        %v2505 = vmax.f32 %v2248, %v2377
        %v2506 = vmax.f32 %v2249, %v2378
        %v2507 = vmax.f32 %v2250, %v2379
        %v2508 = vmax.f32 %v2251, %v2380
        %v2509 = vmax.f32 %v2252, %v2381
        %v2510 = vmax.f32 %v2253, %v2382
        %v2511 = vmax.f32 %v2254, %v2383
        %v2512 = vmax.f32 %v2255, %v2384
        %v2513 = vmax.f32 %v2256, %v2385
        %v2514 = vmax.f32 %v2257, %v2386
        %v2515 = vmax.f32 %v2258, %v2387
        %v2516 = vmax.f32 %v2259, %v2388
        %v2517 = vmax.f32 %v2260, %v2389
        %v2518 = vmax.f32 %v2261, %v2390
        %v2519 = vmax.f32 %v2262, %v2391
        %v2520 = vmax.f32 %v2263, %v2392
        %v2521 = vmax.f32 %v2264, %v2393
        %v2522 = vmax.f32 %v2265, %v2394
        %v2523 = vmax.f32 %v2266, %v2395
        %v2524 = vmax.f32 %v2267, %v2396
        %v2525 = vmax.f32 %v2268, %v2397
        %v2526 = vmax.f32 %v2269, %v2398
        %v2527 = vmax.f32 %v2270, %v2399
        %v2528 = vmax.f32 %v2271, %v2400
        %v2529 = vmax.f32 %v2272, %v2401
        %v2530 = vmax.f32 %v2273, %v2402
        %v2531 = vmax.f32 %v2274, %v2403
        %v2532 = vmax.f32 %v2275, %v2404
        %v2533 = vmax.f32 %v2276, %v2405
        %v2534 = vmax.f32 %v2277, %v2406
        %v2535 = vmax.f32 %v2278, %v2407
        %v2536 = vmax.f32 %v2279, %v2408
        %v2537 = vmax.f32 %v2280, %v2409
        %v2538 = vmax.f32 %v2281, %v2410
        %v2539 = vmax.f32 %v2282, %v2411
        %v2540 = vmax.f32 %v2283, %v2412
        %v2541 = vmax.f32 %v2284, %v2413
        %v2542 = vmax.f32 %v2285, %v2414
        %v2543 = vmax.f32 %v2286, %v2415
        %v2544 = vmax.f32 %v2287, %v2416
        %v2545 = vmax.f32 %v2288, %v2417
        %v2546 = vmax.f32 %v2289, %v2418
        %v2547 = vmax.f32 %v2290, %v2419
        %v2548 = vmax.f32 %v2291, %v2420
        %v2549 = vmax.f32 %v2292, %v2421
        %v2550 = vmax.f32 %v2293, %v2422
        %v2551 = vmax.f32 %v2294, %v2423
        %v2552 = vmax.f32 %v2295, %v2424
        %v2553 = vmax.f32 %v2296, %v2425
        %v2554 = vmax.f32 %v2297, %v2426
        %v2555 = vmax.f32 %v2298, %v2427
        %v2556 = vmax.f32 %v2299, %v2428
        %v2557 = vmax.f32 %v2300, %v2429
        %v2558 = vmax.f32 %v2301, %v2430
        %v2559 = vmax.f32 %v2302, %v2431
        %v2560 = vmax.f32 %v2303, %v2432
        %v2561 = vmax.f32 %v2304, %v2433
        %v2562 = vmax.f32 %v2305, %v2434
        %v2563 = vmax.f32 %v2306, %v2435
        %v2564 = vmax.f32 %v2307, %v2436
        %v2565 = vmax.f32 %v2308, %v2437
        %v2566 = vmax.f32 %v2309, %v2438
        %v2567 = vmax.f32 %v2310, %v2439
        %v2568 = vmax.f32 %v2311, %v2440
        %v2569 = vmax.f32 %v2312, %v2441
        %v2570 = vmax.f32 %v2313, %v2442
        %v2571 = vmax.f32 %v2314, %v2443
        %v2572 = vmax.f32 %v2315, %v2444
        %v2573 = vmax.f32 %v2316, %v2445
        %v2574 = vmax.f32 %v2317, %v2446
        %v2575 = vmax.f32 %v2318, %v2447
        %v2576 = vmax.f32 %v2319, %v2448
        %v2577 = vmax.f32 %v2320, %v2449
        %v2578 = vmax.f32 %v2321, %v2450
        %v2579 = vmax.f32 %v2322, %v2451
        %v2580 = vmax.f32 %v2323, %v2452
        %v2581 = vmax.f32 %v2324, %v2453
        %v2582 = vmax.f32 %v2325, %v2454
        %v2583 = vmax.f32 %v2326, %v2455
        %v2584 = vmax.f32 %v2327, %v2456
        %v2585 = vmax.f32 %v2328, %v2457
        %v2586 = vmax.f32 %v2329, %v2458
        %v2587 = vmax.f32 %v2330, %v2459
        %v2588 = vmax.f32 %v2331, %v2460
        %v2589 = vmax.f32 %v2332, %v2461
        %v2590 = vmax.f32 %v2333, %v2462
        %v2591 = vmax.f32 %v2334, %v2463
        %v2592 = vmax.f32 %v2335, %v2464
        %v2593 = vmax.f32 %v2336, %v2465
        %v2594 = vmax.f32 %v2337, %v2466
        %v2595 = vmax.f32 %v2338, %v2467
        %v2596 = vmax.f32 %v2339, %v2468
        %v2597 = vmax.f32 %v2340, %v2469
        %v2598 = vmax.f32 %v2341, %v2470
        %v2599 = vmax.f32 %v2342, %v2471
        %v2600 = vmax.f32 %v2343, %v2472
        %v2601 = vmax.f32 %v2344, %v2473
        %v2602 = vmax.f32 %v2345, %v2474
        %v2603 = vmax.f32 %v2346, %v2475
        %v2604 = vmax.f32 %v2347, %v2476
        %v2605 = vmax.f32 %v2348, %v2477
        %v2606 = vmax.f32 %v2349, %v2478
        %v2607 = vmax.f32 %v2350, %v2479
        %v2608 = vmax.f32 %v2351, %v2480
        %v2609 = vmax.f32 %v2352, %v2481
        %v2610 = vmax.f32 %v2353, %v2482
        %v2611 = vmax.f32 %v2354, %v2483
        %v2612 = vmax.f32 %v2355, %v2484
        %v2613 = vmax.f32 %v2356, %v2485
        %v2614 = vmax.f32 %v2357, %v2486
        %v2615 = vmax.f32 %v2358, %v2487
        %v2616 = vmax.f32 %v2359, %v2488
        %v2617 = vmax.f32 %v2360, %v2489
        %v2618 = vmax.f32 %v2361, %v2490
        %v2619 = vmax.f32 %v2362, %v2491
        %v2620 = vmax.f32 %v2363, %v2492
        %v2621 = vmax.f32 %v2364, %v2493
        %v2622 = vmax.f32 %v2365, %v2494
        %v2623 = vmax.f32 %v2366, %v2495
        %v2624 = vmax.f32 %v2367, %v2496
        %v2625 = vmax.f32 %v2368, %v2497
        %v2626 = vmax.f32 %v2369, %v2498
        %v2627 = vmax.f32 %v2370, %v2499
        %v2628 = vmax.f32 %v2371, %v2500
        %v2629 = vmax.f32 %v2372, %v2501
        %v2630 = vmax.f32 %v2373, %v2502
        %v2631 = vrot.slane %v2503, 7
        %v2632 = vrot.slane %v2507, 7
        %v2633 = vrot.slane %v2511, 7
        %v2634 = vrot.slane %v2515, 7
        %v2635 = vrot.slane %v2519, 7
        %v2636 = vrot.slane %v2523, 7
        %v2637 = vrot.slane %v2527, 7
        %v2638 = vrot.slane %v2531, 7
        %v2639 = vrot.slane %v2535, 7
        %v2640 = vrot.slane %v2539, 7
        %v2641 = vrot.slane %v2543, 7
        %v2642 = vrot.slane %v2547, 7
        %v2643 = vrot.slane %v2551, 7
        %v2644 = vrot.slane %v2555, 7
        %v2645 = vrot.slane %v2559, 7
        %v2646 = vrot.slane %v2563, 7
        %v2647 = vrot.slane %v2567, 7
        %v2648 = vrot.slane %v2571, 7
        %v2649 = vrot.slane %v2575, 7
        %v2650 = vrot.slane %v2579, 7
        %v2651 = vrot.slane %v2583, 7
        %v2652 = vrot.slane %v2587, 7
        %v2653 = vrot.slane %v2591, 7
        %v2654 = vrot.slane %v2595, 7
        %v2655 = vrot.slane %v2599, 7
        %v2656 = vrot.slane %v2603, 7
        %v2657 = vrot.slane %v2607, 7
        %v2658 = vrot.slane %v2611, 7
        %v2659 = vrot.slane %v2615, 7
        %v2660 = vrot.slane %v2619, 7
        %v2661 = vrot.slane %v2623, 7
        %v2662 = vrot.slane %v2627, 7
        %v2663 = vrot.slane %v2504, 7
        %v2664 = vrot.slane %v2508, 7
        %v2665 = vrot.slane %v2512, 7
        %v2666 = vrot.slane %v2516, 7
        %v2667 = vrot.slane %v2520, 7
        %v2668 = vrot.slane %v2524, 7
        %v2669 = vrot.slane %v2528, 7
        %v2670 = vrot.slane %v2532, 7
        %v2671 = vrot.slane %v2536, 7
        %v2672 = vrot.slane %v2540, 7
        %v2673 = vrot.slane %v2544, 7
        %v2674 = vrot.slane %v2548, 7
        %v2675 = vrot.slane %v2552, 7
        %v2676 = vrot.slane %v2556, 7
        %v2677 = vrot.slane %v2560, 7
        %v2678 = vrot.slane %v2564, 7
        %v2679 = vrot.slane %v2568, 7
        %v2680 = vrot.slane %v2572, 7
        %v2681 = vrot.slane %v2576, 7
        %v2682 = vrot.slane %v2580, 7
        %v2683 = vrot.slane %v2584, 7
        %v2684 = vrot.slane %v2588, 7
        %v2685 = vrot.slane %v2592, 7
        %v2686 = vrot.slane %v2596, 7
        %v2687 = vrot.slane %v2600, 7
        %v2688 = vrot.slane %v2604, 7
        %v2689 = vrot.slane %v2608, 7
        %v2690 = vrot.slane %v2612, 7
        %v2691 = vrot.slane %v2616, 7
        %v2692 = vrot.slane %v2620, 7
        %v2693 = vrot.slane %v2624, 7
        %v2694 = vrot.slane %v2628, 7
        %v2695 = vrot.slane %v2505, 7
        %v2696 = vrot.slane %v2509, 7
        %v2697 = vrot.slane %v2513, 7
        %v2698 = vrot.slane %v2517, 7
        %v2699 = vrot.slane %v2521, 7
        %v2700 = vrot.slane %v2525, 7
        %v2701 = vrot.slane %v2529, 7
        %v2702 = vrot.slane %v2533, 7
        %v2703 = vrot.slane %v2537, 7
        %v2704 = vrot.slane %v2541, 7
        %v2705 = vrot.slane %v2545, 7
        %v2706 = vrot.slane %v2549, 7
        %v2707 = vrot.slane %v2553, 7
        %v2708 = vrot.slane %v2557, 7
        %v2709 = vrot.slane %v2561, 7
        %v2710 = vrot.slane %v2565, 7
        %v2711 = vrot.slane %v2569, 7
        %v2712 = vrot.slane %v2573, 7
        %v2713 = vrot.slane %v2577, 7
        %v2714 = vrot.slane %v2581, 7
        %v2715 = vrot.slane %v2585, 7
        %v2716 = vrot.slane %v2589, 7
        %v2717 = vrot.slane %v2593, 7
        %v2718 = vrot.slane %v2597, 7
        %v2719 = vrot.slane %v2601, 7
        %v2720 = vrot.slane %v2605, 7
        %v2721 = vrot.slane %v2609, 7
        %v2722 = vrot.slane %v2613, 7
        %v2723 = vrot.slane %v2617, 7
        %v2724 = vrot.slane %v2621, 7
        %v2725 = vrot.slane %v2625, 7
        %v2726 = vrot.slane %v2629, 7
        %v2727 = vlaneseq
        %v2728 = vshrl.u32 %v2727, 7
        %vm2729 = vcmp.lt.s32.totalorder %v2728, 1
        %v2730 = vsel %vm2729, %v2663, %v2695
        %v2731 = vsel %vm2729, %v2664, %v2696
        %v2732 = vsel %vm2729, %v2665, %v2697
        %v2733 = vsel %vm2729, %v2666, %v2698
        %v2734 = vsel %vm2729, %v2667, %v2699
        %v2735 = vsel %vm2729, %v2668, %v2700
        %v2736 = vsel %vm2729, %v2669, %v2701
        %v2737 = vsel %vm2729, %v2670, %v2702
        %v2738 = vsel %vm2729, %v2671, %v2703
        %v2739 = vsel %vm2729, %v2672, %v2704
        %v2740 = vsel %vm2729, %v2673, %v2705
        %v2741 = vsel %vm2729, %v2674, %v2706
        %v2742 = vsel %vm2729, %v2675, %v2707
        %v2743 = vsel %vm2729, %v2676, %v2708
        %v2744 = vsel %vm2729, %v2677, %v2709
        %v2745 = vsel %vm2729, %v2678, %v2710
        %v2746 = vsel %vm2729, %v2679, %v2711
        %v2747 = vsel %vm2729, %v2680, %v2712
        %v2748 = vsel %vm2729, %v2681, %v2713
        %v2749 = vsel %vm2729, %v2682, %v2714
        %v2750 = vsel %vm2729, %v2683, %v2715
        %v2751 = vsel %vm2729, %v2684, %v2716
        %v2752 = vsel %vm2729, %v2685, %v2717
        %v2753 = vsel %vm2729, %v2686, %v2718
        %v2754 = vsel %vm2729, %v2687, %v2719
        %v2755 = vsel %vm2729, %v2688, %v2720
        %v2756 = vsel %vm2729, %v2689, %v2721
        %v2757 = vsel %vm2729, %v2690, %v2722
        %v2758 = vsel %vm2729, %v2691, %v2723
        %v2759 = vsel %vm2729, %v2692, %v2724
        %v2760 = vsel %vm2729, %v2693, %v2725
        %v2761 = vsel %vm2729, %v2694, %v2726
        %v2762 = vsel %vm2729, %v2631, %v2663
        %v2763 = vsel %vm2729, %v2632, %v2664
        %v2764 = vsel %vm2729, %v2633, %v2665
        %v2765 = vsel %vm2729, %v2634, %v2666
        %v2766 = vsel %vm2729, %v2635, %v2667
        %v2767 = vsel %vm2729, %v2636, %v2668
        %v2768 = vsel %vm2729, %v2637, %v2669
        %v2769 = vsel %vm2729, %v2638, %v2670
        %v2770 = vsel %vm2729, %v2639, %v2671
        %v2771 = vsel %vm2729, %v2640, %v2672
        %v2772 = vsel %vm2729, %v2641, %v2673
        %v2773 = vsel %vm2729, %v2642, %v2674
        %v2774 = vsel %vm2729, %v2643, %v2675
        %v2775 = vsel %vm2729, %v2644, %v2676
        %v2776 = vsel %vm2729, %v2645, %v2677
        %v2777 = vsel %vm2729, %v2646, %v2678
        %v2778 = vsel %vm2729, %v2647, %v2679
        %v2779 = vsel %vm2729, %v2648, %v2680
        %v2780 = vsel %vm2729, %v2649, %v2681
        %v2781 = vsel %vm2729, %v2650, %v2682
        %v2782 = vsel %vm2729, %v2651, %v2683
        %v2783 = vsel %vm2729, %v2652, %v2684
        %v2784 = vsel %vm2729, %v2653, %v2685
        %v2785 = vsel %vm2729, %v2654, %v2686
        %v2786 = vsel %vm2729, %v2655, %v2687
        %v2787 = vsel %vm2729, %v2656, %v2688
        %v2788 = vsel %vm2729, %v2657, %v2689
        %v2789 = vsel %vm2729, %v2658, %v2690
        %v2790 = vsel %vm2729, %v2659, %v2691
        %v2791 = vsel %vm2729, %v2660, %v2692
        %v2792 = vsel %vm2729, %v2661, %v2693
        %v2793 = vsel %vm2729, %v2662, %v2694
        %v2794 = vmax.f32 %v2504, %v2762
        %v2795 = vmax.f32 %v2505, %v2730
        %v2796 = vmax.f32 %v2508, %v2763
        %v2797 = vmax.f32 %v2509, %v2731
        %v2798 = vmax.f32 %v2512, %v2764
        %v2799 = vmax.f32 %v2513, %v2732
        %v2800 = vmax.f32 %v2516, %v2765
        %v2801 = vmax.f32 %v2517, %v2733
        %v2802 = vmax.f32 %v2520, %v2766
        %v2803 = vmax.f32 %v2521, %v2734
        %v2804 = vmax.f32 %v2524, %v2767
        %v2805 = vmax.f32 %v2525, %v2735
        %v2806 = vmax.f32 %v2528, %v2768
        %v2807 = vmax.f32 %v2529, %v2736
        %v2808 = vmax.f32 %v2532, %v2769
        %v2809 = vmax.f32 %v2533, %v2737
        %v2810 = vmax.f32 %v2536, %v2770
        %v2811 = vmax.f32 %v2537, %v2738
        %v2812 = vmax.f32 %v2540, %v2771
        %v2813 = vmax.f32 %v2541, %v2739
        %v2814 = vmax.f32 %v2544, %v2772
        %v2815 = vmax.f32 %v2545, %v2740
        %v2816 = vmax.f32 %v2548, %v2773
        %v2817 = vmax.f32 %v2549, %v2741
        %v2818 = vmax.f32 %v2552, %v2774
        %v2819 = vmax.f32 %v2553, %v2742
        %v2820 = vmax.f32 %v2556, %v2775
        %v2821 = vmax.f32 %v2557, %v2743
        %v2822 = vmax.f32 %v2560, %v2776
        %v2823 = vmax.f32 %v2561, %v2744
        %v2824 = vmax.f32 %v2564, %v2777
        %v2825 = vmax.f32 %v2565, %v2745
        %v2826 = vmax.f32 %v2568, %v2778
        %v2827 = vmax.f32 %v2569, %v2746
        %v2828 = vmax.f32 %v2572, %v2779
        %v2829 = vmax.f32 %v2573, %v2747
        %v2830 = vmax.f32 %v2576, %v2780
        %v2831 = vmax.f32 %v2577, %v2748
        %v2832 = vmax.f32 %v2580, %v2781
        %v2833 = vmax.f32 %v2581, %v2749
        %v2834 = vmax.f32 %v2584, %v2782
        %v2835 = vmax.f32 %v2585, %v2750
        %v2836 = vmax.f32 %v2588, %v2783
        %v2837 = vmax.f32 %v2589, %v2751
        %v2838 = vmax.f32 %v2592, %v2784
        %v2839 = vmax.f32 %v2593, %v2752
        %v2840 = vmax.f32 %v2596, %v2785
        %v2841 = vmax.f32 %v2597, %v2753
        %v2842 = vmax.f32 %v2600, %v2786
        %v2843 = vmax.f32 %v2601, %v2754
        %v2844 = vmax.f32 %v2604, %v2787
        %v2845 = vmax.f32 %v2605, %v2755
        %v2846 = vmax.f32 %v2608, %v2788
        %v2847 = vmax.f32 %v2609, %v2756
        %v2848 = vmax.f32 %v2612, %v2789
        %v2849 = vmax.f32 %v2613, %v2757
        %v2850 = vmax.f32 %v2616, %v2790
        %v2851 = vmax.f32 %v2617, %v2758
        %v2852 = vmax.f32 %v2620, %v2791
        %v2853 = vmax.f32 %v2621, %v2759
        %v2854 = vmax.f32 %v2624, %v2792
        %v2855 = vmax.f32 %v2625, %v2760
        %v2856 = vmax.f32 %v2628, %v2793
        %v2857 = vmax.f32 %v2629, %v2761
        %v2858 = vrot.slane %v2504, 1
        %v2859 = vrot.slane %v2508, 1
        %v2860 = vrot.slane %v2512, 1
        %v2861 = vrot.slane %v2516, 1
        %v2862 = vrot.slane %v2520, 1
        %v2863 = vrot.slane %v2524, 1
        %v2864 = vrot.slane %v2528, 1
        %v2865 = vrot.slane %v2532, 1
        %v2866 = vrot.slane %v2536, 1
        %v2867 = vrot.slane %v2540, 1
        %v2868 = vrot.slane %v2544, 1
        %v2869 = vrot.slane %v2548, 1
        %v2870 = vrot.slane %v2552, 1
        %v2871 = vrot.slane %v2556, 1
        %v2872 = vrot.slane %v2560, 1
        %v2873 = vrot.slane %v2564, 1
        %v2874 = vrot.slane %v2568, 1
        %v2875 = vrot.slane %v2572, 1
        %v2876 = vrot.slane %v2576, 1
        %v2877 = vrot.slane %v2580, 1
        %v2878 = vrot.slane %v2584, 1
        %v2879 = vrot.slane %v2588, 1
        %v2880 = vrot.slane %v2592, 1
        %v2881 = vrot.slane %v2596, 1
        %v2882 = vrot.slane %v2600, 1
        %v2883 = vrot.slane %v2604, 1
        %v2884 = vrot.slane %v2608, 1
        %v2885 = vrot.slane %v2612, 1
        %v2886 = vrot.slane %v2616, 1
        %v2887 = vrot.slane %v2620, 1
        %v2888 = vrot.slane %v2624, 1
        %v2889 = vrot.slane %v2628, 1
        %v2890 = vrot.slane %v2505, 1
        %v2891 = vrot.slane %v2509, 1
        %v2892 = vrot.slane %v2513, 1
        %v2893 = vrot.slane %v2517, 1
        %v2894 = vrot.slane %v2521, 1
        %v2895 = vrot.slane %v2525, 1
        %v2896 = vrot.slane %v2529, 1
        %v2897 = vrot.slane %v2533, 1
        %v2898 = vrot.slane %v2537, 1
        %v2899 = vrot.slane %v2541, 1
        %v2900 = vrot.slane %v2545, 1
        %v2901 = vrot.slane %v2549, 1
        %v2902 = vrot.slane %v2553, 1
        %v2903 = vrot.slane %v2557, 1
        %v2904 = vrot.slane %v2561, 1
        %v2905 = vrot.slane %v2565, 1
        %v2906 = vrot.slane %v2569, 1
        %v2907 = vrot.slane %v2573, 1
        %v2908 = vrot.slane %v2577, 1
        %v2909 = vrot.slane %v2581, 1
        %v2910 = vrot.slane %v2585, 1
        %v2911 = vrot.slane %v2589, 1
        %v2912 = vrot.slane %v2593, 1
        %v2913 = vrot.slane %v2597, 1
        %v2914 = vrot.slane %v2601, 1
        %v2915 = vrot.slane %v2605, 1
        %v2916 = vrot.slane %v2609, 1
        %v2917 = vrot.slane %v2613, 1
        %v2918 = vrot.slane %v2617, 1
        %v2919 = vrot.slane %v2621, 1
        %v2920 = vrot.slane %v2625, 1
        %v2921 = vrot.slane %v2629, 1
        %v2922 = vrot.slane %v2506, 1
        %v2923 = vrot.slane %v2510, 1
        %v2924 = vrot.slane %v2514, 1
        %v2925 = vrot.slane %v2518, 1
        %v2926 = vrot.slane %v2522, 1
        %v2927 = vrot.slane %v2526, 1
        %v2928 = vrot.slane %v2530, 1
        %v2929 = vrot.slane %v2534, 1
        %v2930 = vrot.slane %v2538, 1
        %v2931 = vrot.slane %v2542, 1
        %v2932 = vrot.slane %v2546, 1
        %v2933 = vrot.slane %v2550, 1
        %v2934 = vrot.slane %v2554, 1
        %v2935 = vrot.slane %v2558, 1
        %v2936 = vrot.slane %v2562, 1
        %v2937 = vrot.slane %v2566, 1
        %v2938 = vrot.slane %v2570, 1
        %v2939 = vrot.slane %v2574, 1
        %v2940 = vrot.slane %v2578, 1
        %v2941 = vrot.slane %v2582, 1
        %v2942 = vrot.slane %v2586, 1
        %v2943 = vrot.slane %v2590, 1
        %v2944 = vrot.slane %v2594, 1
        %v2945 = vrot.slane %v2598, 1
        %v2946 = vrot.slane %v2602, 1
        %v2947 = vrot.slane %v2606, 1
        %v2948 = vrot.slane %v2610, 1
        %v2949 = vrot.slane %v2614, 1
        %v2950 = vrot.slane %v2618, 1
        %v2951 = vrot.slane %v2622, 1
        %v2952 = vrot.slane %v2626, 1
        %v2953 = vrot.slane %v2630, 1
        %vm2954 = vcmp.lt.s32.totalorder %v2728, 7
        %v2955 = vsel %vm2954, %v2890, %v2922
        %v2956 = vsel %vm2954, %v2891, %v2923
        %v2957 = vsel %vm2954, %v2892, %v2924
        %v2958 = vsel %vm2954, %v2893, %v2925
        %v2959 = vsel %vm2954, %v2894, %v2926
        %v2960 = vsel %vm2954, %v2895, %v2927
        %v2961 = vsel %vm2954, %v2896, %v2928
        %v2962 = vsel %vm2954, %v2897, %v2929
        %v2963 = vsel %vm2954, %v2898, %v2930
        %v2964 = vsel %vm2954, %v2899, %v2931
        %v2965 = vsel %vm2954, %v2900, %v2932
        %v2966 = vsel %vm2954, %v2901, %v2933
        %v2967 = vsel %vm2954, %v2902, %v2934
        %v2968 = vsel %vm2954, %v2903, %v2935
        %v2969 = vsel %vm2954, %v2904, %v2936
        %v2970 = vsel %vm2954, %v2905, %v2937
        %v2971 = vsel %vm2954, %v2906, %v2938
        %v2972 = vsel %vm2954, %v2907, %v2939
        %v2973 = vsel %vm2954, %v2908, %v2940
        %v2974 = vsel %vm2954, %v2909, %v2941
        %v2975 = vsel %vm2954, %v2910, %v2942
        %v2976 = vsel %vm2954, %v2911, %v2943
        %v2977 = vsel %vm2954, %v2912, %v2944
        %v2978 = vsel %vm2954, %v2913, %v2945
        %v2979 = vsel %vm2954, %v2914, %v2946
        %v2980 = vsel %vm2954, %v2915, %v2947
        %v2981 = vsel %vm2954, %v2916, %v2948
        %v2982 = vsel %vm2954, %v2917, %v2949
        %v2983 = vsel %vm2954, %v2918, %v2950
        %v2984 = vsel %vm2954, %v2919, %v2951
        %v2985 = vsel %vm2954, %v2920, %v2952
        %v2986 = vsel %vm2954, %v2921, %v2953
        %v2987 = vsel %vm2954, %v2858, %v2890
        %v2988 = vsel %vm2954, %v2859, %v2891
        %v2989 = vsel %vm2954, %v2860, %v2892
        %v2990 = vsel %vm2954, %v2861, %v2893
        %v2991 = vsel %vm2954, %v2862, %v2894
        %v2992 = vsel %vm2954, %v2863, %v2895
        %v2993 = vsel %vm2954, %v2864, %v2896
        %v2994 = vsel %vm2954, %v2865, %v2897
        %v2995 = vsel %vm2954, %v2866, %v2898
        %v2996 = vsel %vm2954, %v2867, %v2899
        %v2997 = vsel %vm2954, %v2868, %v2900
        %v2998 = vsel %vm2954, %v2869, %v2901
        %v2999 = vsel %vm2954, %v2870, %v2902
        %v3000 = vsel %vm2954, %v2871, %v2903
        %v3001 = vsel %vm2954, %v2872, %v2904
        %v3002 = vsel %vm2954, %v2873, %v2905
        %v3003 = vsel %vm2954, %v2874, %v2906
        %v3004 = vsel %vm2954, %v2875, %v2907
        %v3005 = vsel %vm2954, %v2876, %v2908
        %v3006 = vsel %vm2954, %v2877, %v2909
        %v3007 = vsel %vm2954, %v2878, %v2910
        %v3008 = vsel %vm2954, %v2879, %v2911
        %v3009 = vsel %vm2954, %v2880, %v2912
        %v3010 = vsel %vm2954, %v2881, %v2913
        %v3011 = vsel %vm2954, %v2882, %v2914
        %v3012 = vsel %vm2954, %v2883, %v2915
        %v3013 = vsel %vm2954, %v2884, %v2916
        %v3014 = vsel %vm2954, %v2885, %v2917
        %v3015 = vsel %vm2954, %v2886, %v2918
        %v3016 = vsel %vm2954, %v2887, %v2919
        %v3017 = vsel %vm2954, %v2888, %v2920
        %v3018 = vsel %vm2954, %v2889, %v2921
        %v3019 = vmax.f32 %v2794, %v2987
        %v3020 = vmax.f32 %v2795, %v2955
        %v3021 = vmax.f32 %v2796, %v2988
        %v3022 = vmax.f32 %v2797, %v2956
        %v3023 = vmax.f32 %v2798, %v2989
        %v3024 = vmax.f32 %v2799, %v2957
        %v3025 = vmax.f32 %v2800, %v2990
        %v3026 = vmax.f32 %v2801, %v2958
        %v3027 = vmax.f32 %v2802, %v2991
        %v3028 = vmax.f32 %v2803, %v2959
        %v3029 = vmax.f32 %v2804, %v2992
        %v3030 = vmax.f32 %v2805, %v2960
        %v3031 = vmax.f32 %v2806, %v2993
        %v3032 = vmax.f32 %v2807, %v2961
        %v3033 = vmax.f32 %v2808, %v2994
        %v3034 = vmax.f32 %v2809, %v2962
        %v3035 = vmax.f32 %v2810, %v2995
        %v3036 = vmax.f32 %v2811, %v2963
        %v3037 = vmax.f32 %v2812, %v2996
        %v3038 = vmax.f32 %v2813, %v2964
        %v3039 = vmax.f32 %v2814, %v2997
        %v3040 = vmax.f32 %v2815, %v2965
        %v3041 = vmax.f32 %v2816, %v2998
        %v3042 = vmax.f32 %v2817, %v2966
        %v3043 = vmax.f32 %v2818, %v2999
        %v3044 = vmax.f32 %v2819, %v2967
        %v3045 = vmax.f32 %v2820, %v3000
        %v3046 = vmax.f32 %v2821, %v2968
        %v3047 = vmax.f32 %v2822, %v3001
        %v3048 = vmax.f32 %v2823, %v2969
        %v3049 = vmax.f32 %v2824, %v3002
        %v3050 = vmax.f32 %v2825, %v2970
        %v3051 = vmax.f32 %v2826, %v3003
        %v3052 = vmax.f32 %v2827, %v2971
        %v3053 = vmax.f32 %v2828, %v3004
        %v3054 = vmax.f32 %v2829, %v2972
        %v3055 = vmax.f32 %v2830, %v3005
        %v3056 = vmax.f32 %v2831, %v2973
        %v3057 = vmax.f32 %v2832, %v3006
        %v3058 = vmax.f32 %v2833, %v2974
        %v3059 = vmax.f32 %v2834, %v3007
        %v3060 = vmax.f32 %v2835, %v2975
        %v3061 = vmax.f32 %v2836, %v3008
        %v3062 = vmax.f32 %v2837, %v2976
        %v3063 = vmax.f32 %v2838, %v3009
        %v3064 = vmax.f32 %v2839, %v2977
        %v3065 = vmax.f32 %v2840, %v3010
        %v3066 = vmax.f32 %v2841, %v2978
        %v3067 = vmax.f32 %v2842, %v3011
        %v3068 = vmax.f32 %v2843, %v2979
        %v3069 = vmax.f32 %v2844, %v3012
        %v3070 = vmax.f32 %v2845, %v2980
        %v3071 = vmax.f32 %v2846, %v3013
        %v3072 = vmax.f32 %v2847, %v2981
        %v3073 = vmax.f32 %v2848, %v3014
        %v3074 = vmax.f32 %v2849, %v2982
        %v3075 = vmax.f32 %v2850, %v3015
        %v3076 = vmax.f32 %v2851, %v2983
        %v3077 = vmax.f32 %v2852, %v3016
        %v3078 = vmax.f32 %v2853, %v2984
        %v3079 = vmax.f32 %v2854, %v3017
        %v3080 = vmax.f32 %v2855, %v2985
        %v3081 = vmax.f32 %v2856, %v3018
        %v3082 = vmax.f32 %v2857, %v2986
        %v3083 = vrot.slane %v2503, 6
        %v3084 = vrot.slane %v2507, 6
        %v3085 = vrot.slane %v2511, 6
        %v3086 = vrot.slane %v2515, 6
        %v3087 = vrot.slane %v2519, 6
        %v3088 = vrot.slane %v2523, 6
        %v3089 = vrot.slane %v2527, 6
        %v3090 = vrot.slane %v2531, 6
        %v3091 = vrot.slane %v2535, 6
        %v3092 = vrot.slane %v2539, 6
        %v3093 = vrot.slane %v2543, 6
        %v3094 = vrot.slane %v2547, 6
        %v3095 = vrot.slane %v2551, 6
        %v3096 = vrot.slane %v2555, 6
        %v3097 = vrot.slane %v2559, 6
        %v3098 = vrot.slane %v2563, 6
        %v3099 = vrot.slane %v2567, 6
        %v3100 = vrot.slane %v2571, 6
        %v3101 = vrot.slane %v2575, 6
        %v3102 = vrot.slane %v2579, 6
        %v3103 = vrot.slane %v2583, 6
        %v3104 = vrot.slane %v2587, 6
        %v3105 = vrot.slane %v2591, 6
        %v3106 = vrot.slane %v2595, 6
        %v3107 = vrot.slane %v2599, 6
        %v3108 = vrot.slane %v2603, 6
        %v3109 = vrot.slane %v2607, 6
        %v3110 = vrot.slane %v2611, 6
        %v3111 = vrot.slane %v2615, 6
        %v3112 = vrot.slane %v2619, 6
        %v3113 = vrot.slane %v2623, 6
        %v3114 = vrot.slane %v2627, 6
        %v3115 = vrot.slane %v2504, 6
        %v3116 = vrot.slane %v2508, 6
        %v3117 = vrot.slane %v2512, 6
        %v3118 = vrot.slane %v2516, 6
        %v3119 = vrot.slane %v2520, 6
        %v3120 = vrot.slane %v2524, 6
        %v3121 = vrot.slane %v2528, 6
        %v3122 = vrot.slane %v2532, 6
        %v3123 = vrot.slane %v2536, 6
        %v3124 = vrot.slane %v2540, 6
        %v3125 = vrot.slane %v2544, 6
        %v3126 = vrot.slane %v2548, 6
        %v3127 = vrot.slane %v2552, 6
        %v3128 = vrot.slane %v2556, 6
        %v3129 = vrot.slane %v2560, 6
        %v3130 = vrot.slane %v2564, 6
        %v3131 = vrot.slane %v2568, 6
        %v3132 = vrot.slane %v2572, 6
        %v3133 = vrot.slane %v2576, 6
        %v3134 = vrot.slane %v2580, 6
        %v3135 = vrot.slane %v2584, 6
        %v3136 = vrot.slane %v2588, 6
        %v3137 = vrot.slane %v2592, 6
        %v3138 = vrot.slane %v2596, 6
        %v3139 = vrot.slane %v2600, 6
        %v3140 = vrot.slane %v2604, 6
        %v3141 = vrot.slane %v2608, 6
        %v3142 = vrot.slane %v2612, 6
        %v3143 = vrot.slane %v2616, 6
        %v3144 = vrot.slane %v2620, 6
        %v3145 = vrot.slane %v2624, 6
        %v3146 = vrot.slane %v2628, 6
        %v3147 = vrot.slane %v2505, 6
        %v3148 = vrot.slane %v2509, 6
        %v3149 = vrot.slane %v2513, 6
        %v3150 = vrot.slane %v2517, 6
        %v3151 = vrot.slane %v2521, 6
        %v3152 = vrot.slane %v2525, 6
        %v3153 = vrot.slane %v2529, 6
        %v3154 = vrot.slane %v2533, 6
        %v3155 = vrot.slane %v2537, 6
        %v3156 = vrot.slane %v2541, 6
        %v3157 = vrot.slane %v2545, 6
        %v3158 = vrot.slane %v2549, 6
        %v3159 = vrot.slane %v2553, 6
        %v3160 = vrot.slane %v2557, 6
        %v3161 = vrot.slane %v2561, 6
        %v3162 = vrot.slane %v2565, 6
        %v3163 = vrot.slane %v2569, 6
        %v3164 = vrot.slane %v2573, 6
        %v3165 = vrot.slane %v2577, 6
        %v3166 = vrot.slane %v2581, 6
        %v3167 = vrot.slane %v2585, 6
        %v3168 = vrot.slane %v2589, 6
        %v3169 = vrot.slane %v2593, 6
        %v3170 = vrot.slane %v2597, 6
        %v3171 = vrot.slane %v2601, 6
        %v3172 = vrot.slane %v2605, 6
        %v3173 = vrot.slane %v2609, 6
        %v3174 = vrot.slane %v2613, 6
        %v3175 = vrot.slane %v2617, 6
        %v3176 = vrot.slane %v2621, 6
        %v3177 = vrot.slane %v2625, 6
        %v3178 = vrot.slane %v2629, 6
        %vm3179 = vcmp.lt.s32.totalorder %v2728, 2
        %v3180 = vsel %vm3179, %v3115, %v3147
        %v3181 = vsel %vm3179, %v3116, %v3148
        %v3182 = vsel %vm3179, %v3117, %v3149
        %v3183 = vsel %vm3179, %v3118, %v3150
        %v3184 = vsel %vm3179, %v3119, %v3151
        %v3185 = vsel %vm3179, %v3120, %v3152
        %v3186 = vsel %vm3179, %v3121, %v3153
        %v3187 = vsel %vm3179, %v3122, %v3154
        %v3188 = vsel %vm3179, %v3123, %v3155
        %v3189 = vsel %vm3179, %v3124, %v3156
        %v3190 = vsel %vm3179, %v3125, %v3157
        %v3191 = vsel %vm3179, %v3126, %v3158
        %v3192 = vsel %vm3179, %v3127, %v3159
        %v3193 = vsel %vm3179, %v3128, %v3160
        %v3194 = vsel %vm3179, %v3129, %v3161
        %v3195 = vsel %vm3179, %v3130, %v3162
        %v3196 = vsel %vm3179, %v3131, %v3163
        %v3197 = vsel %vm3179, %v3132, %v3164
        %v3198 = vsel %vm3179, %v3133, %v3165
        %v3199 = vsel %vm3179, %v3134, %v3166
        %v3200 = vsel %vm3179, %v3135, %v3167
        %v3201 = vsel %vm3179, %v3136, %v3168
        %v3202 = vsel %vm3179, %v3137, %v3169
        %v3203 = vsel %vm3179, %v3138, %v3170
        %v3204 = vsel %vm3179, %v3139, %v3171
        %v3205 = vsel %vm3179, %v3140, %v3172
        %v3206 = vsel %vm3179, %v3141, %v3173
        %v3207 = vsel %vm3179, %v3142, %v3174
        %v3208 = vsel %vm3179, %v3143, %v3175
        %v3209 = vsel %vm3179, %v3144, %v3176
        %v3210 = vsel %vm3179, %v3145, %v3177
        %v3211 = vsel %vm3179, %v3146, %v3178
        %v3212 = vsel %vm3179, %v3083, %v3115
        %v3213 = vsel %vm3179, %v3084, %v3116
        %v3214 = vsel %vm3179, %v3085, %v3117
        %v3215 = vsel %vm3179, %v3086, %v3118
        %v3216 = vsel %vm3179, %v3087, %v3119
        %v3217 = vsel %vm3179, %v3088, %v3120
        %v3218 = vsel %vm3179, %v3089, %v3121
        %v3219 = vsel %vm3179, %v3090, %v3122
        %v3220 = vsel %vm3179, %v3091, %v3123
        %v3221 = vsel %vm3179, %v3092, %v3124
        %v3222 = vsel %vm3179, %v3093, %v3125
        %v3223 = vsel %vm3179, %v3094, %v3126
        %v3224 = vsel %vm3179, %v3095, %v3127
        %v3225 = vsel %vm3179, %v3096, %v3128
        %v3226 = vsel %vm3179, %v3097, %v3129
        %v3227 = vsel %vm3179, %v3098, %v3130
        %v3228 = vsel %vm3179, %v3099, %v3131
        %v3229 = vsel %vm3179, %v3100, %v3132
        %v3230 = vsel %vm3179, %v3101, %v3133
        %v3231 = vsel %vm3179, %v3102, %v3134
        %v3232 = vsel %vm3179, %v3103, %v3135
        %v3233 = vsel %vm3179, %v3104, %v3136
        %v3234 = vsel %vm3179, %v3105, %v3137
        %v3235 = vsel %vm3179, %v3106, %v3138
        %v3236 = vsel %vm3179, %v3107, %v3139
        %v3237 = vsel %vm3179, %v3108, %v3140
        %v3238 = vsel %vm3179, %v3109, %v3141
        %v3239 = vsel %vm3179, %v3110, %v3142
        %v3240 = vsel %vm3179, %v3111, %v3143
        %v3241 = vsel %vm3179, %v3112, %v3144
        %v3242 = vsel %vm3179, %v3113, %v3145
        %v3243 = vsel %vm3179, %v3114, %v3146
        %v3244 = vmax.f32 %v3019, %v3212
        %v3245 = vmax.f32 %v3020, %v3180
        %v3246 = vmax.f32 %v3021, %v3213
        %v3247 = vmax.f32 %v3022, %v3181
        %v3248 = vmax.f32 %v3023, %v3214
        %v3249 = vmax.f32 %v3024, %v3182
        %v3250 = vmax.f32 %v3025, %v3215
        %v3251 = vmax.f32 %v3026, %v3183
        %v3252 = vmax.f32 %v3027, %v3216
        %v3253 = vmax.f32 %v3028, %v3184
        %v3254 = vmax.f32 %v3029, %v3217
        %v3255 = vmax.f32 %v3030, %v3185
        %v3256 = vmax.f32 %v3031, %v3218
        %v3257 = vmax.f32 %v3032, %v3186
        %v3258 = vmax.f32 %v3033, %v3219
        %v3259 = vmax.f32 %v3034, %v3187
        %v3260 = vmax.f32 %v3035, %v3220
        %v3261 = vmax.f32 %v3036, %v3188
        %v3262 = vmax.f32 %v3037, %v3221
        %v3263 = vmax.f32 %v3038, %v3189
        %v3264 = vmax.f32 %v3039, %v3222
        %v3265 = vmax.f32 %v3040, %v3190
        %v3266 = vmax.f32 %v3041, %v3223
        %v3267 = vmax.f32 %v3042, %v3191
        %v3268 = vmax.f32 %v3043, %v3224
        %v3269 = vmax.f32 %v3044, %v3192
        %v3270 = vmax.f32 %v3045, %v3225
        %v3271 = vmax.f32 %v3046, %v3193
        %v3272 = vmax.f32 %v3047, %v3226
        %v3273 = vmax.f32 %v3048, %v3194
        %v3274 = vmax.f32 %v3049, %v3227
        %v3275 = vmax.f32 %v3050, %v3195
        %v3276 = vmax.f32 %v3051, %v3228
        %v3277 = vmax.f32 %v3052, %v3196
        %v3278 = vmax.f32 %v3053, %v3229
        %v3279 = vmax.f32 %v3054, %v3197
        %v3280 = vmax.f32 %v3055, %v3230
        %v3281 = vmax.f32 %v3056, %v3198
        %v3282 = vmax.f32 %v3057, %v3231
        %v3283 = vmax.f32 %v3058, %v3199
        %v3284 = vmax.f32 %v3059, %v3232
        %v3285 = vmax.f32 %v3060, %v3200
        %v3286 = vmax.f32 %v3061, %v3233
        %v3287 = vmax.f32 %v3062, %v3201
        %v3288 = vmax.f32 %v3063, %v3234
        %v3289 = vmax.f32 %v3064, %v3202
        %v3290 = vmax.f32 %v3065, %v3235
        %v3291 = vmax.f32 %v3066, %v3203
        %v3292 = vmax.f32 %v3067, %v3236
        %v3293 = vmax.f32 %v3068, %v3204
        %v3294 = vmax.f32 %v3069, %v3237
        %v3295 = vmax.f32 %v3070, %v3205
        %v3296 = vmax.f32 %v3071, %v3238
        %v3297 = vmax.f32 %v3072, %v3206
        %v3298 = vmax.f32 %v3073, %v3239
        %v3299 = vmax.f32 %v3074, %v3207
        %v3300 = vmax.f32 %v3075, %v3240
        %v3301 = vmax.f32 %v3076, %v3208
        %v3302 = vmax.f32 %v3077, %v3241
        %v3303 = vmax.f32 %v3078, %v3209
        %v3304 = vmax.f32 %v3079, %v3242
        %v3305 = vmax.f32 %v3080, %v3210
        %v3306 = vmax.f32 %v3081, %v3243
        %v3307 = vmax.f32 %v3082, %v3211
        %v3308 = vrot.slane %v2504, 2
        %v3309 = vrot.slane %v2508, 2
        %v3310 = vrot.slane %v2512, 2
        %v3311 = vrot.slane %v2516, 2
        %v3312 = vrot.slane %v2520, 2
        %v3313 = vrot.slane %v2524, 2
        %v3314 = vrot.slane %v2528, 2
        %v3315 = vrot.slane %v2532, 2
        %v3316 = vrot.slane %v2536, 2
        %v3317 = vrot.slane %v2540, 2
        %v3318 = vrot.slane %v2544, 2
        %v3319 = vrot.slane %v2548, 2
        %v3320 = vrot.slane %v2552, 2
        %v3321 = vrot.slane %v2556, 2
        %v3322 = vrot.slane %v2560, 2
        %v3323 = vrot.slane %v2564, 2
        %v3324 = vrot.slane %v2568, 2
        %v3325 = vrot.slane %v2572, 2
        %v3326 = vrot.slane %v2576, 2
        %v3327 = vrot.slane %v2580, 2
        %v3328 = vrot.slane %v2584, 2
        %v3329 = vrot.slane %v2588, 2
        %v3330 = vrot.slane %v2592, 2
        %v3331 = vrot.slane %v2596, 2
        %v3332 = vrot.slane %v2600, 2
        %v3333 = vrot.slane %v2604, 2
        %v3334 = vrot.slane %v2608, 2
        %v3335 = vrot.slane %v2612, 2
        %v3336 = vrot.slane %v2616, 2
        %v3337 = vrot.slane %v2620, 2
        %v3338 = vrot.slane %v2624, 2
        %v3339 = vrot.slane %v2628, 2
        %v3340 = vrot.slane %v2505, 2
        %v3341 = vrot.slane %v2509, 2
        %v3342 = vrot.slane %v2513, 2
        %v3343 = vrot.slane %v2517, 2
        %v3344 = vrot.slane %v2521, 2
        %v3345 = vrot.slane %v2525, 2
        %v3346 = vrot.slane %v2529, 2
        %v3347 = vrot.slane %v2533, 2
        %v3348 = vrot.slane %v2537, 2
        %v3349 = vrot.slane %v2541, 2
        %v3350 = vrot.slane %v2545, 2
        %v3351 = vrot.slane %v2549, 2
        %v3352 = vrot.slane %v2553, 2
        %v3353 = vrot.slane %v2557, 2
        %v3354 = vrot.slane %v2561, 2
        %v3355 = vrot.slane %v2565, 2
        %v3356 = vrot.slane %v2569, 2
        %v3357 = vrot.slane %v2573, 2
        %v3358 = vrot.slane %v2577, 2
        %v3359 = vrot.slane %v2581, 2
        %v3360 = vrot.slane %v2585, 2
        %v3361 = vrot.slane %v2589, 2
        %v3362 = vrot.slane %v2593, 2
        %v3363 = vrot.slane %v2597, 2
        %v3364 = vrot.slane %v2601, 2
        %v3365 = vrot.slane %v2605, 2
        %v3366 = vrot.slane %v2609, 2
        %v3367 = vrot.slane %v2613, 2
        %v3368 = vrot.slane %v2617, 2
        %v3369 = vrot.slane %v2621, 2
        %v3370 = vrot.slane %v2625, 2
        %v3371 = vrot.slane %v2629, 2
        %v3372 = vrot.slane %v2506, 2
        %v3373 = vrot.slane %v2510, 2
        %v3374 = vrot.slane %v2514, 2
        %v3375 = vrot.slane %v2518, 2
        %v3376 = vrot.slane %v2522, 2
        %v3377 = vrot.slane %v2526, 2
        %v3378 = vrot.slane %v2530, 2
        %v3379 = vrot.slane %v2534, 2
        %v3380 = vrot.slane %v2538, 2
        %v3381 = vrot.slane %v2542, 2
        %v3382 = vrot.slane %v2546, 2
        %v3383 = vrot.slane %v2550, 2
        %v3384 = vrot.slane %v2554, 2
        %v3385 = vrot.slane %v2558, 2
        %v3386 = vrot.slane %v2562, 2
        %v3387 = vrot.slane %v2566, 2
        %v3388 = vrot.slane %v2570, 2
        %v3389 = vrot.slane %v2574, 2
        %v3390 = vrot.slane %v2578, 2
        %v3391 = vrot.slane %v2582, 2
        %v3392 = vrot.slane %v2586, 2
        %v3393 = vrot.slane %v2590, 2
        %v3394 = vrot.slane %v2594, 2
        %v3395 = vrot.slane %v2598, 2
        %v3396 = vrot.slane %v2602, 2
        %v3397 = vrot.slane %v2606, 2
        %v3398 = vrot.slane %v2610, 2
        %v3399 = vrot.slane %v2614, 2
        %v3400 = vrot.slane %v2618, 2
        %v3401 = vrot.slane %v2622, 2
        %v3402 = vrot.slane %v2626, 2
        %v3403 = vrot.slane %v2630, 2
        %vm3404 = vcmp.lt.s32.totalorder %v2728, 6
        %v3405 = vsel %vm3404, %v3340, %v3372
        %v3406 = vsel %vm3404, %v3341, %v3373
        %v3407 = vsel %vm3404, %v3342, %v3374
        %v3408 = vsel %vm3404, %v3343, %v3375
        %v3409 = vsel %vm3404, %v3344, %v3376
        %v3410 = vsel %vm3404, %v3345, %v3377
        %v3411 = vsel %vm3404, %v3346, %v3378
        %v3412 = vsel %vm3404, %v3347, %v3379
        %v3413 = vsel %vm3404, %v3348, %v3380
        %v3414 = vsel %vm3404, %v3349, %v3381
        %v3415 = vsel %vm3404, %v3350, %v3382
        %v3416 = vsel %vm3404, %v3351, %v3383
        %v3417 = vsel %vm3404, %v3352, %v3384
        %v3418 = vsel %vm3404, %v3353, %v3385
        %v3419 = vsel %vm3404, %v3354, %v3386
        %v3420 = vsel %vm3404, %v3355, %v3387
        %v3421 = vsel %vm3404, %v3356, %v3388
        %v3422 = vsel %vm3404, %v3357, %v3389
        %v3423 = vsel %vm3404, %v3358, %v3390
        %v3424 = vsel %vm3404, %v3359, %v3391
        %v3425 = vsel %vm3404, %v3360, %v3392
        %v3426 = vsel %vm3404, %v3361, %v3393
        %v3427 = vsel %vm3404, %v3362, %v3394
        %v3428 = vsel %vm3404, %v3363, %v3395
        %v3429 = vsel %vm3404, %v3364, %v3396
        %v3430 = vsel %vm3404, %v3365, %v3397
        %v3431 = vsel %vm3404, %v3366, %v3398
        %v3432 = vsel %vm3404, %v3367, %v3399
        %v3433 = vsel %vm3404, %v3368, %v3400
        %v3434 = vsel %vm3404, %v3369, %v3401
        %v3435 = vsel %vm3404, %v3370, %v3402
        %v3436 = vsel %vm3404, %v3371, %v3403
        %v3437 = vsel %vm3404, %v3308, %v3340
        %v3438 = vsel %vm3404, %v3309, %v3341
        %v3439 = vsel %vm3404, %v3310, %v3342
        %v3440 = vsel %vm3404, %v3311, %v3343
        %v3441 = vsel %vm3404, %v3312, %v3344
        %v3442 = vsel %vm3404, %v3313, %v3345
        %v3443 = vsel %vm3404, %v3314, %v3346
        %v3444 = vsel %vm3404, %v3315, %v3347
        %v3445 = vsel %vm3404, %v3316, %v3348
        %v3446 = vsel %vm3404, %v3317, %v3349
        %v3447 = vsel %vm3404, %v3318, %v3350
        %v3448 = vsel %vm3404, %v3319, %v3351
        %v3449 = vsel %vm3404, %v3320, %v3352
        %v3450 = vsel %vm3404, %v3321, %v3353
        %v3451 = vsel %vm3404, %v3322, %v3354
        %v3452 = vsel %vm3404, %v3323, %v3355
        %v3453 = vsel %vm3404, %v3324, %v3356
        %v3454 = vsel %vm3404, %v3325, %v3357
        %v3455 = vsel %vm3404, %v3326, %v3358
        %v3456 = vsel %vm3404, %v3327, %v3359
        %v3457 = vsel %vm3404, %v3328, %v3360
        %v3458 = vsel %vm3404, %v3329, %v3361
        %v3459 = vsel %vm3404, %v3330, %v3362
        %v3460 = vsel %vm3404, %v3331, %v3363
        %v3461 = vsel %vm3404, %v3332, %v3364
        %v3462 = vsel %vm3404, %v3333, %v3365
        %v3463 = vsel %vm3404, %v3334, %v3366
        %v3464 = vsel %vm3404, %v3335, %v3367
        %v3465 = vsel %vm3404, %v3336, %v3368
        %v3466 = vsel %vm3404, %v3337, %v3369
        %v3467 = vsel %vm3404, %v3338, %v3370
        %v3468 = vsel %vm3404, %v3339, %v3371
        %v3469 = vmax.f32 %v3244, %v3437
        %v3470 = vmax.f32 %v3245, %v3405
        %v3471 = vmax.f32 %v3246, %v3438
        %v3472 = vmax.f32 %v3247, %v3406
        %v3473 = vmax.f32 %v3248, %v3439
        %v3474 = vmax.f32 %v3249, %v3407
        %v3475 = vmax.f32 %v3250, %v3440
        %v3476 = vmax.f32 %v3251, %v3408
        %v3477 = vmax.f32 %v3252, %v3441
        %v3478 = vmax.f32 %v3253, %v3409
        %v3479 = vmax.f32 %v3254, %v3442
        %v3480 = vmax.f32 %v3255, %v3410
        %v3481 = vmax.f32 %v3256, %v3443
        %v3482 = vmax.f32 %v3257, %v3411
        %v3483 = vmax.f32 %v3258, %v3444
        %v3484 = vmax.f32 %v3259, %v3412
        %v3485 = vmax.f32 %v3260, %v3445
        %v3486 = vmax.f32 %v3261, %v3413
        %v3487 = vmax.f32 %v3262, %v3446
        %v3488 = vmax.f32 %v3263, %v3414
        %v3489 = vmax.f32 %v3264, %v3447
        %v3490 = vmax.f32 %v3265, %v3415
        %v3491 = vmax.f32 %v3266, %v3448
        %v3492 = vmax.f32 %v3267, %v3416
        %v3493 = vmax.f32 %v3268, %v3449
        %v3494 = vmax.f32 %v3269, %v3417
        %v3495 = vmax.f32 %v3270, %v3450
        %v3496 = vmax.f32 %v3271, %v3418
        %v3497 = vmax.f32 %v3272, %v3451
        %v3498 = vmax.f32 %v3273, %v3419
        %v3499 = vmax.f32 %v3274, %v3452
        %v3500 = vmax.f32 %v3275, %v3420
        %v3501 = vmax.f32 %v3276, %v3453
        %v3502 = vmax.f32 %v3277, %v3421
        %v3503 = vmax.f32 %v3278, %v3454
        %v3504 = vmax.f32 %v3279, %v3422
        %v3505 = vmax.f32 %v3280, %v3455
        %v3506 = vmax.f32 %v3281, %v3423
        %v3507 = vmax.f32 %v3282, %v3456
        %v3508 = vmax.f32 %v3283, %v3424
        %v3509 = vmax.f32 %v3284, %v3457
        %v3510 = vmax.f32 %v3285, %v3425
        %v3511 = vmax.f32 %v3286, %v3458
        %v3512 = vmax.f32 %v3287, %v3426
        %v3513 = vmax.f32 %v3288, %v3459
        %v3514 = vmax.f32 %v3289, %v3427
        %v3515 = vmax.f32 %v3290, %v3460
        %v3516 = vmax.f32 %v3291, %v3428
        %v3517 = vmax.f32 %v3292, %v3461
        %v3518 = vmax.f32 %v3293, %v3429
        %v3519 = vmax.f32 %v3294, %v3462
        %v3520 = vmax.f32 %v3295, %v3430
        %v3521 = vmax.f32 %v3296, %v3463
        %v3522 = vmax.f32 %v3297, %v3431
        %v3523 = vmax.f32 %v3298, %v3464
        %v3524 = vmax.f32 %v3299, %v3432
        %v3525 = vmax.f32 %v3300, %v3465
        %v3526 = vmax.f32 %v3301, %v3433
        %v3527 = vmax.f32 %v3302, %v3466
        %v3528 = vmax.f32 %v3303, %v3434
        %v3529 = vmax.f32 %v3304, %v3467
        %v3530 = vmax.f32 %v3305, %v3435
        %v3531 = vmax.f32 %v3306, %v3468
        %v3532 = vmax.f32 %v3307, %v3436
        %3533 = vst.msk [vmem:[%s1216 + $0x8] sm:$0xff] %vm1198, %v3469
        %3534 = vst.msk [vmem:[%s1216 + $0x10] sm:$0xff] %vm1198, %v3470
        %3535 = vst.msk [vmem:[%s1216 + $0x28] sm:$0xff] %vm1198, %v3471
        %3536 = vst.msk [vmem:[%s1216 + $0x30] sm:$0xff] %vm1198, %v3472
        %3537 = vst.msk [vmem:[%s1216 + $0x48] sm:$0xff] %vm1198, %v3473
        %3538 = vst.msk [vmem:[%s1216 + $0x50] sm:$0xff] %vm1198, %v3474
        %3539 = vst.msk [vmem:[%s1216 + $0x68] sm:$0xff] %vm1198, %v3475
        %3540 = vst.msk [vmem:[%s1216 + $0x70] sm:$0xff] %vm1198, %v3476
        %3541 = vst.msk [vmem:[%s1216 + $0x88] sm:$0xff] %vm1198, %v3477
        %3542 = vst.msk [vmem:[%s1216 + $0x90] sm:$0xff] %vm1198, %v3478
        %3543 = vst.msk [vmem:[%s1216 + $0xa8] sm:$0xff] %vm1198, %v3479
        %3544 = vst.msk [vmem:[%s1216 + $0xb0] sm:$0xff] %vm1198, %v3480
        %3545 = vst.msk [vmem:[%s1216 + $0xc8] sm:$0xff] %vm1198, %v3481
        %3546 = vst.msk [vmem:[%s1216 + $0xd0] sm:$0xff] %vm1198, %v3482
        %3547 = vst.msk [vmem:[%s1216 + $0xe8] sm:$0xff] %vm1198, %v3483
        %3548 = vst.msk [vmem:[%s1216 + $0xf0] sm:$0xff] %vm1198, %v3484
        %3549 = vst.msk [vmem:[%s1216 + $0x108] sm:$0xff] %vm1198, %v3485
        %3550 = vst.msk [vmem:[%s1216 + $0x110] sm:$0xff] %vm1198, %v3486
        %3551 = vst.msk [vmem:[%s1216 + $0x128] sm:$0xff] %vm1198, %v3487
        %3552 = vst.msk [vmem:[%s1216 + $0x130] sm:$0xff] %vm1198, %v3488
        %3553 = vst.msk [vmem:[%s1216 + $0x148] sm:$0xff] %vm1198, %v3489
        %3554 = vst.msk [vmem:[%s1216 + $0x150] sm:$0xff] %vm1198, %v3490
        %3555 = vst.msk [vmem:[%s1216 + $0x168] sm:$0xff] %vm1198, %v3491
        %3556 = vst.msk [vmem:[%s1216 + $0x170] sm:$0xff] %vm1198, %v3492
        %3557 = vst.msk [vmem:[%s1216 + $0x188] sm:$0xff] %vm1198, %v3493
        %3558 = vst.msk [vmem:[%s1216 + $0x190] sm:$0xff] %vm1198, %v3494
        %3559 = vst.msk [vmem:[%s1216 + $0x1a8] sm:$0xff] %vm1198, %v3495
        %3560 = vst.msk [vmem:[%s1216 + $0x1b0] sm:$0xff] %vm1198, %v3496
        %3561 = vst.msk [vmem:[%s1216 + $0x1c8] sm:$0xff] %vm1198, %v3497
        %3562 = vst.msk [vmem:[%s1216 + $0x1d0] sm:$0xff] %vm1198, %v3498
        %3563 = vst.msk [vmem:[%s1216 + $0x1e8] sm:$0xff] %vm1198, %v3499
        %3564 = vst.msk [vmem:[%s1216 + $0x1f0] sm:$0xff] %vm1198, %v3500
        %3565 = vst.msk [vmem:[%s1216 + $0x208] sm:$0xff] %vm1198, %v3501
        %3566 = vst.msk [vmem:[%s1216 + $0x210] sm:$0xff] %vm1198, %v3502
        %3567 = vst.msk [vmem:[%s1216 + $0x228] sm:$0xff] %vm1198, %v3503
        %3568 = vst.msk [vmem:[%s1216 + $0x230] sm:$0xff] %vm1198, %v3504
        %3569 = vst.msk [vmem:[%s1216 + $0x248] sm:$0xff] %vm1198, %v3505
        %3570 = vst.msk [vmem:[%s1216 + $0x250] sm:$0xff] %vm1198, %v3506
        %3571 = vst.msk [vmem:[%s1216 + $0x268] sm:$0xff] %vm1198, %v3507
        %3572 = vst.msk [vmem:[%s1216 + $0x270] sm:$0xff] %vm1198, %v3508
        %3573 = vst.msk [vmem:[%s1216 + $0x288] sm:$0xff] %vm1198, %v3509
        %3574 = vst.msk [vmem:[%s1216 + $0x290] sm:$0xff] %vm1198, %v3510
        %3575 = vst.msk [vmem:[%s1216 + $0x2a8] sm:$0xff] %vm1198, %v3511
        %3576 = vst.msk [vmem:[%s1216 + $0x2b0] sm:$0xff] %vm1198, %v3512
        %3577 = vst.msk [vmem:[%s1216 + $0x2c8] sm:$0xff] %vm1198, %v3513
        %3578 = vst.msk [vmem:[%s1216 + $0x2d0] sm:$0xff] %vm1198, %v3514
        %3579 = vst.msk [vmem:[%s1216 + $0x2e8] sm:$0xff] %vm1198, %v3515
        %3580 = vst.msk [vmem:[%s1216 + $0x2f0] sm:$0xff] %vm1198, %v3516
        %3581 = vst.msk [vmem:[%s1216 + $0x308] sm:$0xff] %vm1198, %v3517
        %3582 = vst.msk [vmem:[%s1216 + $0x310] sm:$0xff] %vm1198, %v3518
        %3583 = vst.msk [vmem:[%s1216 + $0x328] sm:$0xff] %vm1198, %v3519
        %3584 = vst.msk [vmem:[%s1216 + $0x330] sm:$0xff] %vm1198, %v3520
        %3585 = vst.msk [vmem:[%s1216 + $0x348] sm:$0xff] %vm1198, %v3521
        %3586 = vst.msk [vmem:[%s1216 + $0x350] sm:$0xff] %vm1198, %v3522
        %3587 = vst.msk [vmem:[%s1216 + $0x368] sm:$0xff] %vm1198, %v3523
        %3588 = vst.msk [vmem:[%s1216 + $0x370] sm:$0xff] %vm1198, %v3524
        %3589 = vst.msk [vmem:[%s1216 + $0x388] sm:$0xff] %vm1198, %v3525
        %3590 = vst.msk [vmem:[%s1216 + $0x390] sm:$0xff] %vm1198, %v3526
        %3591 = vst.msk [vmem:[%s1216 + $0x3a8] sm:$0xff] %vm1198, %v3527
        %3592 = vst.msk [vmem:[%s1216 + $0x3b0] sm:$0xff] %vm1198, %v3528
        %3593 = vst.msk [vmem:[%s1216 + $0x3c8] sm:$0xff] %vm1198, %v3529
        %3594 = vst.msk [vmem:[%s1216 + $0x3d0] sm:$0xff] %vm1198, %v3530
        %3595 = vst.msk [vmem:[%s1216 + $0x3e8] sm:$0xff] %vm1198, %v3531
        %3596 = vst.msk [vmem:[%s1216 + $0x3f0] sm:$0xff] %vm1198, %v3532
        %v3597 = vld [vmem:[%s1347 + $0x8] sm:$0xff]
        %v3598 = vld [vmem:[%s1347 + $0x10] sm:$0xff]
        %v3599 = vld [vmem:[%s1347 + $0x28] sm:$0xff]
        %v3600 = vld [vmem:[%s1347 + $0x30] sm:$0xff]
        %v3601 = vld [vmem:[%s1347 + $0x48] sm:$0xff]
        %v3602 = vld [vmem:[%s1347 + $0x50] sm:$0xff]
        %v3603 = vld [vmem:[%s1347 + $0x68] sm:$0xff]
        %v3604 = vld [vmem:[%s1347 + $0x70] sm:$0xff]
        %v3605 = vld [vmem:[%s1347 + $0x88] sm:$0xff]
        %v3606 = vld [vmem:[%s1347 + $0x90] sm:$0xff]
        %v3607 = vld [vmem:[%s1347 + $0xa8] sm:$0xff]
        %v3608 = vld [vmem:[%s1347 + $0xb0] sm:$0xff]
        %v3609 = vld [vmem:[%s1347 + $0xc8] sm:$0xff]
        %v3610 = vld [vmem:[%s1347 + $0xd0] sm:$0xff]
        %v3611 = vld [vmem:[%s1347 + $0xe8] sm:$0xff]
        %v3612 = vld [vmem:[%s1347 + $0xf0] sm:$0xff]
        %v3613 = vld [vmem:[%s1347 + $0x108] sm:$0xff]
        %v3614 = vld [vmem:[%s1347 + $0x110] sm:$0xff]
        %v3615 = vld [vmem:[%s1347 + $0x128] sm:$0xff]
        %v3616 = vld [vmem:[%s1347 + $0x130] sm:$0xff]
        %v3617 = vld [vmem:[%s1347 + $0x148] sm:$0xff]
        %v3618 = vld [vmem:[%s1347 + $0x150] sm:$0xff]
        %v3619 = vld [vmem:[%s1347 + $0x168] sm:$0xff]
        %v3620 = vld [vmem:[%s1347 + $0x170] sm:$0xff]
        %v3621 = vld [vmem:[%s1347 + $0x188] sm:$0xff]
        %v3622 = vld [vmem:[%s1347 + $0x190] sm:$0xff]
        %v3623 = vld [vmem:[%s1347 + $0x1a8] sm:$0xff]
        %v3624 = vld [vmem:[%s1347 + $0x1b0] sm:$0xff]
        %v3625 = vld [vmem:[%s1347 + $0x1c8] sm:$0xff]
        %v3626 = vld [vmem:[%s1347 + $0x1d0] sm:$0xff]
        %v3627 = vld [vmem:[%s1347 + $0x1e8] sm:$0xff]
        %v3628 = vld [vmem:[%s1347 + $0x1f0] sm:$0xff]
        %v3629 = vld [vmem:[%s1347 + $0x208] sm:$0xff]
        %v3630 = vld [vmem:[%s1347 + $0x210] sm:$0xff]
        %v3631 = vld [vmem:[%s1347 + $0x228] sm:$0xff]
        %v3632 = vld [vmem:[%s1347 + $0x230] sm:$0xff]
        %v3633 = vld [vmem:[%s1347 + $0x248] sm:$0xff]
        %v3634 = vld [vmem:[%s1347 + $0x250] sm:$0xff]
        %v3635 = vld [vmem:[%s1347 + $0x268] sm:$0xff]
        %v3636 = vld [vmem:[%s1347 + $0x270] sm:$0xff]
        %v3637 = vld [vmem:[%s1347 + $0x288] sm:$0xff]
        %v3638 = vld [vmem:[%s1347 + $0x290] sm:$0xff]
        %v3639 = vld [vmem:[%s1347 + $0x2a8] sm:$0xff]
        %v3640 = vld [vmem:[%s1347 + $0x2b0] sm:$0xff]
        %v3641 = vld [vmem:[%s1347 + $0x2c8] sm:$0xff]
        %v3642 = vld [vmem:[%s1347 + $0x2d0] sm:$0xff]
        %v3643 = vld [vmem:[%s1347 + $0x2e8] sm:$0xff]
        %v3644 = vld [vmem:[%s1347 + $0x2f0] sm:$0xff]
        %v3645 = vld [vmem:[%s1347 + $0x308] sm:$0xff]
        %v3646 = vld [vmem:[%s1347 + $0x310] sm:$0xff]
        %v3647 = vld [vmem:[%s1347 + $0x328] sm:$0xff]
        %v3648 = vld [vmem:[%s1347 + $0x330] sm:$0xff]
        %v3649 = vld [vmem:[%s1347 + $0x348] sm:$0xff]
        %v3650 = vld [vmem:[%s1347 + $0x350] sm:$0xff]
        %v3651 = vld [vmem:[%s1347 + $0x368] sm:$0xff]
        %v3652 = vld [vmem:[%s1347 + $0x370] sm:$0xff]
        %v3653 = vld [vmem:[%s1347 + $0x388] sm:$0xff]
        %v3654 = vld [vmem:[%s1347 + $0x390] sm:$0xff]
        %v3655 = vld [vmem:[%s1347 + $0x3a8] sm:$0xff]
        %v3656 = vld [vmem:[%s1347 + $0x3b0] sm:$0xff]
        %v3657 = vld [vmem:[%s1347 + $0x3c8] sm:$0xff]
        %v3658 = vld [vmem:[%s1347 + $0x3d0] sm:$0xff]
        %v3659 = vld [vmem:[%s1347 + $0x3e8] sm:$0xff]
        %v3660 = vld [vmem:[%s1347 + $0x3f0] sm:$0xff]
        %v3661 = vpack.c.bf16 %v3598, %v3597
        %v3662 = vpack.c.bf16 %v3600, %v3599
        %v3663 = vpack.c.bf16 %v3602, %v3601
        %v3664 = vpack.c.bf16 %v3604, %v3603
        %v3665 = vpack.c.bf16 %v3606, %v3605
        %v3666 = vpack.c.bf16 %v3608, %v3607
        %v3667 = vpack.c.bf16 %v3610, %v3609
        %v3668 = vpack.c.bf16 %v3612, %v3611
        %v3669 = vpack.c.bf16 %v3614, %v3613
        %v3670 = vpack.c.bf16 %v3616, %v3615
        %v3671 = vpack.c.bf16 %v3618, %v3617
        %v3672 = vpack.c.bf16 %v3620, %v3619
        %v3673 = vpack.c.bf16 %v3622, %v3621
        %v3674 = vpack.c.bf16 %v3624, %v3623
        %v3675 = vpack.c.bf16 %v3626, %v3625
        %v3676 = vpack.c.bf16 %v3628, %v3627
        %v3677 = vpack.c.bf16 %v3630, %v3629
        %v3678 = vpack.c.bf16 %v3632, %v3631
        %v3679 = vpack.c.bf16 %v3634, %v3633
        %v3680 = vpack.c.bf16 %v3636, %v3635
        %v3681 = vpack.c.bf16 %v3638, %v3637
        %v3682 = vpack.c.bf16 %v3640, %v3639
        %v3683 = vpack.c.bf16 %v3642, %v3641
        %v3684 = vpack.c.bf16 %v3644, %v3643
        %v3685 = vpack.c.bf16 %v3646, %v3645
        %v3686 = vpack.c.bf16 %v3648, %v3647
        %v3687 = vpack.c.bf16 %v3650, %v3649
        %v3688 = vpack.c.bf16 %v3652, %v3651
        %v3689 = vpack.c.bf16 %v3654, %v3653
        %v3690 = vpack.c.bf16 %v3656, %v3655
        %v3691 = vpack.c.bf16 %v3658, %v3657
        %v3692 = vpack.c.bf16 %v3660, %v3659
        %3725 = vrot.lane.b32.xlu0 %v3661, 4
        %v3726 = vpop.permute.xlu0 %3725
        %3727 = vrot.lane.b32.xlu0 %v3662, 4
        %v3728 = vpop.permute.xlu0 %3727
        %3729 = vrot.lane.b32.xlu0 %v3663, 4
        %v3730 = vpop.permute.xlu0 %3729
        %3731 = vrot.lane.b32.xlu0 %v3664, 4
        %v3732 = vpop.permute.xlu0 %3731
        %3733 = vrot.lane.b32.xlu0 %v3665, 4
        %v3734 = vpop.permute.xlu0 %3733
        %3735 = vrot.lane.b32.xlu0 %v3666, 4
        %v3736 = vpop.permute.xlu0 %3735
        %3737 = vrot.lane.b32.xlu0 %v3667, 4
        %v3738 = vpop.permute.xlu0 %3737
        %3739 = vrot.lane.b32.xlu0 %v3668, 4
        %v3740 = vpop.permute.xlu0 %3739
        %3741 = vrot.lane.b32.xlu0 %v3669, 4
        %v3742 = vpop.permute.xlu0 %3741
        %3743 = vrot.lane.b32.xlu0 %v3670, 4
        %v3744 = vpop.permute.xlu0 %3743
        %3745 = vrot.lane.b32.xlu0 %v3671, 4
        %v3746 = vpop.permute.xlu0 %3745
        %3747 = vrot.lane.b32.xlu0 %v3672, 4
        %v3748 = vpop.permute.xlu0 %3747
        %3749 = vrot.lane.b32.xlu0 %v3673, 4
        %v3750 = vpop.permute.xlu0 %3749
        %3751 = vrot.lane.b32.xlu0 %v3674, 4
        %v3752 = vpop.permute.xlu0 %3751
        %3753 = vrot.lane.b32.xlu0 %v3675, 4
        %v3754 = vpop.permute.xlu0 %3753
        %3755 = vrot.lane.b32.xlu0 %v3676, 4
        %v3756 = vpop.permute.xlu0 %3755
        %3757 = vrot.lane.b32.xlu0 %v3677, 4
        %v3758 = vpop.permute.xlu0 %3757
        %3759 = vrot.lane.b32.xlu0 %v3678, 4
        %v3760 = vpop.permute.xlu0 %3759
        %3761 = vrot.lane.b32.xlu0 %v3679, 4
        %v3762 = vpop.permute.xlu0 %3761
        %3763 = vrot.lane.b32.xlu0 %v3680, 4
        %v3764 = vpop.permute.xlu0 %3763
        %3765 = vrot.lane.b32.xlu0 %v3681, 4
        %v3766 = vpop.permute.xlu0 %3765
        %3767 = vrot.lane.b32.xlu0 %v3682, 4
        %v3768 = vpop.permute.xlu0 %3767
        %3769 = vrot.lane.b32.xlu0 %v3683, 4
        %v3770 = vpop.permute.xlu0 %3769
        %3771 = vrot.lane.b32.xlu0 %v3684, 4
        %v3772 = vpop.permute.xlu0 %3771
        %3773 = vrot.lane.b32.xlu0 %v3685, 4
        %v3774 = vpop.permute.xlu0 %3773
        %3775 = vrot.lane.b32.xlu0 %v3686, 4
        %v3776 = vpop.permute.xlu0 %3775
        %3777 = vrot.lane.b32.xlu0 %v3687, 4
        %v3778 = vpop.permute.xlu0 %3777
        %3779 = vrot.lane.b32.xlu0 %v3688, 4
        %v3780 = vpop.permute.xlu0 %3779
        %3781 = vrot.lane.b32.xlu0 %v3689, 4
        %v3782 = vpop.permute.xlu0 %3781
        %3783 = vrot.lane.b32.xlu0 %v3690, 4
        %v3784 = vpop.permute.xlu0 %3783
        %3785 = vrot.lane.b32.xlu0 %v3691, 4
        %v3786 = vpop.permute.xlu0 %3785
        %3787 = vrot.lane.b32.xlu0 %v3692, 4
        %v3788 = vpop.permute.xlu0 %3787
        %vm3821 = vcmask 64544
        %3822 = vst.msk [vmem:[#allocation3] sm:$0xff] %vm3821, %v3726
        %3823 = vst.msk [vmem:[#allocation3 + $0x8] sm:$0xff] %vm3821, %v3728
        %3824 = vst.msk [vmem:[#allocation3 + $0x10] sm:$0xff] %vm3821, %v3730
        %3825 = vst.msk [vmem:[#allocation3 + $0x18] sm:$0xff] %vm3821, %v3732
        %3826 = vst.msk [vmem:[#allocation3 + $0x20] sm:$0xff] %vm3821, %v3734
        %3827 = vst.msk [vmem:[#allocation3 + $0x28] sm:$0xff] %vm3821, %v3736
        %3828 = vst.msk [vmem:[#allocation3 + $0x30] sm:$0xff] %vm3821, %v3738
        %3829 = vst.msk [vmem:[#allocation3 + $0x38] sm:$0xff] %vm3821, %v3740
        %3830 = vst.msk [vmem:[#allocation3 + $0x40] sm:$0xff] %vm3821, %v3742
        %3831 = vst.msk [vmem:[#allocation3 + $0x48] sm:$0xff] %vm3821, %v3744
        %3832 = vst.msk [vmem:[#allocation3 + $0x50] sm:$0xff] %vm3821, %v3746
        %3833 = vst.msk [vmem:[#allocation3 + $0x58] sm:$0xff] %vm3821, %v3748
        %3834 = vst.msk [vmem:[#allocation3 + $0x60] sm:$0xff] %vm3821, %v3750
        %3835 = vst.msk [vmem:[#allocation3 + $0x68] sm:$0xff] %vm3821, %v3752
        %3836 = vst.msk [vmem:[#allocation3 + $0x70] sm:$0xff] %vm3821, %v3754
        %3837 = vst.msk [vmem:[#allocation3 + $0x78] sm:$0xff] %vm3821, %v3756
        %3838 = vst.msk [vmem:[#allocation3 + $0x80] sm:$0xff] %vm3821, %v3758
        %3839 = vst.msk [vmem:[#allocation3 + $0x88] sm:$0xff] %vm3821, %v3760
        %3840 = vst.msk [vmem:[#allocation3 + $0x90] sm:$0xff] %vm3821, %v3762
        %3841 = vst.msk [vmem:[#allocation3 + $0x98] sm:$0xff] %vm3821, %v3764
        %3842 = vst.msk [vmem:[#allocation3 + $0xa0] sm:$0xff] %vm3821, %v3766
        %3843 = vst.msk [vmem:[#allocation3 + $0xa8] sm:$0xff] %vm3821, %v3768
        %3844 = vst.msk [vmem:[#allocation3 + $0xb0] sm:$0xff] %vm3821, %v3770
        %3845 = vst.msk [vmem:[#allocation3 + $0xb8] sm:$0xff] %vm3821, %v3772
        %3846 = vst.msk [vmem:[#allocation3 + $0xc0] sm:$0xff] %vm3821, %v3774
        %3847 = vst.msk [vmem:[#allocation3 + $0xc8] sm:$0xff] %vm3821, %v3776
        %3848 = vst.msk [vmem:[#allocation3 + $0xd0] sm:$0xff] %vm3821, %v3778
        %3849 = vst.msk [vmem:[#allocation3 + $0xd8] sm:$0xff] %vm3821, %v3780
        %3850 = vst.msk [vmem:[#allocation3 + $0xe0] sm:$0xff] %vm3821, %v3782
        %3851 = vst.msk [vmem:[#allocation3 + $0xe8] sm:$0xff] %vm3821, %v3784
        %3852 = vst.msk [vmem:[#allocation3 + $0xf0] sm:$0xff] %vm3821, %v3786
        %3853 = vst.msk [vmem:[#allocation3 + $0xf8] sm:$0xff] %vm3821, %v3788
        %v3854 = vld [vmem:[#allocation2] sm:$0xff]
        %v3855 = vld [vmem:[#allocation2 + $0x8] sm:$0xff]
        %v3856 = vld [vmem:[#allocation2 + $0x10] sm:$0xff]
        %v3857 = vld [vmem:[#allocation2 + $0x18] sm:$0xff]
        %v3858 = vld [vmem:[#allocation2 + $0x20] sm:$0xff]
        %v3859 = vld [vmem:[#allocation2 + $0x28] sm:$0xff]
        %v3860 = vld [vmem:[#allocation2 + $0x30] sm:$0xff]
        %v3861 = vld [vmem:[#allocation2 + $0x38] sm:$0xff]
        %v3862 = vld [vmem:[#allocation2 + $0x40] sm:$0xff]
        %v3863 = vld [vmem:[#allocation2 + $0x48] sm:$0xff]
        %v3864 = vld [vmem:[#allocation2 + $0x50] sm:$0xff]
        %v3865 = vld [vmem:[#allocation2 + $0x58] sm:$0xff]
        %v3866 = vld [vmem:[#allocation2 + $0x60] sm:$0xff]
        %v3867 = vld [vmem:[#allocation2 + $0x68] sm:$0xff]
        %v3868 = vld [vmem:[#allocation2 + $0x70] sm:$0xff]
        %v3869 = vld [vmem:[#allocation2 + $0x78] sm:$0xff]
        %v3870 = vld [vmem:[#allocation2 + $0x80] sm:$0xff]
        %v3871 = vld [vmem:[#allocation2 + $0x88] sm:$0xff]
        %v3872 = vld [vmem:[#allocation2 + $0x90] sm:$0xff]
        %v3873 = vld [vmem:[#allocation2 + $0x98] sm:$0xff]
        %v3874 = vld [vmem:[#allocation2 + $0xa0] sm:$0xff]
        %v3875 = vld [vmem:[#allocation2 + $0xa8] sm:$0xff]
        %v3876 = vld [vmem:[#allocation2 + $0xb0] sm:$0xff]
        %v3877 = vld [vmem:[#allocation2 + $0xb8] sm:$0xff]
        %v3878 = vld [vmem:[#allocation2 + $0xc0] sm:$0xff]
        %v3879 = vld [vmem:[#allocation2 + $0xc8] sm:$0xff]
        %v3880 = vld [vmem:[#allocation2 + $0xd0] sm:$0xff]
        %v3881 = vld [vmem:[#allocation2 + $0xd8] sm:$0xff]
        %v3882 = vld [vmem:[#allocation2 + $0xe0] sm:$0xff]
        %v3883 = vld [vmem:[#allocation2 + $0xe8] sm:$0xff]
        %v3884 = vld [vmem:[#allocation2 + $0xf0] sm:$0xff]
        %v3885 = vld [vmem:[#allocation2 + $0xf8] sm:$0xff]
        %v3886 = vld [vmem:[#allocation2 + $0x100] sm:$0xff]
        %v3887 = vld [vmem:[#allocation2 + $0x108] sm:$0xff]
        %v3888 = vld [vmem:[#allocation2 + $0x110] sm:$0xff]
        %v3889 = vld [vmem:[#allocation2 + $0x118] sm:$0xff]
        %v3890 = vld [vmem:[#allocation2 + $0x120] sm:$0xff]
        %v3891 = vld [vmem:[#allocation2 + $0x128] sm:$0xff]
        %v3892 = vld [vmem:[#allocation2 + $0x130] sm:$0xff]
        %v3893 = vld [vmem:[#allocation2 + $0x138] sm:$0xff]
        %v3894 = vld [vmem:[#allocation2 + $0x140] sm:$0xff]
        %v3895 = vld [vmem:[#allocation2 + $0x148] sm:$0xff]
        %v3896 = vld [vmem:[#allocation2 + $0x150] sm:$0xff]
        %v3897 = vld [vmem:[#allocation2 + $0x158] sm:$0xff]
        %v3898 = vld [vmem:[#allocation2 + $0x160] sm:$0xff]
        %v3899 = vld [vmem:[#allocation2 + $0x168] sm:$0xff]
        %v3900 = vld [vmem:[#allocation2 + $0x170] sm:$0xff]
        %v3901 = vld [vmem:[#allocation2 + $0x178] sm:$0xff]
        %v3902 = vld [vmem:[#allocation2 + $0x180] sm:$0xff]
        %v3903 = vld [vmem:[#allocation2 + $0x188] sm:$0xff]
        %v3904 = vld [vmem:[#allocation2 + $0x190] sm:$0xff]
        %v3905 = vld [vmem:[#allocation2 + $0x198] sm:$0xff]
        %v3906 = vld [vmem:[#allocation2 + $0x1a0] sm:$0xff]
        %v3907 = vld [vmem:[#allocation2 + $0x1a8] sm:$0xff]
        %v3908 = vld [vmem:[#allocation2 + $0x1b0] sm:$0xff]
        %v3909 = vld [vmem:[#allocation2 + $0x1b8] sm:$0xff]
        %v3910 = vld [vmem:[#allocation2 + $0x1c0] sm:$0xff]
        %v3911 = vld [vmem:[#allocation2 + $0x1c8] sm:$0xff]
        %v3912 = vld [vmem:[#allocation2 + $0x1d0] sm:$0xff]
        %v3913 = vld [vmem:[#allocation2 + $0x1d8] sm:$0xff]
        %v3914 = vld [vmem:[#allocation2 + $0x1e0] sm:$0xff]
        %v3915 = vld [vmem:[#allocation2 + $0x1e8] sm:$0xff]
        %v3916 = vld [vmem:[#allocation2 + $0x1f0] sm:$0xff]
        %v3917 = vld [vmem:[#allocation2 + $0x1f8] sm:$0xff]
        %v3918 = vld [vmem:[#allocation2 + $0x200] sm:$0xff]
        %v3919 = vld [vmem:[#allocation2 + $0x208] sm:$0xff]
        %v3920 = vld [vmem:[#allocation2 + $0x210] sm:$0xff]
        %v3921 = vld [vmem:[#allocation2 + $0x218] sm:$0xff]
        %v3922 = vld [vmem:[#allocation2 + $0x220] sm:$0xff]
        %v3923 = vld [vmem:[#allocation2 + $0x228] sm:$0xff]
        %v3924 = vld [vmem:[#allocation2 + $0x230] sm:$0xff]
        %v3925 = vld [vmem:[#allocation2 + $0x238] sm:$0xff]
        %v3926 = vld [vmem:[#allocation2 + $0x240] sm:$0xff]
        %v3927 = vld [vmem:[#allocation2 + $0x248] sm:$0xff]
        %v3928 = vld [vmem:[#allocation2 + $0x250] sm:$0xff]
        %v3929 = vld [vmem:[#allocation2 + $0x258] sm:$0xff]
        %v3930 = vld [vmem:[#allocation2 + $0x260] sm:$0xff]
        %v3931 = vld [vmem:[#allocation2 + $0x268] sm:$0xff]
        %v3932 = vld [vmem:[#allocation2 + $0x270] sm:$0xff]
        %v3933 = vld [vmem:[#allocation2 + $0x278] sm:$0xff]
        %v3934 = vld [vmem:[#allocation2 + $0x280] sm:$0xff]
        %v3935 = vld [vmem:[#allocation2 + $0x288] sm:$0xff]
        %v3936 = vld [vmem:[#allocation2 + $0x290] sm:$0xff]
        %v3937 = vld [vmem:[#allocation2 + $0x298] sm:$0xff]
        %v3938 = vld [vmem:[#allocation2 + $0x2a0] sm:$0xff]
        %v3939 = vld [vmem:[#allocation2 + $0x2a8] sm:$0xff]
        %v3940 = vld [vmem:[#allocation2 + $0x2b0] sm:$0xff]
        %v3941 = vld [vmem:[#allocation2 + $0x2b8] sm:$0xff]
        %v3942 = vld [vmem:[#allocation2 + $0x2c0] sm:$0xff]
        %v3943 = vld [vmem:[#allocation2 + $0x2c8] sm:$0xff]
        %v3944 = vld [vmem:[#allocation2 + $0x2d0] sm:$0xff]
        %v3945 = vld [vmem:[#allocation2 + $0x2d8] sm:$0xff]
        %v3946 = vld [vmem:[#allocation2 + $0x2e0] sm:$0xff]
        %v3947 = vld [vmem:[#allocation2 + $0x2e8] sm:$0xff]
        %v3948 = vld [vmem:[#allocation2 + $0x2f0] sm:$0xff]
        %v3949 = vld [vmem:[#allocation2 + $0x2f8] sm:$0xff]
        %v3950 = vld [vmem:[#allocation2 + $0x300] sm:$0xff]
        %v3951 = vld [vmem:[#allocation2 + $0x308] sm:$0xff]
        %v3952 = vld [vmem:[#allocation2 + $0x310] sm:$0xff]
        %v3953 = vld [vmem:[#allocation2 + $0x318] sm:$0xff]
        %v3954 = vld [vmem:[#allocation2 + $0x320] sm:$0xff]
        %v3955 = vld [vmem:[#allocation2 + $0x328] sm:$0xff]
        %v3956 = vld [vmem:[#allocation2 + $0x330] sm:$0xff]
        %v3957 = vld [vmem:[#allocation2 + $0x338] sm:$0xff]
        %v3958 = vld [vmem:[#allocation2 + $0x340] sm:$0xff]
        %v3959 = vld [vmem:[#allocation2 + $0x348] sm:$0xff]
        %v3960 = vld [vmem:[#allocation2 + $0x350] sm:$0xff]
        %v3961 = vld [vmem:[#allocation2 + $0x358] sm:$0xff]
        %v3962 = vld [vmem:[#allocation2 + $0x360] sm:$0xff]
        %v3963 = vld [vmem:[#allocation2 + $0x368] sm:$0xff]
        %v3964 = vld [vmem:[#allocation2 + $0x370] sm:$0xff]
        %v3965 = vld [vmem:[#allocation2 + $0x378] sm:$0xff]
        %v3966 = vld [vmem:[#allocation2 + $0x380] sm:$0xff]
        %v3967 = vld [vmem:[#allocation2 + $0x388] sm:$0xff]
        %v3968 = vld [vmem:[#allocation2 + $0x390] sm:$0xff]
        %v3969 = vld [vmem:[#allocation2 + $0x398] sm:$0xff]
        %v3970 = vld [vmem:[#allocation2 + $0x3a0] sm:$0xff]
        %v3971 = vld [vmem:[#allocation2 + $0x3a8] sm:$0xff]
        %v3972 = vld [vmem:[#allocation2 + $0x3b0] sm:$0xff]
        %v3973 = vld [vmem:[#allocation2 + $0x3b8] sm:$0xff]
        %v3974 = vld [vmem:[#allocation2 + $0x3c0] sm:$0xff]
        %v3975 = vld [vmem:[#allocation2 + $0x3c8] sm:$0xff]
        %v3976 = vld [vmem:[#allocation2 + $0x3d0] sm:$0xff]
        %v3977 = vld [vmem:[#allocation2 + $0x3d8] sm:$0xff]
        %v3978 = vld [vmem:[#allocation2 + $0x3e0] sm:$0xff]
        %v3979 = vld [vmem:[#allocation2 + $0x3e8] sm:$0xff]
        %v3980 = vld [vmem:[#allocation2 + $0x3f0] sm:$0xff]
        %v3981 = vld [vmem:[#allocation2 + $0x3f8] sm:$0xff]
        %v3982 = vld [vmem:[%s1604] sm:$0xff]
        %v3983 = vld [vmem:[%s1604 + $0x8] sm:$0xff]
        %v3984 = vld [vmem:[%s1604 + $0x10] sm:$0xff]
        %v3985 = vld [vmem:[%s1604 + $0x18] sm:$0xff]
        %v3986 = vld [vmem:[%s1604 + $0x20] sm:$0xff]
        %v3987 = vld [vmem:[%s1604 + $0x28] sm:$0xff]
        %v3988 = vld [vmem:[%s1604 + $0x30] sm:$0xff]
        %v3989 = vld [vmem:[%s1604 + $0x38] sm:$0xff]
        %v3990 = vld [vmem:[%s1604 + $0x40] sm:$0xff]
        %v3991 = vld [vmem:[%s1604 + $0x48] sm:$0xff]
        %v3992 = vld [vmem:[%s1604 + $0x50] sm:$0xff]
        %v3993 = vld [vmem:[%s1604 + $0x58] sm:$0xff]
        %v3994 = vld [vmem:[%s1604 + $0x60] sm:$0xff]
        %v3995 = vld [vmem:[%s1604 + $0x68] sm:$0xff]
        %v3996 = vld [vmem:[%s1604 + $0x70] sm:$0xff]
        %v3997 = vld [vmem:[%s1604 + $0x78] sm:$0xff]
        %v3998 = vld [vmem:[%s1604 + $0x80] sm:$0xff]
        %v3999 = vld [vmem:[%s1604 + $0x88] sm:$0xff]
        %v4000 = vld [vmem:[%s1604 + $0x90] sm:$0xff]
        %v4001 = vld [vmem:[%s1604 + $0x98] sm:$0xff]
        %v4002 = vld [vmem:[%s1604 + $0xa0] sm:$0xff]
        %v4003 = vld [vmem:[%s1604 + $0xa8] sm:$0xff]
        %v4004 = vld [vmem:[%s1604 + $0xb0] sm:$0xff]
        %v4005 = vld [vmem:[%s1604 + $0xb8] sm:$0xff]
        %v4006 = vld [vmem:[%s1604 + $0xc0] sm:$0xff]
        %v4007 = vld [vmem:[%s1604 + $0xc8] sm:$0xff]
        %v4008 = vld [vmem:[%s1604 + $0xd0] sm:$0xff]
        %v4009 = vld [vmem:[%s1604 + $0xd8] sm:$0xff]
        %v4010 = vld [vmem:[%s1604 + $0xe0] sm:$0xff]
        %v4011 = vld [vmem:[%s1604 + $0xe8] sm:$0xff]
        %v4012 = vld [vmem:[%s1604 + $0xf0] sm:$0xff]
        %v4013 = vld [vmem:[%s1604 + $0xf8] sm:$0xff]
        %v4014 = vld [vmem:[%s1604 + $0x100] sm:$0xff]
        %v4015 = vld [vmem:[%s1604 + $0x108] sm:$0xff]
        %v4016 = vld [vmem:[%s1604 + $0x110] sm:$0xff]
        %v4017 = vld [vmem:[%s1604 + $0x118] sm:$0xff]
        %v4018 = vld [vmem:[%s1604 + $0x120] sm:$0xff]
        %v4019 = vld [vmem:[%s1604 + $0x128] sm:$0xff]
        %v4020 = vld [vmem:[%s1604 + $0x130] sm:$0xff]
        %v4021 = vld [vmem:[%s1604 + $0x138] sm:$0xff]
        %v4022 = vld [vmem:[%s1604 + $0x140] sm:$0xff]
        %v4023 = vld [vmem:[%s1604 + $0x148] sm:$0xff]
        %v4024 = vld [vmem:[%s1604 + $0x150] sm:$0xff]
        %v4025 = vld [vmem:[%s1604 + $0x158] sm:$0xff]
        %v4026 = vld [vmem:[%s1604 + $0x160] sm:$0xff]
        %v4027 = vld [vmem:[%s1604 + $0x168] sm:$0xff]
        %v4028 = vld [vmem:[%s1604 + $0x170] sm:$0xff]
        %v4029 = vld [vmem:[%s1604 + $0x178] sm:$0xff]
        %v4030 = vld [vmem:[%s1604 + $0x180] sm:$0xff]
        %v4031 = vld [vmem:[%s1604 + $0x188] sm:$0xff]
        %v4032 = vld [vmem:[%s1604 + $0x190] sm:$0xff]
        %v4033 = vld [vmem:[%s1604 + $0x198] sm:$0xff]
        %v4034 = vld [vmem:[%s1604 + $0x1a0] sm:$0xff]
        %v4035 = vld [vmem:[%s1604 + $0x1a8] sm:$0xff]
        %v4036 = vld [vmem:[%s1604 + $0x1b0] sm:$0xff]
        %v4037 = vld [vmem:[%s1604 + $0x1b8] sm:$0xff]
        %v4038 = vld [vmem:[%s1604 + $0x1c0] sm:$0xff]
        %v4039 = vld [vmem:[%s1604 + $0x1c8] sm:$0xff]
        %v4040 = vld [vmem:[%s1604 + $0x1d0] sm:$0xff]
        %v4041 = vld [vmem:[%s1604 + $0x1d8] sm:$0xff]
        %v4042 = vld [vmem:[%s1604 + $0x1e0] sm:$0xff]
        %v4043 = vld [vmem:[%s1604 + $0x1e8] sm:$0xff]
        %v4044 = vld [vmem:[%s1604 + $0x1f0] sm:$0xff]
        %v4045 = vld [vmem:[%s1604 + $0x1f8] sm:$0xff]
        %v4046 = vld [vmem:[%s1604 + $0x200] sm:$0xff]
        %v4047 = vld [vmem:[%s1604 + $0x208] sm:$0xff]
        %v4048 = vld [vmem:[%s1604 + $0x210] sm:$0xff]
        %v4049 = vld [vmem:[%s1604 + $0x218] sm:$0xff]
        %v4050 = vld [vmem:[%s1604 + $0x220] sm:$0xff]
        %v4051 = vld [vmem:[%s1604 + $0x228] sm:$0xff]
        %v4052 = vld [vmem:[%s1604 + $0x230] sm:$0xff]
        %v4053 = vld [vmem:[%s1604 + $0x238] sm:$0xff]
        %v4054 = vld [vmem:[%s1604 + $0x240] sm:$0xff]
        %v4055 = vld [vmem:[%s1604 + $0x248] sm:$0xff]
        %v4056 = vld [vmem:[%s1604 + $0x250] sm:$0xff]
        %v4057 = vld [vmem:[%s1604 + $0x258] sm:$0xff]
        %v4058 = vld [vmem:[%s1604 + $0x260] sm:$0xff]
        %v4059 = vld [vmem:[%s1604 + $0x268] sm:$0xff]
        %v4060 = vld [vmem:[%s1604 + $0x270] sm:$0xff]
        %v4061 = vld [vmem:[%s1604 + $0x278] sm:$0xff]
        %v4062 = vld [vmem:[%s1604 + $0x280] sm:$0xff]
        %v4063 = vld [vmem:[%s1604 + $0x288] sm:$0xff]
        %v4064 = vld [vmem:[%s1604 + $0x290] sm:$0xff]
        %v4065 = vld [vmem:[%s1604 + $0x298] sm:$0xff]
        %v4066 = vld [vmem:[%s1604 + $0x2a0] sm:$0xff]
        %v4067 = vld [vmem:[%s1604 + $0x2a8] sm:$0xff]
        %v4068 = vld [vmem:[%s1604 + $0x2b0] sm:$0xff]
        %v4069 = vld [vmem:[%s1604 + $0x2b8] sm:$0xff]
        %v4070 = vld [vmem:[%s1604 + $0x2c0] sm:$0xff]
        %v4071 = vld [vmem:[%s1604 + $0x2c8] sm:$0xff]
        %v4072 = vld [vmem:[%s1604 + $0x2d0] sm:$0xff]
        %v4073 = vld [vmem:[%s1604 + $0x2d8] sm:$0xff]
        %v4074 = vld [vmem:[%s1604 + $0x2e0] sm:$0xff]
        %v4075 = vld [vmem:[%s1604 + $0x2e8] sm:$0xff]
        %v4076 = vld [vmem:[%s1604 + $0x2f0] sm:$0xff]
        %v4077 = vld [vmem:[%s1604 + $0x2f8] sm:$0xff]
        %v4078 = vld [vmem:[%s1604 + $0x300] sm:$0xff]
        %v4079 = vld [vmem:[%s1604 + $0x308] sm:$0xff]
        %v4080 = vld [vmem:[%s1604 + $0x310] sm:$0xff]
        %v4081 = vld [vmem:[%s1604 + $0x318] sm:$0xff]
        %v4082 = vld [vmem:[%s1604 + $0x320] sm:$0xff]
        %v4083 = vld [vmem:[%s1604 + $0x328] sm:$0xff]
        %v4084 = vld [vmem:[%s1604 + $0x330] sm:$0xff]
        %v4085 = vld [vmem:[%s1604 + $0x338] sm:$0xff]
        %v4086 = vld [vmem:[%s1604 + $0x340] sm:$0xff]
        %v4087 = vld [vmem:[%s1604 + $0x348] sm:$0xff]
        %v4088 = vld [vmem:[%s1604 + $0x350] sm:$0xff]
        %v4089 = vld [vmem:[%s1604 + $0x358] sm:$0xff]
        %v4090 = vld [vmem:[%s1604 + $0x360] sm:$0xff]
        %v4091 = vld [vmem:[%s1604 + $0x368] sm:$0xff]
        %v4092 = vld [vmem:[%s1604 + $0x370] sm:$0xff]
        %v4093 = vld [vmem:[%s1604 + $0x378] sm:$0xff]
        %v4094 = vld [vmem:[%s1604 + $0x380] sm:$0xff]
        %v4095 = vld [vmem:[%s1604 + $0x388] sm:$0xff]
        %v4096 = vld [vmem:[%s1604 + $0x390] sm:$0xff]
        %v4097 = vld [vmem:[%s1604 + $0x398] sm:$0xff]
        %v4098 = vld [vmem:[%s1604 + $0x3a0] sm:$0xff]
        %v4099 = vld [vmem:[%s1604 + $0x3a8] sm:$0xff]
        %v4100 = vld [vmem:[%s1604 + $0x3b0] sm:$0xff]
        %v4101 = vld [vmem:[%s1604 + $0x3b8] sm:$0xff]
        %v4102 = vld [vmem:[%s1604 + $0x3c0] sm:$0xff]
        %v4103 = vld [vmem:[%s1604 + $0x3c8] sm:$0xff]
        %v4104 = vld [vmem:[%s1604 + $0x3d0] sm:$0xff]
        %v4105 = vld [vmem:[%s1604 + $0x3d8] sm:$0xff]
        %v4106 = vld [vmem:[%s1604 + $0x3e0] sm:$0xff]
        %v4107 = vld [vmem:[%s1604 + $0x3e8] sm:$0xff]
        %v4108 = vld [vmem:[%s1604 + $0x3f0] sm:$0xff]
        %v4109 = vld [vmem:[%s1604 + $0x3f8] sm:$0xff]
        %v4110 = vmax.f32 %v3854, %v3982
        %v4111 = vmax.f32 %v3855, %v3983
        %v4112 = vmax.f32 %v3856, %v3984
        %v4113 = vmax.f32 %v3857, %v3985
        %v4114 = vmax.f32 %v3858, %v3986
        %v4115 = vmax.f32 %v3859, %v3987
        %v4116 = vmax.f32 %v3860, %v3988
        %v4117 = vmax.f32 %v3861, %v3989
        %v4118 = vmax.f32 %v3862, %v3990
        %v4119 = vmax.f32 %v3863, %v3991
        %v4120 = vmax.f32 %v3864, %v3992
        %v4121 = vmax.f32 %v3865, %v3993
        %v4122 = vmax.f32 %v3866, %v3994
        %v4123 = vmax.f32 %v3867, %v3995
        %v4124 = vmax.f32 %v3868, %v3996
        %v4125 = vmax.f32 %v3869, %v3997
        %v4126 = vmax.f32 %v3870, %v3998
        %v4127 = vmax.f32 %v3871, %v3999
        %v4128 = vmax.f32 %v3872, %v4000
        %v4129 = vmax.f32 %v3873, %v4001
        %v4130 = vmax.f32 %v3874, %v4002
        %v4131 = vmax.f32 %v3875, %v4003
        %v4132 = vmax.f32 %v3876, %v4004
        %v4133 = vmax.f32 %v3877, %v4005
        %v4134 = vmax.f32 %v3878, %v4006
        %v4135 = vmax.f32 %v3879, %v4007
        %v4136 = vmax.f32 %v3880, %v4008
        %v4137 = vmax.f32 %v3881, %v4009
        %v4138 = vmax.f32 %v3882, %v4010
        %v4139 = vmax.f32 %v3883, %v4011
        %v4140 = vmax.f32 %v3884, %v4012
        %v4141 = vmax.f32 %v3885, %v4013
        %v4142 = vmax.f32 %v3886, %v4014
        %v4143 = vmax.f32 %v3887, %v4015
        %v4144 = vmax.f32 %v3888, %v4016
        %v4145 = vmax.f32 %v3889, %v4017
        %v4146 = vmax.f32 %v3890, %v4018
        %v4147 = vmax.f32 %v3891, %v4019
        %v4148 = vmax.f32 %v3892, %v4020
        %v4149 = vmax.f32 %v3893, %v4021
        %v4150 = vmax.f32 %v3894, %v4022
        %v4151 = vmax.f32 %v3895, %v4023
        %v4152 = vmax.f32 %v3896, %v4024
        %v4153 = vmax.f32 %v3897, %v4025
        %v4154 = vmax.f32 %v3898, %v4026
        %v4155 = vmax.f32 %v3899, %v4027
        %v4156 = vmax.f32 %v3900, %v4028
        %v4157 = vmax.f32 %v3901, %v4029
        %v4158 = vmax.f32 %v3902, %v4030
        %v4159 = vmax.f32 %v3903, %v4031
        %v4160 = vmax.f32 %v3904, %v4032
        %v4161 = vmax.f32 %v3905, %v4033
        %v4162 = vmax.f32 %v3906, %v4034
        %v4163 = vmax.f32 %v3907, %v4035
        %v4164 = vmax.f32 %v3908, %v4036
        %v4165 = vmax.f32 %v3909, %v4037
        %v4166 = vmax.f32 %v3910, %v4038
        %v4167 = vmax.f32 %v3911, %v4039
        %v4168 = vmax.f32 %v3912, %v4040
        %v4169 = vmax.f32 %v3913, %v4041
        %v4170 = vmax.f32 %v3914, %v4042
        %v4171 = vmax.f32 %v3915, %v4043
        %v4172 = vmax.f32 %v3916, %v4044
        %v4173 = vmax.f32 %v3917, %v4045
        %v4174 = vmax.f32 %v3918, %v4046
        %v4175 = vmax.f32 %v3919, %v4047
        %v4176 = vmax.f32 %v3920, %v4048
        %v4177 = vmax.f32 %v3921, %v4049
        %v4178 = vmax.f32 %v3922, %v4050
        %v4179 = vmax.f32 %v3923, %v4051
        %v4180 = vmax.f32 %v3924, %v4052
        %v4181 = vmax.f32 %v3925, %v4053
        %v4182 = vmax.f32 %v3926, %v4054
        %v4183 = vmax.f32 %v3927, %v4055
        %v4184 = vmax.f32 %v3928, %v4056
        %v4185 = vmax.f32 %v3929, %v4057
        %v4186 = vmax.f32 %v3930, %v4058
        %v4187 = vmax.f32 %v3931, %v4059
        %v4188 = vmax.f32 %v3932, %v4060
        %v4189 = vmax.f32 %v3933, %v4061
        %v4190 = vmax.f32 %v3934, %v4062
        %v4191 = vmax.f32 %v3935, %v4063
        %v4192 = vmax.f32 %v3936, %v4064
        %v4193 = vmax.f32 %v3937, %v4065
        %v4194 = vmax.f32 %v3938, %v4066
        %v4195 = vmax.f32 %v3939, %v4067
        %v4196 = vmax.f32 %v3940, %v4068
        %v4197 = vmax.f32 %v3941, %v4069
        %v4198 = vmax.f32 %v3942, %v4070
        %v4199 = vmax.f32 %v3943, %v4071
        %v4200 = vmax.f32 %v3944, %v4072
        %v4201 = vmax.f32 %v3945, %v4073
        %v4202 = vmax.f32 %v3946, %v4074
        %v4203 = vmax.f32 %v3947, %v4075
        %v4204 = vmax.f32 %v3948, %v4076
        %v4205 = vmax.f32 %v3949, %v4077
        %v4206 = vmax.f32 %v3950, %v4078
        %v4207 = vmax.f32 %v3951, %v4079
        %v4208 = vmax.f32 %v3952, %v4080
        %v4209 = vmax.f32 %v3953, %v4081
        %v4210 = vmax.f32 %v3954, %v4082
        %v4211 = vmax.f32 %v3955, %v4083
        %v4212 = vmax.f32 %v3956, %v4084
        %v4213 = vmax.f32 %v3957, %v4085
        %v4214 = vmax.f32 %v3958, %v4086
        %v4215 = vmax.f32 %v3959, %v4087
        %v4216 = vmax.f32 %v3960, %v4088
        %v4217 = vmax.f32 %v3961, %v4089
        %v4218 = vmax.f32 %v3962, %v4090
        %v4219 = vmax.f32 %v3963, %v4091
        %v4220 = vmax.f32 %v3964, %v4092
        %v4221 = vmax.f32 %v3965, %v4093
        %v4222 = vmax.f32 %v3966, %v4094
        %v4223 = vmax.f32 %v3967, %v4095
        %v4224 = vmax.f32 %v3968, %v4096
        %v4225 = vmax.f32 %v3969, %v4097
        %v4226 = vmax.f32 %v3970, %v4098
        %v4227 = vmax.f32 %v3971, %v4099
        %v4228 = vmax.f32 %v3972, %v4100
        %v4229 = vmax.f32 %v3973, %v4101
        %v4230 = vmax.f32 %v3974, %v4102
        %v4231 = vmax.f32 %v3975, %v4103
        %v4232 = vmax.f32 %v3976, %v4104
        %v4233 = vmax.f32 %v3977, %v4105
        %v4234 = vmax.f32 %v3978, %v4106
        %v4235 = vmax.f32 %v3979, %v4107
        %v4236 = vmax.f32 %v3980, %v4108
        %v4237 = vmax.f32 %v3981, %v4109
        %v4238 = vld [vmem:[%s1216] sm:$0xff]
        %v4239 = vld [vmem:[%s1216 + $0x8] sm:$0xff]
        %v4240 = vld [vmem:[%s1216 + $0x10] sm:$0xff]
        %v4241 = vld [vmem:[%s1216 + $0x18] sm:$0xff]
        %v4242 = vld [vmem:[%s1216 + $0x20] sm:$0xff]
        %v4243 = vld [vmem:[%s1216 + $0x28] sm:$0xff]
        %v4244 = vld [vmem:[%s1216 + $0x30] sm:$0xff]
        %v4245 = vld [vmem:[%s1216 + $0x38] sm:$0xff]
        %v4246 = vld [vmem:[%s1216 + $0x40] sm:$0xff]
        %v4247 = vld [vmem:[%s1216 + $0x48] sm:$0xff]
        %v4248 = vld [vmem:[%s1216 + $0x50] sm:$0xff]
        %v4249 = vld [vmem:[%s1216 + $0x58] sm:$0xff]
        %v4250 = vld [vmem:[%s1216 + $0x60] sm:$0xff]
        %v4251 = vld [vmem:[%s1216 + $0x68] sm:$0xff]
        %v4252 = vld [vmem:[%s1216 + $0x70] sm:$0xff]
        %v4253 = vld [vmem:[%s1216 + $0x78] sm:$0xff]
        %v4254 = vld [vmem:[%s1216 + $0x80] sm:$0xff]
        %v4255 = vld [vmem:[%s1216 + $0x88] sm:$0xff]
        %v4256 = vld [vmem:[%s1216 + $0x90] sm:$0xff]
        %v4257 = vld [vmem:[%s1216 + $0x98] sm:$0xff]
        %v4258 = vld [vmem:[%s1216 + $0xa0] sm:$0xff]
        %v4259 = vld [vmem:[%s1216 + $0xa8] sm:$0xff]
        %v4260 = vld [vmem:[%s1216 + $0xb0] sm:$0xff]
        %v4261 = vld [vmem:[%s1216 + $0xb8] sm:$0xff]
        %v4262 = vld [vmem:[%s1216 + $0xc0] sm:$0xff]
        %v4263 = vld [vmem:[%s1216 + $0xc8] sm:$0xff]
        %v4264 = vld [vmem:[%s1216 + $0xd0] sm:$0xff]
        %v4265 = vld [vmem:[%s1216 + $0xd8] sm:$0xff]
        %v4266 = vld [vmem:[%s1216 + $0xe0] sm:$0xff]
        %v4267 = vld [vmem:[%s1216 + $0xe8] sm:$0xff]
        %v4268 = vld [vmem:[%s1216 + $0xf0] sm:$0xff]
        %v4269 = vld [vmem:[%s1216 + $0xf8] sm:$0xff]
        %v4270 = vld [vmem:[%s1216 + $0x100] sm:$0xff]
        %v4271 = vld [vmem:[%s1216 + $0x108] sm:$0xff]
        %v4272 = vld [vmem:[%s1216 + $0x110] sm:$0xff]
        %v4273 = vld [vmem:[%s1216 + $0x118] sm:$0xff]
        %v4274 = vld [vmem:[%s1216 + $0x120] sm:$0xff]
        %v4275 = vld [vmem:[%s1216 + $0x128] sm:$0xff]
        %v4276 = vld [vmem:[%s1216 + $0x130] sm:$0xff]
        %v4277 = vld [vmem:[%s1216 + $0x138] sm:$0xff]
        %v4278 = vld [vmem:[%s1216 + $0x140] sm:$0xff]
        %v4279 = vld [vmem:[%s1216 + $0x148] sm:$0xff]
        %v4280 = vld [vmem:[%s1216 + $0x150] sm:$0xff]
        %v4281 = vld [vmem:[%s1216 + $0x158] sm:$0xff]
        %v4282 = vld [vmem:[%s1216 + $0x160] sm:$0xff]
        %v4283 = vld [vmem:[%s1216 + $0x168] sm:$0xff]
        %v4284 = vld [vmem:[%s1216 + $0x170] sm:$0xff]
        %v4285 = vld [vmem:[%s1216 + $0x178] sm:$0xff]
        %v4286 = vld [vmem:[%s1216 + $0x180] sm:$0xff]
        %v4287 = vld [vmem:[%s1216 + $0x188] sm:$0xff]
        %v4288 = vld [vmem:[%s1216 + $0x190] sm:$0xff]
        %v4289 = vld [vmem:[%s1216 + $0x198] sm:$0xff]
        %v4290 = vld [vmem:[%s1216 + $0x1a0] sm:$0xff]
        %v4291 = vld [vmem:[%s1216 + $0x1a8] sm:$0xff]
        %v4292 = vld [vmem:[%s1216 + $0x1b0] sm:$0xff]
        %v4293 = vld [vmem:[%s1216 + $0x1b8] sm:$0xff]
        %v4294 = vld [vmem:[%s1216 + $0x1c0] sm:$0xff]
        %v4295 = vld [vmem:[%s1216 + $0x1c8] sm:$0xff]
        %v4296 = vld [vmem:[%s1216 + $0x1d0] sm:$0xff]
        %v4297 = vld [vmem:[%s1216 + $0x1d8] sm:$0xff]
        %v4298 = vld [vmem:[%s1216 + $0x1e0] sm:$0xff]
        %v4299 = vld [vmem:[%s1216 + $0x1e8] sm:$0xff]
        %v4300 = vld [vmem:[%s1216 + $0x1f0] sm:$0xff]
        %v4301 = vld [vmem:[%s1216 + $0x1f8] sm:$0xff]
        %v4302 = vld [vmem:[%s1216 + $0x200] sm:$0xff]
        %v4303 = vld [vmem:[%s1216 + $0x208] sm:$0xff]
        %v4304 = vld [vmem:[%s1216 + $0x210] sm:$0xff]
        %v4305 = vld [vmem:[%s1216 + $0x218] sm:$0xff]
        %v4306 = vld [vmem:[%s1216 + $0x220] sm:$0xff]
        %v4307 = vld [vmem:[%s1216 + $0x228] sm:$0xff]
        %v4308 = vld [vmem:[%s1216 + $0x230] sm:$0xff]
        %v4309 = vld [vmem:[%s1216 + $0x238] sm:$0xff]
        %v4310 = vld [vmem:[%s1216 + $0x240] sm:$0xff]
        %v4311 = vld [vmem:[%s1216 + $0x248] sm:$0xff]
        %v4312 = vld [vmem:[%s1216 + $0x250] sm:$0xff]
        %v4313 = vld [vmem:[%s1216 + $0x258] sm:$0xff]
        %v4314 = vld [vmem:[%s1216 + $0x260] sm:$0xff]
        %v4315 = vld [vmem:[%s1216 + $0x268] sm:$0xff]
        %v4316 = vld [vmem:[%s1216 + $0x270] sm:$0xff]
        %v4317 = vld [vmem:[%s1216 + $0x278] sm:$0xff]
        %v4318 = vld [vmem:[%s1216 + $0x280] sm:$0xff]
        %v4319 = vld [vmem:[%s1216 + $0x288] sm:$0xff]
        %v4320 = vld [vmem:[%s1216 + $0x290] sm:$0xff]
        %v4321 = vld [vmem:[%s1216 + $0x298] sm:$0xff]
        %v4322 = vld [vmem:[%s1216 + $0x2a0] sm:$0xff]
        %v4323 = vld [vmem:[%s1216 + $0x2a8] sm:$0xff]
        %v4324 = vld [vmem:[%s1216 + $0x2b0] sm:$0xff]
        %v4325 = vld [vmem:[%s1216 + $0x2b8] sm:$0xff]
        %v4326 = vld [vmem:[%s1216 + $0x2c0] sm:$0xff]
        %v4327 = vld [vmem:[%s1216 + $0x2c8] sm:$0xff]
        %v4328 = vld [vmem:[%s1216 + $0x2d0] sm:$0xff]
        %v4329 = vld [vmem:[%s1216 + $0x2d8] sm:$0xff]
        %v4330 = vld [vmem:[%s1216 + $0x2e0] sm:$0xff]
        %v4331 = vld [vmem:[%s1216 + $0x2e8] sm:$0xff]
        %v4332 = vld [vmem:[%s1216 + $0x2f0] sm:$0xff]
        %v4333 = vld [vmem:[%s1216 + $0x2f8] sm:$0xff]
        %v4334 = vld [vmem:[%s1216 + $0x300] sm:$0xff]
        %v4335 = vld [vmem:[%s1216 + $0x308] sm:$0xff]
        %v4336 = vld [vmem:[%s1216 + $0x310] sm:$0xff]
        %v4337 = vld [vmem:[%s1216 + $0x318] sm:$0xff]
        %v4338 = vld [vmem:[%s1216 + $0x320] sm:$0xff]
        %v4339 = vld [vmem:[%s1216 + $0x328] sm:$0xff]
        %v4340 = vld [vmem:[%s1216 + $0x330] sm:$0xff]
        %v4341 = vld [vmem:[%s1216 + $0x338] sm:$0xff]
        %v4342 = vld [vmem:[%s1216 + $0x340] sm:$0xff]
        %v4343 = vld [vmem:[%s1216 + $0x348] sm:$0xff]
        %v4344 = vld [vmem:[%s1216 + $0x350] sm:$0xff]
        %v4345 = vld [vmem:[%s1216 + $0x358] sm:$0xff]
        %v4346 = vld [vmem:[%s1216 + $0x360] sm:$0xff]
        %v4347 = vld [vmem:[%s1216 + $0x368] sm:$0xff]
        %v4348 = vld [vmem:[%s1216 + $0x370] sm:$0xff]
        %v4349 = vld [vmem:[%s1216 + $0x378] sm:$0xff]
        %v4350 = vld [vmem:[%s1216 + $0x380] sm:$0xff]
        %v4351 = vld [vmem:[%s1216 + $0x388] sm:$0xff]
        %v4352 = vld [vmem:[%s1216 + $0x390] sm:$0xff]
        %v4353 = vld [vmem:[%s1216 + $0x398] sm:$0xff]
        %v4354 = vld [vmem:[%s1216 + $0x3a0] sm:$0xff]
        %v4355 = vld [vmem:[%s1216 + $0x3a8] sm:$0xff]
        %v4356 = vld [vmem:[%s1216 + $0x3b0] sm:$0xff]
        %v4357 = vld [vmem:[%s1216 + $0x3b8] sm:$0xff]
        %v4358 = vld [vmem:[%s1216 + $0x3c0] sm:$0xff]
        %v4359 = vld [vmem:[%s1216 + $0x3c8] sm:$0xff]
        %v4360 = vld [vmem:[%s1216 + $0x3d0] sm:$0xff]
        %v4361 = vld [vmem:[%s1216 + $0x3d8] sm:$0xff]
        %v4362 = vld [vmem:[%s1216 + $0x3e0] sm:$0xff]
        %v4363 = vld [vmem:[%s1216 + $0x3e8] sm:$0xff]
        %v4364 = vld [vmem:[%s1216 + $0x3f0] sm:$0xff]
        %v4365 = vld [vmem:[%s1216 + $0x3f8] sm:$0xff]
        %v4366 = vmax.f32 %v4110, %v4238
        %v4367 = vmax.f32 %v4111, %v4239
        %v4368 = vmax.f32 %v4112, %v4240
        %v4369 = vmax.f32 %v4113, %v4241
        %v4370 = vmax.f32 %v4114, %v4242
        %v4371 = vmax.f32 %v4115, %v4243
        %v4372 = vmax.f32 %v4116, %v4244
        %v4373 = vmax.f32 %v4117, %v4245
        %v4374 = vmax.f32 %v4118, %v4246
        %v4375 = vmax.f32 %v4119, %v4247
        %v4376 = vmax.f32 %v4120, %v4248
        %v4377 = vmax.f32 %v4121, %v4249
        %v4378 = vmax.f32 %v4122, %v4250
        %v4379 = vmax.f32 %v4123, %v4251
        %v4380 = vmax.f32 %v4124, %v4252
        %v4381 = vmax.f32 %v4125, %v4253
        %v4382 = vmax.f32 %v4126, %v4254
        %v4383 = vmax.f32 %v4127, %v4255
        %v4384 = vmax.f32 %v4128, %v4256
        %v4385 = vmax.f32 %v4129, %v4257
        %v4386 = vmax.f32 %v4130, %v4258
        %v4387 = vmax.f32 %v4131, %v4259
        %v4388 = vmax.f32 %v4132, %v4260
        %v4389 = vmax.f32 %v4133, %v4261
        %v4390 = vmax.f32 %v4134, %v4262
        %v4391 = vmax.f32 %v4135, %v4263
        %v4392 = vmax.f32 %v4136, %v4264
        %v4393 = vmax.f32 %v4137, %v4265
        %v4394 = vmax.f32 %v4138, %v4266
        %v4395 = vmax.f32 %v4139, %v4267
        %v4396 = vmax.f32 %v4140, %v4268
        %v4397 = vmax.f32 %v4141, %v4269
        %v4398 = vmax.f32 %v4142, %v4270
        %v4399 = vmax.f32 %v4143, %v4271
        %v4400 = vmax.f32 %v4144, %v4272
        %v4401 = vmax.f32 %v4145, %v4273
        %v4402 = vmax.f32 %v4146, %v4274
        %v4403 = vmax.f32 %v4147, %v4275
        %v4404 = vmax.f32 %v4148, %v4276
        %v4405 = vmax.f32 %v4149, %v4277
        %v4406 = vmax.f32 %v4150, %v4278
        %v4407 = vmax.f32 %v4151, %v4279
        %v4408 = vmax.f32 %v4152, %v4280
        %v4409 = vmax.f32 %v4153, %v4281
        %v4410 = vmax.f32 %v4154, %v4282
        %v4411 = vmax.f32 %v4155, %v4283
        %v4412 = vmax.f32 %v4156, %v4284
        %v4413 = vmax.f32 %v4157, %v4285
        %v4414 = vmax.f32 %v4158, %v4286
        %v4415 = vmax.f32 %v4159, %v4287
        %v4416 = vmax.f32 %v4160, %v4288
        %v4417 = vmax.f32 %v4161, %v4289
        %v4418 = vmax.f32 %v4162, %v4290
        %v4419 = vmax.f32 %v4163, %v4291
        %v4420 = vmax.f32 %v4164, %v4292
        %v4421 = vmax.f32 %v4165, %v4293
        %v4422 = vmax.f32 %v4166, %v4294
        %v4423 = vmax.f32 %v4167, %v4295
        %v4424 = vmax.f32 %v4168, %v4296
        %v4425 = vmax.f32 %v4169, %v4297
        %v4426 = vmax.f32 %v4170, %v4298
        %v4427 = vmax.f32 %v4171, %v4299
        %v4428 = vmax.f32 %v4172, %v4300
        %v4429 = vmax.f32 %v4173, %v4301
        %v4430 = vmax.f32 %v4174, %v4302
        %v4431 = vmax.f32 %v4175, %v4303
        %v4432 = vmax.f32 %v4176, %v4304
        %v4433 = vmax.f32 %v4177, %v4305
        %v4434 = vmax.f32 %v4178, %v4306
        %v4435 = vmax.f32 %v4179, %v4307
        %v4436 = vmax.f32 %v4180, %v4308
        %v4437 = vmax.f32 %v4181, %v4309
        %v4438 = vmax.f32 %v4182, %v4310
        %v4439 = vmax.f32 %v4183, %v4311
        %v4440 = vmax.f32 %v4184, %v4312
        %v4441 = vmax.f32 %v4185, %v4313
        %v4442 = vmax.f32 %v4186, %v4314
        %v4443 = vmax.f32 %v4187, %v4315
        %v4444 = vmax.f32 %v4188, %v4316
        %v4445 = vmax.f32 %v4189, %v4317
        %v4446 = vmax.f32 %v4190, %v4318
        %v4447 = vmax.f32 %v4191, %v4319
        %v4448 = vmax.f32 %v4192, %v4320
        %v4449 = vmax.f32 %v4193, %v4321
        %v4450 = vmax.f32 %v4194, %v4322
        %v4451 = vmax.f32 %v4195, %v4323
        %v4452 = vmax.f32 %v4196, %v4324
        %v4453 = vmax.f32 %v4197, %v4325
        %v4454 = vmax.f32 %v4198, %v4326
        %v4455 = vmax.f32 %v4199, %v4327
        %v4456 = vmax.f32 %v4200, %v4328
        %v4457 = vmax.f32 %v4201, %v4329
        %v4458 = vmax.f32 %v4202, %v4330
        %v4459 = vmax.f32 %v4203, %v4331
        %v4460 = vmax.f32 %v4204, %v4332
        %v4461 = vmax.f32 %v4205, %v4333
        %v4462 = vmax.f32 %v4206, %v4334
        %v4463 = vmax.f32 %v4207, %v4335
        %v4464 = vmax.f32 %v4208, %v4336
        %v4465 = vmax.f32 %v4209, %v4337
        %v4466 = vmax.f32 %v4210, %v4338
        %v4467 = vmax.f32 %v4211, %v4339
        %v4468 = vmax.f32 %v4212, %v4340
        %v4469 = vmax.f32 %v4213, %v4341
        %v4470 = vmax.f32 %v4214, %v4342
        %v4471 = vmax.f32 %v4215, %v4343
        %v4472 = vmax.f32 %v4216, %v4344
        %v4473 = vmax.f32 %v4217, %v4345
        %v4474 = vmax.f32 %v4218, %v4346
        %v4475 = vmax.f32 %v4219, %v4347
        %v4476 = vmax.f32 %v4220, %v4348
        %v4477 = vmax.f32 %v4221, %v4349
        %v4478 = vmax.f32 %v4222, %v4350
        %v4479 = vmax.f32 %v4223, %v4351
        %v4480 = vmax.f32 %v4224, %v4352
        %v4481 = vmax.f32 %v4225, %v4353
        %v4482 = vmax.f32 %v4226, %v4354
        %v4483 = vmax.f32 %v4227, %v4355
        %v4484 = vmax.f32 %v4228, %v4356
        %v4485 = vmax.f32 %v4229, %v4357
        %v4486 = vmax.f32 %v4230, %v4358
        %v4487 = vmax.f32 %v4231, %v4359
        %v4488 = vmax.f32 %v4232, %v4360
        %v4489 = vmax.f32 %v4233, %v4361
        %v4490 = vmax.f32 %v4234, %v4362
        %v4491 = vmax.f32 %v4235, %v4363
        %v4492 = vmax.f32 %v4236, %v4364
        %v4493 = vmax.f32 %v4237, %v4365
        %v4494 = vld [vmem:[%s2117] sm:$0xff]
        %v4495 = vld [vmem:[%s2117 + $0x8] sm:$0xff]
        %v4496 = vld [vmem:[%s2117 + $0x10] sm:$0xff]
        %v4497 = vld [vmem:[%s2117 + $0x18] sm:$0xff]
        %v4498 = vld [vmem:[%s2117 + $0x20] sm:$0xff]
        %v4499 = vld [vmem:[%s2117 + $0x28] sm:$0xff]
        %v4500 = vld [vmem:[%s2117 + $0x30] sm:$0xff]
        %v4501 = vld [vmem:[%s2117 + $0x38] sm:$0xff]
        %v4502 = vld [vmem:[%s2117 + $0x40] sm:$0xff]
        %v4503 = vld [vmem:[%s2117 + $0x48] sm:$0xff]
        %v4504 = vld [vmem:[%s2117 + $0x50] sm:$0xff]
        %v4505 = vld [vmem:[%s2117 + $0x58] sm:$0xff]
        %v4506 = vld [vmem:[%s2117 + $0x60] sm:$0xff]
        %v4507 = vld [vmem:[%s2117 + $0x68] sm:$0xff]
        %v4508 = vld [vmem:[%s2117 + $0x70] sm:$0xff]
        %v4509 = vld [vmem:[%s2117 + $0x78] sm:$0xff]
        %v4510 = vld [vmem:[%s2117 + $0x80] sm:$0xff]
        %v4511 = vld [vmem:[%s2117 + $0x88] sm:$0xff]
        %v4512 = vld [vmem:[%s2117 + $0x90] sm:$0xff]
        %v4513 = vld [vmem:[%s2117 + $0x98] sm:$0xff]
        %v4514 = vld [vmem:[%s2117 + $0xa0] sm:$0xff]
        %v4515 = vld [vmem:[%s2117 + $0xa8] sm:$0xff]
        %v4516 = vld [vmem:[%s2117 + $0xb0] sm:$0xff]
        %v4517 = vld [vmem:[%s2117 + $0xb8] sm:$0xff]
        %v4518 = vld [vmem:[%s2117 + $0xc0] sm:$0xff]
        %v4519 = vld [vmem:[%s2117 + $0xc8] sm:$0xff]
        %v4520 = vld [vmem:[%s2117 + $0xd0] sm:$0xff]
        %v4521 = vld [vmem:[%s2117 + $0xd8] sm:$0xff]
        %v4522 = vld [vmem:[%s2117 + $0xe0] sm:$0xff]
        %v4523 = vld [vmem:[%s2117 + $0xe8] sm:$0xff]
        %v4524 = vld [vmem:[%s2117 + $0xf0] sm:$0xff]
        %v4525 = vld [vmem:[%s2117 + $0xf8] sm:$0xff]
        %v4526 = vld [vmem:[%s2117 + $0x100] sm:$0xff]
        %v4527 = vld [vmem:[%s2117 + $0x108] sm:$0xff]
        %v4528 = vld [vmem:[%s2117 + $0x110] sm:$0xff]
        %v4529 = vld [vmem:[%s2117 + $0x118] sm:$0xff]
        %v4530 = vld [vmem:[%s2117 + $0x120] sm:$0xff]
        %v4531 = vld [vmem:[%s2117 + $0x128] sm:$0xff]
        %v4532 = vld [vmem:[%s2117 + $0x130] sm:$0xff]
        %v4533 = vld [vmem:[%s2117 + $0x138] sm:$0xff]
        %v4534 = vld [vmem:[%s2117 + $0x140] sm:$0xff]
        %v4535 = vld [vmem:[%s2117 + $0x148] sm:$0xff]
        %v4536 = vld [vmem:[%s2117 + $0x150] sm:$0xff]
        %v4537 = vld [vmem:[%s2117 + $0x158] sm:$0xff]
        %v4538 = vld [vmem:[%s2117 + $0x160] sm:$0xff]
        %v4539 = vld [vmem:[%s2117 + $0x168] sm:$0xff]
        %v4540 = vld [vmem:[%s2117 + $0x170] sm:$0xff]
        %v4541 = vld [vmem:[%s2117 + $0x178] sm:$0xff]
        %v4542 = vld [vmem:[%s2117 + $0x180] sm:$0xff]
        %v4543 = vld [vmem:[%s2117 + $0x188] sm:$0xff]
        %v4544 = vld [vmem:[%s2117 + $0x190] sm:$0xff]
        %v4545 = vld [vmem:[%s2117 + $0x198] sm:$0xff]
        %v4546 = vld [vmem:[%s2117 + $0x1a0] sm:$0xff]
        %v4547 = vld [vmem:[%s2117 + $0x1a8] sm:$0xff]
        %v4548 = vld [vmem:[%s2117 + $0x1b0] sm:$0xff]
        %v4549 = vld [vmem:[%s2117 + $0x1b8] sm:$0xff]
        %v4550 = vld [vmem:[%s2117 + $0x1c0] sm:$0xff]
        %v4551 = vld [vmem:[%s2117 + $0x1c8] sm:$0xff]
        %v4552 = vld [vmem:[%s2117 + $0x1d0] sm:$0xff]
        %v4553 = vld [vmem:[%s2117 + $0x1d8] sm:$0xff]
        %v4554 = vld [vmem:[%s2117 + $0x1e0] sm:$0xff]
        %v4555 = vld [vmem:[%s2117 + $0x1e8] sm:$0xff]
        %v4556 = vld [vmem:[%s2117 + $0x1f0] sm:$0xff]
        %v4557 = vld [vmem:[%s2117 + $0x1f8] sm:$0xff]
        %v4558 = vld [vmem:[%s2117 + $0x200] sm:$0xff]
        %v4559 = vld [vmem:[%s2117 + $0x208] sm:$0xff]
        %v4560 = vld [vmem:[%s2117 + $0x210] sm:$0xff]
        %v4561 = vld [vmem:[%s2117 + $0x218] sm:$0xff]
        %v4562 = vld [vmem:[%s2117 + $0x220] sm:$0xff]
        %v4563 = vld [vmem:[%s2117 + $0x228] sm:$0xff]
        %v4564 = vld [vmem:[%s2117 + $0x230] sm:$0xff]
        %v4565 = vld [vmem:[%s2117 + $0x238] sm:$0xff]
        %v4566 = vld [vmem:[%s2117 + $0x240] sm:$0xff]
        %v4567 = vld [vmem:[%s2117 + $0x248] sm:$0xff]
        %v4568 = vld [vmem:[%s2117 + $0x250] sm:$0xff]
        %v4569 = vld [vmem:[%s2117 + $0x258] sm:$0xff]
        %v4570 = vld [vmem:[%s2117 + $0x260] sm:$0xff]
        %v4571 = vld [vmem:[%s2117 + $0x268] sm:$0xff]
        %v4572 = vld [vmem:[%s2117 + $0x270] sm:$0xff]
        %v4573 = vld [vmem:[%s2117 + $0x278] sm:$0xff]
        %v4574 = vld [vmem:[%s2117 + $0x280] sm:$0xff]
        %v4575 = vld [vmem:[%s2117 + $0x288] sm:$0xff]
        %v4576 = vld [vmem:[%s2117 + $0x290] sm:$0xff]
        %v4577 = vld [vmem:[%s2117 + $0x298] sm:$0xff]
        %v4578 = vld [vmem:[%s2117 + $0x2a0] sm:$0xff]
        %v4579 = vld [vmem:[%s2117 + $0x2a8] sm:$0xff]
        %v4580 = vld [vmem:[%s2117 + $0x2b0] sm:$0xff]
        %v4581 = vld [vmem:[%s2117 + $0x2b8] sm:$0xff]
        %v4582 = vld [vmem:[%s2117 + $0x2c0] sm:$0xff]
        %v4583 = vld [vmem:[%s2117 + $0x2c8] sm:$0xff]
        %v4584 = vld [vmem:[%s2117 + $0x2d0] sm:$0xff]
        %v4585 = vld [vmem:[%s2117 + $0x2d8] sm:$0xff]
        %v4586 = vld [vmem:[%s2117 + $0x2e0] sm:$0xff]
        %v4587 = vld [vmem:[%s2117 + $0x2e8] sm:$0xff]
        %v4588 = vld [vmem:[%s2117 + $0x2f0] sm:$0xff]
        %v4589 = vld [vmem:[%s2117 + $0x2f8] sm:$0xff]
        %v4590 = vld [vmem:[%s2117 + $0x300] sm:$0xff]
        %v4591 = vld [vmem:[%s2117 + $0x308] sm:$0xff]
        %v4592 = vld [vmem:[%s2117 + $0x310] sm:$0xff]
        %v4593 = vld [vmem:[%s2117 + $0x318] sm:$0xff]
        %v4594 = vld [vmem:[%s2117 + $0x320] sm:$0xff]
        %v4595 = vld [vmem:[%s2117 + $0x328] sm:$0xff]
        %v4596 = vld [vmem:[%s2117 + $0x330] sm:$0xff]
        %v4597 = vld [vmem:[%s2117 + $0x338] sm:$0xff]
        %v4598 = vld [vmem:[%s2117 + $0x340] sm:$0xff]
        %v4599 = vld [vmem:[%s2117 + $0x348] sm:$0xff]
        %v4600 = vld [vmem:[%s2117 + $0x350] sm:$0xff]
        %v4601 = vld [vmem:[%s2117 + $0x358] sm:$0xff]
        %v4602 = vld [vmem:[%s2117 + $0x360] sm:$0xff]
        %v4603 = vld [vmem:[%s2117 + $0x368] sm:$0xff]
        %v4604 = vld [vmem:[%s2117 + $0x370] sm:$0xff]
        %v4605 = vld [vmem:[%s2117 + $0x378] sm:$0xff]
        %v4606 = vld [vmem:[%s2117 + $0x380] sm:$0xff]
        %v4607 = vld [vmem:[%s2117 + $0x388] sm:$0xff]
        %v4608 = vld [vmem:[%s2117 + $0x390] sm:$0xff]
        %v4609 = vld [vmem:[%s2117 + $0x398] sm:$0xff]
        %v4610 = vld [vmem:[%s2117 + $0x3a0] sm:$0xff]
        %v4611 = vld [vmem:[%s2117 + $0x3a8] sm:$0xff]
        %v4612 = vld [vmem:[%s2117 + $0x3b0] sm:$0xff]
        %v4613 = vld [vmem:[%s2117 + $0x3b8] sm:$0xff]
        %v4614 = vld [vmem:[%s2117 + $0x3c0] sm:$0xff]
        %v4615 = vld [vmem:[%s2117 + $0x3c8] sm:$0xff]
        %v4616 = vld [vmem:[%s2117 + $0x3d0] sm:$0xff]
        %v4617 = vld [vmem:[%s2117 + $0x3d8] sm:$0xff]
        %v4618 = vld [vmem:[%s2117 + $0x3e0] sm:$0xff]
        %v4619 = vld [vmem:[%s2117 + $0x3e8] sm:$0xff]
        %v4620 = vld [vmem:[%s2117 + $0x3f0] sm:$0xff]
        %v4621 = vld [vmem:[%s2117 + $0x3f8] sm:$0xff]
        %v4622 = vmax.f32 %v4366, %v4494
        %v4623 = vmax.f32 %v4367, %v4495
        %v4624 = vmax.f32 %v4368, %v4496
        %v4625 = vmax.f32 %v4369, %v4497
        %v4626 = vmax.f32 %v4370, %v4498
        %v4627 = vmax.f32 %v4371, %v4499
        %v4628 = vmax.f32 %v4372, %v4500
        %v4629 = vmax.f32 %v4373, %v4501
        %v4630 = vmax.f32 %v4374, %v4502
        %v4631 = vmax.f32 %v4375, %v4503
        %v4632 = vmax.f32 %v4376, %v4504
        %v4633 = vmax.f32 %v4377, %v4505
        %v4634 = vmax.f32 %v4378, %v4506
        %v4635 = vmax.f32 %v4379, %v4507
        %v4636 = vmax.f32 %v4380, %v4508
        %v4637 = vmax.f32 %v4381, %v4509
        %v4638 = vmax.f32 %v4382, %v4510
        %v4639 = vmax.f32 %v4383, %v4511
        %v4640 = vmax.f32 %v4384, %v4512
        %v4641 = vmax.f32 %v4385, %v4513
        %v4642 = vmax.f32 %v4386, %v4514
        %v4643 = vmax.f32 %v4387, %v4515
        %v4644 = vmax.f32 %v4388, %v4516
        %v4645 = vmax.f32 %v4389, %v4517
        %v4646 = vmax.f32 %v4390, %v4518
        %v4647 = vmax.f32 %v4391, %v4519
        %v4648 = vmax.f32 %v4392, %v4520
        %v4649 = vmax.f32 %v4393, %v4521
        %v4650 = vmax.f32 %v4394, %v4522
        %v4651 = vmax.f32 %v4395, %v4523
        %v4652 = vmax.f32 %v4396, %v4524
        %v4653 = vmax.f32 %v4397, %v4525
        %v4654 = vmax.f32 %v4398, %v4526
        %v4655 = vmax.f32 %v4399, %v4527
        %v4656 = vmax.f32 %v4400, %v4528
        %v4657 = vmax.f32 %v4401, %v4529
        %v4658 = vmax.f32 %v4402, %v4530
        %v4659 = vmax.f32 %v4403, %v4531
        %v4660 = vmax.f32 %v4404, %v4532
        %v4661 = vmax.f32 %v4405, %v4533
        %v4662 = vmax.f32 %v4406, %v4534
        %v4663 = vmax.f32 %v4407, %v4535
        %v4664 = vmax.f32 %v4408, %v4536
        %v4665 = vmax.f32 %v4409, %v4537
        %v4666 = vmax.f32 %v4410, %v4538
        %v4667 = vmax.f32 %v4411, %v4539
        %v4668 = vmax.f32 %v4412, %v4540
        %v4669 = vmax.f32 %v4413, %v4541
        %v4670 = vmax.f32 %v4414, %v4542
        %v4671 = vmax.f32 %v4415, %v4543
        %v4672 = vmax.f32 %v4416, %v4544
        %v4673 = vmax.f32 %v4417, %v4545
        %v4674 = vmax.f32 %v4418, %v4546
        %v4675 = vmax.f32 %v4419, %v4547
        %v4676 = vmax.f32 %v4420, %v4548
        %v4677 = vmax.f32 %v4421, %v4549
        %v4678 = vmax.f32 %v4422, %v4550
        %v4679 = vmax.f32 %v4423, %v4551
        %v4680 = vmax.f32 %v4424, %v4552
        %v4681 = vmax.f32 %v4425, %v4553
        %v4682 = vmax.f32 %v4426, %v4554
        %v4683 = vmax.f32 %v4427, %v4555
        %v4684 = vmax.f32 %v4428, %v4556
        %v4685 = vmax.f32 %v4429, %v4557
        %v4686 = vmax.f32 %v4430, %v4558
        %v4687 = vmax.f32 %v4431, %v4559
        %v4688 = vmax.f32 %v4432, %v4560
        %v4689 = vmax.f32 %v4433, %v4561
        %v4690 = vmax.f32 %v4434, %v4562
        %v4691 = vmax.f32 %v4435, %v4563
        %v4692 = vmax.f32 %v4436, %v4564
        %v4693 = vmax.f32 %v4437, %v4565
        %v4694 = vmax.f32 %v4438, %v4566
        %v4695 = vmax.f32 %v4439, %v4567
        %v4696 = vmax.f32 %v4440, %v4568
        %v4697 = vmax.f32 %v4441, %v4569
        %v4698 = vmax.f32 %v4442, %v4570
        %v4699 = vmax.f32 %v4443, %v4571
        %v4700 = vmax.f32 %v4444, %v4572
        %v4701 = vmax.f32 %v4445, %v4573
        %v4702 = vmax.f32 %v4446, %v4574
        %v4703 = vmax.f32 %v4447, %v4575
        %v4704 = vmax.f32 %v4448, %v4576
        %v4705 = vmax.f32 %v4449, %v4577
        %v4706 = vmax.f32 %v4450, %v4578
        %v4707 = vmax.f32 %v4451, %v4579
        %v4708 = vmax.f32 %v4452, %v4580
        %v4709 = vmax.f32 %v4453, %v4581
        %v4710 = vmax.f32 %v4454, %v4582
        %v4711 = vmax.f32 %v4455, %v4583
        %v4712 = vmax.f32 %v4456, %v4584
        %v4713 = vmax.f32 %v4457, %v4585
        %v4714 = vmax.f32 %v4458, %v4586
        %v4715 = vmax.f32 %v4459, %v4587
        %v4716 = vmax.f32 %v4460, %v4588
        %v4717 = vmax.f32 %v4461, %v4589
        %v4718 = vmax.f32 %v4462, %v4590
        %v4719 = vmax.f32 %v4463, %v4591
        %v4720 = vmax.f32 %v4464, %v4592
        %v4721 = vmax.f32 %v4465, %v4593
        %v4722 = vmax.f32 %v4466, %v4594
        %v4723 = vmax.f32 %v4467, %v4595
        %v4724 = vmax.f32 %v4468, %v4596
        %v4725 = vmax.f32 %v4469, %v4597
        %v4726 = vmax.f32 %v4470, %v4598
        %v4727 = vmax.f32 %v4471, %v4599
        %v4728 = vmax.f32 %v4472, %v4600
        %v4729 = vmax.f32 %v4473, %v4601
        %v4730 = vmax.f32 %v4474, %v4602
        %v4731 = vmax.f32 %v4475, %v4603
        %v4732 = vmax.f32 %v4476, %v4604
        %v4733 = vmax.f32 %v4477, %v4605
        %v4734 = vmax.f32 %v4478, %v4606
        %v4735 = vmax.f32 %v4479, %v4607
        %v4736 = vmax.f32 %v4480, %v4608
        %v4737 = vmax.f32 %v4481, %v4609
        %v4738 = vmax.f32 %v4482, %v4610
        %v4739 = vmax.f32 %v4483, %v4611
        %v4740 = vmax.f32 %v4484, %v4612
        %v4741 = vmax.f32 %v4485, %v4613
        %v4742 = vmax.f32 %v4486, %v4614
        %v4743 = vmax.f32 %v4487, %v4615
        %v4744 = vmax.f32 %v4488, %v4616
        %v4745 = vmax.f32 %v4489, %v4617
        %v4746 = vmax.f32 %v4490, %v4618
        %v4747 = vmax.f32 %v4491, %v4619
        %v4748 = vmax.f32 %v4492, %v4620
        %v4749 = vmax.f32 %v4493, %v4621
        %v4750 = vld [vmem:[%s2374] sm:$0xff]
        %v4751 = vld [vmem:[%s2374 + $0x8] sm:$0xff]
        %v4752 = vld [vmem:[%s2374 + $0x10] sm:$0xff]
        %v4753 = vld [vmem:[%s2374 + $0x18] sm:$0xff]
        %v4754 = vld [vmem:[%s2374 + $0x20] sm:$0xff]
        %v4755 = vld [vmem:[%s2374 + $0x28] sm:$0xff]
        %v4756 = vld [vmem:[%s2374 + $0x30] sm:$0xff]
        %v4757 = vld [vmem:[%s2374 + $0x38] sm:$0xff]
        %v4758 = vld [vmem:[%s2374 + $0x40] sm:$0xff]
        %v4759 = vld [vmem:[%s2374 + $0x48] sm:$0xff]
        %v4760 = vld [vmem:[%s2374 + $0x50] sm:$0xff]
        %v4761 = vld [vmem:[%s2374 + $0x58] sm:$0xff]
        %v4762 = vld [vmem:[%s2374 + $0x60] sm:$0xff]
        %v4763 = vld [vmem:[%s2374 + $0x68] sm:$0xff]
        %v4764 = vld [vmem:[%s2374 + $0x70] sm:$0xff]
        %v4765 = vld [vmem:[%s2374 + $0x78] sm:$0xff]
        %v4766 = vld [vmem:[%s2374 + $0x80] sm:$0xff]
        %v4767 = vld [vmem:[%s2374 + $0x88] sm:$0xff]
        %v4768 = vld [vmem:[%s2374 + $0x90] sm:$0xff]
        %v4769 = vld [vmem:[%s2374 + $0x98] sm:$0xff]
        %v4770 = vld [vmem:[%s2374 + $0xa0] sm:$0xff]
        %v4771 = vld [vmem:[%s2374 + $0xa8] sm:$0xff]
        %v4772 = vld [vmem:[%s2374 + $0xb0] sm:$0xff]
        %v4773 = vld [vmem:[%s2374 + $0xb8] sm:$0xff]
        %v4774 = vld [vmem:[%s2374 + $0xc0] sm:$0xff]
        %v4775 = vld [vmem:[%s2374 + $0xc8] sm:$0xff]
        %v4776 = vld [vmem:[%s2374 + $0xd0] sm:$0xff]
        %v4777 = vld [vmem:[%s2374 + $0xd8] sm:$0xff]
        %v4778 = vld [vmem:[%s2374 + $0xe0] sm:$0xff]
        %v4779 = vld [vmem:[%s2374 + $0xe8] sm:$0xff]
        %v4780 = vld [vmem:[%s2374 + $0xf0] sm:$0xff]
        %v4781 = vld [vmem:[%s2374 + $0xf8] sm:$0xff]
        %v4782 = vld [vmem:[%s2374 + $0x100] sm:$0xff]
        %v4783 = vld [vmem:[%s2374 + $0x108] sm:$0xff]
        %v4784 = vld [vmem:[%s2374 + $0x110] sm:$0xff]
        %v4785 = vld [vmem:[%s2374 + $0x118] sm:$0xff]
        %v4786 = vld [vmem:[%s2374 + $0x120] sm:$0xff]
        %v4787 = vld [vmem:[%s2374 + $0x128] sm:$0xff]
        %v4788 = vld [vmem:[%s2374 + $0x130] sm:$0xff]
        %v4789 = vld [vmem:[%s2374 + $0x138] sm:$0xff]
        %v4790 = vld [vmem:[%s2374 + $0x140] sm:$0xff]
        %v4791 = vld [vmem:[%s2374 + $0x148] sm:$0xff]
        %v4792 = vld [vmem:[%s2374 + $0x150] sm:$0xff]
        %v4793 = vld [vmem:[%s2374 + $0x158] sm:$0xff]
        %v4794 = vld [vmem:[%s2374 + $0x160] sm:$0xff]
        %v4795 = vld [vmem:[%s2374 + $0x168] sm:$0xff]
        %v4796 = vld [vmem:[%s2374 + $0x170] sm:$0xff]
        %v4797 = vld [vmem:[%s2374 + $0x178] sm:$0xff]
        %v4798 = vld [vmem:[%s2374 + $0x180] sm:$0xff]
        %v4799 = vld [vmem:[%s2374 + $0x188] sm:$0xff]
        %v4800 = vld [vmem:[%s2374 + $0x190] sm:$0xff]
        %v4801 = vld [vmem:[%s2374 + $0x198] sm:$0xff]
        %v4802 = vld [vmem:[%s2374 + $0x1a0] sm:$0xff]
        %v4803 = vld [vmem:[%s2374 + $0x1a8] sm:$0xff]
        %v4804 = vld [vmem:[%s2374 + $0x1b0] sm:$0xff]
        %v4805 = vld [vmem:[%s2374 + $0x1b8] sm:$0xff]
        %v4806 = vld [vmem:[%s2374 + $0x1c0] sm:$0xff]
        %v4807 = vld [vmem:[%s2374 + $0x1c8] sm:$0xff]
        %v4808 = vld [vmem:[%s2374 + $0x1d0] sm:$0xff]
        %v4809 = vld [vmem:[%s2374 + $0x1d8] sm:$0xff]
        %v4810 = vld [vmem:[%s2374 + $0x1e0] sm:$0xff]
        %v4811 = vld [vmem:[%s2374 + $0x1e8] sm:$0xff]
        %v4812 = vld [vmem:[%s2374 + $0x1f0] sm:$0xff]
        %v4813 = vld [vmem:[%s2374 + $0x1f8] sm:$0xff]
        %v4814 = vld [vmem:[%s2374 + $0x200] sm:$0xff]
        %v4815 = vld [vmem:[%s2374 + $0x208] sm:$0xff]
        %v4816 = vld [vmem:[%s2374 + $0x210] sm:$0xff]
        %v4817 = vld [vmem:[%s2374 + $0x218] sm:$0xff]
        %v4818 = vld [vmem:[%s2374 + $0x220] sm:$0xff]
        %v4819 = vld [vmem:[%s2374 + $0x228] sm:$0xff]
        %v4820 = vld [vmem:[%s2374 + $0x230] sm:$0xff]
        %v4821 = vld [vmem:[%s2374 + $0x238] sm:$0xff]
        %v4822 = vld [vmem:[%s2374 + $0x240] sm:$0xff]
        %v4823 = vld [vmem:[%s2374 + $0x248] sm:$0xff]
        %v4824 = vld [vmem:[%s2374 + $0x250] sm:$0xff]
        %v4825 = vld [vmem:[%s2374 + $0x258] sm:$0xff]
        %v4826 = vld [vmem:[%s2374 + $0x260] sm:$0xff]
        %v4827 = vld [vmem:[%s2374 + $0x268] sm:$0xff]
        %v4828 = vld [vmem:[%s2374 + $0x270] sm:$0xff]
        %v4829 = vld [vmem:[%s2374 + $0x278] sm:$0xff]
        %v4830 = vld [vmem:[%s2374 + $0x280] sm:$0xff]
        %v4831 = vld [vmem:[%s2374 + $0x288] sm:$0xff]
        %v4832 = vld [vmem:[%s2374 + $0x290] sm:$0xff]
        %v4833 = vld [vmem:[%s2374 + $0x298] sm:$0xff]
        %v4834 = vld [vmem:[%s2374 + $0x2a0] sm:$0xff]
        %v4835 = vld [vmem:[%s2374 + $0x2a8] sm:$0xff]
        %v4836 = vld [vmem:[%s2374 + $0x2b0] sm:$0xff]
        %v4837 = vld [vmem:[%s2374 + $0x2b8] sm:$0xff]
        %v4838 = vld [vmem:[%s2374 + $0x2c0] sm:$0xff]
        %v4839 = vld [vmem:[%s2374 + $0x2c8] sm:$0xff]
        %v4840 = vld [vmem:[%s2374 + $0x2d0] sm:$0xff]
        %v4841 = vld [vmem:[%s2374 + $0x2d8] sm:$0xff]
        %v4842 = vld [vmem:[%s2374 + $0x2e0] sm:$0xff]
        %v4843 = vld [vmem:[%s2374 + $0x2e8] sm:$0xff]
        %v4844 = vld [vmem:[%s2374 + $0x2f0] sm:$0xff]
        %v4845 = vld [vmem:[%s2374 + $0x2f8] sm:$0xff]
        %v4846 = vld [vmem:[%s2374 + $0x300] sm:$0xff]
        %v4847 = vld [vmem:[%s2374 + $0x308] sm:$0xff]
        %v4848 = vld [vmem:[%s2374 + $0x310] sm:$0xff]
        %v4849 = vld [vmem:[%s2374 + $0x318] sm:$0xff]
        %v4850 = vld [vmem:[%s2374 + $0x320] sm:$0xff]
        %v4851 = vld [vmem:[%s2374 + $0x328] sm:$0xff]
        %v4852 = vld [vmem:[%s2374 + $0x330] sm:$0xff]
        %v4853 = vld [vmem:[%s2374 + $0x338] sm:$0xff]
        %v4854 = vld [vmem:[%s2374 + $0x340] sm:$0xff]
        %v4855 = vld [vmem:[%s2374 + $0x348] sm:$0xff]
        %v4856 = vld [vmem:[%s2374 + $0x350] sm:$0xff]
        %v4857 = vld [vmem:[%s2374 + $0x358] sm:$0xff]
        %v4858 = vld [vmem:[%s2374 + $0x360] sm:$0xff]
        %v4859 = vld [vmem:[%s2374 + $0x368] sm:$0xff]
        %v4860 = vld [vmem:[%s2374 + $0x370] sm:$0xff]
        %v4861 = vld [vmem:[%s2374 + $0x378] sm:$0xff]
        %v4862 = vld [vmem:[%s2374 + $0x380] sm:$0xff]
        %v4863 = vld [vmem:[%s2374 + $0x388] sm:$0xff]
        %v4864 = vld [vmem:[%s2374 + $0x390] sm:$0xff]
        %v4865 = vld [vmem:[%s2374 + $0x398] sm:$0xff]
        %v4866 = vld [vmem:[%s2374 + $0x3a0] sm:$0xff]
        %v4867 = vld [vmem:[%s2374 + $0x3a8] sm:$0xff]
        %v4868 = vld [vmem:[%s2374 + $0x3b0] sm:$0xff]
        %v4869 = vld [vmem:[%s2374 + $0x3b8] sm:$0xff]
        %v4870 = vld [vmem:[%s2374 + $0x3c0] sm:$0xff]
        %v4871 = vld [vmem:[%s2374 + $0x3c8] sm:$0xff]
        %v4872 = vld [vmem:[%s2374 + $0x3d0] sm:$0xff]
        %v4873 = vld [vmem:[%s2374 + $0x3d8] sm:$0xff]
        %v4874 = vld [vmem:[%s2374 + $0x3e0] sm:$0xff]
        %v4875 = vld [vmem:[%s2374 + $0x3e8] sm:$0xff]
        %v4876 = vld [vmem:[%s2374 + $0x3f0] sm:$0xff]
        %v4877 = vld [vmem:[%s2374 + $0x3f8] sm:$0xff]
        %v4878 = vmax.f32 %v4622, %v4750
        %v4879 = vmax.f32 %v4623, %v4751
        %v4880 = vmax.f32 %v4624, %v4752
        %v4881 = vmax.f32 %v4625, %v4753
        %v4882 = vmax.f32 %v4626, %v4754
        %v4883 = vmax.f32 %v4627, %v4755
        %v4884 = vmax.f32 %v4628, %v4756
        %v4885 = vmax.f32 %v4629, %v4757
        %v4886 = vmax.f32 %v4630, %v4758
        %v4887 = vmax.f32 %v4631, %v4759
        %v4888 = vmax.f32 %v4632, %v4760
        %v4889 = vmax.f32 %v4633, %v4761
        %v4890 = vmax.f32 %v4634, %v4762
        %v4891 = vmax.f32 %v4635, %v4763
        %v4892 = vmax.f32 %v4636, %v4764
        %v4893 = vmax.f32 %v4637, %v4765
        %v4894 = vmax.f32 %v4638, %v4766
        %v4895 = vmax.f32 %v4639, %v4767
        %v4896 = vmax.f32 %v4640, %v4768
        %v4897 = vmax.f32 %v4641, %v4769
        %v4898 = vmax.f32 %v4642, %v4770
        %v4899 = vmax.f32 %v4643, %v4771
        %v4900 = vmax.f32 %v4644, %v4772
        %v4901 = vmax.f32 %v4645, %v4773
        %v4902 = vmax.f32 %v4646, %v4774
        %v4903 = vmax.f32 %v4647, %v4775
        %v4904 = vmax.f32 %v4648, %v4776
        %v4905 = vmax.f32 %v4649, %v4777
        %v4906 = vmax.f32 %v4650, %v4778
        %v4907 = vmax.f32 %v4651, %v4779
        %v4908 = vmax.f32 %v4652, %v4780
        %v4909 = vmax.f32 %v4653, %v4781
        %v4910 = vmax.f32 %v4654, %v4782
        %v4911 = vmax.f32 %v4655, %v4783
        %v4912 = vmax.f32 %v4656, %v4784
        %v4913 = vmax.f32 %v4657, %v4785
        %v4914 = vmax.f32 %v4658, %v4786
        %v4915 = vmax.f32 %v4659, %v4787
        %v4916 = vmax.f32 %v4660, %v4788
        %v4917 = vmax.f32 %v4661, %v4789
        %v4918 = vmax.f32 %v4662, %v4790
        %v4919 = vmax.f32 %v4663, %v4791
        %v4920 = vmax.f32 %v4664, %v4792
        %v4921 = vmax.f32 %v4665, %v4793
        %v4922 = vmax.f32 %v4666, %v4794
        %v4923 = vmax.f32 %v4667, %v4795
        %v4924 = vmax.f32 %v4668, %v4796
        %v4925 = vmax.f32 %v4669, %v4797
        %v4926 = vmax.f32 %v4670, %v4798
        %v4927 = vmax.f32 %v4671, %v4799
        %v4928 = vmax.f32 %v4672, %v4800
        %v4929 = vmax.f32 %v4673, %v4801
        %v4930 = vmax.f32 %v4674, %v4802
        %v4931 = vmax.f32 %v4675, %v4803
        %v4932 = vmax.f32 %v4676, %v4804
        %v4933 = vmax.f32 %v4677, %v4805
        %v4934 = vmax.f32 %v4678, %v4806
        %v4935 = vmax.f32 %v4679, %v4807
        %v4936 = vmax.f32 %v4680, %v4808
        %v4937 = vmax.f32 %v4681, %v4809
        %v4938 = vmax.f32 %v4682, %v4810
        %v4939 = vmax.f32 %v4683, %v4811
        %v4940 = vmax.f32 %v4684, %v4812
        %v4941 = vmax.f32 %v4685, %v4813
        %v4942 = vmax.f32 %v4686, %v4814
        %v4943 = vmax.f32 %v4687, %v4815
        %v4944 = vmax.f32 %v4688, %v4816
        %v4945 = vmax.f32 %v4689, %v4817
        %v4946 = vmax.f32 %v4690, %v4818
        %v4947 = vmax.f32 %v4691, %v4819
        %v4948 = vmax.f32 %v4692, %v4820
        %v4949 = vmax.f32 %v4693, %v4821
        %v4950 = vmax.f32 %v4694, %v4822
        %v4951 = vmax.f32 %v4695, %v4823
        %v4952 = vmax.f32 %v4696, %v4824
        %v4953 = vmax.f32 %v4697, %v4825
        %v4954 = vmax.f32 %v4698, %v4826
        %v4955 = vmax.f32 %v4699, %v4827
        %v4956 = vmax.f32 %v4700, %v4828
        %v4957 = vmax.f32 %v4701, %v4829
        %v4958 = vmax.f32 %v4702, %v4830
        %v4959 = vmax.f32 %v4703, %v4831
        %v4960 = vmax.f32 %v4704, %v4832
        %v4961 = vmax.f32 %v4705, %v4833
        %v4962 = vmax.f32 %v4706, %v4834
        %v4963 = vmax.f32 %v4707, %v4835
        %v4964 = vmax.f32 %v4708, %v4836
        %v4965 = vmax.f32 %v4709, %v4837
        %v4966 = vmax.f32 %v4710, %v4838
        %v4967 = vmax.f32 %v4711, %v4839
        %v4968 = vmax.f32 %v4712, %v4840
        %v4969 = vmax.f32 %v4713, %v4841
        %v4970 = vmax.f32 %v4714, %v4842
        %v4971 = vmax.f32 %v4715, %v4843
        %v4972 = vmax.f32 %v4716, %v4844
        %v4973 = vmax.f32 %v4717, %v4845
        %v4974 = vmax.f32 %v4718, %v4846
        %v4975 = vmax.f32 %v4719, %v4847
        %v4976 = vmax.f32 %v4720, %v4848
        %v4977 = vmax.f32 %v4721, %v4849
        %v4978 = vmax.f32 %v4722, %v4850
        %v4979 = vmax.f32 %v4723, %v4851
        %v4980 = vmax.f32 %v4724, %v4852
        %v4981 = vmax.f32 %v4725, %v4853
        %v4982 = vmax.f32 %v4726, %v4854
        %v4983 = vmax.f32 %v4727, %v4855
        %v4984 = vmax.f32 %v4728, %v4856
        %v4985 = vmax.f32 %v4729, %v4857
        %v4986 = vmax.f32 %v4730, %v4858
        %v4987 = vmax.f32 %v4731, %v4859
        %v4988 = vmax.f32 %v4732, %v4860
        %v4989 = vmax.f32 %v4733, %v4861
        %v4990 = vmax.f32 %v4734, %v4862
        %v4991 = vmax.f32 %v4735, %v4863
        %v4992 = vmax.f32 %v4736, %v4864
        %v4993 = vmax.f32 %v4737, %v4865
        %v4994 = vmax.f32 %v4738, %v4866
        %v4995 = vmax.f32 %v4739, %v4867
        %v4996 = vmax.f32 %v4740, %v4868
        %v4997 = vmax.f32 %v4741, %v4869
        %v4998 = vmax.f32 %v4742, %v4870
        %v4999 = vmax.f32 %v4743, %v4871
        %v5000 = vmax.f32 %v4744, %v4872
        %v5001 = vmax.f32 %v4745, %v4873
        %v5002 = vmax.f32 %v4746, %v4874
        %v5003 = vmax.f32 %v4747, %v4875
        %v5004 = vmax.f32 %v4748, %v4876
        %v5005 = vmax.f32 %v4749, %v4877
        %v5006 = vrot.slane %v4878, 7
        %v5007 = vrot.slane %v4882, 7
        %v5008 = vrot.slane %v4886, 7
        %v5009 = vrot.slane %v4890, 7
        %v5010 = vrot.slane %v4894, 7
        %v5011 = vrot.slane %v4898, 7
        %v5012 = vrot.slane %v4902, 7
        %v5013 = vrot.slane %v4906, 7
        %v5014 = vrot.slane %v4910, 7
        %v5015 = vrot.slane %v4914, 7
        %v5016 = vrot.slane %v4918, 7
        %v5017 = vrot.slane %v4922, 7
        %v5018 = vrot.slane %v4926, 7
        %v5019 = vrot.slane %v4930, 7
        %v5020 = vrot.slane %v4934, 7
        %v5021 = vrot.slane %v4938, 7
        %v5022 = vrot.slane %v4942, 7
        %v5023 = vrot.slane %v4946, 7
        %v5024 = vrot.slane %v4950, 7
        %v5025 = vrot.slane %v4954, 7
        %v5026 = vrot.slane %v4958, 7
        %v5027 = vrot.slane %v4962, 7
        %v5028 = vrot.slane %v4966, 7
        %v5029 = vrot.slane %v4970, 7
        %v5030 = vrot.slane %v4974, 7
        %v5031 = vrot.slane %v4978, 7
        %v5032 = vrot.slane %v4982, 7
        %v5033 = vrot.slane %v4986, 7
        %v5034 = vrot.slane %v4990, 7
        %v5035 = vrot.slane %v4994, 7
        %v5036 = vrot.slane %v4998, 7
        %v5037 = vrot.slane %v5002, 7
        %v5038 = vrot.slane %v4879, 7
        %v5039 = vrot.slane %v4883, 7
        %v5040 = vrot.slane %v4887, 7
        %v5041 = vrot.slane %v4891, 7
        %v5042 = vrot.slane %v4895, 7
        %v5043 = vrot.slane %v4899, 7
        %v5044 = vrot.slane %v4903, 7
        %v5045 = vrot.slane %v4907, 7
        %v5046 = vrot.slane %v4911, 7
        %v5047 = vrot.slane %v4915, 7
        %v5048 = vrot.slane %v4919, 7
        %v5049 = vrot.slane %v4923, 7
        %v5050 = vrot.slane %v4927, 7
        %v5051 = vrot.slane %v4931, 7
        %v5052 = vrot.slane %v4935, 7
        %v5053 = vrot.slane %v4939, 7
        %v5054 = vrot.slane %v4943, 7
        %v5055 = vrot.slane %v4947, 7
        %v5056 = vrot.slane %v4951, 7
        %v5057 = vrot.slane %v4955, 7
        %v5058 = vrot.slane %v4959, 7
        %v5059 = vrot.slane %v4963, 7
        %v5060 = vrot.slane %v4967, 7
        %v5061 = vrot.slane %v4971, 7
        %v5062 = vrot.slane %v4975, 7
        %v5063 = vrot.slane %v4979, 7
        %v5064 = vrot.slane %v4983, 7
        %v5065 = vrot.slane %v4987, 7
        %v5066 = vrot.slane %v4991, 7
        %v5067 = vrot.slane %v4995, 7
        %v5068 = vrot.slane %v4999, 7
        %v5069 = vrot.slane %v5003, 7
        %v5070 = vrot.slane %v4880, 7
        %v5071 = vrot.slane %v4884, 7
        %v5072 = vrot.slane %v4888, 7
        %v5073 = vrot.slane %v4892, 7
        %v5074 = vrot.slane %v4896, 7
        %v5075 = vrot.slane %v4900, 7
        %v5076 = vrot.slane %v4904, 7
        %v5077 = vrot.slane %v4908, 7
        %v5078 = vrot.slane %v4912, 7
        %v5079 = vrot.slane %v4916, 7
        %v5080 = vrot.slane %v4920, 7
        %v5081 = vrot.slane %v4924, 7
        %v5082 = vrot.slane %v4928, 7
        %v5083 = vrot.slane %v4932, 7
        %v5084 = vrot.slane %v4936, 7
        %v5085 = vrot.slane %v4940, 7
        %v5086 = vrot.slane %v4944, 7
        %v5087 = vrot.slane %v4948, 7
        %v5088 = vrot.slane %v4952, 7
        %v5089 = vrot.slane %v4956, 7
        %v5090 = vrot.slane %v4960, 7
        %v5091 = vrot.slane %v4964, 7
        %v5092 = vrot.slane %v4968, 7
        %v5093 = vrot.slane %v4972, 7
        %v5094 = vrot.slane %v4976, 7
        %v5095 = vrot.slane %v4980, 7
        %v5096 = vrot.slane %v4984, 7
        %v5097 = vrot.slane %v4988, 7
        %v5098 = vrot.slane %v4992, 7
        %v5099 = vrot.slane %v4996, 7
        %v5100 = vrot.slane %v5000, 7
        %v5101 = vrot.slane %v5004, 7
        %v5102 = vsel %vm2729, %v5038, %v5070
        %v5103 = vsel %vm2729, %v5039, %v5071
        %v5104 = vsel %vm2729, %v5040, %v5072
        %v5105 = vsel %vm2729, %v5041, %v5073
        %v5106 = vsel %vm2729, %v5042, %v5074
        %v5107 = vsel %vm2729, %v5043, %v5075
        %v5108 = vsel %vm2729, %v5044, %v5076
        %v5109 = vsel %vm2729, %v5045, %v5077
        %v5110 = vsel %vm2729, %v5046, %v5078
        %v5111 = vsel %vm2729, %v5047, %v5079
        %v5112 = vsel %vm2729, %v5048, %v5080
        %v5113 = vsel %vm2729, %v5049, %v5081
        %v5114 = vsel %vm2729, %v5050, %v5082
        %v5115 = vsel %vm2729, %v5051, %v5083
        %v5116 = vsel %vm2729, %v5052, %v5084
        %v5117 = vsel %vm2729, %v5053, %v5085
        %v5118 = vsel %vm2729, %v5054, %v5086
        %v5119 = vsel %vm2729, %v5055, %v5087
        %v5120 = vsel %vm2729, %v5056, %v5088
        %v5121 = vsel %vm2729, %v5057, %v5089
        %v5122 = vsel %vm2729, %v5058, %v5090
        %v5123 = vsel %vm2729, %v5059, %v5091
        %v5124 = vsel %vm2729, %v5060, %v5092
        %v5125 = vsel %vm2729, %v5061, %v5093
        %v5126 = vsel %vm2729, %v5062, %v5094
        %v5127 = vsel %vm2729, %v5063, %v5095
        %v5128 = vsel %vm2729, %v5064, %v5096
        %v5129 = vsel %vm2729, %v5065, %v5097
        %v5130 = vsel %vm2729, %v5066, %v5098
        %v5131 = vsel %vm2729, %v5067, %v5099
        %v5132 = vsel %vm2729, %v5068, %v5100
        %v5133 = vsel %vm2729, %v5069, %v5101
        %v5134 = vsel %vm2729, %v5006, %v5038
        %v5135 = vsel %vm2729, %v5007, %v5039
        %v5136 = vsel %vm2729, %v5008, %v5040
        %v5137 = vsel %vm2729, %v5009, %v5041
        %v5138 = vsel %vm2729, %v5010, %v5042
        %v5139 = vsel %vm2729, %v5011, %v5043
        %v5140 = vsel %vm2729, %v5012, %v5044
        %v5141 = vsel %vm2729, %v5013, %v5045
        %v5142 = vsel %vm2729, %v5014, %v5046
        %v5143 = vsel %vm2729, %v5015, %v5047
        %v5144 = vsel %vm2729, %v5016, %v5048
        %v5145 = vsel %vm2729, %v5017, %v5049
        %v5146 = vsel %vm2729, %v5018, %v5050
        %v5147 = vsel %vm2729, %v5019, %v5051
        %v5148 = vsel %vm2729, %v5020, %v5052
        %v5149 = vsel %vm2729, %v5021, %v5053
        %v5150 = vsel %vm2729, %v5022, %v5054
        %v5151 = vsel %vm2729, %v5023, %v5055
        %v5152 = vsel %vm2729, %v5024, %v5056
        %v5153 = vsel %vm2729, %v5025, %v5057
        %v5154 = vsel %vm2729, %v5026, %v5058
        %v5155 = vsel %vm2729, %v5027, %v5059
        %v5156 = vsel %vm2729, %v5028, %v5060
        %v5157 = vsel %vm2729, %v5029, %v5061
        %v5158 = vsel %vm2729, %v5030, %v5062
        %v5159 = vsel %vm2729, %v5031, %v5063
        %v5160 = vsel %vm2729, %v5032, %v5064
        %v5161 = vsel %vm2729, %v5033, %v5065
        %v5162 = vsel %vm2729, %v5034, %v5066
        %v5163 = vsel %vm2729, %v5035, %v5067
        %v5164 = vsel %vm2729, %v5036, %v5068
        %v5165 = vsel %vm2729, %v5037, %v5069
        %v5166 = vmax.f32 %v4879, %v5134
        %v5167 = vmax.f32 %v4880, %v5102
        %v5168 = vmax.f32 %v4883, %v5135
        %v5169 = vmax.f32 %v4884, %v5103
        %v5170 = vmax.f32 %v4887, %v5136
        %v5171 = vmax.f32 %v4888, %v5104
        %v5172 = vmax.f32 %v4891, %v5137
        %v5173 = vmax.f32 %v4892, %v5105
        %v5174 = vmax.f32 %v4895, %v5138
        %v5175 = vmax.f32 %v4896, %v5106
        %v5176 = vmax.f32 %v4899, %v5139
        %v5177 = vmax.f32 %v4900, %v5107
        %v5178 = vmax.f32 %v4903, %v5140
        %v5179 = vmax.f32 %v4904, %v5108
        %v5180 = vmax.f32 %v4907, %v5141
        %v5181 = vmax.f32 %v4908, %v5109
        %v5182 = vmax.f32 %v4911, %v5142
        %v5183 = vmax.f32 %v4912, %v5110
        %v5184 = vmax.f32 %v4915, %v5143
        %v5185 = vmax.f32 %v4916, %v5111
        %v5186 = vmax.f32 %v4919, %v5144
        %v5187 = vmax.f32 %v4920, %v5112
        %v5188 = vmax.f32 %v4923, %v5145
        %v5189 = vmax.f32 %v4924, %v5113
        %v5190 = vmax.f32 %v4927, %v5146
        %v5191 = vmax.f32 %v4928, %v5114
        %v5192 = vmax.f32 %v4931, %v5147
        %v5193 = vmax.f32 %v4932, %v5115
        %v5194 = vmax.f32 %v4935, %v5148
        %v5195 = vmax.f32 %v4936, %v5116
        %v5196 = vmax.f32 %v4939, %v5149
        %v5197 = vmax.f32 %v4940, %v5117
        %v5198 = vmax.f32 %v4943, %v5150
        %v5199 = vmax.f32 %v4944, %v5118
        %v5200 = vmax.f32 %v4947, %v5151
        %v5201 = vmax.f32 %v4948, %v5119
        %v5202 = vmax.f32 %v4951, %v5152
        %v5203 = vmax.f32 %v4952, %v5120
        %v5204 = vmax.f32 %v4955, %v5153
        %v5205 = vmax.f32 %v4956, %v5121
        %v5206 = vmax.f32 %v4959, %v5154
        %v5207 = vmax.f32 %v4960, %v5122
        %v5208 = vmax.f32 %v4963, %v5155
        %v5209 = vmax.f32 %v4964, %v5123
        %v5210 = vmax.f32 %v4967, %v5156
        %v5211 = vmax.f32 %v4968, %v5124
        %v5212 = vmax.f32 %v4971, %v5157
        %v5213 = vmax.f32 %v4972, %v5125
        %v5214 = vmax.f32 %v4975, %v5158
        %v5215 = vmax.f32 %v4976, %v5126
        %v5216 = vmax.f32 %v4979, %v5159
        %v5217 = vmax.f32 %v4980, %v5127
        %v5218 = vmax.f32 %v4983, %v5160
        %v5219 = vmax.f32 %v4984, %v5128
        %v5220 = vmax.f32 %v4987, %v5161
        %v5221 = vmax.f32 %v4988, %v5129
        %v5222 = vmax.f32 %v4991, %v5162
        %v5223 = vmax.f32 %v4992, %v5130
        %v5224 = vmax.f32 %v4995, %v5163
        %v5225 = vmax.f32 %v4996, %v5131
        %v5226 = vmax.f32 %v4999, %v5164
        %v5227 = vmax.f32 %v5000, %v5132
        %v5228 = vmax.f32 %v5003, %v5165
        %v5229 = vmax.f32 %v5004, %v5133
        %v5230 = vrot.slane %v4879, 1
        %v5231 = vrot.slane %v4883, 1
        %v5232 = vrot.slane %v4887, 1
        %v5233 = vrot.slane %v4891, 1
        %v5234 = vrot.slane %v4895, 1
        %v5235 = vrot.slane %v4899, 1
        %v5236 = vrot.slane %v4903, 1
        %v5237 = vrot.slane %v4907, 1
        %v5238 = vrot.slane %v4911, 1
        %v5239 = vrot.slane %v4915, 1
        %v5240 = vrot.slane %v4919, 1
        %v5241 = vrot.slane %v4923, 1
        %v5242 = vrot.slane %v4927, 1
        %v5243 = vrot.slane %v4931, 1
        %v5244 = vrot.slane %v4935, 1
        %v5245 = vrot.slane %v4939, 1
        %v5246 = vrot.slane %v4943, 1
        %v5247 = vrot.slane %v4947, 1
        %v5248 = vrot.slane %v4951, 1
        %v5249 = vrot.slane %v4955, 1
        %v5250 = vrot.slane %v4959, 1
        %v5251 = vrot.slane %v4963, 1
        %v5252 = vrot.slane %v4967, 1
        %v5253 = vrot.slane %v4971, 1
        %v5254 = vrot.slane %v4975, 1
        %v5255 = vrot.slane %v4979, 1
        %v5256 = vrot.slane %v4983, 1
        %v5257 = vrot.slane %v4987, 1
        %v5258 = vrot.slane %v4991, 1
        %v5259 = vrot.slane %v4995, 1
        %v5260 = vrot.slane %v4999, 1
        %v5261 = vrot.slane %v5003, 1
        %v5262 = vrot.slane %v4880, 1
        %v5263 = vrot.slane %v4884, 1
        %v5264 = vrot.slane %v4888, 1
        %v5265 = vrot.slane %v4892, 1
        %v5266 = vrot.slane %v4896, 1
        %v5267 = vrot.slane %v4900, 1
        %v5268 = vrot.slane %v4904, 1
        %v5269 = vrot.slane %v4908, 1
        %v5270 = vrot.slane %v4912, 1
        %v5271 = vrot.slane %v4916, 1
        %v5272 = vrot.slane %v4920, 1
        %v5273 = vrot.slane %v4924, 1
        %v5274 = vrot.slane %v4928, 1
        %v5275 = vrot.slane %v4932, 1
        %v5276 = vrot.slane %v4936, 1
        %v5277 = vrot.slane %v4940, 1
        %v5278 = vrot.slane %v4944, 1
        %v5279 = vrot.slane %v4948, 1
        %v5280 = vrot.slane %v4952, 1
        %v5281 = vrot.slane %v4956, 1
        %v5282 = vrot.slane %v4960, 1
        %v5283 = vrot.slane %v4964, 1
        %v5284 = vrot.slane %v4968, 1
        %v5285 = vrot.slane %v4972, 1
        %v5286 = vrot.slane %v4976, 1
        %v5287 = vrot.slane %v4980, 1
        %v5288 = vrot.slane %v4984, 1
        %v5289 = vrot.slane %v4988, 1
        %v5290 = vrot.slane %v4992, 1
        %v5291 = vrot.slane %v4996, 1
        %v5292 = vrot.slane %v5000, 1
        %v5293 = vrot.slane %v5004, 1
        %v5294 = vrot.slane %v4881, 1
        %v5295 = vrot.slane %v4885, 1
        %v5296 = vrot.slane %v4889, 1
        %v5297 = vrot.slane %v4893, 1
        %v5298 = vrot.slane %v4897, 1
        %v5299 = vrot.slane %v4901, 1
        %v5300 = vrot.slane %v4905, 1
        %v5301 = vrot.slane %v4909, 1
        %v5302 = vrot.slane %v4913, 1
        %v5303 = vrot.slane %v4917, 1
        %v5304 = vrot.slane %v4921, 1
        %v5305 = vrot.slane %v4925, 1
        %v5306 = vrot.slane %v4929, 1
        %v5307 = vrot.slane %v4933, 1
        %v5308 = vrot.slane %v4937, 1
        %v5309 = vrot.slane %v4941, 1
        %v5310 = vrot.slane %v4945, 1
        %v5311 = vrot.slane %v4949, 1
        %v5312 = vrot.slane %v4953, 1
        %v5313 = vrot.slane %v4957, 1
        %v5314 = vrot.slane %v4961, 1
        %v5315 = vrot.slane %v4965, 1
        %v5316 = vrot.slane %v4969, 1
        %v5317 = vrot.slane %v4973, 1
        %v5318 = vrot.slane %v4977, 1
        %v5319 = vrot.slane %v4981, 1
        %v5320 = vrot.slane %v4985, 1
        %v5321 = vrot.slane %v4989, 1
        %v5322 = vrot.slane %v4993, 1
        %v5323 = vrot.slane %v4997, 1
        %v5324 = vrot.slane %v5001, 1
        %v5325 = vrot.slane %v5005, 1
        %v5326 = vsel %vm2954, %v5262, %v5294
        %v5327 = vsel %vm2954, %v5263, %v5295
        %v5328 = vsel %vm2954, %v5264, %v5296
        %v5329 = vsel %vm2954, %v5265, %v5297
        %v5330 = vsel %vm2954, %v5266, %v5298
        %v5331 = vsel %vm2954, %v5267, %v5299
        %v5332 = vsel %vm2954, %v5268, %v5300
        %v5333 = vsel %vm2954, %v5269, %v5301
        %v5334 = vsel %vm2954, %v5270, %v5302
        %v5335 = vsel %vm2954, %v5271, %v5303
        %v5336 = vsel %vm2954, %v5272, %v5304
        %v5337 = vsel %vm2954, %v5273, %v5305
        %v5338 = vsel %vm2954, %v5274, %v5306
        %v5339 = vsel %vm2954, %v5275, %v5307
        %v5340 = vsel %vm2954, %v5276, %v5308
        %v5341 = vsel %vm2954, %v5277, %v5309
        %v5342 = vsel %vm2954, %v5278, %v5310
        %v5343 = vsel %vm2954, %v5279, %v5311
        %v5344 = vsel %vm2954, %v5280, %v5312
        %v5345 = vsel %vm2954, %v5281, %v5313
        %v5346 = vsel %vm2954, %v5282, %v5314
        %v5347 = vsel %vm2954, %v5283, %v5315
        %v5348 = vsel %vm2954, %v5284, %v5316
        %v5349 = vsel %vm2954, %v5285, %v5317
        %v5350 = vsel %vm2954, %v5286, %v5318
        %v5351 = vsel %vm2954, %v5287, %v5319
        %v5352 = vsel %vm2954, %v5288, %v5320
        %v5353 = vsel %vm2954, %v5289, %v5321
        %v5354 = vsel %vm2954, %v5290, %v5322
        %v5355 = vsel %vm2954, %v5291, %v5323
        %v5356 = vsel %vm2954, %v5292, %v5324
        %v5357 = vsel %vm2954, %v5293, %v5325
        %v5358 = vsel %vm2954, %v5230, %v5262
        %v5359 = vsel %vm2954, %v5231, %v5263
        %v5360 = vsel %vm2954, %v5232, %v5264
        %v5361 = vsel %vm2954, %v5233, %v5265
        %v5362 = vsel %vm2954, %v5234, %v5266
        %v5363 = vsel %vm2954, %v5235, %v5267
        %v5364 = vsel %vm2954, %v5236, %v5268
        %v5365 = vsel %vm2954, %v5237, %v5269
        %v5366 = vsel %vm2954, %v5238, %v5270
        %v5367 = vsel %vm2954, %v5239, %v5271
        %v5368 = vsel %vm2954, %v5240, %v5272
        %v5369 = vsel %vm2954, %v5241, %v5273
        %v5370 = vsel %vm2954, %v5242, %v5274
        %v5371 = vsel %vm2954, %v5243, %v5275
        %v5372 = vsel %vm2954, %v5244, %v5276
        %v5373 = vsel %vm2954, %v5245, %v5277
        %v5374 = vsel %vm2954, %v5246, %v5278
        %v5375 = vsel %vm2954, %v5247, %v5279
        %v5376 = vsel %vm2954, %v5248, %v5280
        %v5377 = vsel %vm2954, %v5249, %v5281
        %v5378 = vsel %vm2954, %v5250, %v5282
        %v5379 = vsel %vm2954, %v5251, %v5283
        %v5380 = vsel %vm2954, %v5252, %v5284
        %v5381 = vsel %vm2954, %v5253, %v5285
        %v5382 = vsel %vm2954, %v5254, %v5286
        %v5383 = vsel %vm2954, %v5255, %v5287
        %v5384 = vsel %vm2954, %v5256, %v5288
        %v5385 = vsel %vm2954, %v5257, %v5289
        %v5386 = vsel %vm2954, %v5258, %v5290
        %v5387 = vsel %vm2954, %v5259, %v5291
        %v5388 = vsel %vm2954, %v5260, %v5292
        %v5389 = vsel %vm2954, %v5261, %v5293
        %v5390 = vmax.f32 %v5166, %v5358
        %v5391 = vmax.f32 %v5167, %v5326
        %v5392 = vmax.f32 %v5168, %v5359
        %v5393 = vmax.f32 %v5169, %v5327
        %v5394 = vmax.f32 %v5170, %v5360
        %v5395 = vmax.f32 %v5171, %v5328
        %v5396 = vmax.f32 %v5172, %v5361
        %v5397 = vmax.f32 %v5173, %v5329
        %v5398 = vmax.f32 %v5174, %v5362
        %v5399 = vmax.f32 %v5175, %v5330
        %v5400 = vmax.f32 %v5176, %v5363
        %v5401 = vmax.f32 %v5177, %v5331
        %v5402 = vmax.f32 %v5178, %v5364
        %v5403 = vmax.f32 %v5179, %v5332
        %v5404 = vmax.f32 %v5180, %v5365
        %v5405 = vmax.f32 %v5181, %v5333
        %v5406 = vmax.f32 %v5182, %v5366
        %v5407 = vmax.f32 %v5183, %v5334
        %v5408 = vmax.f32 %v5184, %v5367
        %v5409 = vmax.f32 %v5185, %v5335
        %v5410 = vmax.f32 %v5186, %v5368
        %v5411 = vmax.f32 %v5187, %v5336
        %v5412 = vmax.f32 %v5188, %v5369
        %v5413 = vmax.f32 %v5189, %v5337
        %v5414 = vmax.f32 %v5190, %v5370
        %v5415 = vmax.f32 %v5191, %v5338
        %v5416 = vmax.f32 %v5192, %v5371
        %v5417 = vmax.f32 %v5193, %v5339
        %v5418 = vmax.f32 %v5194, %v5372
        %v5419 = vmax.f32 %v5195, %v5340
        %v5420 = vmax.f32 %v5196, %v5373
        %v5421 = vmax.f32 %v5197, %v5341
        %v5422 = vmax.f32 %v5198, %v5374
        %v5423 = vmax.f32 %v5199, %v5342
        %v5424 = vmax.f32 %v5200, %v5375
        %v5425 = vmax.f32 %v5201, %v5343
        %v5426 = vmax.f32 %v5202, %v5376
        %v5427 = vmax.f32 %v5203, %v5344
        %v5428 = vmax.f32 %v5204, %v5377
        %v5429 = vmax.f32 %v5205, %v5345
        %v5430 = vmax.f32 %v5206, %v5378
        %v5431 = vmax.f32 %v5207, %v5346
        %v5432 = vmax.f32 %v5208, %v5379
        %v5433 = vmax.f32 %v5209, %v5347
        %v5434 = vmax.f32 %v5210, %v5380
        %v5435 = vmax.f32 %v5211, %v5348
        %v5436 = vmax.f32 %v5212, %v5381
        %v5437 = vmax.f32 %v5213, %v5349
        %v5438 = vmax.f32 %v5214, %v5382
        %v5439 = vmax.f32 %v5215, %v5350
        %v5440 = vmax.f32 %v5216, %v5383
        %v5441 = vmax.f32 %v5217, %v5351
        %v5442 = vmax.f32 %v5218, %v5384
        %v5443 = vmax.f32 %v5219, %v5352
        %v5444 = vmax.f32 %v5220, %v5385
        %v5445 = vmax.f32 %v5221, %v5353
        %v5446 = vmax.f32 %v5222, %v5386
        %v5447 = vmax.f32 %v5223, %v5354
        %v5448 = vmax.f32 %v5224, %v5387
        %v5449 = vmax.f32 %v5225, %v5355
        %v5450 = vmax.f32 %v5226, %v5388
        %v5451 = vmax.f32 %v5227, %v5356
        %v5452 = vmax.f32 %v5228, %v5389
        %v5453 = vmax.f32 %v5229, %v5357
        %v5454 = vrot.slane %v4878, 6
        %v5455 = vrot.slane %v4882, 6
        %v5456 = vrot.slane %v4886, 6
        %v5457 = vrot.slane %v4890, 6
        %v5458 = vrot.slane %v4894, 6
        %v5459 = vrot.slane %v4898, 6
        %v5460 = vrot.slane %v4902, 6
        %v5461 = vrot.slane %v4906, 6
        %v5462 = vrot.slane %v4910, 6
        %v5463 = vrot.slane %v4914, 6
        %v5464 = vrot.slane %v4918, 6
        %v5465 = vrot.slane %v4922, 6
        %v5466 = vrot.slane %v4926, 6
        %v5467 = vrot.slane %v4930, 6
        %v5468 = vrot.slane %v4934, 6
        %v5469 = vrot.slane %v4938, 6
        %v5470 = vrot.slane %v4942, 6
        %v5471 = vrot.slane %v4946, 6
        %v5472 = vrot.slane %v4950, 6
        %v5473 = vrot.slane %v4954, 6
        %v5474 = vrot.slane %v4958, 6
        %v5475 = vrot.slane %v4962, 6
        %v5476 = vrot.slane %v4966, 6
        %v5477 = vrot.slane %v4970, 6
        %v5478 = vrot.slane %v4974, 6
        %v5479 = vrot.slane %v4978, 6
        %v5480 = vrot.slane %v4982, 6
        %v5481 = vrot.slane %v4986, 6
        %v5482 = vrot.slane %v4990, 6
        %v5483 = vrot.slane %v4994, 6
        %v5484 = vrot.slane %v4998, 6
        %v5485 = vrot.slane %v5002, 6
        %v5486 = vrot.slane %v4879, 6
        %v5487 = vrot.slane %v4883, 6
        %v5488 = vrot.slane %v4887, 6
        %v5489 = vrot.slane %v4891, 6
        %v5490 = vrot.slane %v4895, 6
        %v5491 = vrot.slane %v4899, 6
        %v5492 = vrot.slane %v4903, 6
        %v5493 = vrot.slane %v4907, 6
        %v5494 = vrot.slane %v4911, 6
        %v5495 = vrot.slane %v4915, 6
        %v5496 = vrot.slane %v4919, 6
        %v5497 = vrot.slane %v4923, 6
        %v5498 = vrot.slane %v4927, 6
        %v5499 = vrot.slane %v4931, 6
        %v5500 = vrot.slane %v4935, 6
        %v5501 = vrot.slane %v4939, 6
        %v5502 = vrot.slane %v4943, 6
        %v5503 = vrot.slane %v4947, 6
        %v5504 = vrot.slane %v4951, 6
        %v5505 = vrot.slane %v4955, 6
        %v5506 = vrot.slane %v4959, 6
        %v5507 = vrot.slane %v4963, 6
        %v5508 = vrot.slane %v4967, 6
        %v5509 = vrot.slane %v4971, 6
        %v5510 = vrot.slane %v4975, 6
        %v5511 = vrot.slane %v4979, 6
        %v5512 = vrot.slane %v4983, 6
        %v5513 = vrot.slane %v4987, 6
        %v5514 = vrot.slane %v4991, 6
        %v5515 = vrot.slane %v4995, 6
        %v5516 = vrot.slane %v4999, 6
        %v5517 = vrot.slane %v5003, 6
        %v5518 = vrot.slane %v4880, 6
        %v5519 = vrot.slane %v4884, 6
        %v5520 = vrot.slane %v4888, 6
        %v5521 = vrot.slane %v4892, 6
        %v5522 = vrot.slane %v4896, 6
        %v5523 = vrot.slane %v4900, 6
        %v5524 = vrot.slane %v4904, 6
        %v5525 = vrot.slane %v4908, 6
        %v5526 = vrot.slane %v4912, 6
        %v5527 = vrot.slane %v4916, 6
        %v5528 = vrot.slane %v4920, 6
        %v5529 = vrot.slane %v4924, 6
        %v5530 = vrot.slane %v4928, 6
        %v5531 = vrot.slane %v4932, 6
        %v5532 = vrot.slane %v4936, 6
        %v5533 = vrot.slane %v4940, 6
        %v5534 = vrot.slane %v4944, 6
        %v5535 = vrot.slane %v4948, 6
        %v5536 = vrot.slane %v4952, 6
        %v5537 = vrot.slane %v4956, 6
        %v5538 = vrot.slane %v4960, 6
        %v5539 = vrot.slane %v4964, 6
        %v5540 = vrot.slane %v4968, 6
        %v5541 = vrot.slane %v4972, 6
        %v5542 = vrot.slane %v4976, 6
        %v5543 = vrot.slane %v4980, 6
        %v5544 = vrot.slane %v4984, 6
        %v5545 = vrot.slane %v4988, 6
        %v5546 = vrot.slane %v4992, 6
        %v5547 = vrot.slane %v4996, 6
        %v5548 = vrot.slane %v5000, 6
        %v5549 = vrot.slane %v5004, 6
        %v5550 = vsel %vm3179, %v5486, %v5518
        %v5551 = vsel %vm3179, %v5487, %v5519
        %v5552 = vsel %vm3179, %v5488, %v5520
        %v5553 = vsel %vm3179, %v5489, %v5521
        %v5554 = vsel %vm3179, %v5490, %v5522
        %v5555 = vsel %vm3179, %v5491, %v5523
        %v5556 = vsel %vm3179, %v5492, %v5524
        %v5557 = vsel %vm3179, %v5493, %v5525
        %v5558 = vsel %vm3179, %v5494, %v5526
        %v5559 = vsel %vm3179, %v5495, %v5527
        %v5560 = vsel %vm3179, %v5496, %v5528
        %v5561 = vsel %vm3179, %v5497, %v5529
        %v5562 = vsel %vm3179, %v5498, %v5530
        %v5563 = vsel %vm3179, %v5499, %v5531
        %v5564 = vsel %vm3179, %v5500, %v5532
        %v5565 = vsel %vm3179, %v5501, %v5533
        %v5566 = vsel %vm3179, %v5502, %v5534
        %v5567 = vsel %vm3179, %v5503, %v5535
        %v5568 = vsel %vm3179, %v5504, %v5536
        %v5569 = vsel %vm3179, %v5505, %v5537
        %v5570 = vsel %vm3179, %v5506, %v5538
        %v5571 = vsel %vm3179, %v5507, %v5539
        %v5572 = vsel %vm3179, %v5508, %v5540
        %v5573 = vsel %vm3179, %v5509, %v5541
        %v5574 = vsel %vm3179, %v5510, %v5542
        %v5575 = vsel %vm3179, %v5511, %v5543
        %v5576 = vsel %vm3179, %v5512, %v5544
        %v5577 = vsel %vm3179, %v5513, %v5545
        %v5578 = vsel %vm3179, %v5514, %v5546
        %v5579 = vsel %vm3179, %v5515, %v5547
        %v5580 = vsel %vm3179, %v5516, %v5548
        %v5581 = vsel %vm3179, %v5517, %v5549
        %v5582 = vsel %vm3179, %v5454, %v5486
        %v5583 = vsel %vm3179, %v5455, %v5487
        %v5584 = vsel %vm3179, %v5456, %v5488
        %v5585 = vsel %vm3179, %v5457, %v5489
        %v5586 = vsel %vm3179, %v5458, %v5490
        %v5587 = vsel %vm3179, %v5459, %v5491
        %v5588 = vsel %vm3179, %v5460, %v5492
        %v5589 = vsel %vm3179, %v5461, %v5493
        %v5590 = vsel %vm3179, %v5462, %v5494
        %v5591 = vsel %vm3179, %v5463, %v5495
        %v5592 = vsel %vm3179, %v5464, %v5496
        %v5593 = vsel %vm3179, %v5465, %v5497
        %v5594 = vsel %vm3179, %v5466, %v5498
        %v5595 = vsel %vm3179, %v5467, %v5499
        %v5596 = vsel %vm3179, %v5468, %v5500
        %v5597 = vsel %vm3179, %v5469, %v5501
        %v5598 = vsel %vm3179, %v5470, %v5502
        %v5599 = vsel %vm3179, %v5471, %v5503
        %v5600 = vsel %vm3179, %v5472, %v5504
        %v5601 = vsel %vm3179, %v5473, %v5505
        %v5602 = vsel %vm3179, %v5474, %v5506
        %v5603 = vsel %vm3179, %v5475, %v5507
        %v5604 = vsel %vm3179, %v5476, %v5508
        %v5605 = vsel %vm3179, %v5477, %v5509
        %v5606 = vsel %vm3179, %v5478, %v5510
        %v5607 = vsel %vm3179, %v5479, %v5511
        %v5608 = vsel %vm3179, %v5480, %v5512
        %v5609 = vsel %vm3179, %v5481, %v5513
        %v5610 = vsel %vm3179, %v5482, %v5514
        %v5611 = vsel %vm3179, %v5483, %v5515
        %v5612 = vsel %vm3179, %v5484, %v5516
        %v5613 = vsel %vm3179, %v5485, %v5517
        %v5614 = vmax.f32 %v5390, %v5582
        %v5615 = vmax.f32 %v5391, %v5550
        %v5616 = vmax.f32 %v5392, %v5583
        %v5617 = vmax.f32 %v5393, %v5551
        %v5618 = vmax.f32 %v5394, %v5584
        %v5619 = vmax.f32 %v5395, %v5552
        %v5620 = vmax.f32 %v5396, %v5585
        %v5621 = vmax.f32 %v5397, %v5553
        %v5622 = vmax.f32 %v5398, %v5586
        %v5623 = vmax.f32 %v5399, %v5554
        %v5624 = vmax.f32 %v5400, %v5587
        %v5625 = vmax.f32 %v5401, %v5555
        %v5626 = vmax.f32 %v5402, %v5588
        %v5627 = vmax.f32 %v5403, %v5556
        %v5628 = vmax.f32 %v5404, %v5589
        %v5629 = vmax.f32 %v5405, %v5557
        %v5630 = vmax.f32 %v5406, %v5590
        %v5631 = vmax.f32 %v5407, %v5558
        %v5632 = vmax.f32 %v5408, %v5591
        %v5633 = vmax.f32 %v5409, %v5559
        %v5634 = vmax.f32 %v5410, %v5592
        %v5635 = vmax.f32 %v5411, %v5560
        %v5636 = vmax.f32 %v5412, %v5593
        %v5637 = vmax.f32 %v5413, %v5561
        %v5638 = vmax.f32 %v5414, %v5594
        %v5639 = vmax.f32 %v5415, %v5562
        %v5640 = vmax.f32 %v5416, %v5595
        %v5641 = vmax.f32 %v5417, %v5563
        %v5642 = vmax.f32 %v5418, %v5596
        %v5643 = vmax.f32 %v5419, %v5564
        %v5644 = vmax.f32 %v5420, %v5597
        %v5645 = vmax.f32 %v5421, %v5565
        %v5646 = vmax.f32 %v5422, %v5598
        %v5647 = vmax.f32 %v5423, %v5566
        %v5648 = vmax.f32 %v5424, %v5599
        %v5649 = vmax.f32 %v5425, %v5567
        %v5650 = vmax.f32 %v5426, %v5600
        %v5651 = vmax.f32 %v5427, %v5568
        %v5652 = vmax.f32 %v5428, %v5601
        %v5653 = vmax.f32 %v5429, %v5569
        %v5654 = vmax.f32 %v5430, %v5602
        %v5655 = vmax.f32 %v5431, %v5570
        %v5656 = vmax.f32 %v5432, %v5603
        %v5657 = vmax.f32 %v5433, %v5571
        %v5658 = vmax.f32 %v5434, %v5604
        %v5659 = vmax.f32 %v5435, %v5572
        %v5660 = vmax.f32 %v5436, %v5605
        %v5661 = vmax.f32 %v5437, %v5573
        %v5662 = vmax.f32 %v5438, %v5606
        %v5663 = vmax.f32 %v5439, %v5574
        %v5664 = vmax.f32 %v5440, %v5607
        %v5665 = vmax.f32 %v5441, %v5575
        %v5666 = vmax.f32 %v5442, %v5608
        %v5667 = vmax.f32 %v5443, %v5576
        %v5668 = vmax.f32 %v5444, %v5609
        %v5669 = vmax.f32 %v5445, %v5577
        %v5670 = vmax.f32 %v5446, %v5610
        %v5671 = vmax.f32 %v5447, %v5578
        %v5672 = vmax.f32 %v5448, %v5611
        %v5673 = vmax.f32 %v5449, %v5579
        %v5674 = vmax.f32 %v5450, %v5612
        %v5675 = vmax.f32 %v5451, %v5580
        %v5676 = vmax.f32 %v5452, %v5613
        %v5677 = vmax.f32 %v5453, %v5581
        %v5678 = vrot.slane %v4879, 2
        %v5679 = vrot.slane %v4883, 2
        %v5680 = vrot.slane %v4887, 2
        %v5681 = vrot.slane %v4891, 2
        %v5682 = vrot.slane %v4895, 2
        %v5683 = vrot.slane %v4899, 2
        %v5684 = vrot.slane %v4903, 2
        %v5685 = vrot.slane %v4907, 2
        %v5686 = vrot.slane %v4911, 2
        %v5687 = vrot.slane %v4915, 2
        %v5688 = vrot.slane %v4919, 2
        %v5689 = vrot.slane %v4923, 2
        %v5690 = vrot.slane %v4927, 2
        %v5691 = vrot.slane %v4931, 2
        %v5692 = vrot.slane %v4935, 2
        %v5693 = vrot.slane %v4939, 2
        %v5694 = vrot.slane %v4943, 2
        %v5695 = vrot.slane %v4947, 2
        %v5696 = vrot.slane %v4951, 2
        %v5697 = vrot.slane %v4955, 2
        %v5698 = vrot.slane %v4959, 2
        %v5699 = vrot.slane %v4963, 2
        %v5700 = vrot.slane %v4967, 2
        %v5701 = vrot.slane %v4971, 2
        %v5702 = vrot.slane %v4975, 2
        %v5703 = vrot.slane %v4979, 2
        %v5704 = vrot.slane %v4983, 2
        %v5705 = vrot.slane %v4987, 2
        %v5706 = vrot.slane %v4991, 2
        %v5707 = vrot.slane %v4995, 2
        %v5708 = vrot.slane %v4999, 2
        %v5709 = vrot.slane %v5003, 2
        %v5710 = vrot.slane %v4880, 2
        %v5711 = vrot.slane %v4884, 2
        %v5712 = vrot.slane %v4888, 2
        %v5713 = vrot.slane %v4892, 2
        %v5714 = vrot.slane %v4896, 2
        %v5715 = vrot.slane %v4900, 2
        %v5716 = vrot.slane %v4904, 2
        %v5717 = vrot.slane %v4908, 2
        %v5718 = vrot.slane %v4912, 2
        %v5719 = vrot.slane %v4916, 2
        %v5720 = vrot.slane %v4920, 2
        %v5721 = vrot.slane %v4924, 2
        %v5722 = vrot.slane %v4928, 2
        %v5723 = vrot.slane %v4932, 2
        %v5724 = vrot.slane %v4936, 2
        %v5725 = vrot.slane %v4940, 2
        %v5726 = vrot.slane %v4944, 2
        %v5727 = vrot.slane %v4948, 2
        %v5728 = vrot.slane %v4952, 2
        %v5729 = vrot.slane %v4956, 2
        %v5730 = vrot.slane %v4960, 2
        %v5731 = vrot.slane %v4964, 2
        %v5732 = vrot.slane %v4968, 2
        %v5733 = vrot.slane %v4972, 2
        %v5734 = vrot.slane %v4976, 2
        %v5735 = vrot.slane %v4980, 2
        %v5736 = vrot.slane %v4984, 2
        %v5737 = vrot.slane %v4988, 2
        %v5738 = vrot.slane %v4992, 2
        %v5739 = vrot.slane %v4996, 2
        %v5740 = vrot.slane %v5000, 2
        %v5741 = vrot.slane %v5004, 2
        %v5742 = vrot.slane %v4881, 2
        %v5743 = vrot.slane %v4885, 2
        %v5744 = vrot.slane %v4889, 2
        %v5745 = vrot.slane %v4893, 2
        %v5746 = vrot.slane %v4897, 2
        %v5747 = vrot.slane %v4901, 2
        %v5748 = vrot.slane %v4905, 2
        %v5749 = vrot.slane %v4909, 2
        %v5750 = vrot.slane %v4913, 2
        %v5751 = vrot.slane %v4917, 2
        %v5752 = vrot.slane %v4921, 2
        %v5753 = vrot.slane %v4925, 2
        %v5754 = vrot.slane %v4929, 2
        %v5755 = vrot.slane %v4933, 2
        %v5756 = vrot.slane %v4937, 2
        %v5757 = vrot.slane %v4941, 2
        %v5758 = vrot.slane %v4945, 2
        %v5759 = vrot.slane %v4949, 2
        %v5760 = vrot.slane %v4953, 2
        %v5761 = vrot.slane %v4957, 2
        %v5762 = vrot.slane %v4961, 2
        %v5763 = vrot.slane %v4965, 2
        %v5764 = vrot.slane %v4969, 2
        %v5765 = vrot.slane %v4973, 2
        %v5766 = vrot.slane %v4977, 2
        %v5767 = vrot.slane %v4981, 2
        %v5768 = vrot.slane %v4985, 2
        %v5769 = vrot.slane %v4989, 2
        %v5770 = vrot.slane %v4993, 2
        %v5771 = vrot.slane %v4997, 2
        %v5772 = vrot.slane %v5001, 2
        %v5773 = vrot.slane %v5005, 2
        %v5774 = vsel %vm3404, %v5710, %v5742
        %v5775 = vsel %vm3404, %v5711, %v5743
        %v5776 = vsel %vm3404, %v5712, %v5744
        %v5777 = vsel %vm3404, %v5713, %v5745
        %v5778 = vsel %vm3404, %v5714, %v5746
        %v5779 = vsel %vm3404, %v5715, %v5747
        %v5780 = vsel %vm3404, %v5716, %v5748
        %v5781 = vsel %vm3404, %v5717, %v5749
        %v5782 = vsel %vm3404, %v5718, %v5750
        %v5783 = vsel %vm3404, %v5719, %v5751
        %v5784 = vsel %vm3404, %v5720, %v5752
        %v5785 = vsel %vm3404, %v5721, %v5753
        %v5786 = vsel %vm3404, %v5722, %v5754
        %v5787 = vsel %vm3404, %v5723, %v5755
        %v5788 = vsel %vm3404, %v5724, %v5756
        %v5789 = vsel %vm3404, %v5725, %v5757
        %v5790 = vsel %vm3404, %v5726, %v5758
        %v5791 = vsel %vm3404, %v5727, %v5759
        %v5792 = vsel %vm3404, %v5728, %v5760
        %v5793 = vsel %vm3404, %v5729, %v5761
        %v5794 = vsel %vm3404, %v5730, %v5762
        %v5795 = vsel %vm3404, %v5731, %v5763
        %v5796 = vsel %vm3404, %v5732, %v5764
        %v5797 = vsel %vm3404, %v5733, %v5765
        %v5798 = vsel %vm3404, %v5734, %v5766
        %v5799 = vsel %vm3404, %v5735, %v5767
        %v5800 = vsel %vm3404, %v5736, %v5768
        %v5801 = vsel %vm3404, %v5737, %v5769
        %v5802 = vsel %vm3404, %v5738, %v5770
        %v5803 = vsel %vm3404, %v5739, %v5771
        %v5804 = vsel %vm3404, %v5740, %v5772
        %v5805 = vsel %vm3404, %v5741, %v5773
        %v5806 = vsel %vm3404, %v5678, %v5710
        %v5807 = vsel %vm3404, %v5679, %v5711
        %v5808 = vsel %vm3404, %v5680, %v5712
        %v5809 = vsel %vm3404, %v5681, %v5713
        %v5810 = vsel %vm3404, %v5682, %v5714
        %v5811 = vsel %vm3404, %v5683, %v5715
        %v5812 = vsel %vm3404, %v5684, %v5716
        %v5813 = vsel %vm3404, %v5685, %v5717
        %v5814 = vsel %vm3404, %v5686, %v5718
        %v5815 = vsel %vm3404, %v5687, %v5719
        %v5816 = vsel %vm3404, %v5688, %v5720
        %v5817 = vsel %vm3404, %v5689, %v5721
        %v5818 = vsel %vm3404, %v5690, %v5722
        %v5819 = vsel %vm3404, %v5691, %v5723
        %v5820 = vsel %vm3404, %v5692, %v5724
        %v5821 = vsel %vm3404, %v5693, %v5725
        %v5822 = vsel %vm3404, %v5694, %v5726
        %v5823 = vsel %vm3404, %v5695, %v5727
        %v5824 = vsel %vm3404, %v5696, %v5728
        %v5825 = vsel %vm3404, %v5697, %v5729
        %v5826 = vsel %vm3404, %v5698, %v5730
        %v5827 = vsel %vm3404, %v5699, %v5731
        %v5828 = vsel %vm3404, %v5700, %v5732
        %v5829 = vsel %vm3404, %v5701, %v5733
        %v5830 = vsel %vm3404, %v5702, %v5734
        %v5831 = vsel %vm3404, %v5703, %v5735
        %v5832 = vsel %vm3404, %v5704, %v5736
        %v5833 = vsel %vm3404, %v5705, %v5737
        %v5834 = vsel %vm3404, %v5706, %v5738
        %v5835 = vsel %vm3404, %v5707, %v5739
        %v5836 = vsel %vm3404, %v5708, %v5740
        %v5837 = vsel %vm3404, %v5709, %v5741
        %v5838 = vmax.f32 %v5614, %v5806
        %v5839 = vmax.f32 %v5615, %v5774
        %v5840 = vmax.f32 %v5616, %v5807
        %v5841 = vmax.f32 %v5617, %v5775
        %v5842 = vmax.f32 %v5618, %v5808
        %v5843 = vmax.f32 %v5619, %v5776
        %v5844 = vmax.f32 %v5620, %v5809
        %v5845 = vmax.f32 %v5621, %v5777
        %v5846 = vmax.f32 %v5622, %v5810
        %v5847 = vmax.f32 %v5623, %v5778
        %v5848 = vmax.f32 %v5624, %v5811
        %v5849 = vmax.f32 %v5625, %v5779
        %v5850 = vmax.f32 %v5626, %v5812
        %v5851 = vmax.f32 %v5627, %v5780
        %v5852 = vmax.f32 %v5628, %v5813
        %v5853 = vmax.f32 %v5629, %v5781
        %v5854 = vmax.f32 %v5630, %v5814
        %v5855 = vmax.f32 %v5631, %v5782
        %v5856 = vmax.f32 %v5632, %v5815
        %v5857 = vmax.f32 %v5633, %v5783
        %v5858 = vmax.f32 %v5634, %v5816
        %v5859 = vmax.f32 %v5635, %v5784
        %v5860 = vmax.f32 %v5636, %v5817
        %v5861 = vmax.f32 %v5637, %v5785
        %v5862 = vmax.f32 %v5638, %v5818
        %v5863 = vmax.f32 %v5639, %v5786
        %v5864 = vmax.f32 %v5640, %v5819
        %v5865 = vmax.f32 %v5641, %v5787
        %v5866 = vmax.f32 %v5642, %v5820
        %v5867 = vmax.f32 %v5643, %v5788
        %v5868 = vmax.f32 %v5644, %v5821
        %v5869 = vmax.f32 %v5645, %v5789
        %v5870 = vmax.f32 %v5646, %v5822
        %v5871 = vmax.f32 %v5647, %v5790
        %v5872 = vmax.f32 %v5648, %v5823
        %v5873 = vmax.f32 %v5649, %v5791
        %v5874 = vmax.f32 %v5650, %v5824
        %v5875 = vmax.f32 %v5651, %v5792
        %v5876 = vmax.f32 %v5652, %v5825
        %v5877 = vmax.f32 %v5653, %v5793
        %v5878 = vmax.f32 %v5654, %v5826
        %v5879 = vmax.f32 %v5655, %v5794
        %v5880 = vmax.f32 %v5656, %v5827
        %v5881 = vmax.f32 %v5657, %v5795
        %v5882 = vmax.f32 %v5658, %v5828
        %v5883 = vmax.f32 %v5659, %v5796
        %v5884 = vmax.f32 %v5660, %v5829
        %v5885 = vmax.f32 %v5661, %v5797
        %v5886 = vmax.f32 %v5662, %v5830
        %v5887 = vmax.f32 %v5663, %v5798
        %v5888 = vmax.f32 %v5664, %v5831
        %v5889 = vmax.f32 %v5665, %v5799
        %v5890 = vmax.f32 %v5666, %v5832
        %v5891 = vmax.f32 %v5667, %v5800
        %v5892 = vmax.f32 %v5668, %v5833
        %v5893 = vmax.f32 %v5669, %v5801
        %v5894 = vmax.f32 %v5670, %v5834
        %v5895 = vmax.f32 %v5671, %v5802
        %v5896 = vmax.f32 %v5672, %v5835
        %v5897 = vmax.f32 %v5673, %v5803
        %v5898 = vmax.f32 %v5674, %v5836
        %v5899 = vmax.f32 %v5675, %v5804
        %v5900 = vmax.f32 %v5676, %v5837
        %v5901 = vmax.f32 %v5677, %v5805
        %5902 = vst.msk [vmem:[%s1216 + $0x8] sm:$0xff] %vm1198, %v5838
        %5903 = vst.msk [vmem:[%s1216 + $0x10] sm:$0xff] %vm1198, %v5839
        %5904 = vst.msk [vmem:[%s1216 + $0x28] sm:$0xff] %vm1198, %v5840
        %5905 = vst.msk [vmem:[%s1216 + $0x30] sm:$0xff] %vm1198, %v5841
        %5906 = vst.msk [vmem:[%s1216 + $0x48] sm:$0xff] %vm1198, %v5842
        %5907 = vst.msk [vmem:[%s1216 + $0x50] sm:$0xff] %vm1198, %v5843
        %5908 = vst.msk [vmem:[%s1216 + $0x68] sm:$0xff] %vm1198, %v5844
        %5909 = vst.msk [vmem:[%s1216 + $0x70] sm:$0xff] %vm1198, %v5845
        %5910 = vst.msk [vmem:[%s1216 + $0x88] sm:$0xff] %vm1198, %v5846
        %5911 = vst.msk [vmem:[%s1216 + $0x90] sm:$0xff] %vm1198, %v5847
        %5912 = vst.msk [vmem:[%s1216 + $0xa8] sm:$0xff] %vm1198, %v5848
        %5913 = vst.msk [vmem:[%s1216 + $0xb0] sm:$0xff] %vm1198, %v5849
        %5914 = vst.msk [vmem:[%s1216 + $0xc8] sm:$0xff] %vm1198, %v5850
        %5915 = vst.msk [vmem:[%s1216 + $0xd0] sm:$0xff] %vm1198, %v5851
        %5916 = vst.msk [vmem:[%s1216 + $0xe8] sm:$0xff] %vm1198, %v5852
        %5917 = vst.msk [vmem:[%s1216 + $0xf0] sm:$0xff] %vm1198, %v5853
        %5918 = vst.msk [vmem:[%s1216 + $0x108] sm:$0xff] %vm1198, %v5854
        %5919 = vst.msk [vmem:[%s1216 + $0x110] sm:$0xff] %vm1198, %v5855
        %5920 = vst.msk [vmem:[%s1216 + $0x128] sm:$0xff] %vm1198, %v5856
        %5921 = vst.msk [vmem:[%s1216 + $0x130] sm:$0xff] %vm1198, %v5857
        %5922 = vst.msk [vmem:[%s1216 + $0x148] sm:$0xff] %vm1198, %v5858
        %5923 = vst.msk [vmem:[%s1216 + $0x150] sm:$0xff] %vm1198, %v5859
        %5924 = vst.msk [vmem:[%s1216 + $0x168] sm:$0xff] %vm1198, %v5860
        %5925 = vst.msk [vmem:[%s1216 + $0x170] sm:$0xff] %vm1198, %v5861
        %5926 = vst.msk [vmem:[%s1216 + $0x188] sm:$0xff] %vm1198, %v5862
        %5927 = vst.msk [vmem:[%s1216 + $0x190] sm:$0xff] %vm1198, %v5863
        %5928 = vst.msk [vmem:[%s1216 + $0x1a8] sm:$0xff] %vm1198, %v5864
        %5929 = vst.msk [vmem:[%s1216 + $0x1b0] sm:$0xff] %vm1198, %v5865
        %5930 = vst.msk [vmem:[%s1216 + $0x1c8] sm:$0xff] %vm1198, %v5866
        %5931 = vst.msk [vmem:[%s1216 + $0x1d0] sm:$0xff] %vm1198, %v5867
        %5932 = vst.msk [vmem:[%s1216 + $0x1e8] sm:$0xff] %vm1198, %v5868
        %5933 = vst.msk [vmem:[%s1216 + $0x1f0] sm:$0xff] %vm1198, %v5869
        %5934 = vst.msk [vmem:[%s1216 + $0x208] sm:$0xff] %vm1198, %v5870
        %5935 = vst.msk [vmem:[%s1216 + $0x210] sm:$0xff] %vm1198, %v5871
        %5936 = vst.msk [vmem:[%s1216 + $0x228] sm:$0xff] %vm1198, %v5872
        %5937 = vst.msk [vmem:[%s1216 + $0x230] sm:$0xff] %vm1198, %v5873
        %5938 = vst.msk [vmem:[%s1216 + $0x248] sm:$0xff] %vm1198, %v5874
        %5939 = vst.msk [vmem:[%s1216 + $0x250] sm:$0xff] %vm1198, %v5875
        %5940 = vst.msk [vmem:[%s1216 + $0x268] sm:$0xff] %vm1198, %v5876
        %5941 = vst.msk [vmem:[%s1216 + $0x270] sm:$0xff] %vm1198, %v5877
        %5942 = vst.msk [vmem:[%s1216 + $0x288] sm:$0xff] %vm1198, %v5878
        %5943 = vst.msk [vmem:[%s1216 + $0x290] sm:$0xff] %vm1198, %v5879
        %5944 = vst.msk [vmem:[%s1216 + $0x2a8] sm:$0xff] %vm1198, %v5880
        %5945 = vst.msk [vmem:[%s1216 + $0x2b0] sm:$0xff] %vm1198, %v5881
        %5946 = vst.msk [vmem:[%s1216 + $0x2c8] sm:$0xff] %vm1198, %v5882
        %5947 = vst.msk [vmem:[%s1216 + $0x2d0] sm:$0xff] %vm1198, %v5883
        %5948 = vst.msk [vmem:[%s1216 + $0x2e8] sm:$0xff] %vm1198, %v5884
        %5949 = vst.msk [vmem:[%s1216 + $0x2f0] sm:$0xff] %vm1198, %v5885
        %5950 = vst.msk [vmem:[%s1216 + $0x308] sm:$0xff] %vm1198, %v5886
        %5951 = vst.msk [vmem:[%s1216 + $0x310] sm:$0xff] %vm1198, %v5887
        %5952 = vst.msk [vmem:[%s1216 + $0x328] sm:$0xff] %vm1198, %v5888
        %5953 = vst.msk [vmem:[%s1216 + $0x330] sm:$0xff] %vm1198, %v5889
        %5954 = vst.msk [vmem:[%s1216 + $0x348] sm:$0xff] %vm1198, %v5890
        %5955 = vst.msk [vmem:[%s1216 + $0x350] sm:$0xff] %vm1198, %v5891
        %5956 = vst.msk [vmem:[%s1216 + $0x368] sm:$0xff] %vm1198, %v5892
        %5957 = vst.msk [vmem:[%s1216 + $0x370] sm:$0xff] %vm1198, %v5893
        %5958 = vst.msk [vmem:[%s1216 + $0x388] sm:$0xff] %vm1198, %v5894
        %5959 = vst.msk [vmem:[%s1216 + $0x390] sm:$0xff] %vm1198, %v5895
        %5960 = vst.msk [vmem:[%s1216 + $0x3a8] sm:$0xff] %vm1198, %v5896
        %5961 = vst.msk [vmem:[%s1216 + $0x3b0] sm:$0xff] %vm1198, %v5897
        %5962 = vst.msk [vmem:[%s1216 + $0x3c8] sm:$0xff] %vm1198, %v5898
        %5963 = vst.msk [vmem:[%s1216 + $0x3d0] sm:$0xff] %vm1198, %v5899
        %5964 = vst.msk [vmem:[%s1216 + $0x3e8] sm:$0xff] %vm1198, %v5900
        %5965 = vst.msk [vmem:[%s1216 + $0x3f0] sm:$0xff] %vm1198, %v5901
        %v5966 = vld [vmem:[%s1347 + $0x8] sm:$0xff]
        %v5967 = vld [vmem:[%s1347 + $0x10] sm:$0xff]
        %v5968 = vld [vmem:[%s1347 + $0x28] sm:$0xff]
        %v5969 = vld [vmem:[%s1347 + $0x30] sm:$0xff]
        %v5970 = vld [vmem:[%s1347 + $0x48] sm:$0xff]
        %v5971 = vld [vmem:[%s1347 + $0x50] sm:$0xff]
        %v5972 = vld [vmem:[%s1347 + $0x68] sm:$0xff]
        %v5973 = vld [vmem:[%s1347 + $0x70] sm:$0xff]
        %v5974 = vld [vmem:[%s1347 + $0x88] sm:$0xff]
        %v5975 = vld [vmem:[%s1347 + $0x90] sm:$0xff]
        %v5976 = vld [vmem:[%s1347 + $0xa8] sm:$0xff]
        %v5977 = vld [vmem:[%s1347 + $0xb0] sm:$0xff]
        %v5978 = vld [vmem:[%s1347 + $0xc8] sm:$0xff]
        %v5979 = vld [vmem:[%s1347 + $0xd0] sm:$0xff]
        %v5980 = vld [vmem:[%s1347 + $0xe8] sm:$0xff]
        %v5981 = vld [vmem:[%s1347 + $0xf0] sm:$0xff]
        %v5982 = vld [vmem:[%s1347 + $0x108] sm:$0xff]
        %v5983 = vld [vmem:[%s1347 + $0x110] sm:$0xff]
        %v5984 = vld [vmem:[%s1347 + $0x128] sm:$0xff]
        %v5985 = vld [vmem:[%s1347 + $0x130] sm:$0xff]
        %v5986 = vld [vmem:[%s1347 + $0x148] sm:$0xff]
        %v5987 = vld [vmem:[%s1347 + $0x150] sm:$0xff]
        %v5988 = vld [vmem:[%s1347 + $0x168] sm:$0xff]
        %v5989 = vld [vmem:[%s1347 + $0x170] sm:$0xff]
        %v5990 = vld [vmem:[%s1347 + $0x188] sm:$0xff]
        %v5991 = vld [vmem:[%s1347 + $0x190] sm:$0xff]
        %v5992 = vld [vmem:[%s1347 + $0x1a8] sm:$0xff]
        %v5993 = vld [vmem:[%s1347 + $0x1b0] sm:$0xff]
        %v5994 = vld [vmem:[%s1347 + $0x1c8] sm:$0xff]
        %v5995 = vld [vmem:[%s1347 + $0x1d0] sm:$0xff]
        %v5996 = vld [vmem:[%s1347 + $0x1e8] sm:$0xff]
        %v5997 = vld [vmem:[%s1347 + $0x1f0] sm:$0xff]
        %v5998 = vld [vmem:[%s1347 + $0x208] sm:$0xff]
        %v5999 = vld [vmem:[%s1347 + $0x210] sm:$0xff]
        %v6000 = vld [vmem:[%s1347 + $0x228] sm:$0xff]
        %v6001 = vld [vmem:[%s1347 + $0x230] sm:$0xff]
        %v6002 = vld [vmem:[%s1347 + $0x248] sm:$0xff]
        %v6003 = vld [vmem:[%s1347 + $0x250] sm:$0xff]
        %v6004 = vld [vmem:[%s1347 + $0x268] sm:$0xff]
        %v6005 = vld [vmem:[%s1347 + $0x270] sm:$0xff]
        %v6006 = vld [vmem:[%s1347 + $0x288] sm:$0xff]
        %v6007 = vld [vmem:[%s1347 + $0x290] sm:$0xff]
        %v6008 = vld [vmem:[%s1347 + $0x2a8] sm:$0xff]
        %v6009 = vld [vmem:[%s1347 + $0x2b0] sm:$0xff]
        %v6010 = vld [vmem:[%s1347 + $0x2c8] sm:$0xff]
        %v6011 = vld [vmem:[%s1347 + $0x2d0] sm:$0xff]
        %v6012 = vld [vmem:[%s1347 + $0x2e8] sm:$0xff]
        %v6013 = vld [vmem:[%s1347 + $0x2f0] sm:$0xff]
        %v6014 = vld [vmem:[%s1347 + $0x308] sm:$0xff]
        %v6015 = vld [vmem:[%s1347 + $0x310] sm:$0xff]
        %v6016 = vld [vmem:[%s1347 + $0x328] sm:$0xff]
        %v6017 = vld [vmem:[%s1347 + $0x330] sm:$0xff]
        %v6018 = vld [vmem:[%s1347 + $0x348] sm:$0xff]
        %v6019 = vld [vmem:[%s1347 + $0x350] sm:$0xff]
        %v6020 = vld [vmem:[%s1347 + $0x368] sm:$0xff]
        %v6021 = vld [vmem:[%s1347 + $0x370] sm:$0xff]
        %v6022 = vld [vmem:[%s1347 + $0x388] sm:$0xff]
        %v6023 = vld [vmem:[%s1347 + $0x390] sm:$0xff]
        %v6024 = vld [vmem:[%s1347 + $0x3a8] sm:$0xff]
        %v6025 = vld [vmem:[%s1347 + $0x3b0] sm:$0xff]
        %v6026 = vld [vmem:[%s1347 + $0x3c8] sm:$0xff]
        %v6027 = vld [vmem:[%s1347 + $0x3d0] sm:$0xff]
        %v6028 = vld [vmem:[%s1347 + $0x3e8] sm:$0xff]
        %v6029 = vld [vmem:[%s1347 + $0x3f0] sm:$0xff]
        %v6030 = vpack.c.bf16 %v5967, %v5966
        %v6031 = vpack.c.bf16 %v5969, %v5968
        %v6032 = vpack.c.bf16 %v5971, %v5970
        %v6033 = vpack.c.bf16 %v5973, %v5972
        %v6034 = vpack.c.bf16 %v5975, %v5974
        %v6035 = vpack.c.bf16 %v5977, %v5976
        %v6036 = vpack.c.bf16 %v5979, %v5978
        %v6037 = vpack.c.bf16 %v5981, %v5980
        %v6038 = vpack.c.bf16 %v5983, %v5982
        %v6039 = vpack.c.bf16 %v5985, %v5984
        %v6040 = vpack.c.bf16 %v5987, %v5986
        %v6041 = vpack.c.bf16 %v5989, %v5988
        %v6042 = vpack.c.bf16 %v5991, %v5990
        %v6043 = vpack.c.bf16 %v5993, %v5992
        %v6044 = vpack.c.bf16 %v5995, %v5994
        %v6045 = vpack.c.bf16 %v5997, %v5996
        %v6046 = vpack.c.bf16 %v5999, %v5998
        %v6047 = vpack.c.bf16 %v6001, %v6000
        %v6048 = vpack.c.bf16 %v6003, %v6002
        %v6049 = vpack.c.bf16 %v6005, %v6004
        %v6050 = vpack.c.bf16 %v6007, %v6006
        %v6051 = vpack.c.bf16 %v6009, %v6008
        %v6052 = vpack.c.bf16 %v6011, %v6010
        %v6053 = vpack.c.bf16 %v6013, %v6012
        %v6054 = vpack.c.bf16 %v6015, %v6014
        %v6055 = vpack.c.bf16 %v6017, %v6016
        %v6056 = vpack.c.bf16 %v6019, %v6018
        %v6057 = vpack.c.bf16 %v6021, %v6020
        %v6058 = vpack.c.bf16 %v6023, %v6022
        %v6059 = vpack.c.bf16 %v6025, %v6024
        %v6060 = vpack.c.bf16 %v6027, %v6026
        %v6061 = vpack.c.bf16 %v6029, %v6028
        %6094 = vrot.lane.b32.xlu0 %v6030, 8
        %v6095 = vpop.permute.xlu0 %6094
        %6096 = vrot.lane.b32.xlu0 %v6031, 8
        %v6097 = vpop.permute.xlu0 %6096
        %6098 = vrot.lane.b32.xlu0 %v6032, 8
        %v6099 = vpop.permute.xlu0 %6098
        %6100 = vrot.lane.b32.xlu0 %v6033, 8
        %v6101 = vpop.permute.xlu0 %6100
        %6102 = vrot.lane.b32.xlu0 %v6034, 8
        %v6103 = vpop.permute.xlu0 %6102
        %6104 = vrot.lane.b32.xlu0 %v6035, 8
        %v6105 = vpop.permute.xlu0 %6104
        %6106 = vrot.lane.b32.xlu0 %v6036, 8
        %v6107 = vpop.permute.xlu0 %6106
        %6108 = vrot.lane.b32.xlu0 %v6037, 8
        %v6109 = vpop.permute.xlu0 %6108
        %6110 = vrot.lane.b32.xlu0 %v6038, 8
        %v6111 = vpop.permute.xlu0 %6110
        %6112 = vrot.lane.b32.xlu0 %v6039, 8
        %v6113 = vpop.permute.xlu0 %6112
        %6114 = vrot.lane.b32.xlu0 %v6040, 8
        %v6115 = vpop.permute.xlu0 %6114
        %6116 = vrot.lane.b32.xlu0 %v6041, 8
        %v6117 = vpop.permute.xlu0 %6116
        %6118 = vrot.lane.b32.xlu0 %v6042, 8
        %v6119 = vpop.permute.xlu0 %6118
        %6120 = vrot.lane.b32.xlu0 %v6043, 8
        %v6121 = vpop.permute.xlu0 %6120
        %6122 = vrot.lane.b32.xlu0 %v6044, 8
        %v6123 = vpop.permute.xlu0 %6122
        %6124 = vrot.lane.b32.xlu0 %v6045, 8
        %v6125 = vpop.permute.xlu0 %6124
        %6126 = vrot.lane.b32.xlu0 %v6046, 8
        %v6127 = vpop.permute.xlu0 %6126
        %6128 = vrot.lane.b32.xlu0 %v6047, 8
        %v6129 = vpop.permute.xlu0 %6128
        %6130 = vrot.lane.b32.xlu0 %v6048, 8
        %v6131 = vpop.permute.xlu0 %6130
        %6132 = vrot.lane.b32.xlu0 %v6049, 8
        %v6133 = vpop.permute.xlu0 %6132
        %6134 = vrot.lane.b32.xlu0 %v6050, 8
        %v6135 = vpop.permute.xlu0 %6134
        %6136 = vrot.lane.b32.xlu0 %v6051, 8
        %v6137 = vpop.permute.xlu0 %6136
        %6138 = vrot.lane.b32.xlu0 %v6052, 8
        %v6139 = vpop.permute.xlu0 %6138
        %6140 = vrot.lane.b32.xlu0 %v6053, 8
        %v6141 = vpop.permute.xlu0 %6140
        %6142 = vrot.lane.b32.xlu0 %v6054, 8
        %v6143 = vpop.permute.xlu0 %6142
        %6144 = vrot.lane.b32.xlu0 %v6055, 8
        %v6145 = vpop.permute.xlu0 %6144
        %6146 = vrot.lane.b32.xlu0 %v6056, 8
        %v6147 = vpop.permute.xlu0 %6146
        %6148 = vrot.lane.b32.xlu0 %v6057, 8
        %v6149 = vpop.permute.xlu0 %6148
        %6150 = vrot.lane.b32.xlu0 %v6058, 8
        %v6151 = vpop.permute.xlu0 %6150
        %6152 = vrot.lane.b32.xlu0 %v6059, 8
        %v6153 = vpop.permute.xlu0 %6152
        %6154 = vrot.lane.b32.xlu0 %v6060, 8
        %v6155 = vpop.permute.xlu0 %6154
        %6156 = vrot.lane.b32.xlu0 %v6061, 8
        %v6157 = vpop.permute.xlu0 %6156
        %vm6190 = vcmask 97344
        %6191 = vst.msk [vmem:[#allocation3] sm:$0xff] %vm6190, %v6095
        %6192 = vst.msk [vmem:[#allocation3 + $0x8] sm:$0xff] %vm6190, %v6097
        %6193 = vst.msk [vmem:[#allocation3 + $0x10] sm:$0xff] %vm6190, %v6099
        %6194 = vst.msk [vmem:[#allocation3 + $0x18] sm:$0xff] %vm6190, %v6101
        %6195 = vst.msk [vmem:[#allocation3 + $0x20] sm:$0xff] %vm6190, %v6103
        %6196 = vst.msk [vmem:[#allocation3 + $0x28] sm:$0xff] %vm6190, %v6105
        %6197 = vst.msk [vmem:[#allocation3 + $0x30] sm:$0xff] %vm6190, %v6107
        %6198 = vst.msk [vmem:[#allocation3 + $0x38] sm:$0xff] %vm6190, %v6109
        %6199 = vst.msk [vmem:[#allocation3 + $0x40] sm:$0xff] %vm6190, %v6111
        %6200 = vst.msk [vmem:[#allocation3 + $0x48] sm:$0xff] %vm6190, %v6113
        %6201 = vst.msk [vmem:[#allocation3 + $0x50] sm:$0xff] %vm6190, %v6115
        %6202 = vst.msk [vmem:[#allocation3 + $0x58] sm:$0xff] %vm6190, %v6117
        %6203 = vst.msk [vmem:[#allocation3 + $0x60] sm:$0xff] %vm6190, %v6119
        %6204 = vst.msk [vmem:[#allocation3 + $0x68] sm:$0xff] %vm6190, %v6121
        %6205 = vst.msk [vmem:[#allocation3 + $0x70] sm:$0xff] %vm6190, %v6123
        %6206 = vst.msk [vmem:[#allocation3 + $0x78] sm:$0xff] %vm6190, %v6125
        %6207 = vst.msk [vmem:[#allocation3 + $0x80] sm:$0xff] %vm6190, %v6127
        %6208 = vst.msk [vmem:[#allocation3 + $0x88] sm:$0xff] %vm6190, %v6129
        %6209 = vst.msk [vmem:[#allocation3 + $0x90] sm:$0xff] %vm6190, %v6131
        %6210 = vst.msk [vmem:[#allocation3 + $0x98] sm:$0xff] %vm6190, %v6133
        %6211 = vst.msk [vmem:[#allocation3 + $0xa0] sm:$0xff] %vm6190, %v6135
        %6212 = vst.msk [vmem:[#allocation3 + $0xa8] sm:$0xff] %vm6190, %v6137
        %6213 = vst.msk [vmem:[#allocation3 + $0xb0] sm:$0xff] %vm6190, %v6139
        %6214 = vst.msk [vmem:[#allocation3 + $0xb8] sm:$0xff] %vm6190, %v6141
        %6215 = vst.msk [vmem:[#allocation3 + $0xc0] sm:$0xff] %vm6190, %v6143
        %6216 = vst.msk [vmem:[#allocation3 + $0xc8] sm:$0xff] %vm6190, %v6145
        %6217 = vst.msk [vmem:[#allocation3 + $0xd0] sm:$0xff] %vm6190, %v6147
        %6218 = vst.msk [vmem:[#allocation3 + $0xd8] sm:$0xff] %vm6190, %v6149
        %6219 = vst.msk [vmem:[#allocation3 + $0xe0] sm:$0xff] %vm6190, %v6151
        %6220 = vst.msk [vmem:[#allocation3 + $0xe8] sm:$0xff] %vm6190, %v6153
        %6221 = vst.msk [vmem:[#allocation3 + $0xf0] sm:$0xff] %vm6190, %v6155
        %6222 = vst.msk [vmem:[#allocation3 + $0xf8] sm:$0xff] %vm6190, %v6157
        %v6223 = vld [vmem:[#allocation2] sm:$0xff]
        %v6224 = vld [vmem:[#allocation2 + $0x8] sm:$0xff]
        %v6225 = vld [vmem:[#allocation2 + $0x10] sm:$0xff]
        %v6226 = vld [vmem:[#allocation2 + $0x18] sm:$0xff]
        %v6227 = vld [vmem:[#allocation2 + $0x20] sm:$0xff]
        %v6228 = vld [vmem:[#allocation2 + $0x28] sm:$0xff]
        %v6229 = vld [vmem:[#allocation2 + $0x30] sm:$0xff]
        %v6230 = vld [vmem:[#allocation2 + $0x38] sm:$0xff]
        %v6231 = vld [vmem:[#allocation2 + $0x40] sm:$0xff]
        %v6232 = vld [vmem:[#allocation2 + $0x48] sm:$0xff]
        %v6233 = vld [vmem:[#allocation2 + $0x50] sm:$0xff]
        %v6234 = vld [vmem:[#allocation2 + $0x58] sm:$0xff]
        %v6235 = vld [vmem:[#allocation2 + $0x60] sm:$0xff]
        %v6236 = vld [vmem:[#allocation2 + $0x68] sm:$0xff]
        %v6237 = vld [vmem:[#allocation2 + $0x70] sm:$0xff]
        %v6238 = vld [vmem:[#allocation2 + $0x78] sm:$0xff]
        %v6239 = vld [vmem:[#allocation2 + $0x80] sm:$0xff]
        %v6240 = vld [vmem:[#allocation2 + $0x88] sm:$0xff]
        %v6241 = vld [vmem:[#allocation2 + $0x90] sm:$0xff]
        %v6242 = vld [vmem:[#allocation2 + $0x98] sm:$0xff]
        %v6243 = vld [vmem:[#allocation2 + $0xa0] sm:$0xff]
        %v6244 = vld [vmem:[#allocation2 + $0xa8] sm:$0xff]
        %v6245 = vld [vmem:[#allocation2 + $0xb0] sm:$0xff]
        %v6246 = vld [vmem:[#allocation2 + $0xb8] sm:$0xff]
        %v6247 = vld [vmem:[#allocation2 + $0xc0] sm:$0xff]
        %v6248 = vld [vmem:[#allocation2 + $0xc8] sm:$0xff]
        %v6249 = vld [vmem:[#allocation2 + $0xd0] sm:$0xff]
        %v6250 = vld [vmem:[#allocation2 + $0xd8] sm:$0xff]
        %v6251 = vld [vmem:[#allocation2 + $0xe0] sm:$0xff]
        %v6252 = vld [vmem:[#allocation2 + $0xe8] sm:$0xff]
        %v6253 = vld [vmem:[#allocation2 + $0xf0] sm:$0xff]
        %v6254 = vld [vmem:[#allocation2 + $0xf8] sm:$0xff]
        %v6255 = vld [vmem:[#allocation2 + $0x100] sm:$0xff]
        %v6256 = vld [vmem:[#allocation2 + $0x108] sm:$0xff]
        %v6257 = vld [vmem:[#allocation2 + $0x110] sm:$0xff]
        %v6258 = vld [vmem:[#allocation2 + $0x118] sm:$0xff]
        %v6259 = vld [vmem:[#allocation2 + $0x120] sm:$0xff]
        %v6260 = vld [vmem:[#allocation2 + $0x128] sm:$0xff]
        %v6261 = vld [vmem:[#allocation2 + $0x130] sm:$0xff]
        %v6262 = vld [vmem:[#allocation2 + $0x138] sm:$0xff]
        %v6263 = vld [vmem:[#allocation2 + $0x140] sm:$0xff]
        %v6264 = vld [vmem:[#allocation2 + $0x148] sm:$0xff]
        %v6265 = vld [vmem:[#allocation2 + $0x150] sm:$0xff]
        %v6266 = vld [vmem:[#allocation2 + $0x158] sm:$0xff]
        %v6267 = vld [vmem:[#allocation2 + $0x160] sm:$0xff]
        %v6268 = vld [vmem:[#allocation2 + $0x168] sm:$0xff]
        %v6269 = vld [vmem:[#allocation2 + $0x170] sm:$0xff]
        %v6270 = vld [vmem:[#allocation2 + $0x178] sm:$0xff]
        %v6271 = vld [vmem:[#allocation2 + $0x180] sm:$0xff]
        %v6272 = vld [vmem:[#allocation2 + $0x188] sm:$0xff]
        %v6273 = vld [vmem:[#allocation2 + $0x190] sm:$0xff]
        %v6274 = vld [vmem:[#allocation2 + $0x198] sm:$0xff]
        %v6275 = vld [vmem:[#allocation2 + $0x1a0] sm:$0xff]
        %v6276 = vld [vmem:[#allocation2 + $0x1a8] sm:$0xff]
        %v6277 = vld [vmem:[#allocation2 + $0x1b0] sm:$0xff]
        %v6278 = vld [vmem:[#allocation2 + $0x1b8] sm:$0xff]
        %v6279 = vld [vmem:[#allocation2 + $0x1c0] sm:$0xff]
        %v6280 = vld [vmem:[#allocation2 + $0x1c8] sm:$0xff]
        %v6281 = vld [vmem:[#allocation2 + $0x1d0] sm:$0xff]
        %v6282 = vld [vmem:[#allocation2 + $0x1d8] sm:$0xff]
        %v6283 = vld [vmem:[#allocation2 + $0x1e0] sm:$0xff]
        %v6284 = vld [vmem:[#allocation2 + $0x1e8] sm:$0xff]
        %v6285 = vld [vmem:[#allocation2 + $0x1f0] sm:$0xff]
        %v6286 = vld [vmem:[#allocation2 + $0x1f8] sm:$0xff]
        %v6287 = vld [vmem:[#allocation2 + $0x200] sm:$0xff]
        %v6288 = vld [vmem:[#allocation2 + $0x208] sm:$0xff]
        %v6289 = vld [vmem:[#allocation2 + $0x210] sm:$0xff]
        %v6290 = vld [vmem:[#allocation2 + $0x218] sm:$0xff]
        %v6291 = vld [vmem:[#allocation2 + $0x220] sm:$0xff]
        %v6292 = vld [vmem:[#allocation2 + $0x228] sm:$0xff]
        %v6293 = vld [vmem:[#allocation2 + $0x230] sm:$0xff]
        %v6294 = vld [vmem:[#allocation2 + $0x238] sm:$0xff]
        %v6295 = vld [vmem:[#allocation2 + $0x240] sm:$0xff]
        %v6296 = vld [vmem:[#allocation2 + $0x248] sm:$0xff]
        %v6297 = vld [vmem:[#allocation2 + $0x250] sm:$0xff]
        %v6298 = vld [vmem:[#allocation2 + $0x258] sm:$0xff]
        %v6299 = vld [vmem:[#allocation2 + $0x260] sm:$0xff]
        %v6300 = vld [vmem:[#allocation2 + $0x268] sm:$0xff]
        %v6301 = vld [vmem:[#allocation2 + $0x270] sm:$0xff]
        %v6302 = vld [vmem:[#allocation2 + $0x278] sm:$0xff]
        %v6303 = vld [vmem:[#allocation2 + $0x280] sm:$0xff]
        %v6304 = vld [vmem:[#allocation2 + $0x288] sm:$0xff]
        %v6305 = vld [vmem:[#allocation2 + $0x290] sm:$0xff]
        %v6306 = vld [vmem:[#allocation2 + $0x298] sm:$0xff]
        %v6307 = vld [vmem:[#allocation2 + $0x2a0] sm:$0xff]
        %v6308 = vld [vmem:[#allocation2 + $0x2a8] sm:$0xff]
        %v6309 = vld [vmem:[#allocation2 + $0x2b0] sm:$0xff]
        %v6310 = vld [vmem:[#allocation2 + $0x2b8] sm:$0xff]
        %v6311 = vld [vmem:[#allocation2 + $0x2c0] sm:$0xff]
        %v6312 = vld [vmem:[#allocation2 + $0x2c8] sm:$0xff]
        %v6313 = vld [vmem:[#allocation2 + $0x2d0] sm:$0xff]
        %v6314 = vld [vmem:[#allocation2 + $0x2d8] sm:$0xff]
        %v6315 = vld [vmem:[#allocation2 + $0x2e0] sm:$0xff]
        %v6316 = vld [vmem:[#allocation2 + $0x2e8] sm:$0xff]
        %v6317 = vld [vmem:[#allocation2 + $0x2f0] sm:$0xff]
        %v6318 = vld [vmem:[#allocation2 + $0x2f8] sm:$0xff]
        %v6319 = vld [vmem:[#allocation2 + $0x300] sm:$0xff]
        %v6320 = vld [vmem:[#allocation2 + $0x308] sm:$0xff]
        %v6321 = vld [vmem:[#allocation2 + $0x310] sm:$0xff]
        %v6322 = vld [vmem:[#allocation2 + $0x318] sm:$0xff]
        %v6323 = vld [vmem:[#allocation2 + $0x320] sm:$0xff]
        %v6324 = vld [vmem:[#allocation2 + $0x328] sm:$0xff]
        %v6325 = vld [vmem:[#allocation2 + $0x330] sm:$0xff]
        %v6326 = vld [vmem:[#allocation2 + $0x338] sm:$0xff]
        %v6327 = vld [vmem:[#allocation2 + $0x340] sm:$0xff]
        %v6328 = vld [vmem:[#allocation2 + $0x348] sm:$0xff]
        %v6329 = vld [vmem:[#allocation2 + $0x350] sm:$0xff]
        %v6330 = vld [vmem:[#allocation2 + $0x358] sm:$0xff]
        %v6331 = vld [vmem:[#allocation2 + $0x360] sm:$0xff]
        %v6332 = vld [vmem:[#allocation2 + $0x368] sm:$0xff]
        %v6333 = vld [vmem:[#allocation2 + $0x370] sm:$0xff]
        %v6334 = vld [vmem:[#allocation2 + $0x378] sm:$0xff]
        %v6335 = vld [vmem:[#allocation2 + $0x380] sm:$0xff]
        %v6336 = vld [vmem:[#allocation2 + $0x388] sm:$0xff]
        %v6337 = vld [vmem:[#allocation2 + $0x390] sm:$0xff]
        %v6338 = vld [vmem:[#allocation2 + $0x398] sm:$0xff]
        %v6339 = vld [vmem:[#allocation2 + $0x3a0] sm:$0xff]
        %v6340 = vld [vmem:[#allocation2 + $0x3a8] sm:$0xff]
        %v6341 = vld [vmem:[#allocation2 + $0x3b0] sm:$0xff]
        %v6342 = vld [vmem:[#allocation2 + $0x3b8] sm:$0xff]
        %v6343 = vld [vmem:[#allocation2 + $0x3c0] sm:$0xff]
        %v6344 = vld [vmem:[#allocation2 + $0x3c8] sm:$0xff]
        %v6345 = vld [vmem:[#allocation2 + $0x3d0] sm:$0xff]
        %v6346 = vld [vmem:[#allocation2 + $0x3d8] sm:$0xff]
        %v6347 = vld [vmem:[#allocation2 + $0x3e0] sm:$0xff]
        %v6348 = vld [vmem:[#allocation2 + $0x3e8] sm:$0xff]
        %v6349 = vld [vmem:[#allocation2 + $0x3f0] sm:$0xff]
        %v6350 = vld [vmem:[#allocation2 + $0x3f8] sm:$0xff]
        %v6351 = vld [vmem:[%s1604] sm:$0xff]
        %v6352 = vld [vmem:[%s1604 + $0x8] sm:$0xff]
        %v6353 = vld [vmem:[%s1604 + $0x10] sm:$0xff]
        %v6354 = vld [vmem:[%s1604 + $0x18] sm:$0xff]
        %v6355 = vld [vmem:[%s1604 + $0x20] sm:$0xff]
        %v6356 = vld [vmem:[%s1604 + $0x28] sm:$0xff]
        %v6357 = vld [vmem:[%s1604 + $0x30] sm:$0xff]
        %v6358 = vld [vmem:[%s1604 + $0x38] sm:$0xff]
        %v6359 = vld [vmem:[%s1604 + $0x40] sm:$0xff]
        %v6360 = vld [vmem:[%s1604 + $0x48] sm:$0xff]
        %v6361 = vld [vmem:[%s1604 + $0x50] sm:$0xff]
        %v6362 = vld [vmem:[%s1604 + $0x58] sm:$0xff]
        %v6363 = vld [vmem:[%s1604 + $0x60] sm:$0xff]
        %v6364 = vld [vmem:[%s1604 + $0x68] sm:$0xff]
        %v6365 = vld [vmem:[%s1604 + $0x70] sm:$0xff]
        %v6366 = vld [vmem:[%s1604 + $0x78] sm:$0xff]
        %v6367 = vld [vmem:[%s1604 + $0x80] sm:$0xff]
        %v6368 = vld [vmem:[%s1604 + $0x88] sm:$0xff]
        %v6369 = vld [vmem:[%s1604 + $0x90] sm:$0xff]
        %v6370 = vld [vmem:[%s1604 + $0x98] sm:$0xff]
        %v6371 = vld [vmem:[%s1604 + $0xa0] sm:$0xff]
        %v6372 = vld [vmem:[%s1604 + $0xa8] sm:$0xff]
        %v6373 = vld [vmem:[%s1604 + $0xb0] sm:$0xff]
        %v6374 = vld [vmem:[%s1604 + $0xb8] sm:$0xff]
        %v6375 = vld [vmem:[%s1604 + $0xc0] sm:$0xff]
        %v6376 = vld [vmem:[%s1604 + $0xc8] sm:$0xff]
        %v6377 = vld [vmem:[%s1604 + $0xd0] sm:$0xff]
        %v6378 = vld [vmem:[%s1604 + $0xd8] sm:$0xff]
        %v6379 = vld [vmem:[%s1604 + $0xe0] sm:$0xff]
        %v6380 = vld [vmem:[%s1604 + $0xe8] sm:$0xff]
        %v6381 = vld [vmem:[%s1604 + $0xf0] sm:$0xff]
        %v6382 = vld [vmem:[%s1604 + $0xf8] sm:$0xff]
        %v6383 = vld [vmem:[%s1604 + $0x100] sm:$0xff]
        %v6384 = vld [vmem:[%s1604 + $0x108] sm:$0xff]
        %v6385 = vld [vmem:[%s1604 + $0x110] sm:$0xff]
        %v6386 = vld [vmem:[%s1604 + $0x118] sm:$0xff]
        %v6387 = vld [vmem:[%s1604 + $0x120] sm:$0xff]
        %v6388 = vld [vmem:[%s1604 + $0x128] sm:$0xff]
        %v6389 = vld [vmem:[%s1604 + $0x130] sm:$0xff]
        %v6390 = vld [vmem:[%s1604 + $0x138] sm:$0xff]
        %v6391 = vld [vmem:[%s1604 + $0x140] sm:$0xff]
        %v6392 = vld [vmem:[%s1604 + $0x148] sm:$0xff]
        %v6393 = vld [vmem:[%s1604 + $0x150] sm:$0xff]
        %v6394 = vld [vmem:[%s1604 + $0x158] sm:$0xff]
        %v6395 = vld [vmem:[%s1604 + $0x160] sm:$0xff]
        %v6396 = vld [vmem:[%s1604 + $0x168] sm:$0xff]
        %v6397 = vld [vmem:[%s1604 + $0x170] sm:$0xff]
        %v6398 = vld [vmem:[%s1604 + $0x178] sm:$0xff]
        %v6399 = vld [vmem:[%s1604 + $0x180] sm:$0xff]
        %v6400 = vld [vmem:[%s1604 + $0x188] sm:$0xff]
        %v6401 = vld [vmem:[%s1604 + $0x190] sm:$0xff]
        %v6402 = vld [vmem:[%s1604 + $0x198] sm:$0xff]
        %v6403 = vld [vmem:[%s1604 + $0x1a0] sm:$0xff]
        %v6404 = vld [vmem:[%s1604 + $0x1a8] sm:$0xff]
        %v6405 = vld [vmem:[%s1604 + $0x1b0] sm:$0xff]
        %v6406 = vld [vmem:[%s1604 + $0x1b8] sm:$0xff]
        %v6407 = vld [vmem:[%s1604 + $0x1c0] sm:$0xff]
        %v6408 = vld [vmem:[%s1604 + $0x1c8] sm:$0xff]
        %v6409 = vld [vmem:[%s1604 + $0x1d0] sm:$0xff]
        %v6410 = vld [vmem:[%s1604 + $0x1d8] sm:$0xff]
        %v6411 = vld [vmem:[%s1604 + $0x1e0] sm:$0xff]
        %v6412 = vld [vmem:[%s1604 + $0x1e8] sm:$0xff]
        %v6413 = vld [vmem:[%s1604 + $0x1f0] sm:$0xff]
        %v6414 = vld [vmem:[%s1604 + $0x1f8] sm:$0xff]
        %v6415 = vld [vmem:[%s1604 + $0x200] sm:$0xff]
        %v6416 = vld [vmem:[%s1604 + $0x208] sm:$0xff]
        %v6417 = vld [vmem:[%s1604 + $0x210] sm:$0xff]
        %v6418 = vld [vmem:[%s1604 + $0x218] sm:$0xff]
        %v6419 = vld [vmem:[%s1604 + $0x220] sm:$0xff]
        %v6420 = vld [vmem:[%s1604 + $0x228] sm:$0xff]
        %v6421 = vld [vmem:[%s1604 + $0x230] sm:$0xff]
        %v6422 = vld [vmem:[%s1604 + $0x238] sm:$0xff]
        %v6423 = vld [vmem:[%s1604 + $0x240] sm:$0xff]
        %v6424 = vld [vmem:[%s1604 + $0x248] sm:$0xff]
        %v6425 = vld [vmem:[%s1604 + $0x250] sm:$0xff]
        %v6426 = vld [vmem:[%s1604 + $0x258] sm:$0xff]
        %v6427 = vld [vmem:[%s1604 + $0x260] sm:$0xff]
        %v6428 = vld [vmem:[%s1604 + $0x268] sm:$0xff]
        %v6429 = vld [vmem:[%s1604 + $0x270] sm:$0xff]
        %v6430 = vld [vmem:[%s1604 + $0x278] sm:$0xff]
        %v6431 = vld [vmem:[%s1604 + $0x280] sm:$0xff]
        %v6432 = vld [vmem:[%s1604 + $0x288] sm:$0xff]
        %v6433 = vld [vmem:[%s1604 + $0x290] sm:$0xff]
        %v6434 = vld [vmem:[%s1604 + $0x298] sm:$0xff]
        %v6435 = vld [vmem:[%s1604 + $0x2a0] sm:$0xff]
        %v6436 = vld [vmem:[%s1604 + $0x2a8] sm:$0xff]
        %v6437 = vld [vmem:[%s1604 + $0x2b0] sm:$0xff]
        %v6438 = vld [vmem:[%s1604 + $0x2b8] sm:$0xff]
        %v6439 = vld [vmem:[%s1604 + $0x2c0] sm:$0xff]
        %v6440 = vld [vmem:[%s1604 + $0x2c8] sm:$0xff]
        %v6441 = vld [vmem:[%s1604 + $0x2d0] sm:$0xff]
        %v6442 = vld [vmem:[%s1604 + $0x2d8] sm:$0xff]
        %v6443 = vld [vmem:[%s1604 + $0x2e0] sm:$0xff]
        %v6444 = vld [vmem:[%s1604 + $0x2e8] sm:$0xff]
        %v6445 = vld [vmem:[%s1604 + $0x2f0] sm:$0xff]
        %v6446 = vld [vmem:[%s1604 + $0x2f8] sm:$0xff]
        %v6447 = vld [vmem:[%s1604 + $0x300] sm:$0xff]
        %v6448 = vld [vmem:[%s1604 + $0x308] sm:$0xff]
        %v6449 = vld [vmem:[%s1604 + $0x310] sm:$0xff]
        %v6450 = vld [vmem:[%s1604 + $0x318] sm:$0xff]
        %v6451 = vld [vmem:[%s1604 + $0x320] sm:$0xff]
        %v6452 = vld [vmem:[%s1604 + $0x328] sm:$0xff]
        %v6453 = vld [vmem:[%s1604 + $0x330] sm:$0xff]
        %v6454 = vld [vmem:[%s1604 + $0x338] sm:$0xff]
        %v6455 = vld [vmem:[%s1604 + $0x340] sm:$0xff]
        %v6456 = vld [vmem:[%s1604 + $0x348] sm:$0xff]
        %v6457 = vld [vmem:[%s1604 + $0x350] sm:$0xff]
        %v6458 = vld [vmem:[%s1604 + $0x358] sm:$0xff]
        %v6459 = vld [vmem:[%s1604 + $0x360] sm:$0xff]
        %v6460 = vld [vmem:[%s1604 + $0x368] sm:$0xff]
        %v6461 = vld [vmem:[%s1604 + $0x370] sm:$0xff]
        %v6462 = vld [vmem:[%s1604 + $0x378] sm:$0xff]
        %v6463 = vld [vmem:[%s1604 + $0x380] sm:$0xff]
        %v6464 = vld [vmem:[%s1604 + $0x388] sm:$0xff]
        %v6465 = vld [vmem:[%s1604 + $0x390] sm:$0xff]
        %v6466 = vld [vmem:[%s1604 + $0x398] sm:$0xff]
        %v6467 = vld [vmem:[%s1604 + $0x3a0] sm:$0xff]
        %v6468 = vld [vmem:[%s1604 + $0x3a8] sm:$0xff]
        %v6469 = vld [vmem:[%s1604 + $0x3b0] sm:$0xff]
        %v6470 = vld [vmem:[%s1604 + $0x3b8] sm:$0xff]
        %v6471 = vld [vmem:[%s1604 + $0x3c0] sm:$0xff]
        %v6472 = vld [vmem:[%s1604 + $0x3c8] sm:$0xff]
        %v6473 = vld [vmem:[%s1604 + $0x3d0] sm:$0xff]
        %v6474 = vld [vmem:[%s1604 + $0x3d8] sm:$0xff]
        %v6475 = vld [vmem:[%s1604 + $0x3e0] sm:$0xff]
        %v6476 = vld [vmem:[%s1604 + $0x3e8] sm:$0xff]
        %v6477 = vld [vmem:[%s1604 + $0x3f0] sm:$0xff]
        %v6478 = vld [vmem:[%s1604 + $0x3f8] sm:$0xff]
        %v6479 = vmax.f32 %v6223, %v6351
        %v6480 = vmax.f32 %v6224, %v6352
        %v6481 = vmax.f32 %v6225, %v6353
        %v6482 = vmax.f32 %v6226, %v6354
        %v6483 = vmax.f32 %v6227, %v6355
        %v6484 = vmax.f32 %v6228, %v6356
        %v6485 = vmax.f32 %v6229, %v6357
        %v6486 = vmax.f32 %v6230, %v6358
        %v6487 = vmax.f32 %v6231, %v6359
        %v6488 = vmax.f32 %v6232, %v6360
        %v6489 = vmax.f32 %v6233, %v6361
        %v6490 = vmax.f32 %v6234, %v6362
        %v6491 = vmax.f32 %v6235, %v6363
        %v6492 = vmax.f32 %v6236, %v6364
        %v6493 = vmax.f32 %v6237, %v6365
        %v6494 = vmax.f32 %v6238, %v6366
        %v6495 = vmax.f32 %v6239, %v6367
        %v6496 = vmax.f32 %v6240, %v6368
        %v6497 = vmax.f32 %v6241, %v6369
        %v6498 = vmax.f32 %v6242, %v6370
        %v6499 = vmax.f32 %v6243, %v6371
        %v6500 = vmax.f32 %v6244, %v6372
        %v6501 = vmax.f32 %v6245, %v6373
        %v6502 = vmax.f32 %v6246, %v6374
        %v6503 = vmax.f32 %v6247, %v6375
        %v6504 = vmax.f32 %v6248, %v6376
        %v6505 = vmax.f32 %v6249, %v6377
        %v6506 = vmax.f32 %v6250, %v6378
        %v6507 = vmax.f32 %v6251, %v6379
        %v6508 = vmax.f32 %v6252, %v6380
        %v6509 = vmax.f32 %v6253, %v6381
        %v6510 = vmax.f32 %v6254, %v6382
        %v6511 = vmax.f32 %v6255, %v6383
        %v6512 = vmax.f32 %v6256, %v6384
        %v6513 = vmax.f32 %v6257, %v6385
        %v6514 = vmax.f32 %v6258, %v6386
        %v6515 = vmax.f32 %v6259, %v6387
        %v6516 = vmax.f32 %v6260, %v6388
        %v6517 = vmax.f32 %v6261, %v6389
        %v6518 = vmax.f32 %v6262, %v6390
        %v6519 = vmax.f32 %v6263, %v6391
        %v6520 = vmax.f32 %v6264, %v6392
        %v6521 = vmax.f32 %v6265, %v6393
        %v6522 = vmax.f32 %v6266, %v6394
        %v6523 = vmax.f32 %v6267, %v6395
        %v6524 = vmax.f32 %v6268, %v6396
        %v6525 = vmax.f32 %v6269, %v6397
        %v6526 = vmax.f32 %v6270, %v6398
        %v6527 = vmax.f32 %v6271, %v6399
        %v6528 = vmax.f32 %v6272, %v6400
        %v6529 = vmax.f32 %v6273, %v6401
        %v6530 = vmax.f32 %v6274, %v6402
        %v6531 = vmax.f32 %v6275, %v6403
        %v6532 = vmax.f32 %v6276, %v6404
        %v6533 = vmax.f32 %v6277, %v6405
        %v6534 = vmax.f32 %v6278, %v6406
        %v6535 = vmax.f32 %v6279, %v6407
        %v6536 = vmax.f32 %v6280, %v6408
        %v6537 = vmax.f32 %v6281, %v6409
        %v6538 = vmax.f32 %v6282, %v6410
        %v6539 = vmax.f32 %v6283, %v6411
        %v6540 = vmax.f32 %v6284, %v6412
        %v6541 = vmax.f32 %v6285, %v6413
        %v6542 = vmax.f32 %v6286, %v6414
        %v6543 = vmax.f32 %v6287, %v6415
        %v6544 = vmax.f32 %v6288, %v6416
        %v6545 = vmax.f32 %v6289, %v6417
        %v6546 = vmax.f32 %v6290, %v6418
        %v6547 = vmax.f32 %v6291, %v6419
        %v6548 = vmax.f32 %v6292, %v6420
        %v6549 = vmax.f32 %v6293, %v6421
        %v6550 = vmax.f32 %v6294, %v6422
        %v6551 = vmax.f32 %v6295, %v6423
        %v6552 = vmax.f32 %v6296, %v6424
        %v6553 = vmax.f32 %v6297, %v6425
        %v6554 = vmax.f32 %v6298, %v6426
        %v6555 = vmax.f32 %v6299, %v6427
        %v6556 = vmax.f32 %v6300, %v6428
        %v6557 = vmax.f32 %v6301, %v6429
        %v6558 = vmax.f32 %v6302, %v6430
        %v6559 = vmax.f32 %v6303, %v6431
        %v6560 = vmax.f32 %v6304, %v6432
        %v6561 = vmax.f32 %v6305, %v6433
        %v6562 = vmax.f32 %v6306, %v6434
        %v6563 = vmax.f32 %v6307, %v6435
        %v6564 = vmax.f32 %v6308, %v6436
        %v6565 = vmax.f32 %v6309, %v6437
        %v6566 = vmax.f32 %v6310, %v6438
        %v6567 = vmax.f32 %v6311, %v6439
        %v6568 = vmax.f32 %v6312, %v6440
        %v6569 = vmax.f32 %v6313, %v6441
        %v6570 = vmax.f32 %v6314, %v6442
        %v6571 = vmax.f32 %v6315, %v6443
        %v6572 = vmax.f32 %v6316, %v6444
        %v6573 = vmax.f32 %v6317, %v6445
        %v6574 = vmax.f32 %v6318, %v6446
        %v6575 = vmax.f32 %v6319, %v6447
        %v6576 = vmax.f32 %v6320, %v6448
        %v6577 = vmax.f32 %v6321, %v6449
        %v6578 = vmax.f32 %v6322, %v6450
        %v6579 = vmax.f32 %v6323, %v6451
        %v6580 = vmax.f32 %v6324, %v6452
        %v6581 = vmax.f32 %v6325, %v6453
        %v6582 = vmax.f32 %v6326, %v6454
        %v6583 = vmax.f32 %v6327, %v6455
        %v6584 = vmax.f32 %v6328, %v6456
        %v6585 = vmax.f32 %v6329, %v6457
        %v6586 = vmax.f32 %v6330, %v6458
        %v6587 = vmax.f32 %v6331, %v6459
        %v6588 = vmax.f32 %v6332, %v6460
        %v6589 = vmax.f32 %v6333, %v6461
        %v6590 = vmax.f32 %v6334, %v6462
        %v6591 = vmax.f32 %v6335, %v6463
        %v6592 = vmax.f32 %v6336, %v6464
        %v6593 = vmax.f32 %v6337, %v6465
        %v6594 = vmax.f32 %v6338, %v6466
        %v6595 = vmax.f32 %v6339, %v6467
        %v6596 = vmax.f32 %v6340, %v6468
        %v6597 = vmax.f32 %v6341, %v6469
        %v6598 = vmax.f32 %v6342, %v6470
        %v6599 = vmax.f32 %v6343, %v6471
        %v6600 = vmax.f32 %v6344, %v6472
        %v6601 = vmax.f32 %v6345, %v6473
        %v6602 = vmax.f32 %v6346, %v6474
        %v6603 = vmax.f32 %v6347, %v6475
        %v6604 = vmax.f32 %v6348, %v6476
        %v6605 = vmax.f32 %v6349, %v6477
        %v6606 = vmax.f32 %v6350, %v6478
        %v6607 = vld [vmem:[%s1216] sm:$0xff]
        %v6608 = vld [vmem:[%s1216 + $0x8] sm:$0xff]
        %v6609 = vld [vmem:[%s1216 + $0x10] sm:$0xff]
        %v6610 = vld [vmem:[%s1216 + $0x18] sm:$0xff]
        %v6611 = vld [vmem:[%s1216 + $0x20] sm:$0xff]
        %v6612 = vld [vmem:[%s1216 + $0x28] sm:$0xff]
        %v6613 = vld [vmem:[%s1216 + $0x30] sm:$0xff]
        %v6614 = vld [vmem:[%s1216 + $0x38] sm:$0xff]
        %v6615 = vld [vmem:[%s1216 + $0x40] sm:$0xff]
        %v6616 = vld [vmem:[%s1216 + $0x48] sm:$0xff]
        %v6617 = vld [vmem:[%s1216 + $0x50] sm:$0xff]
        %v6618 = vld [vmem:[%s1216 + $0x58] sm:$0xff]
        %v6619 = vld [vmem:[%s1216 + $0x60] sm:$0xff]
        %v6620 = vld [vmem:[%s1216 + $0x68] sm:$0xff]
        %v6621 = vld [vmem:[%s1216 + $0x70] sm:$0xff]
        %v6622 = vld [vmem:[%s1216 + $0x78] sm:$0xff]
        %v6623 = vld [vmem:[%s1216 + $0x80] sm:$0xff]
        %v6624 = vld [vmem:[%s1216 + $0x88] sm:$0xff]
        %v6625 = vld [vmem:[%s1216 + $0x90] sm:$0xff]
        %v6626 = vld [vmem:[%s1216 + $0x98] sm:$0xff]
        %v6627 = vld [vmem:[%s1216 + $0xa0] sm:$0xff]
        %v6628 = vld [vmem:[%s1216 + $0xa8] sm:$0xff]
        %v6629 = vld [vmem:[%s1216 + $0xb0] sm:$0xff]
        %v6630 = vld [vmem:[%s1216 + $0xb8] sm:$0xff]
        %v6631 = vld [vmem:[%s1216 + $0xc0] sm:$0xff]
        %v6632 = vld [vmem:[%s1216 + $0xc8] sm:$0xff]
        %v6633 = vld [vmem:[%s1216 + $0xd0] sm:$0xff]
        %v6634 = vld [vmem:[%s1216 + $0xd8] sm:$0xff]
        %v6635 = vld [vmem:[%s1216 + $0xe0] sm:$0xff]
        %v6636 = vld [vmem:[%s1216 + $0xe8] sm:$0xff]
        %v6637 = vld [vmem:[%s1216 + $0xf0] sm:$0xff]
        %v6638 = vld [vmem:[%s1216 + $0xf8] sm:$0xff]
        %v6639 = vld [vmem:[%s1216 + $0x100] sm:$0xff]
        %v6640 = vld [vmem:[%s1216 + $0x108] sm:$0xff]
        %v6641 = vld [vmem:[%s1216 + $0x110] sm:$0xff]
        %v6642 = vld [vmem:[%s1216 + $0x118] sm:$0xff]
        %v6643 = vld [vmem:[%s1216 + $0x120] sm:$0xff]
        %v6644 = vld [vmem:[%s1216 + $0x128] sm:$0xff]
        %v6645 = vld [vmem:[%s1216 + $0x130] sm:$0xff]
        %v6646 = vld [vmem:[%s1216 + $0x138] sm:$0xff]
        %v6647 = vld [vmem:[%s1216 + $0x140] sm:$0xff]
        %v6648 = vld [vmem:[%s1216 + $0x148] sm:$0xff]
        %v6649 = vld [vmem:[%s1216 + $0x150] sm:$0xff]
        %v6650 = vld [vmem:[%s1216 + $0x158] sm:$0xff]
        %v6651 = vld [vmem:[%s1216 + $0x160] sm:$0xff]
        %v6652 = vld [vmem:[%s1216 + $0x168] sm:$0xff]
        %v6653 = vld [vmem:[%s1216 + $0x170] sm:$0xff]
        %v6654 = vld [vmem:[%s1216 + $0x178] sm:$0xff]
        %v6655 = vld [vmem:[%s1216 + $0x180] sm:$0xff]
        %v6656 = vld [vmem:[%s1216 + $0x188] sm:$0xff]
        %v6657 = vld [vmem:[%s1216 + $0x190] sm:$0xff]
        %v6658 = vld [vmem:[%s1216 + $0x198] sm:$0xff]
        %v6659 = vld [vmem:[%s1216 + $0x1a0] sm:$0xff]
        %v6660 = vld [vmem:[%s1216 + $0x1a8] sm:$0xff]
        %v6661 = vld [vmem:[%s1216 + $0x1b0] sm:$0xff]
        %v6662 = vld [vmem:[%s1216 + $0x1b8] sm:$0xff]
        %v6663 = vld [vmem:[%s1216 + $0x1c0] sm:$0xff]
        %v6664 = vld [vmem:[%s1216 + $0x1c8] sm:$0xff]
        %v6665 = vld [vmem:[%s1216 + $0x1d0] sm:$0xff]
        %v6666 = vld [vmem:[%s1216 + $0x1d8] sm:$0xff]
        %v6667 = vld [vmem:[%s1216 + $0x1e0] sm:$0xff]
        %v6668 = vld [vmem:[%s1216 + $0x1e8] sm:$0xff]
        %v6669 = vld [vmem:[%s1216 + $0x1f0] sm:$0xff]
        %v6670 = vld [vmem:[%s1216 + $0x1f8] sm:$0xff]
        %v6671 = vld [vmem:[%s1216 + $0x200] sm:$0xff]
        %v6672 = vld [vmem:[%s1216 + $0x208] sm:$0xff]
        %v6673 = vld [vmem:[%s1216 + $0x210] sm:$0xff]
        %v6674 = vld [vmem:[%s1216 + $0x218] sm:$0xff]
        %v6675 = vld [vmem:[%s1216 + $0x220] sm:$0xff]
        %v6676 = vld [vmem:[%s1216 + $0x228] sm:$0xff]
        %v6677 = vld [vmem:[%s1216 + $0x230] sm:$0xff]
        %v6678 = vld [vmem:[%s1216 + $0x238] sm:$0xff]
        %v6679 = vld [vmem:[%s1216 + $0x240] sm:$0xff]
        %v6680 = vld [vmem:[%s1216 + $0x248] sm:$0xff]
        %v6681 = vld [vmem:[%s1216 + $0x250] sm:$0xff]
        %v6682 = vld [vmem:[%s1216 + $0x258] sm:$0xff]
        %v6683 = vld [vmem:[%s1216 + $0x260] sm:$0xff]
        %v6684 = vld [vmem:[%s1216 + $0x268] sm:$0xff]
        %v6685 = vld [vmem:[%s1216 + $0x270] sm:$0xff]
        %v6686 = vld [vmem:[%s1216 + $0x278] sm:$0xff]
        %v6687 = vld [vmem:[%s1216 + $0x280] sm:$0xff]
        %v6688 = vld [vmem:[%s1216 + $0x288] sm:$0xff]
        %v6689 = vld [vmem:[%s1216 + $0x290] sm:$0xff]
        %v6690 = vld [vmem:[%s1216 + $0x298] sm:$0xff]
        %v6691 = vld [vmem:[%s1216 + $0x2a0] sm:$0xff]
        %v6692 = vld [vmem:[%s1216 + $0x2a8] sm:$0xff]
        %v6693 = vld [vmem:[%s1216 + $0x2b0] sm:$0xff]
        %v6694 = vld [vmem:[%s1216 + $0x2b8] sm:$0xff]
        %v6695 = vld [vmem:[%s1216 + $0x2c0] sm:$0xff]
        %v6696 = vld [vmem:[%s1216 + $0x2c8] sm:$0xff]
        %v6697 = vld [vmem:[%s1216 + $0x2d0] sm:$0xff]
        %v6698 = vld [vmem:[%s1216 + $0x2d8] sm:$0xff]
        %v6699 = vld [vmem:[%s1216 + $0x2e0] sm:$0xff]
        %v6700 = vld [vmem:[%s1216 + $0x2e8] sm:$0xff]
        %v6701 = vld [vmem:[%s1216 + $0x2f0] sm:$0xff]
        %v6702 = vld [vmem:[%s1216 + $0x2f8] sm:$0xff]
        %v6703 = vld [vmem:[%s1216 + $0x300] sm:$0xff]
        %v6704 = vld [vmem:[%s1216 + $0x308] sm:$0xff]
        %v6705 = vld [vmem:[%s1216 + $0x310] sm:$0xff]
        %v6706 = vld [vmem:[%s1216 + $0x318] sm:$0xff]
        %v6707 = vld [vmem:[%s1216 + $0x320] sm:$0xff]
        %v6708 = vld [vmem:[%s1216 + $0x328] sm:$0xff]
        %v6709 = vld [vmem:[%s1216 + $0x330] sm:$0xff]
        %v6710 = vld [vmem:[%s1216 + $0x338] sm:$0xff]
        %v6711 = vld [vmem:[%s1216 + $0x340] sm:$0xff]
        %v6712 = vld [vmem:[%s1216 + $0x348] sm:$0xff]
        %v6713 = vld [vmem:[%s1216 + $0x350] sm:$0xff]
        %v6714 = vld [vmem:[%s1216 + $0x358] sm:$0xff]
        %v6715 = vld [vmem:[%s1216 + $0x360] sm:$0xff]
        %v6716 = vld [vmem:[%s1216 + $0x368] sm:$0xff]
        %v6717 = vld [vmem:[%s1216 + $0x370] sm:$0xff]
        %v6718 = vld [vmem:[%s1216 + $0x378] sm:$0xff]
        %v6719 = vld [vmem:[%s1216 + $0x380] sm:$0xff]
        %v6720 = vld [vmem:[%s1216 + $0x388] sm:$0xff]
        %v6721 = vld [vmem:[%s1216 + $0x390] sm:$0xff]
        %v6722 = vld [vmem:[%s1216 + $0x398] sm:$0xff]
        %v6723 = vld [vmem:[%s1216 + $0x3a0] sm:$0xff]
        %v6724 = vld [vmem:[%s1216 + $0x3a8] sm:$0xff]
        %v6725 = vld [vmem:[%s1216 + $0x3b0] sm:$0xff]
        %v6726 = vld [vmem:[%s1216 + $0x3b8] sm:$0xff]
        %v6727 = vld [vmem:[%s1216 + $0x3c0] sm:$0xff]
        %v6728 = vld [vmem:[%s1216 + $0x3c8] sm:$0xff]
        %v6729 = vld [vmem:[%s1216 + $0x3d0] sm:$0xff]
        %v6730 = vld [vmem:[%s1216 + $0x3d8] sm:$0xff]
        %v6731 = vld [vmem:[%s1216 + $0x3e0] sm:$0xff]
        %v6732 = vld [vmem:[%s1216 + $0x3e8] sm:$0xff]
        %v6733 = vld [vmem:[%s1216 + $0x3f0] sm:$0xff]
        %v6734 = vld [vmem:[%s1216 + $0x3f8] sm:$0xff]
        %v6735 = vmax.f32 %v6479, %v6607
        %v6736 = vmax.f32 %v6480, %v6608
        %v6737 = vmax.f32 %v6481, %v6609
        %v6738 = vmax.f32 %v6482, %v6610
        %v6739 = vmax.f32 %v6483, %v6611
        %v6740 = vmax.f32 %v6484, %v6612
        %v6741 = vmax.f32 %v6485, %v6613
        %v6742 = vmax.f32 %v6486, %v6614
        %v6743 = vmax.f32 %v6487, %v6615
        %v6744 = vmax.f32 %v6488, %v6616
        %v6745 = vmax.f32 %v6489, %v6617
        %v6746 = vmax.f32 %v6490, %v6618
        %v6747 = vmax.f32 %v6491, %v6619
        %v6748 = vmax.f32 %v6492, %v6620
        %v6749 = vmax.f32 %v6493, %v6621
        %v6750 = vmax.f32 %v6494, %v6622
        %v6751 = vmax.f32 %v6495, %v6623
        %v6752 = vmax.f32 %v6496, %v6624
        %v6753 = vmax.f32 %v6497, %v6625
        %v6754 = vmax.f32 %v6498, %v6626
        %v6755 = vmax.f32 %v6499, %v6627
        %v6756 = vmax.f32 %v6500, %v6628
        %v6757 = vmax.f32 %v6501, %v6629
        %v6758 = vmax.f32 %v6502, %v6630
        %v6759 = vmax.f32 %v6503, %v6631
        %v6760 = vmax.f32 %v6504, %v6632
        %v6761 = vmax.f32 %v6505, %v6633
        %v6762 = vmax.f32 %v6506, %v6634
        %v6763 = vmax.f32 %v6507, %v6635
        %v6764 = vmax.f32 %v6508, %v6636
        %v6765 = vmax.f32 %v6509, %v6637
        %v6766 = vmax.f32 %v6510, %v6638
        %v6767 = vmax.f32 %v6511, %v6639
        %v6768 = vmax.f32 %v6512, %v6640
        %v6769 = vmax.f32 %v6513, %v6641
        %v6770 = vmax.f32 %v6514, %v6642
        %v6771 = vmax.f32 %v6515, %v6643
        %v6772 = vmax.f32 %v6516, %v6644
        %v6773 = vmax.f32 %v6517, %v6645
        %v6774 = vmax.f32 %v6518, %v6646
        %v6775 = vmax.f32 %v6519, %v6647
        %v6776 = vmax.f32 %v6520, %v6648
        %v6777 = vmax.f32 %v6521, %v6649
        %v6778 = vmax.f32 %v6522, %v6650
        %v6779 = vmax.f32 %v6523, %v6651
        %v6780 = vmax.f32 %v6524, %v6652
        %v6781 = vmax.f32 %v6525, %v6653
        %v6782 = vmax.f32 %v6526, %v6654
        %v6783 = vmax.f32 %v6527, %v6655
        %v6784 = vmax.f32 %v6528, %v6656
        %v6785 = vmax.f32 %v6529, %v6657
        %v6786 = vmax.f32 %v6530, %v6658
        %v6787 = vmax.f32 %v6531, %v6659
        %v6788 = vmax.f32 %v6532, %v6660
        %v6789 = vmax.f32 %v6533, %v6661
        %v6790 = vmax.f32 %v6534, %v6662
        %v6791 = vmax.f32 %v6535, %v6663
        %v6792 = vmax.f32 %v6536, %v6664
        %v6793 = vmax.f32 %v6537, %v6665
        %v6794 = vmax.f32 %v6538, %v6666
        %v6795 = vmax.f32 %v6539, %v6667
        %v6796 = vmax.f32 %v6540, %v6668
        %v6797 = vmax.f32 %v6541, %v6669
        %v6798 = vmax.f32 %v6542, %v6670
        %v6799 = vmax.f32 %v6543, %v6671
        %v6800 = vmax.f32 %v6544, %v6672
        %v6801 = vmax.f32 %v6545, %v6673
        %v6802 = vmax.f32 %v6546, %v6674
        %v6803 = vmax.f32 %v6547, %v6675
        %v6804 = vmax.f32 %v6548, %v6676
        %v6805 = vmax.f32 %v6549, %v6677
        %v6806 = vmax.f32 %v6550, %v6678
        %v6807 = vmax.f32 %v6551, %v6679
        %v6808 = vmax.f32 %v6552, %v6680
        %v6809 = vmax.f32 %v6553, %v6681
        %v6810 = vmax.f32 %v6554, %v6682
        %v6811 = vmax.f32 %v6555, %v6683
        %v6812 = vmax.f32 %v6556, %v6684
        %v6813 = vmax.f32 %v6557, %v6685
        %v6814 = vmax.f32 %v6558, %v6686
        %v6815 = vmax.f32 %v6559, %v6687
        %v6816 = vmax.f32 %v6560, %v6688
        %v6817 = vmax.f32 %v6561, %v6689
        %v6818 = vmax.f32 %v6562, %v6690
        %v6819 = vmax.f32 %v6563, %v6691
        %v6820 = vmax.f32 %v6564, %v6692
        %v6821 = vmax.f32 %v6565, %v6693
        %v6822 = vmax.f32 %v6566, %v6694
        %v6823 = vmax.f32 %v6567, %v6695
        %v6824 = vmax.f32 %v6568, %v6696
        %v6825 = vmax.f32 %v6569, %v6697
        %v6826 = vmax.f32 %v6570, %v6698
        %v6827 = vmax.f32 %v6571, %v6699
        %v6828 = vmax.f32 %v6572, %v6700
        %v6829 = vmax.f32 %v6573, %v6701
        %v6830 = vmax.f32 %v6574, %v6702
        %v6831 = vmax.f32 %v6575, %v6703
        %v6832 = vmax.f32 %v6576, %v6704
        %v6833 = vmax.f32 %v6577, %v6705
        %v6834 = vmax.f32 %v6578, %v6706
        %v6835 = vmax.f32 %v6579, %v6707
        %v6836 = vmax.f32 %v6580, %v6708
        %v6837 = vmax.f32 %v6581, %v6709
        %v6838 = vmax.f32 %v6582, %v6710
        %v6839 = vmax.f32 %v6583, %v6711
        %v6840 = vmax.f32 %v6584, %v6712
        %v6841 = vmax.f32 %v6585, %v6713
        %v6842 = vmax.f32 %v6586, %v6714
        %v6843 = vmax.f32 %v6587, %v6715
        %v6844 = vmax.f32 %v6588, %v6716
        %v6845 = vmax.f32 %v6589, %v6717
        %v6846 = vmax.f32 %v6590, %v6718
        %v6847 = vmax.f32 %v6591, %v6719
        %v6848 = vmax.f32 %v6592, %v6720
        %v6849 = vmax.f32 %v6593, %v6721
        %v6850 = vmax.f32 %v6594, %v6722
        %v6851 = vmax.f32 %v6595, %v6723
        %v6852 = vmax.f32 %v6596, %v6724
        %v6853 = vmax.f32 %v6597, %v6725
        %v6854 = vmax.f32 %v6598, %v6726
        %v6855 = vmax.f32 %v6599, %v6727
        %v6856 = vmax.f32 %v6600, %v6728
        %v6857 = vmax.f32 %v6601, %v6729
        %v6858 = vmax.f32 %v6602, %v6730
        %v6859 = vmax.f32 %v6603, %v6731
        %v6860 = vmax.f32 %v6604, %v6732
        %v6861 = vmax.f32 %v6605, %v6733
        %v6862 = vmax.f32 %v6606, %v6734
        %v6863 = vld [vmem:[%s2117] sm:$0xff]
        %v6864 = vld [vmem:[%s2117 + $0x8] sm:$0xff]
        %v6865 = vld [vmem:[%s2117 + $0x10] sm:$0xff]
        %v6866 = vld [vmem:[%s2117 + $0x18] sm:$0xff]
        %v6867 = vld [vmem:[%s2117 + $0x20] sm:$0xff]
        %v6868 = vld [vmem:[%s2117 + $0x28] sm:$0xff]
        %v6869 = vld [vmem:[%s2117 + $0x30] sm:$0xff]
        %v6870 = vld [vmem:[%s2117 + $0x38] sm:$0xff]
        %v6871 = vld [vmem:[%s2117 + $0x40] sm:$0xff]
        %v6872 = vld [vmem:[%s2117 + $0x48] sm:$0xff]
        %v6873 = vld [vmem:[%s2117 + $0x50] sm:$0xff]
        %v6874 = vld [vmem:[%s2117 + $0x58] sm:$0xff]
        %v6875 = vld [vmem:[%s2117 + $0x60] sm:$0xff]
        %v6876 = vld [vmem:[%s2117 + $0x68] sm:$0xff]
        %v6877 = vld [vmem:[%s2117 + $0x70] sm:$0xff]
        %v6878 = vld [vmem:[%s2117 + $0x78] sm:$0xff]
        %v6879 = vld [vmem:[%s2117 + $0x80] sm:$0xff]
        %v6880 = vld [vmem:[%s2117 + $0x88] sm:$0xff]
        %v6881 = vld [vmem:[%s2117 + $0x90] sm:$0xff]
        %v6882 = vld [vmem:[%s2117 + $0x98] sm:$0xff]
        %v6883 = vld [vmem:[%s2117 + $0xa0] sm:$0xff]
        %v6884 = vld [vmem:[%s2117 + $0xa8] sm:$0xff]
        %v6885 = vld [vmem:[%s2117 + $0xb0] sm:$0xff]
        %v6886 = vld [vmem:[%s2117 + $0xb8] sm:$0xff]
        %v6887 = vld [vmem:[%s2117 + $0xc0] sm:$0xff]
        %v6888 = vld [vmem:[%s2117 + $0xc8] sm:$0xff]
        %v6889 = vld [vmem:[%s2117 + $0xd0] sm:$0xff]
        %v6890 = vld [vmem:[%s2117 + $0xd8] sm:$0xff]
        %v6891 = vld [vmem:[%s2117 + $0xe0] sm:$0xff]
        %v6892 = vld [vmem:[%s2117 + $0xe8] sm:$0xff]
        %v6893 = vld [vmem:[%s2117 + $0xf0] sm:$0xff]
        %v6894 = vld [vmem:[%s2117 + $0xf8] sm:$0xff]
        %v6895 = vld [vmem:[%s2117 + $0x100] sm:$0xff]
        %v6896 = vld [vmem:[%s2117 + $0x108] sm:$0xff]
        %v6897 = vld [vmem:[%s2117 + $0x110] sm:$0xff]
        %v6898 = vld [vmem:[%s2117 + $0x118] sm:$0xff]
        %v6899 = vld [vmem:[%s2117 + $0x120] sm:$0xff]
        %v6900 = vld [vmem:[%s2117 + $0x128] sm:$0xff]
        %v6901 = vld [vmem:[%s2117 + $0x130] sm:$0xff]
        %v6902 = vld [vmem:[%s2117 + $0x138] sm:$0xff]
        %v6903 = vld [vmem:[%s2117 + $0x140] sm:$0xff]
        %v6904 = vld [vmem:[%s2117 + $0x148] sm:$0xff]
        %v6905 = vld [vmem:[%s2117 + $0x150] sm:$0xff]
        %v6906 = vld [vmem:[%s2117 + $0x158] sm:$0xff]
        %v6907 = vld [vmem:[%s2117 + $0x160] sm:$0xff]
        %v6908 = vld [vmem:[%s2117 + $0x168] sm:$0xff]
        %v6909 = vld [vmem:[%s2117 + $0x170] sm:$0xff]
        %v6910 = vld [vmem:[%s2117 + $0x178] sm:$0xff]
        %v6911 = vld [vmem:[%s2117 + $0x180] sm:$0xff]
        %v6912 = vld [vmem:[%s2117 + $0x188] sm:$0xff]
        %v6913 = vld [vmem:[%s2117 + $0x190] sm:$0xff]
        %v6914 = vld [vmem:[%s2117 + $0x198] sm:$0xff]
        %v6915 = vld [vmem:[%s2117 + $0x1a0] sm:$0xff]
        %v6916 = vld [vmem:[%s2117 + $0x1a8] sm:$0xff]
        %v6917 = vld [vmem:[%s2117 + $0x1b0] sm:$0xff]
        %v6918 = vld [vmem:[%s2117 + $0x1b8] sm:$0xff]
        %v6919 = vld [vmem:[%s2117 + $0x1c0] sm:$0xff]
        %v6920 = vld [vmem:[%s2117 + $0x1c8] sm:$0xff]
        %v6921 = vld [vmem:[%s2117 + $0x1d0] sm:$0xff]
        %v6922 = vld [vmem:[%s2117 + $0x1d8] sm:$0xff]
        %v6923 = vld [vmem:[%s2117 + $0x1e0] sm:$0xff]
        %v6924 = vld [vmem:[%s2117 + $0x1e8] sm:$0xff]
        %v6925 = vld [vmem:[%s2117 + $0x1f0] sm:$0xff]
        %v6926 = vld [vmem:[%s2117 + $0x1f8] sm:$0xff]
        %v6927 = vld [vmem:[%s2117 + $0x200] sm:$0xff]
        %v6928 = vld [vmem:[%s2117 + $0x208] sm:$0xff]
        %v6929 = vld [vmem:[%s2117 + $0x210] sm:$0xff]
        %v6930 = vld [vmem:[%s2117 + $0x218] sm:$0xff]
        %v6931 = vld [vmem:[%s2117 + $0x220] sm:$0xff]
        %v6932 = vld [vmem:[%s2117 + $0x228] sm:$0xff]
        %v6933 = vld [vmem:[%s2117 + $0x230] sm:$0xff]
        %v6934 = vld [vmem:[%s2117 + $0x238] sm:$0xff]
        %v6935 = vld [vmem:[%s2117 + $0x240] sm:$0xff]
        %v6936 = vld [vmem:[%s2117 + $0x248] sm:$0xff]
        %v6937 = vld [vmem:[%s2117 + $0x250] sm:$0xff]
        %v6938 = vld [vmem:[%s2117 + $0x258] sm:$0xff]
        %v6939 = vld [vmem:[%s2117 + $0x260] sm:$0xff]
        %v6940 = vld [vmem:[%s2117 + $0x268] sm:$0xff]
        %v6941 = vld [vmem:[%s2117 + $0x270] sm:$0xff]
        %v6942 = vld [vmem:[%s2117 + $0x278] sm:$0xff]
        %v6943 = vld [vmem:[%s2117 + $0x280] sm:$0xff]
        %v6944 = vld [vmem:[%s2117 + $0x288] sm:$0xff]
        %v6945 = vld [vmem:[%s2117 + $0x290] sm:$0xff]
        %v6946 = vld [vmem:[%s2117 + $0x298] sm:$0xff]
        %v6947 = vld [vmem:[%s2117 + $0x2a0] sm:$0xff]
        %v6948 = vld [vmem:[%s2117 + $0x2a8] sm:$0xff]
        %v6949 = vld [vmem:[%s2117 + $0x2b0] sm:$0xff]
        %v6950 = vld [vmem:[%s2117 + $0x2b8] sm:$0xff]
        %v6951 = vld [vmem:[%s2117 + $0x2c0] sm:$0xff]
        %v6952 = vld [vmem:[%s2117 + $0x2c8] sm:$0xff]
        %v6953 = vld [vmem:[%s2117 + $0x2d0] sm:$0xff]
        %v6954 = vld [vmem:[%s2117 + $0x2d8] sm:$0xff]
        %v6955 = vld [vmem:[%s2117 + $0x2e0] sm:$0xff]
        %v6956 = vld [vmem:[%s2117 + $0x2e8] sm:$0xff]
        %v6957 = vld [vmem:[%s2117 + $0x2f0] sm:$0xff]
        %v6958 = vld [vmem:[%s2117 + $0x2f8] sm:$0xff]
        %v6959 = vld [vmem:[%s2117 + $0x300] sm:$0xff]
        %v6960 = vld [vmem:[%s2117 + $0x308] sm:$0xff]
        %v6961 = vld [vmem:[%s2117 + $0x310] sm:$0xff]
        %v6962 = vld [vmem:[%s2117 + $0x318] sm:$0xff]
        %v6963 = vld [vmem:[%s2117 + $0x320] sm:$0xff]
        %v6964 = vld [vmem:[%s2117 + $0x328] sm:$0xff]
        %v6965 = vld [vmem:[%s2117 + $0x330] sm:$0xff]
        %v6966 = vld [vmem:[%s2117 + $0x338] sm:$0xff]
        %v6967 = vld [vmem:[%s2117 + $0x340] sm:$0xff]
        %v6968 = vld [vmem:[%s2117 + $0x348] sm:$0xff]
        %v6969 = vld [vmem:[%s2117 + $0x350] sm:$0xff]
        %v6970 = vld [vmem:[%s2117 + $0x358] sm:$0xff]
        %v6971 = vld [vmem:[%s2117 + $0x360] sm:$0xff]
        %v6972 = vld [vmem:[%s2117 + $0x368] sm:$0xff]
        %v6973 = vld [vmem:[%s2117 + $0x370] sm:$0xff]
        %v6974 = vld [vmem:[%s2117 + $0x378] sm:$0xff]
        %v6975 = vld [vmem:[%s2117 + $0x380] sm:$0xff]
        %v6976 = vld [vmem:[%s2117 + $0x388] sm:$0xff]
        %v6977 = vld [vmem:[%s2117 + $0x390] sm:$0xff]
        %v6978 = vld [vmem:[%s2117 + $0x398] sm:$0xff]
        %v6979 = vld [vmem:[%s2117 + $0x3a0] sm:$0xff]
        %v6980 = vld [vmem:[%s2117 + $0x3a8] sm:$0xff]
        %v6981 = vld [vmem:[%s2117 + $0x3b0] sm:$0xff]
        %v6982 = vld [vmem:[%s2117 + $0x3b8] sm:$0xff]
        %v6983 = vld [vmem:[%s2117 + $0x3c0] sm:$0xff]
        %v6984 = vld [vmem:[%s2117 + $0x3c8] sm:$0xff]
        %v6985 = vld [vmem:[%s2117 + $0x3d0] sm:$0xff]
        %v6986 = vld [vmem:[%s2117 + $0x3d8] sm:$0xff]
        %v6987 = vld [vmem:[%s2117 + $0x3e0] sm:$0xff]
        %v6988 = vld [vmem:[%s2117 + $0x3e8] sm:$0xff]
        %v6989 = vld [vmem:[%s2117 + $0x3f0] sm:$0xff]
        %v6990 = vld [vmem:[%s2117 + $0x3f8] sm:$0xff]
        %v6991 = vmax.f32 %v6735, %v6863
        %v6992 = vmax.f32 %v6736, %v6864
        %v6993 = vmax.f32 %v6737, %v6865
        %v6994 = vmax.f32 %v6738, %v6866
        %v6995 = vmax.f32 %v6739, %v6867
        %v6996 = vmax.f32 %v6740, %v6868
        %v6997 = vmax.f32 %v6741, %v6869
        %v6998 = vmax.f32 %v6742, %v6870
        %v6999 = vmax.f32 %v6743, %v6871
        %v7000 = vmax.f32 %v6744, %v6872
        %v7001 = vmax.f32 %v6745, %v6873
        %v7002 = vmax.f32 %v6746, %v6874
        %v7003 = vmax.f32 %v6747, %v6875
        %v7004 = vmax.f32 %v6748, %v6876
        %v7005 = vmax.f32 %v6749, %v6877
        %v7006 = vmax.f32 %v6750, %v6878
        %v7007 = vmax.f32 %v6751, %v6879
        %v7008 = vmax.f32 %v6752, %v6880
        %v7009 = vmax.f32 %v6753, %v6881
        %v7010 = vmax.f32 %v6754, %v6882
        %v7011 = vmax.f32 %v6755, %v6883
        %v7012 = vmax.f32 %v6756, %v6884
        %v7013 = vmax.f32 %v6757, %v6885
        %v7014 = vmax.f32 %v6758, %v6886
        %v7015 = vmax.f32 %v6759, %v6887
        %v7016 = vmax.f32 %v6760, %v6888
        %v7017 = vmax.f32 %v6761, %v6889
        %v7018 = vmax.f32 %v6762, %v6890
        %v7019 = vmax.f32 %v6763, %v6891
        %v7020 = vmax.f32 %v6764, %v6892
        %v7021 = vmax.f32 %v6765, %v6893
        %v7022 = vmax.f32 %v6766, %v6894
        %v7023 = vmax.f32 %v6767, %v6895
        %v7024 = vmax.f32 %v6768, %v6896
        %v7025 = vmax.f32 %v6769, %v6897
        %v7026 = vmax.f32 %v6770, %v6898
        %v7027 = vmax.f32 %v6771, %v6899
        %v7028 = vmax.f32 %v6772, %v6900
        %v7029 = vmax.f32 %v6773, %v6901
        %v7030 = vmax.f32 %v6774, %v6902
        %v7031 = vmax.f32 %v6775, %v6903
        %v7032 = vmax.f32 %v6776, %v6904
        %v7033 = vmax.f32 %v6777, %v6905
        %v7034 = vmax.f32 %v6778, %v6906
        %v7035 = vmax.f32 %v6779, %v6907
        %v7036 = vmax.f32 %v6780, %v6908
        %v7037 = vmax.f32 %v6781, %v6909
        %v7038 = vmax.f32 %v6782, %v6910
        %v7039 = vmax.f32 %v6783, %v6911
        %v7040 = vmax.f32 %v6784, %v6912
        %v7041 = vmax.f32 %v6785, %v6913
        %v7042 = vmax.f32 %v6786, %v6914
        %v7043 = vmax.f32 %v6787, %v6915
        %v7044 = vmax.f32 %v6788, %v6916
        %v7045 = vmax.f32 %v6789, %v6917
        %v7046 = vmax.f32 %v6790, %v6918
        %v7047 = vmax.f32 %v6791, %v6919
        %v7048 = vmax.f32 %v6792, %v6920
        %v7049 = vmax.f32 %v6793, %v6921
        %v7050 = vmax.f32 %v6794, %v6922
        %v7051 = vmax.f32 %v6795, %v6923
        %v7052 = vmax.f32 %v6796, %v6924
        %v7053 = vmax.f32 %v6797, %v6925
        %v7054 = vmax.f32 %v6798, %v6926
        %v7055 = vmax.f32 %v6799, %v6927
        %v7056 = vmax.f32 %v6800, %v6928
        %v7057 = vmax.f32 %v6801, %v6929
        %v7058 = vmax.f32 %v6802, %v6930
        %v7059 = vmax.f32 %v6803, %v6931
        %v7060 = vmax.f32 %v6804, %v6932
        %v7061 = vmax.f32 %v6805, %v6933
        %v7062 = vmax.f32 %v6806, %v6934
        %v7063 = vmax.f32 %v6807, %v6935
        %v7064 = vmax.f32 %v6808, %v6936
        %v7065 = vmax.f32 %v6809, %v6937
        %v7066 = vmax.f32 %v6810, %v6938
        %v7067 = vmax.f32 %v6811, %v6939
        %v7068 = vmax.f32 %v6812, %v6940
        %v7069 = vmax.f32 %v6813, %v6941
        %v7070 = vmax.f32 %v6814, %v6942
        %v7071 = vmax.f32 %v6815, %v6943
        %v7072 = vmax.f32 %v6816, %v6944
        %v7073 = vmax.f32 %v6817, %v6945
        %v7074 = vmax.f32 %v6818, %v6946
        %v7075 = vmax.f32 %v6819, %v6947
        %v7076 = vmax.f32 %v6820, %v6948
        %v7077 = vmax.f32 %v6821, %v6949
        %v7078 = vmax.f32 %v6822, %v6950
        %v7079 = vmax.f32 %v6823, %v6951
        %v7080 = vmax.f32 %v6824, %v6952
        %v7081 = vmax.f32 %v6825, %v6953
        %v7082 = vmax.f32 %v6826, %v6954
        %v7083 = vmax.f32 %v6827, %v6955
        %v7084 = vmax.f32 %v6828, %v6956
        %v7085 = vmax.f32 %v6829, %v6957
        %v7086 = vmax.f32 %v6830, %v6958
        %v7087 = vmax.f32 %v6831, %v6959
        %v7088 = vmax.f32 %v6832, %v6960
        %v7089 = vmax.f32 %v6833, %v6961
        %v7090 = vmax.f32 %v6834, %v6962
        %v7091 = vmax.f32 %v6835, %v6963
        %v7092 = vmax.f32 %v6836, %v6964
        %v7093 = vmax.f32 %v6837, %v6965
        %v7094 = vmax.f32 %v6838, %v6966
        %v7095 = vmax.f32 %v6839, %v6967
        %v7096 = vmax.f32 %v6840, %v6968
        %v7097 = vmax.f32 %v6841, %v6969
        %v7098 = vmax.f32 %v6842, %v6970
        %v7099 = vmax.f32 %v6843, %v6971
        %v7100 = vmax.f32 %v6844, %v6972
        %v7101 = vmax.f32 %v6845, %v6973
        %v7102 = vmax.f32 %v6846, %v6974
        %v7103 = vmax.f32 %v6847, %v6975
        %v7104 = vmax.f32 %v6848, %v6976
        %v7105 = vmax.f32 %v6849, %v6977
        %v7106 = vmax.f32 %v6850, %v6978
        %v7107 = vmax.f32 %v6851, %v6979
        %v7108 = vmax.f32 %v6852, %v6980
        %v7109 = vmax.f32 %v6853, %v6981
        %v7110 = vmax.f32 %v6854, %v6982
        %v7111 = vmax.f32 %v6855, %v6983
        %v7112 = vmax.f32 %v6856, %v6984
        %v7113 = vmax.f32 %v6857, %v6985
        %v7114 = vmax.f32 %v6858, %v6986
        %v7115 = vmax.f32 %v6859, %v6987
        %v7116 = vmax.f32 %v6860, %v6988
        %v7117 = vmax.f32 %v6861, %v6989
        %v7118 = vmax.f32 %v6862, %v6990
        %v7119 = vld [vmem:[%s2374] sm:$0xff]
        %v7120 = vld [vmem:[%s2374 + $0x8] sm:$0xff]
        %v7121 = vld [vmem:[%s2374 + $0x10] sm:$0xff]
        %v7122 = vld [vmem:[%s2374 + $0x18] sm:$0xff]
        %v7123 = vld [vmem:[%s2374 + $0x20] sm:$0xff]
        %v7124 = vld [vmem:[%s2374 + $0x28] sm:$0xff]
        %v7125 = vld [vmem:[%s2374 + $0x30] sm:$0xff]
        %v7126 = vld [vmem:[%s2374 + $0x38] sm:$0xff]
        %v7127 = vld [vmem:[%s2374 + $0x40] sm:$0xff]
        %v7128 = vld [vmem:[%s2374 + $0x48] sm:$0xff]
        %v7129 = vld [vmem:[%s2374 + $0x50] sm:$0xff]
        %v7130 = vld [vmem:[%s2374 + $0x58] sm:$0xff]
        %v7131 = vld [vmem:[%s2374 + $0x60] sm:$0xff]
        %v7132 = vld [vmem:[%s2374 + $0x68] sm:$0xff]
        %v7133 = vld [vmem:[%s2374 + $0x70] sm:$0xff]
        %v7134 = vld [vmem:[%s2374 + $0x78] sm:$0xff]
        %v7135 = vld [vmem:[%s2374 + $0x80] sm:$0xff]
        %v7136 = vld [vmem:[%s2374 + $0x88] sm:$0xff]
        %v7137 = vld [vmem:[%s2374 + $0x90] sm:$0xff]
        %v7138 = vld [vmem:[%s2374 + $0x98] sm:$0xff]
        %v7139 = vld [vmem:[%s2374 + $0xa0] sm:$0xff]
        %v7140 = vld [vmem:[%s2374 + $0xa8] sm:$0xff]
        %v7141 = vld [vmem:[%s2374 + $0xb0] sm:$0xff]
        %v7142 = vld [vmem:[%s2374 + $0xb8] sm:$0xff]
        %v7143 = vld [vmem:[%s2374 + $0xc0] sm:$0xff]
        %v7144 = vld [vmem:[%s2374 + $0xc8] sm:$0xff]
        %v7145 = vld [vmem:[%s2374 + $0xd0] sm:$0xff]
        %v7146 = vld [vmem:[%s2374 + $0xd8] sm:$0xff]
        %v7147 = vld [vmem:[%s2374 + $0xe0] sm:$0xff]
        %v7148 = vld [vmem:[%s2374 + $0xe8] sm:$0xff]
        %v7149 = vld [vmem:[%s2374 + $0xf0] sm:$0xff]
        %v7150 = vld [vmem:[%s2374 + $0xf8] sm:$0xff]
        %v7151 = vld [vmem:[%s2374 + $0x100] sm:$0xff]
        %v7152 = vld [vmem:[%s2374 + $0x108] sm:$0xff]
        %v7153 = vld [vmem:[%s2374 + $0x110] sm:$0xff]
        %v7154 = vld [vmem:[%s2374 + $0x118] sm:$0xff]
        %v7155 = vld [vmem:[%s2374 + $0x120] sm:$0xff]
        %v7156 = vld [vmem:[%s2374 + $0x128] sm:$0xff]
        %v7157 = vld [vmem:[%s2374 + $0x130] sm:$0xff]
        %v7158 = vld [vmem:[%s2374 + $0x138] sm:$0xff]
        %v7159 = vld [vmem:[%s2374 + $0x140] sm:$0xff]
        %v7160 = vld [vmem:[%s2374 + $0x148] sm:$0xff]
        %v7161 = vld [vmem:[%s2374 + $0x150] sm:$0xff]
        %v7162 = vld [vmem:[%s2374 + $0x158] sm:$0xff]
        %v7163 = vld [vmem:[%s2374 + $0x160] sm:$0xff]
        %v7164 = vld [vmem:[%s2374 + $0x168] sm:$0xff]
        %v7165 = vld [vmem:[%s2374 + $0x170] sm:$0xff]
        %v7166 = vld [vmem:[%s2374 + $0x178] sm:$0xff]
        %v7167 = vld [vmem:[%s2374 + $0x180] sm:$0xff]
        %v7168 = vld [vmem:[%s2374 + $0x188] sm:$0xff]
        %v7169 = vld [vmem:[%s2374 + $0x190] sm:$0xff]
        %v7170 = vld [vmem:[%s2374 + $0x198] sm:$0xff]
        %v7171 = vld [vmem:[%s2374 + $0x1a0] sm:$0xff]
        %v7172 = vld [vmem:[%s2374 + $0x1a8] sm:$0xff]
        %v7173 = vld [vmem:[%s2374 + $0x1b0] sm:$0xff]
        %v7174 = vld [vmem:[%s2374 + $0x1b8] sm:$0xff]
        %v7175 = vld [vmem:[%s2374 + $0x1c0] sm:$0xff]
        %v7176 = vld [vmem:[%s2374 + $0x1c8] sm:$0xff]
        %v7177 = vld [vmem:[%s2374 + $0x1d0] sm:$0xff]
        %v7178 = vld [vmem:[%s2374 + $0x1d8] sm:$0xff]
        %v7179 = vld [vmem:[%s2374 + $0x1e0] sm:$0xff]
        %v7180 = vld [vmem:[%s2374 + $0x1e8] sm:$0xff]
        %v7181 = vld [vmem:[%s2374 + $0x1f0] sm:$0xff]
        %v7182 = vld [vmem:[%s2374 + $0x1f8] sm:$0xff]
        %v7183 = vld [vmem:[%s2374 + $0x200] sm:$0xff]
        %v7184 = vld [vmem:[%s2374 + $0x208] sm:$0xff]
        %v7185 = vld [vmem:[%s2374 + $0x210] sm:$0xff]
        %v7186 = vld [vmem:[%s2374 + $0x218] sm:$0xff]
        %v7187 = vld [vmem:[%s2374 + $0x220] sm:$0xff]
        %v7188 = vld [vmem:[%s2374 + $0x228] sm:$0xff]
        %v7189 = vld [vmem:[%s2374 + $0x230] sm:$0xff]
        %v7190 = vld [vmem:[%s2374 + $0x238] sm:$0xff]
        %v7191 = vld [vmem:[%s2374 + $0x240] sm:$0xff]
        %v7192 = vld [vmem:[%s2374 + $0x248] sm:$0xff]
        %v7193 = vld [vmem:[%s2374 + $0x250] sm:$0xff]
        %v7194 = vld [vmem:[%s2374 + $0x258] sm:$0xff]
        %v7195 = vld [vmem:[%s2374 + $0x260] sm:$0xff]
        %v7196 = vld [vmem:[%s2374 + $0x268] sm:$0xff]
        %v7197 = vld [vmem:[%s2374 + $0x270] sm:$0xff]
        %v7198 = vld [vmem:[%s2374 + $0x278] sm:$0xff]
        %v7199 = vld [vmem:[%s2374 + $0x280] sm:$0xff]
        %v7200 = vld [vmem:[%s2374 + $0x288] sm:$0xff]
        %v7201 = vld [vmem:[%s2374 + $0x290] sm:$0xff]
        %v7202 = vld [vmem:[%s2374 + $0x298] sm:$0xff]
        %v7203 = vld [vmem:[%s2374 + $0x2a0] sm:$0xff]
        %v7204 = vld [vmem:[%s2374 + $0x2a8] sm:$0xff]
        %v7205 = vld [vmem:[%s2374 + $0x2b0] sm:$0xff]
        %v7206 = vld [vmem:[%s2374 + $0x2b8] sm:$0xff]
        %v7207 = vld [vmem:[%s2374 + $0x2c0] sm:$0xff]
        %v7208 = vld [vmem:[%s2374 + $0x2c8] sm:$0xff]
        %v7209 = vld [vmem:[%s2374 + $0x2d0] sm:$0xff]
        %v7210 = vld [vmem:[%s2374 + $0x2d8] sm:$0xff]
        %v7211 = vld [vmem:[%s2374 + $0x2e0] sm:$0xff]
        %v7212 = vld [vmem:[%s2374 + $0x2e8] sm:$0xff]
        %v7213 = vld [vmem:[%s2374 + $0x2f0] sm:$0xff]
        %v7214 = vld [vmem:[%s2374 + $0x2f8] sm:$0xff]
        %v7215 = vld [vmem:[%s2374 + $0x300] sm:$0xff]
        %v7216 = vld [vmem:[%s2374 + $0x308] sm:$0xff]
        %v7217 = vld [vmem:[%s2374 + $0x310] sm:$0xff]
        %v7218 = vld [vmem:[%s2374 + $0x318] sm:$0xff]
        %v7219 = vld [vmem:[%s2374 + $0x320] sm:$0xff]
        %v7220 = vld [vmem:[%s2374 + $0x328] sm:$0xff]
        %v7221 = vld [vmem:[%s2374 + $0x330] sm:$0xff]
        %v7222 = vld [vmem:[%s2374 + $0x338] sm:$0xff]
        %v7223 = vld [vmem:[%s2374 + $0x340] sm:$0xff]
        %v7224 = vld [vmem:[%s2374 + $0x348] sm:$0xff]
        %v7225 = vld [vmem:[%s2374 + $0x350] sm:$0xff]
        %v7226 = vld [vmem:[%s2374 + $0x358] sm:$0xff]
        %v7227 = vld [vmem:[%s2374 + $0x360] sm:$0xff]
        %v7228 = vld [vmem:[%s2374 + $0x368] sm:$0xff]
        %v7229 = vld [vmem:[%s2374 + $0x370] sm:$0xff]
        %v7230 = vld [vmem:[%s2374 + $0x378] sm:$0xff]
        %v7231 = vld [vmem:[%s2374 + $0x380] sm:$0xff]
        %v7232 = vld [vmem:[%s2374 + $0x388] sm:$0xff]
        %v7233 = vld [vmem:[%s2374 + $0x390] sm:$0xff]
        %v7234 = vld [vmem:[%s2374 + $0x398] sm:$0xff]
        %v7235 = vld [vmem:[%s2374 + $0x3a0] sm:$0xff]
        %v7236 = vld [vmem:[%s2374 + $0x3a8] sm:$0xff]
        %v7237 = vld [vmem:[%s2374 + $0x3b0] sm:$0xff]
        %v7238 = vld [vmem:[%s2374 + $0x3b8] sm:$0xff]
        %v7239 = vld [vmem:[%s2374 + $0x3c0] sm:$0xff]
        %v7240 = vld [vmem:[%s2374 + $0x3c8] sm:$0xff]
        %v7241 = vld [vmem:[%s2374 + $0x3d0] sm:$0xff]
        %v7242 = vld [vmem:[%s2374 + $0x3d8] sm:$0xff]
        %v7243 = vld [vmem:[%s2374 + $0x3e0] sm:$0xff]
        %v7244 = vld [vmem:[%s2374 + $0x3e8] sm:$0xff]
        %v7245 = vld [vmem:[%s2374 + $0x3f0] sm:$0xff]
        %v7246 = vld [vmem:[%s2374 + $0x3f8] sm:$0xff]
        %v7247 = vmax.f32 %v6991, %v7119
        %v7248 = vmax.f32 %v6992, %v7120
        %v7249 = vmax.f32 %v6993, %v7121
        %v7250 = vmax.f32 %v6994, %v7122
        %v7251 = vmax.f32 %v6995, %v7123
        %v7252 = vmax.f32 %v6996, %v7124
        %v7253 = vmax.f32 %v6997, %v7125
        %v7254 = vmax.f32 %v6998, %v7126
        %v7255 = vmax.f32 %v6999, %v7127
        %v7256 = vmax.f32 %v7000, %v7128
        %v7257 = vmax.f32 %v7001, %v7129
        %v7258 = vmax.f32 %v7002, %v7130
        %v7259 = vmax.f32 %v7003, %v7131
        %v7260 = vmax.f32 %v7004, %v7132
        %v7261 = vmax.f32 %v7005, %v7133
        %v7262 = vmax.f32 %v7006, %v7134
        %v7263 = vmax.f32 %v7007, %v7135
        %v7264 = vmax.f32 %v7008, %v7136
        %v7265 = vmax.f32 %v7009, %v7137
        %v7266 = vmax.f32 %v7010, %v7138
        %v7267 = vmax.f32 %v7011, %v7139
        %v7268 = vmax.f32 %v7012, %v7140
        %v7269 = vmax.f32 %v7013, %v7141
        %v7270 = vmax.f32 %v7014, %v7142
        %v7271 = vmax.f32 %v7015, %v7143
        %v7272 = vmax.f32 %v7016, %v7144
        %v7273 = vmax.f32 %v7017, %v7145
        %v7274 = vmax.f32 %v7018, %v7146
        %v7275 = vmax.f32 %v7019, %v7147
        %v7276 = vmax.f32 %v7020, %v7148
        %v7277 = vmax.f32 %v7021, %v7149
        %v7278 = vmax.f32 %v7022, %v7150
        %v7279 = vmax.f32 %v7023, %v7151
        %v7280 = vmax.f32 %v7024, %v7152
        %v7281 = vmax.f32 %v7025, %v7153
        %v7282 = vmax.f32 %v7026, %v7154
        %v7283 = vmax.f32 %v7027, %v7155
        %v7284 = vmax.f32 %v7028, %v7156
        %v7285 = vmax.f32 %v7029, %v7157
        %v7286 = vmax.f32 %v7030, %v7158
        %v7287 = vmax.f32 %v7031, %v7159
        %v7288 = vmax.f32 %v7032, %v7160
        %v7289 = vmax.f32 %v7033, %v7161
        %v7290 = vmax.f32 %v7034, %v7162
        %v7291 = vmax.f32 %v7035, %v7163
        %v7292 = vmax.f32 %v7036, %v7164
        %v7293 = vmax.f32 %v7037, %v7165
        %v7294 = vmax.f32 %v7038, %v7166
        %v7295 = vmax.f32 %v7039, %v7167
        %v7296 = vmax.f32 %v7040, %v7168
        %v7297 = vmax.f32 %v7041, %v7169
        %v7298 = vmax.f32 %v7042, %v7170
        %v7299 = vmax.f32 %v7043, %v7171
        %v7300 = vmax.f32 %v7044, %v7172
        %v7301 = vmax.f32 %v7045, %v7173
        %v7302 = vmax.f32 %v7046, %v7174
        %v7303 = vmax.f32 %v7047, %v7175
        %v7304 = vmax.f32 %v7048, %v7176
        %v7305 = vmax.f32 %v7049, %v7177
        %v7306 = vmax.f32 %v7050, %v7178
        %v7307 = vmax.f32 %v7051, %v7179
        %v7308 = vmax.f32 %v7052, %v7180
        %v7309 = vmax.f32 %v7053, %v7181
        %v7310 = vmax.f32 %v7054, %v7182
        %v7311 = vmax.f32 %v7055, %v7183
        %v7312 = vmax.f32 %v7056, %v7184
        %v7313 = vmax.f32 %v7057, %v7185
        %v7314 = vmax.f32 %v7058, %v7186
        %v7315 = vmax.f32 %v7059, %v7187
        %v7316 = vmax.f32 %v7060, %v7188
        %v7317 = vmax.f32 %v7061, %v7189
        %v7318 = vmax.f32 %v7062, %v7190
        %v7319 = vmax.f32 %v7063, %v7191
        %v7320 = vmax.f32 %v7064, %v7192
        %v7321 = vmax.f32 %v7065, %v7193
        %v7322 = vmax.f32 %v7066, %v7194
        %v7323 = vmax.f32 %v7067, %v7195
        %v7324 = vmax.f32 %v7068, %v7196
        %v7325 = vmax.f32 %v7069, %v7197
        %v7326 = vmax.f32 %v7070, %v7198
        %v7327 = vmax.f32 %v7071, %v7199
        %v7328 = vmax.f32 %v7072, %v7200
        %v7329 = vmax.f32 %v7073, %v7201
        %v7330 = vmax.f32 %v7074, %v7202
        %v7331 = vmax.f32 %v7075, %v7203
        %v7332 = vmax.f32 %v7076, %v7204
        %v7333 = vmax.f32 %v7077, %v7205
        %v7334 = vmax.f32 %v7078, %v7206
        %v7335 = vmax.f32 %v7079, %v7207
        %v7336 = vmax.f32 %v7080, %v7208
        %v7337 = vmax.f32 %v7081, %v7209
        %v7338 = vmax.f32 %v7082, %v7210
        %v7339 = vmax.f32 %v7083, %v7211
        %v7340 = vmax.f32 %v7084, %v7212
        %v7341 = vmax.f32 %v7085, %v7213
        %v7342 = vmax.f32 %v7086, %v7214
        %v7343 = vmax.f32 %v7087, %v7215
        %v7344 = vmax.f32 %v7088, %v7216
        %v7345 = vmax.f32 %v7089, %v7217
        %v7346 = vmax.f32 %v7090, %v7218
        %v7347 = vmax.f32 %v7091, %v7219
        %v7348 = vmax.f32 %v7092, %v7220
        %v7349 = vmax.f32 %v7093, %v7221
        %v7350 = vmax.f32 %v7094, %v7222
        %v7351 = vmax.f32 %v7095, %v7223
        %v7352 = vmax.f32 %v7096, %v7224
        %v7353 = vmax.f32 %v7097, %v7225
        %v7354 = vmax.f32 %v7098, %v7226
        %v7355 = vmax.f32 %v7099, %v7227
        %v7356 = vmax.f32 %v7100, %v7228
        %v7357 = vmax.f32 %v7101, %v7229
        %v7358 = vmax.f32 %v7102, %v7230
        %v7359 = vmax.f32 %v7103, %v7231
        %v7360 = vmax.f32 %v7104, %v7232
        %v7361 = vmax.f32 %v7105, %v7233
        %v7362 = vmax.f32 %v7106, %v7234
        %v7363 = vmax.f32 %v7107, %v7235
        %v7364 = vmax.f32 %v7108, %v7236
        %v7365 = vmax.f32 %v7109, %v7237
        %v7366 = vmax.f32 %v7110, %v7238
        %v7367 = vmax.f32 %v7111, %v7239
        %v7368 = vmax.f32 %v7112, %v7240
        %v7369 = vmax.f32 %v7113, %v7241
        %v7370 = vmax.f32 %v7114, %v7242
        %v7371 = vmax.f32 %v7115, %v7243
        %v7372 = vmax.f32 %v7116, %v7244
        %v7373 = vmax.f32 %v7117, %v7245
        %v7374 = vmax.f32 %v7118, %v7246
        %v7375 = vrot.slane %v7247, 7
        %v7376 = vrot.slane %v7251, 7
        %v7377 = vrot.slane %v7255, 7
        %v7378 = vrot.slane %v7259, 7
        %v7379 = vrot.slane %v7263, 7
        %v7380 = vrot.slane %v7267, 7
        %v7381 = vrot.slane %v7271, 7
        %v7382 = vrot.slane %v7275, 7
        %v7383 = vrot.slane %v7279, 7
        %v7384 = vrot.slane %v7283, 7
        %v7385 = vrot.slane %v7287, 7
        %v7386 = vrot.slane %v7291, 7
        %v7387 = vrot.slane %v7295, 7
        %v7388 = vrot.slane %v7299, 7
        %v7389 = vrot.slane %v7303, 7
        %v7390 = vrot.slane %v7307, 7
        %v7391 = vrot.slane %v7311, 7
        %v7392 = vrot.slane %v7315, 7
        %v7393 = vrot.slane %v7319, 7
        %v7394 = vrot.slane %v7323, 7
        %v7395 = vrot.slane %v7327, 7
        %v7396 = vrot.slane %v7331, 7
        %v7397 = vrot.slane %v7335, 7
        %v7398 = vrot.slane %v7339, 7
        %v7399 = vrot.slane %v7343, 7
        %v7400 = vrot.slane %v7347, 7
        %v7401 = vrot.slane %v7351, 7
        %v7402 = vrot.slane %v7355, 7
        %v7403 = vrot.slane %v7359, 7
        %v7404 = vrot.slane %v7363, 7
        %v7405 = vrot.slane %v7367, 7
        %v7406 = vrot.slane %v7371, 7
        %v7407 = vrot.slane %v7248, 7
        %v7408 = vrot.slane %v7252, 7
        %v7409 = vrot.slane %v7256, 7
        %v7410 = vrot.slane %v7260, 7
        %v7411 = vrot.slane %v7264, 7
        %v7412 = vrot.slane %v7268, 7
        %v7413 = vrot.slane %v7272, 7
        %v7414 = vrot.slane %v7276, 7
        %v7415 = vrot.slane %v7280, 7
        %v7416 = vrot.slane %v7284, 7
        %v7417 = vrot.slane %v7288, 7
        %v7418 = vrot.slane %v7292, 7
        %v7419 = vrot.slane %v7296, 7
        %v7420 = vrot.slane %v7300, 7
        %v7421 = vrot.slane %v7304, 7
        %v7422 = vrot.slane %v7308, 7
        %v7423 = vrot.slane %v7312, 7
        %v7424 = vrot.slane %v7316, 7
        %v7425 = vrot.slane %v7320, 7
        %v7426 = vrot.slane %v7324, 7
        %v7427 = vrot.slane %v7328, 7
        %v7428 = vrot.slane %v7332, 7
        %v7429 = vrot.slane %v7336, 7
        %v7430 = vrot.slane %v7340, 7
        %v7431 = vrot.slane %v7344, 7
        %v7432 = vrot.slane %v7348, 7
        %v7433 = vrot.slane %v7352, 7
        %v7434 = vrot.slane %v7356, 7
        %v7435 = vrot.slane %v7360, 7
        %v7436 = vrot.slane %v7364, 7
        %v7437 = vrot.slane %v7368, 7
        %v7438 = vrot.slane %v7372, 7
        %v7439 = vrot.slane %v7249, 7
        %v7440 = vrot.slane %v7253, 7
        %v7441 = vrot.slane %v7257, 7
        %v7442 = vrot.slane %v7261, 7
        %v7443 = vrot.slane %v7265, 7
        %v7444 = vrot.slane %v7269, 7
        %v7445 = vrot.slane %v7273, 7
        %v7446 = vrot.slane %v7277, 7
        %v7447 = vrot.slane %v7281, 7
        %v7448 = vrot.slane %v7285, 7
        %v7449 = vrot.slane %v7289, 7
        %v7450 = vrot.slane %v7293, 7
        %v7451 = vrot.slane %v7297, 7
        %v7452 = vrot.slane %v7301, 7
        %v7453 = vrot.slane %v7305, 7
        %v7454 = vrot.slane %v7309, 7
        %v7455 = vrot.slane %v7313, 7
        %v7456 = vrot.slane %v7317, 7
        %v7457 = vrot.slane %v7321, 7
        %v7458 = vrot.slane %v7325, 7
        %v7459 = vrot.slane %v7329, 7
        %v7460 = vrot.slane %v7333, 7
        %v7461 = vrot.slane %v7337, 7
        %v7462 = vrot.slane %v7341, 7
        %v7463 = vrot.slane %v7345, 7
        %v7464 = vrot.slane %v7349, 7
        %v7465 = vrot.slane %v7353, 7
        %v7466 = vrot.slane %v7357, 7
        %v7467 = vrot.slane %v7361, 7
        %v7468 = vrot.slane %v7365, 7
        %v7469 = vrot.slane %v7369, 7
        %v7470 = vrot.slane %v7373, 7
        %v7471 = vsel %vm2729, %v7407, %v7439
        %v7472 = vsel %vm2729, %v7408, %v7440
        %v7473 = vsel %vm2729, %v7409, %v7441
        %v7474 = vsel %vm2729, %v7410, %v7442
        %v7475 = vsel %vm2729, %v7411, %v7443
        %v7476 = vsel %vm2729, %v7412, %v7444
        %v7477 = vsel %vm2729, %v7413, %v7445
        %v7478 = vsel %vm2729, %v7414, %v7446
        %v7479 = vsel %vm2729, %v7415, %v7447
        %v7480 = vsel %vm2729, %v7416, %v7448
        %v7481 = vsel %vm2729, %v7417, %v7449
        %v7482 = vsel %vm2729, %v7418, %v7450
        %v7483 = vsel %vm2729, %v7419, %v7451
        %v7484 = vsel %vm2729, %v7420, %v7452
        %v7485 = vsel %vm2729, %v7421, %v7453
        %v7486 = vsel %vm2729, %v7422, %v7454
        %v7487 = vsel %vm2729, %v7423, %v7455
        %v7488 = vsel %vm2729, %v7424, %v7456
        %v7489 = vsel %vm2729, %v7425, %v7457
        %v7490 = vsel %vm2729, %v7426, %v7458
        %v7491 = vsel %vm2729, %v7427, %v7459
        %v7492 = vsel %vm2729, %v7428, %v7460
        %v7493 = vsel %vm2729, %v7429, %v7461
        %v7494 = vsel %vm2729, %v7430, %v7462
        %v7495 = vsel %vm2729, %v7431, %v7463
        %v7496 = vsel %vm2729, %v7432, %v7464
        %v7497 = vsel %vm2729, %v7433, %v7465
        %v7498 = vsel %vm2729, %v7434, %v7466
        %v7499 = vsel %vm2729, %v7435, %v7467
        %v7500 = vsel %vm2729, %v7436, %v7468
        %v7501 = vsel %vm2729, %v7437, %v7469
        %v7502 = vsel %vm2729, %v7438, %v7470
        %v7503 = vsel %vm2729, %v7375, %v7407
        %v7504 = vsel %vm2729, %v7376, %v7408
        %v7505 = vsel %vm2729, %v7377, %v7409
        %v7506 = vsel %vm2729, %v7378, %v7410
        %v7507 = vsel %vm2729, %v7379, %v7411
        %v7508 = vsel %vm2729, %v7380, %v7412
        %v7509 = vsel %vm2729, %v7381, %v7413
        %v7510 = vsel %vm2729, %v7382, %v7414
        %v7511 = vsel %vm2729, %v7383, %v7415
        %v7512 = vsel %vm2729, %v7384, %v7416
        %v7513 = vsel %vm2729, %v7385, %v7417
        %v7514 = vsel %vm2729, %v7386, %v7418
        %v7515 = vsel %vm2729, %v7387, %v7419
        %v7516 = vsel %vm2729, %v7388, %v7420
        %v7517 = vsel %vm2729, %v7389, %v7421
        %v7518 = vsel %vm2729, %v7390, %v7422
        %v7519 = vsel %vm2729, %v7391, %v7423
        %v7520 = vsel %vm2729, %v7392, %v7424
        %v7521 = vsel %vm2729, %v7393, %v7425
        %v7522 = vsel %vm2729, %v7394, %v7426
        %v7523 = vsel %vm2729, %v7395, %v7427
        %v7524 = vsel %vm2729, %v7396, %v7428
        %v7525 = vsel %vm2729, %v7397, %v7429
        %v7526 = vsel %vm2729, %v7398, %v7430
        %v7527 = vsel %vm2729, %v7399, %v7431
        %v7528 = vsel %vm2729, %v7400, %v7432
        %v7529 = vsel %vm2729, %v7401, %v7433
        %v7530 = vsel %vm2729, %v7402, %v7434
        %v7531 = vsel %vm2729, %v7403, %v7435
        %v7532 = vsel %vm2729, %v7404, %v7436
        %v7533 = vsel %vm2729, %v7405, %v7437
        %v7534 = vsel %vm2729, %v7406, %v7438
        %v7535 = vmax.f32 %v7248, %v7503
        %v7536 = vmax.f32 %v7249, %v7471
        %v7537 = vmax.f32 %v7252, %v7504
        %v7538 = vmax.f32 %v7253, %v7472
        %v7539 = vmax.f32 %v7256, %v7505
        %v7540 = vmax.f32 %v7257, %v7473
        %v7541 = vmax.f32 %v7260, %v7506
        %v7542 = vmax.f32 %v7261, %v7474
        %v7543 = vmax.f32 %v7264, %v7507
        %v7544 = vmax.f32 %v7265, %v7475
        %v7545 = vmax.f32 %v7268, %v7508
        %v7546 = vmax.f32 %v7269, %v7476
        %v7547 = vmax.f32 %v7272, %v7509
        %v7548 = vmax.f32 %v7273, %v7477
        %v7549 = vmax.f32 %v7276, %v7510
        %v7550 = vmax.f32 %v7277, %v7478
        %v7551 = vmax.f32 %v7280, %v7511
        %v7552 = vmax.f32 %v7281, %v7479
        %v7553 = vmax.f32 %v7284, %v7512
        %v7554 = vmax.f32 %v7285, %v7480
        %v7555 = vmax.f32 %v7288, %v7513
        %v7556 = vmax.f32 %v7289, %v7481
        %v7557 = vmax.f32 %v7292, %v7514
        %v7558 = vmax.f32 %v7293, %v7482
        %v7559 = vmax.f32 %v7296, %v7515
        %v7560 = vmax.f32 %v7297, %v7483
        %v7561 = vmax.f32 %v7300, %v7516
        %v7562 = vmax.f32 %v7301, %v7484
        %v7563 = vmax.f32 %v7304, %v7517
        %v7564 = vmax.f32 %v7305, %v7485
        %v7565 = vmax.f32 %v7308, %v7518
        %v7566 = vmax.f32 %v7309, %v7486
        %v7567 = vmax.f32 %v7312, %v7519
        %v7568 = vmax.f32 %v7313, %v7487
        %v7569 = vmax.f32 %v7316, %v7520
        %v7570 = vmax.f32 %v7317, %v7488
        %v7571 = vmax.f32 %v7320, %v7521
        %v7572 = vmax.f32 %v7321, %v7489
        %v7573 = vmax.f32 %v7324, %v7522
        %v7574 = vmax.f32 %v7325, %v7490
        %v7575 = vmax.f32 %v7328, %v7523
        %v7576 = vmax.f32 %v7329, %v7491
        %v7577 = vmax.f32 %v7332, %v7524
        %v7578 = vmax.f32 %v7333, %v7492
        %v7579 = vmax.f32 %v7336, %v7525
        %v7580 = vmax.f32 %v7337, %v7493
        %v7581 = vmax.f32 %v7340, %v7526
        %v7582 = vmax.f32 %v7341, %v7494
        %v7583 = vmax.f32 %v7344, %v7527
        %v7584 = vmax.f32 %v7345, %v7495
        %v7585 = vmax.f32 %v7348, %v7528
        %v7586 = vmax.f32 %v7349, %v7496
        %v7587 = vmax.f32 %v7352, %v7529
        %v7588 = vmax.f32 %v7353, %v7497
        %v7589 = vmax.f32 %v7356, %v7530
        %v7590 = vmax.f32 %v7357, %v7498
        %v7591 = vmax.f32 %v7360, %v7531
        %v7592 = vmax.f32 %v7361, %v7499
        %v7593 = vmax.f32 %v7364, %v7532
        %v7594 = vmax.f32 %v7365, %v7500
        %v7595 = vmax.f32 %v7368, %v7533
        %v7596 = vmax.f32 %v7369, %v7501
        %v7597 = vmax.f32 %v7372, %v7534
        %v7598 = vmax.f32 %v7373, %v7502
        %v7599 = vrot.slane %v7248, 1
        %v7600 = vrot.slane %v7252, 1
        %v7601 = vrot.slane %v7256, 1
        %v7602 = vrot.slane %v7260, 1
        %v7603 = vrot.slane %v7264, 1
        %v7604 = vrot.slane %v7268, 1
        %v7605 = vrot.slane %v7272, 1
        %v7606 = vrot.slane %v7276, 1
        %v7607 = vrot.slane %v7280, 1
        %v7608 = vrot.slane %v7284, 1
        %v7609 = vrot.slane %v7288, 1
        %v7610 = vrot.slane %v7292, 1
        %v7611 = vrot.slane %v7296, 1
        %v7612 = vrot.slane %v7300, 1
        %v7613 = vrot.slane %v7304, 1
        %v7614 = vrot.slane %v7308, 1
        %v7615 = vrot.slane %v7312, 1
        %v7616 = vrot.slane %v7316, 1
        %v7617 = vrot.slane %v7320, 1
        %v7618 = vrot.slane %v7324, 1
        %v7619 = vrot.slane %v7328, 1
        %v7620 = vrot.slane %v7332, 1
        %v7621 = vrot.slane %v7336, 1
        %v7622 = vrot.slane %v7340, 1
        %v7623 = vrot.slane %v7344, 1
        %v7624 = vrot.slane %v7348, 1
        %v7625 = vrot.slane %v7352, 1
        %v7626 = vrot.slane %v7356, 1
        %v7627 = vrot.slane %v7360, 1
        %v7628 = vrot.slane %v7364, 1
        %v7629 = vrot.slane %v7368, 1
        %v7630 = vrot.slane %v7372, 1
        %v7631 = vrot.slane %v7249, 1
        %v7632 = vrot.slane %v7253, 1
        %v7633 = vrot.slane %v7257, 1
        %v7634 = vrot.slane %v7261, 1
        %v7635 = vrot.slane %v7265, 1
        %v7636 = vrot.slane %v7269, 1
        %v7637 = vrot.slane %v7273, 1
        %v7638 = vrot.slane %v7277, 1
        %v7639 = vrot.slane %v7281, 1
        %v7640 = vrot.slane %v7285, 1
        %v7641 = vrot.slane %v7289, 1
        %v7642 = vrot.slane %v7293, 1
        %v7643 = vrot.slane %v7297, 1
        %v7644 = vrot.slane %v7301, 1
        %v7645 = vrot.slane %v7305, 1
        %v7646 = vrot.slane %v7309, 1
        %v7647 = vrot.slane %v7313, 1
        %v7648 = vrot.slane %v7317, 1
        %v7649 = vrot.slane %v7321, 1
        %v7650 = vrot.slane %v7325, 1
        %v7651 = vrot.slane %v7329, 1
        %v7652 = vrot.slane %v7333, 1
        %v7653 = vrot.slane %v7337, 1
        %v7654 = vrot.slane %v7341, 1
        %v7655 = vrot.slane %v7345, 1
        %v7656 = vrot.slane %v7349, 1
        %v7657 = vrot.slane %v7353, 1
        %v7658 = vrot.slane %v7357, 1
        %v7659 = vrot.slane %v7361, 1
        %v7660 = vrot.slane %v7365, 1
        %v7661 = vrot.slane %v7369, 1
        %v7662 = vrot.slane %v7373, 1
        %v7663 = vrot.slane %v7250, 1
        %v7664 = vrot.slane %v7254, 1
        %v7665 = vrot.slane %v7258, 1
        %v7666 = vrot.slane %v7262, 1
        %v7667 = vrot.slane %v7266, 1
        %v7668 = vrot.slane %v7270, 1
        %v7669 = vrot.slane %v7274, 1
        %v7670 = vrot.slane %v7278, 1
        %v7671 = vrot.slane %v7282, 1
        %v7672 = vrot.slane %v7286, 1
        %v7673 = vrot.slane %v7290, 1
        %v7674 = vrot.slane %v7294, 1
        %v7675 = vrot.slane %v7298, 1
        %v7676 = vrot.slane %v7302, 1
        %v7677 = vrot.slane %v7306, 1
        %v7678 = vrot.slane %v7310, 1
        %v7679 = vrot.slane %v7314, 1
        %v7680 = vrot.slane %v7318, 1
        %v7681 = vrot.slane %v7322, 1
        %v7682 = vrot.slane %v7326, 1
        %v7683 = vrot.slane %v7330, 1
        %v7684 = vrot.slane %v7334, 1
        %v7685 = vrot.slane %v7338, 1
        %v7686 = vrot.slane %v7342, 1
        %v7687 = vrot.slane %v7346, 1
        %v7688 = vrot.slane %v7350, 1
        %v7689 = vrot.slane %v7354, 1
        %v7690 = vrot.slane %v7358, 1
        %v7691 = vrot.slane %v7362, 1
        %v7692 = vrot.slane %v7366, 1
        %v7693 = vrot.slane %v7370, 1
        %v7694 = vrot.slane %v7374, 1
        %v7695 = vsel %vm2954, %v7631, %v7663
        %v7696 = vsel %vm2954, %v7632, %v7664
        %v7697 = vsel %vm2954, %v7633, %v7665
        %v7698 = vsel %vm2954, %v7634, %v7666
        %v7699 = vsel %vm2954, %v7635, %v7667
        %v7700 = vsel %vm2954, %v7636, %v7668
        %v7701 = vsel %vm2954, %v7637, %v7669
        %v7702 = vsel %vm2954, %v7638, %v7670
        %v7703 = vsel %vm2954, %v7639, %v7671
        %v7704 = vsel %vm2954, %v7640, %v7672
        %v7705 = vsel %vm2954, %v7641, %v7673
        %v7706 = vsel %vm2954, %v7642, %v7674
        %v7707 = vsel %vm2954, %v7643, %v7675
        %v7708 = vsel %vm2954, %v7644, %v7676
        %v7709 = vsel %vm2954, %v7645, %v7677
        %v7710 = vsel %vm2954, %v7646, %v7678
        %v7711 = vsel %vm2954, %v7647, %v7679
        %v7712 = vsel %vm2954, %v7648, %v7680
        %v7713 = vsel %vm2954, %v7649, %v7681
        %v7714 = vsel %vm2954, %v7650, %v7682
        %v7715 = vsel %vm2954, %v7651, %v7683
        %v7716 = vsel %vm2954, %v7652, %v7684
        %v7717 = vsel %vm2954, %v7653, %v7685
        %v7718 = vsel %vm2954, %v7654, %v7686
        %v7719 = vsel %vm2954, %v7655, %v7687
        %v7720 = vsel %vm2954, %v7656, %v7688
        %v7721 = vsel %vm2954, %v7657, %v7689
        %v7722 = vsel %vm2954, %v7658, %v7690
        %v7723 = vsel %vm2954, %v7659, %v7691
        %v7724 = vsel %vm2954, %v7660, %v7692
        %v7725 = vsel %vm2954, %v7661, %v7693
        %v7726 = vsel %vm2954, %v7662, %v7694
        %v7727 = vsel %vm2954, %v7599, %v7631
        %v7728 = vsel %vm2954, %v7600, %v7632
        %v7729 = vsel %vm2954, %v7601, %v7633
        %v7730 = vsel %vm2954, %v7602, %v7634
        %v7731 = vsel %vm2954, %v7603, %v7635
        %v7732 = vsel %vm2954, %v7604, %v7636
        %v7733 = vsel %vm2954, %v7605, %v7637
        %v7734 = vsel %vm2954, %v7606, %v7638
        %v7735 = vsel %vm2954, %v7607, %v7639
        %v7736 = vsel %vm2954, %v7608, %v7640
        %v7737 = vsel %vm2954, %v7609, %v7641
        %v7738 = vsel %vm2954, %v7610, %v7642
        %v7739 = vsel %vm2954, %v7611, %v7643
        %v7740 = vsel %vm2954, %v7612, %v7644
        %v7741 = vsel %vm2954, %v7613, %v7645
        %v7742 = vsel %vm2954, %v7614, %v7646
        %v7743 = vsel %vm2954, %v7615, %v7647
        %v7744 = vsel %vm2954, %v7616, %v7648
        %v7745 = vsel %vm2954, %v7617, %v7649
        %v7746 = vsel %vm2954, %v7618, %v7650
        %v7747 = vsel %vm2954, %v7619, %v7651
        %v7748 = vsel %vm2954, %v7620, %v7652
        %v7749 = vsel %vm2954, %v7621, %v7653
        %v7750 = vsel %vm2954, %v7622, %v7654
        %v7751 = vsel %vm2954, %v7623, %v7655
        %v7752 = vsel %vm2954, %v7624, %v7656
        %v7753 = vsel %vm2954, %v7625, %v7657
        %v7754 = vsel %vm2954, %v7626, %v7658
        %v7755 = vsel %vm2954, %v7627, %v7659
        %v7756 = vsel %vm2954, %v7628, %v7660
        %v7757 = vsel %vm2954, %v7629, %v7661
        %v7758 = vsel %vm2954, %v7630, %v7662
        %v7759 = vmax.f32 %v7535, %v7727
        %v7760 = vmax.f32 %v7536, %v7695
        %v7761 = vmax.f32 %v7537, %v7728
        %v7762 = vmax.f32 %v7538, %v7696
        %v7763 = vmax.f32 %v7539, %v7729
        %v7764 = vmax.f32 %v7540, %v7697
        %v7765 = vmax.f32 %v7541, %v7730
        %v7766 = vmax.f32 %v7542, %v7698
        %v7767 = vmax.f32 %v7543, %v7731
        %v7768 = vmax.f32 %v7544, %v7699
        %v7769 = vmax.f32 %v7545, %v7732
        %v7770 = vmax.f32 %v7546, %v7700
        %v7771 = vmax.f32 %v7547, %v7733
        %v7772 = vmax.f32 %v7548, %v7701
        %v7773 = vmax.f32 %v7549, %v7734
        %v7774 = vmax.f32 %v7550, %v7702
        %v7775 = vmax.f32 %v7551, %v7735
        %v7776 = vmax.f32 %v7552, %v7703
        %v7777 = vmax.f32 %v7553, %v7736
        %v7778 = vmax.f32 %v7554, %v7704
        %v7779 = vmax.f32 %v7555, %v7737
        %v7780 = vmax.f32 %v7556, %v7705
        %v7781 = vmax.f32 %v7557, %v7738
        %v7782 = vmax.f32 %v7558, %v7706
        %v7783 = vmax.f32 %v7559, %v7739
        %v7784 = vmax.f32 %v7560, %v7707
        %v7785 = vmax.f32 %v7561, %v7740
        %v7786 = vmax.f32 %v7562, %v7708
        %v7787 = vmax.f32 %v7563, %v7741
        %v7788 = vmax.f32 %v7564, %v7709
        %v7789 = vmax.f32 %v7565, %v7742
        %v7790 = vmax.f32 %v7566, %v7710
        %v7791 = vmax.f32 %v7567, %v7743
        %v7792 = vmax.f32 %v7568, %v7711
        %v7793 = vmax.f32 %v7569, %v7744
        %v7794 = vmax.f32 %v7570, %v7712
        %v7795 = vmax.f32 %v7571, %v7745
        %v7796 = vmax.f32 %v7572, %v7713
        %v7797 = vmax.f32 %v7573, %v7746
        %v7798 = vmax.f32 %v7574, %v7714
        %v7799 = vmax.f32 %v7575, %v7747
        %v7800 = vmax.f32 %v7576, %v7715
        %v7801 = vmax.f32 %v7577, %v7748
        %v7802 = vmax.f32 %v7578, %v7716
        %v7803 = vmax.f32 %v7579, %v7749
        %v7804 = vmax.f32 %v7580, %v7717
        %v7805 = vmax.f32 %v7581, %v7750
        %v7806 = vmax.f32 %v7582, %v7718
        %v7807 = vmax.f32 %v7583, %v7751
        %v7808 = vmax.f32 %v7584, %v7719
        %v7809 = vmax.f32 %v7585, %v7752
        %v7810 = vmax.f32 %v7586, %v7720
        %v7811 = vmax.f32 %v7587, %v7753
        %v7812 = vmax.f32 %v7588, %v7721
        %v7813 = vmax.f32 %v7589, %v7754
        %v7814 = vmax.f32 %v7590, %v7722
        %v7815 = vmax.f32 %v7591, %v7755
        %v7816 = vmax.f32 %v7592, %v7723
        %v7817 = vmax.f32 %v7593, %v7756
        %v7818 = vmax.f32 %v7594, %v7724
        %v7819 = vmax.f32 %v7595, %v7757
        %v7820 = vmax.f32 %v7596, %v7725
        %v7821 = vmax.f32 %v7597, %v7758
        %v7822 = vmax.f32 %v7598, %v7726
        %v7823 = vrot.slane %v7247, 6
        %v7824 = vrot.slane %v7251, 6
        %v7825 = vrot.slane %v7255, 6
        %v7826 = vrot.slane %v7259, 6
        %v7827 = vrot.slane %v7263, 6
        %v7828 = vrot.slane %v7267, 6
        %v7829 = vrot.slane %v7271, 6
        %v7830 = vrot.slane %v7275, 6
        %v7831 = vrot.slane %v7279, 6
        %v7832 = vrot.slane %v7283, 6
        %v7833 = vrot.slane %v7287, 6
        %v7834 = vrot.slane %v7291, 6
        %v7835 = vrot.slane %v7295, 6
        %v7836 = vrot.slane %v7299, 6
        %v7837 = vrot.slane %v7303, 6
        %v7838 = vrot.slane %v7307, 6
        %v7839 = vrot.slane %v7311, 6
        %v7840 = vrot.slane %v7315, 6
        %v7841 = vrot.slane %v7319, 6
        %v7842 = vrot.slane %v7323, 6
        %v7843 = vrot.slane %v7327, 6
        %v7844 = vrot.slane %v7331, 6
        %v7845 = vrot.slane %v7335, 6
        %v7846 = vrot.slane %v7339, 6
        %v7847 = vrot.slane %v7343, 6
        %v7848 = vrot.slane %v7347, 6
        %v7849 = vrot.slane %v7351, 6
        %v7850 = vrot.slane %v7355, 6
        %v7851 = vrot.slane %v7359, 6
        %v7852 = vrot.slane %v7363, 6
        %v7853 = vrot.slane %v7367, 6
        %v7854 = vrot.slane %v7371, 6
        %v7855 = vrot.slane %v7248, 6
        %v7856 = vrot.slane %v7252, 6
        %v7857 = vrot.slane %v7256, 6
        %v7858 = vrot.slane %v7260, 6
        %v7859 = vrot.slane %v7264, 6
        %v7860 = vrot.slane %v7268, 6
        %v7861 = vrot.slane %v7272, 6
        %v7862 = vrot.slane %v7276, 6
        %v7863 = vrot.slane %v7280, 6
        %v7864 = vrot.slane %v7284, 6
        %v7865 = vrot.slane %v7288, 6
        %v7866 = vrot.slane %v7292, 6
        %v7867 = vrot.slane %v7296, 6
        %v7868 = vrot.slane %v7300, 6
        %v7869 = vrot.slane %v7304, 6
        %v7870 = vrot.slane %v7308, 6
        %v7871 = vrot.slane %v7312, 6
        %v7872 = vrot.slane %v7316, 6
        %v7873 = vrot.slane %v7320, 6
        %v7874 = vrot.slane %v7324, 6
        %v7875 = vrot.slane %v7328, 6
        %v7876 = vrot.slane %v7332, 6
        %v7877 = vrot.slane %v7336, 6
        %v7878 = vrot.slane %v7340, 6
        %v7879 = vrot.slane %v7344, 6
        %v7880 = vrot.slane %v7348, 6
        %v7881 = vrot.slane %v7352, 6
        %v7882 = vrot.slane %v7356, 6
        %v7883 = vrot.slane %v7360, 6
        %v7884 = vrot.slane %v7364, 6
        %v7885 = vrot.slane %v7368, 6
        %v7886 = vrot.slane %v7372, 6
        %v7887 = vrot.slane %v7249, 6
        %v7888 = vrot.slane %v7253, 6
        %v7889 = vrot.slane %v7257, 6
        %v7890 = vrot.slane %v7261, 6
        %v7891 = vrot.slane %v7265, 6
        %v7892 = vrot.slane %v7269, 6
        %v7893 = vrot.slane %v7273, 6
        %v7894 = vrot.slane %v7277, 6
        %v7895 = vrot.slane %v7281, 6
        %v7896 = vrot.slane %v7285, 6
        %v7897 = vrot.slane %v7289, 6
        %v7898 = vrot.slane %v7293, 6
        %v7899 = vrot.slane %v7297, 6
        %v7900 = vrot.slane %v7301, 6
        %v7901 = vrot.slane %v7305, 6
        %v7902 = vrot.slane %v7309, 6
        %v7903 = vrot.slane %v7313, 6
        %v7904 = vrot.slane %v7317, 6
        %v7905 = vrot.slane %v7321, 6
        %v7906 = vrot.slane %v7325, 6
        %v7907 = vrot.slane %v7329, 6
        %v7908 = vrot.slane %v7333, 6
        %v7909 = vrot.slane %v7337, 6
        %v7910 = vrot.slane %v7341, 6
        %v7911 = vrot.slane %v7345, 6
        %v7912 = vrot.slane %v7349, 6
        %v7913 = vrot.slane %v7353, 6
        %v7914 = vrot.slane %v7357, 6
        %v7915 = vrot.slane %v7361, 6
        %v7916 = vrot.slane %v7365, 6
        %v7917 = vrot.slane %v7369, 6
        %v7918 = vrot.slane %v7373, 6
        %v7919 = vsel %vm3179, %v7855, %v7887
        %v7920 = vsel %vm3179, %v7856, %v7888
        %v7921 = vsel %vm3179, %v7857, %v7889
        %v7922 = vsel %vm3179, %v7858, %v7890
        %v7923 = vsel %vm3179, %v7859, %v7891
        %v7924 = vsel %vm3179, %v7860, %v7892
        %v7925 = vsel %vm3179, %v7861, %v7893
        %v7926 = vsel %vm3179, %v7862, %v7894
        %v7927 = vsel %vm3179, %v7863, %v7895
        %v7928 = vsel %vm3179, %v7864, %v7896
        %v7929 = vsel %vm3179, %v7865, %v7897
        %v7930 = vsel %vm3179, %v7866, %v7898
        %v7931 = vsel %vm3179, %v7867, %v7899
        %v7932 = vsel %vm3179, %v7868, %v7900
        %v7933 = vsel %vm3179, %v7869, %v7901
        %v7934 = vsel %vm3179, %v7870, %v7902
        %v7935 = vsel %vm3179, %v7871, %v7903
        %v7936 = vsel %vm3179, %v7872, %v7904
        %v7937 = vsel %vm3179, %v7873, %v7905
        %v7938 = vsel %vm3179, %v7874, %v7906
        %v7939 = vsel %vm3179, %v7875, %v7907
        %v7940 = vsel %vm3179, %v7876, %v7908
        %v7941 = vsel %vm3179, %v7877, %v7909
        %v7942 = vsel %vm3179, %v7878, %v7910
        %v7943 = vsel %vm3179, %v7879, %v7911
        %v7944 = vsel %vm3179, %v7880, %v7912
        %v7945 = vsel %vm3179, %v7881, %v7913
        %v7946 = vsel %vm3179, %v7882, %v7914
        %v7947 = vsel %vm3179, %v7883, %v7915
        %v7948 = vsel %vm3179, %v7884, %v7916
        %v7949 = vsel %vm3179, %v7885, %v7917
        %v7950 = vsel %vm3179, %v7886, %v7918
        %v7951 = vsel %vm3179, %v7823, %v7855
        %v7952 = vsel %vm3179, %v7824, %v7856
        %v7953 = vsel %vm3179, %v7825, %v7857
        %v7954 = vsel %vm3179, %v7826, %v7858
        %v7955 = vsel %vm3179, %v7827, %v7859
        %v7956 = vsel %vm3179, %v7828, %v7860
        %v7957 = vsel %vm3179, %v7829, %v7861
        %v7958 = vsel %vm3179, %v7830, %v7862
        %v7959 = vsel %vm3179, %v7831, %v7863
        %v7960 = vsel %vm3179, %v7832, %v7864
        %v7961 = vsel %vm3179, %v7833, %v7865
        %v7962 = vsel %vm3179, %v7834, %v7866
        %v7963 = vsel %vm3179, %v7835, %v7867
        %v7964 = vsel %vm3179, %v7836, %v7868
        %v7965 = vsel %vm3179, %v7837, %v7869
        %v7966 = vsel %vm3179, %v7838, %v7870
        %v7967 = vsel %vm3179, %v7839, %v7871
        %v7968 = vsel %vm3179, %v7840, %v7872
        %v7969 = vsel %vm3179, %v7841, %v7873
        %v7970 = vsel %vm3179, %v7842, %v7874
        %v7971 = vsel %vm3179, %v7843, %v7875
        %v7972 = vsel %vm3179, %v7844, %v7876
        %v7973 = vsel %vm3179, %v7845, %v7877
        %v7974 = vsel %vm3179, %v7846, %v7878
        %v7975 = vsel %vm3179, %v7847, %v7879
        %v7976 = vsel %vm3179, %v7848, %v7880
        %v7977 = vsel %vm3179, %v7849, %v7881
        %v7978 = vsel %vm3179, %v7850, %v7882
        %v7979 = vsel %vm3179, %v7851, %v7883
        %v7980 = vsel %vm3179, %v7852, %v7884
        %v7981 = vsel %vm3179, %v7853, %v7885
        %v7982 = vsel %vm3179, %v7854, %v7886
        %v7983 = vmax.f32 %v7759, %v7951
        %v7984 = vmax.f32 %v7760, %v7919
        %v7985 = vmax.f32 %v7761, %v7952
        %v7986 = vmax.f32 %v7762, %v7920
        %v7987 = vmax.f32 %v7763, %v7953
        %v7988 = vmax.f32 %v7764, %v7921
        %v7989 = vmax.f32 %v7765, %v7954
        %v7990 = vmax.f32 %v7766, %v7922
        %v7991 = vmax.f32 %v7767, %v7955
        %v7992 = vmax.f32 %v7768, %v7923
        %v7993 = vmax.f32 %v7769, %v7956
        %v7994 = vmax.f32 %v7770, %v7924
        %v7995 = vmax.f32 %v7771, %v7957
        %v7996 = vmax.f32 %v7772, %v7925
        %v7997 = vmax.f32 %v7773, %v7958
        %v7998 = vmax.f32 %v7774, %v7926
        %v7999 = vmax.f32 %v7775, %v7959
        %v8000 = vmax.f32 %v7776, %v7927
        %v8001 = vmax.f32 %v7777, %v7960
        %v8002 = vmax.f32 %v7778, %v7928
        %v8003 = vmax.f32 %v7779, %v7961
        %v8004 = vmax.f32 %v7780, %v7929
        %v8005 = vmax.f32 %v7781, %v7962
        %v8006 = vmax.f32 %v7782, %v7930
        %v8007 = vmax.f32 %v7783, %v7963
        %v8008 = vmax.f32 %v7784, %v7931
        %v8009 = vmax.f32 %v7785, %v7964
        %v8010 = vmax.f32 %v7786, %v7932
        %v8011 = vmax.f32 %v7787, %v7965
        %v8012 = vmax.f32 %v7788, %v7933
        %v8013 = vmax.f32 %v7789, %v7966
        %v8014 = vmax.f32 %v7790, %v7934
        %v8015 = vmax.f32 %v7791, %v7967
        %v8016 = vmax.f32 %v7792, %v7935
        %v8017 = vmax.f32 %v7793, %v7968
        %v8018 = vmax.f32 %v7794, %v7936
        %v8019 = vmax.f32 %v7795, %v7969
        %v8020 = vmax.f32 %v7796, %v7937
        %v8021 = vmax.f32 %v7797, %v7970
        %v8022 = vmax.f32 %v7798, %v7938
        %v8023 = vmax.f32 %v7799, %v7971
        %v8024 = vmax.f32 %v7800, %v7939
        %v8025 = vmax.f32 %v7801, %v7972
        %v8026 = vmax.f32 %v7802, %v7940
        %v8027 = vmax.f32 %v7803, %v7973
        %v8028 = vmax.f32 %v7804, %v7941
        %v8029 = vmax.f32 %v7805, %v7974
        %v8030 = vmax.f32 %v7806, %v7942
        %v8031 = vmax.f32 %v7807, %v7975
        %v8032 = vmax.f32 %v7808, %v7943
        %v8033 = vmax.f32 %v7809, %v7976
        %v8034 = vmax.f32 %v7810, %v7944
        %v8035 = vmax.f32 %v7811, %v7977
        %v8036 = vmax.f32 %v7812, %v7945
        %v8037 = vmax.f32 %v7813, %v7978
        %v8038 = vmax.f32 %v7814, %v7946
        %v8039 = vmax.f32 %v7815, %v7979
        %v8040 = vmax.f32 %v7816, %v7947
        %v8041 = vmax.f32 %v7817, %v7980
        %v8042 = vmax.f32 %v7818, %v7948
        %v8043 = vmax.f32 %v7819, %v7981
        %v8044 = vmax.f32 %v7820, %v7949
        %v8045 = vmax.f32 %v7821, %v7982
        %v8046 = vmax.f32 %v7822, %v7950
        %v8047 = vrot.slane %v7248, 2
        %v8048 = vrot.slane %v7252, 2
        %v8049 = vrot.slane %v7256, 2
        %v8050 = vrot.slane %v7260, 2
        %v8051 = vrot.slane %v7264, 2
        %v8052 = vrot.slane %v7268, 2
        %v8053 = vrot.slane %v7272, 2
        %v8054 = vrot.slane %v7276, 2
        %v8055 = vrot.slane %v7280, 2
        %v8056 = vrot.slane %v7284, 2
        %v8057 = vrot.slane %v7288, 2
        %v8058 = vrot.slane %v7292, 2
        %v8059 = vrot.slane %v7296, 2
        %v8060 = vrot.slane %v7300, 2
        %v8061 = vrot.slane %v7304, 2
        %v8062 = vrot.slane %v7308, 2
        %v8063 = vrot.slane %v7312, 2
        %v8064 = vrot.slane %v7316, 2
        %v8065 = vrot.slane %v7320, 2
        %v8066 = vrot.slane %v7324, 2
        %v8067 = vrot.slane %v7328, 2
        %v8068 = vrot.slane %v7332, 2
        %v8069 = vrot.slane %v7336, 2
        %v8070 = vrot.slane %v7340, 2
        %v8071 = vrot.slane %v7344, 2
        %v8072 = vrot.slane %v7348, 2
        %v8073 = vrot.slane %v7352, 2
        %v8074 = vrot.slane %v7356, 2
        %v8075 = vrot.slane %v7360, 2
        %v8076 = vrot.slane %v7364, 2
        %v8077 = vrot.slane %v7368, 2
        %v8078 = vrot.slane %v7372, 2
        %v8079 = vrot.slane %v7249, 2
        %v8080 = vrot.slane %v7253, 2
        %v8081 = vrot.slane %v7257, 2
        %v8082 = vrot.slane %v7261, 2
        %v8083 = vrot.slane %v7265, 2
        %v8084 = vrot.slane %v7269, 2
        %v8085 = vrot.slane %v7273, 2
        %v8086 = vrot.slane %v7277, 2
        %v8087 = vrot.slane %v7281, 2
        %v8088 = vrot.slane %v7285, 2
        %v8089 = vrot.slane %v7289, 2
        %v8090 = vrot.slane %v7293, 2
        %v8091 = vrot.slane %v7297, 2
        %v8092 = vrot.slane %v7301, 2
        %v8093 = vrot.slane %v7305, 2
        %v8094 = vrot.slane %v7309, 2
        %v8095 = vrot.slane %v7313, 2
        %v8096 = vrot.slane %v7317, 2
        %v8097 = vrot.slane %v7321, 2
        %v8098 = vrot.slane %v7325, 2
        %v8099 = vrot.slane %v7329, 2
        %v8100 = vrot.slane %v7333, 2
        %v8101 = vrot.slane %v7337, 2
        %v8102 = vrot.slane %v7341, 2
        %v8103 = vrot.slane %v7345, 2
        %v8104 = vrot.slane %v7349, 2
        %v8105 = vrot.slane %v7353, 2
        %v8106 = vrot.slane %v7357, 2
        %v8107 = vrot.slane %v7361, 2
        %v8108 = vrot.slane %v7365, 2
        %v8109 = vrot.slane %v7369, 2
        %v8110 = vrot.slane %v7373, 2
        %v8111 = vrot.slane %v7250, 2
        %v8112 = vrot.slane %v7254, 2
        %v8113 = vrot.slane %v7258, 2
        %v8114 = vrot.slane %v7262, 2
        %v8115 = vrot.slane %v7266, 2
        %v8116 = vrot.slane %v7270, 2
        %v8117 = vrot.slane %v7274, 2
        %v8118 = vrot.slane %v7278, 2
        %v8119 = vrot.slane %v7282, 2
        %v8120 = vrot.slane %v7286, 2
        %v8121 = vrot.slane %v7290, 2
        %v8122 = vrot.slane %v7294, 2
        %v8123 = vrot.slane %v7298, 2
        %v8124 = vrot.slane %v7302, 2
        %v8125 = vrot.slane %v7306, 2
        %v8126 = vrot.slane %v7310, 2
        %v8127 = vrot.slane %v7314, 2
        %v8128 = vrot.slane %v7318, 2
        %v8129 = vrot.slane %v7322, 2
        %v8130 = vrot.slane %v7326, 2
        %v8131 = vrot.slane %v7330, 2
        %v8132 = vrot.slane %v7334, 2
        %v8133 = vrot.slane %v7338, 2
        %v8134 = vrot.slane %v7342, 2
        %v8135 = vrot.slane %v7346, 2
        %v8136 = vrot.slane %v7350, 2
        %v8137 = vrot.slane %v7354, 2
        %v8138 = vrot.slane %v7358, 2
        %v8139 = vrot.slane %v7362, 2
        %v8140 = vrot.slane %v7366, 2
        %v8141 = vrot.slane %v7370, 2
        %v8142 = vrot.slane %v7374, 2
        %v8143 = vsel %vm3404, %v8079, %v8111
        %v8144 = vsel %vm3404, %v8080, %v8112
        %v8145 = vsel %vm3404, %v8081, %v8113
        %v8146 = vsel %vm3404, %v8082, %v8114
        %v8147 = vsel %vm3404, %v8083, %v8115
        %v8148 = vsel %vm3404, %v8084, %v8116
        %v8149 = vsel %vm3404, %v8085, %v8117
        %v8150 = vsel %vm3404, %v8086, %v8118
        %v8151 = vsel %vm3404, %v8087, %v8119
        %v8152 = vsel %vm3404, %v8088, %v8120
        %v8153 = vsel %vm3404, %v8089, %v8121
        %v8154 = vsel %vm3404, %v8090, %v8122
        %v8155 = vsel %vm3404, %v8091, %v8123
        %v8156 = vsel %vm3404, %v8092, %v8124
        %v8157 = vsel %vm3404, %v8093, %v8125
        %v8158 = vsel %vm3404, %v8094, %v8126
        %v8159 = vsel %vm3404, %v8095, %v8127
        %v8160 = vsel %vm3404, %v8096, %v8128
        %v8161 = vsel %vm3404, %v8097, %v8129
        %v8162 = vsel %vm3404, %v8098, %v8130
        %v8163 = vsel %vm3404, %v8099, %v8131
        %v8164 = vsel %vm3404, %v8100, %v8132
        %v8165 = vsel %vm3404, %v8101, %v8133
        %v8166 = vsel %vm3404, %v8102, %v8134
        %v8167 = vsel %vm3404, %v8103, %v8135
        %v8168 = vsel %vm3404, %v8104, %v8136
        %v8169 = vsel %vm3404, %v8105, %v8137
        %v8170 = vsel %vm3404, %v8106, %v8138
        %v8171 = vsel %vm3404, %v8107, %v8139
        %v8172 = vsel %vm3404, %v8108, %v8140
        %v8173 = vsel %vm3404, %v8109, %v8141
        %v8174 = vsel %vm3404, %v8110, %v8142
        %v8175 = vsel %vm3404, %v8047, %v8079
        %v8176 = vsel %vm3404, %v8048, %v8080
        %v8177 = vsel %vm3404, %v8049, %v8081
        %v8178 = vsel %vm3404, %v8050, %v8082
        %v8179 = vsel %vm3404, %v8051, %v8083
        %v8180 = vsel %vm3404, %v8052, %v8084
        %v8181 = vsel %vm3404, %v8053, %v8085
        %v8182 = vsel %vm3404, %v8054, %v8086
        %v8183 = vsel %vm3404, %v8055, %v8087
        %v8184 = vsel %vm3404, %v8056, %v8088
        %v8185 = vsel %vm3404, %v8057, %v8089
        %v8186 = vsel %vm3404, %v8058, %v8090
        %v8187 = vsel %vm3404, %v8059, %v8091
        %v8188 = vsel %vm3404, %v8060, %v8092
        %v8189 = vsel %vm3404, %v8061, %v8093
        %v8190 = vsel %vm3404, %v8062, %v8094
        %v8191 = vsel %vm3404, %v8063, %v8095
        %v8192 = vsel %vm3404, %v8064, %v8096
        %v8193 = vsel %vm3404, %v8065, %v8097
        %v8194 = vsel %vm3404, %v8066, %v8098
        %v8195 = vsel %vm3404, %v8067, %v8099
        %v8196 = vsel %vm3404, %v8068, %v8100
        %v8197 = vsel %vm3404, %v8069, %v8101
        %v8198 = vsel %vm3404, %v8070, %v8102
        %v8199 = vsel %vm3404, %v8071, %v8103
        %v8200 = vsel %vm3404, %v8072, %v8104
        %v8201 = vsel %vm3404, %v8073, %v8105
        %v8202 = vsel %vm3404, %v8074, %v8106
        %v8203 = vsel %vm3404, %v8075, %v8107
        %v8204 = vsel %vm3404, %v8076, %v8108
        %v8205 = vsel %vm3404, %v8077, %v8109
        %v8206 = vsel %vm3404, %v8078, %v8110
        %v8207 = vmax.f32 %v7983, %v8175
        %v8208 = vmax.f32 %v7984, %v8143
        %v8209 = vmax.f32 %v7985, %v8176
        %v8210 = vmax.f32 %v7986, %v8144
        %v8211 = vmax.f32 %v7987, %v8177
        %v8212 = vmax.f32 %v7988, %v8145
        %v8213 = vmax.f32 %v7989, %v8178
        %v8214 = vmax.f32 %v7990, %v8146
        %v8215 = vmax.f32 %v7991, %v8179
        %v8216 = vmax.f32 %v7992, %v8147
        %v8217 = vmax.f32 %v7993, %v8180
        %v8218 = vmax.f32 %v7994, %v8148
        %v8219 = vmax.f32 %v7995, %v8181
        %v8220 = vmax.f32 %v7996, %v8149
        %v8221 = vmax.f32 %v7997, %v8182
        %v8222 = vmax.f32 %v7998, %v8150
        %v8223 = vmax.f32 %v7999, %v8183
        %v8224 = vmax.f32 %v8000, %v8151
        %v8225 = vmax.f32 %v8001, %v8184
        %v8226 = vmax.f32 %v8002, %v8152
        %v8227 = vmax.f32 %v8003, %v8185
        %v8228 = vmax.f32 %v8004, %v8153
        %v8229 = vmax.f32 %v8005, %v8186
        %v8230 = vmax.f32 %v8006, %v8154
        %v8231 = vmax.f32 %v8007, %v8187
        %v8232 = vmax.f32 %v8008, %v8155
        %v8233 = vmax.f32 %v8009, %v8188
        %v8234 = vmax.f32 %v8010, %v8156
        %v8235 = vmax.f32 %v8011, %v8189
        %v8236 = vmax.f32 %v8012, %v8157
        %v8237 = vmax.f32 %v8013, %v8190
        %v8238 = vmax.f32 %v8014, %v8158
        %v8239 = vmax.f32 %v8015, %v8191
        %v8240 = vmax.f32 %v8016, %v8159
        %v8241 = vmax.f32 %v8017, %v8192
        %v8242 = vmax.f32 %v8018, %v8160
        %v8243 = vmax.f32 %v8019, %v8193
        %v8244 = vmax.f32 %v8020, %v8161
        %v8245 = vmax.f32 %v8021, %v8194
        %v8246 = vmax.f32 %v8022, %v8162
        %v8247 = vmax.f32 %v8023, %v8195
        %v8248 = vmax.f32 %v8024, %v8163
        %v8249 = vmax.f32 %v8025, %v8196
        %v8250 = vmax.f32 %v8026, %v8164
        %v8251 = vmax.f32 %v8027, %v8197
        %v8252 = vmax.f32 %v8028, %v8165
        %v8253 = vmax.f32 %v8029, %v8198
        %v8254 = vmax.f32 %v8030, %v8166
        %v8255 = vmax.f32 %v8031, %v8199
        %v8256 = vmax.f32 %v8032, %v8167
        %v8257 = vmax.f32 %v8033, %v8200
        %v8258 = vmax.f32 %v8034, %v8168
        %v8259 = vmax.f32 %v8035, %v8201
        %v8260 = vmax.f32 %v8036, %v8169
        %v8261 = vmax.f32 %v8037, %v8202
        %v8262 = vmax.f32 %v8038, %v8170
        %v8263 = vmax.f32 %v8039, %v8203
        %v8264 = vmax.f32 %v8040, %v8171
        %v8265 = vmax.f32 %v8041, %v8204
        %v8266 = vmax.f32 %v8042, %v8172
        %v8267 = vmax.f32 %v8043, %v8205
        %v8268 = vmax.f32 %v8044, %v8173
        %v8269 = vmax.f32 %v8045, %v8206
        %v8270 = vmax.f32 %v8046, %v8174
        %8271 = vst.msk [vmem:[%s1216 + $0x8] sm:$0xff] %vm1198, %v8207
        %8272 = vst.msk [vmem:[%s1216 + $0x10] sm:$0xff] %vm1198, %v8208
        %8273 = vst.msk [vmem:[%s1216 + $0x28] sm:$0xff] %vm1198, %v8209
        %8274 = vst.msk [vmem:[%s1216 + $0x30] sm:$0xff] %vm1198, %v8210
        %8275 = vst.msk [vmem:[%s1216 + $0x48] sm:$0xff] %vm1198, %v8211
        %8276 = vst.msk [vmem:[%s1216 + $0x50] sm:$0xff] %vm1198, %v8212
        %8277 = vst.msk [vmem:[%s1216 + $0x68] sm:$0xff] %vm1198, %v8213
        %8278 = vst.msk [vmem:[%s1216 + $0x70] sm:$0xff] %vm1198, %v8214
        %8279 = vst.msk [vmem:[%s1216 + $0x88] sm:$0xff] %vm1198, %v8215
        %8280 = vst.msk [vmem:[%s1216 + $0x90] sm:$0xff] %vm1198, %v8216
        %8281 = vst.msk [vmem:[%s1216 + $0xa8] sm:$0xff] %vm1198, %v8217
        %8282 = vst.msk [vmem:[%s1216 + $0xb0] sm:$0xff] %vm1198, %v8218
        %8283 = vst.msk [vmem:[%s1216 + $0xc8] sm:$0xff] %vm1198, %v8219
        %8284 = vst.msk [vmem:[%s1216 + $0xd0] sm:$0xff] %vm1198, %v8220
        %8285 = vst.msk [vmem:[%s1216 + $0xe8] sm:$0xff] %vm1198, %v8221
        %8286 = vst.msk [vmem:[%s1216 + $0xf0] sm:$0xff] %vm1198, %v8222
        %8287 = vst.msk [vmem:[%s1216 + $0x108] sm:$0xff] %vm1198, %v8223
        %8288 = vst.msk [vmem:[%s1216 + $0x110] sm:$0xff] %vm1198, %v8224
        %8289 = vst.msk [vmem:[%s1216 + $0x128] sm:$0xff] %vm1198, %v8225
        %8290 = vst.msk [vmem:[%s1216 + $0x130] sm:$0xff] %vm1198, %v8226
        %8291 = vst.msk [vmem:[%s1216 + $0x148] sm:$0xff] %vm1198, %v8227
        %8292 = vst.msk [vmem:[%s1216 + $0x150] sm:$0xff] %vm1198, %v8228
        %8293 = vst.msk [vmem:[%s1216 + $0x168] sm:$0xff] %vm1198, %v8229
        %8294 = vst.msk [vmem:[%s1216 + $0x170] sm:$0xff] %vm1198, %v8230
        %8295 = vst.msk [vmem:[%s1216 + $0x188] sm:$0xff] %vm1198, %v8231
        %8296 = vst.msk [vmem:[%s1216 + $0x190] sm:$0xff] %vm1198, %v8232
        %8297 = vst.msk [vmem:[%s1216 + $0x1a8] sm:$0xff] %vm1198, %v8233
        %8298 = vst.msk [vmem:[%s1216 + $0x1b0] sm:$0xff] %vm1198, %v8234
        %8299 = vst.msk [vmem:[%s1216 + $0x1c8] sm:$0xff] %vm1198, %v8235
        %8300 = vst.msk [vmem:[%s1216 + $0x1d0] sm:$0xff] %vm1198, %v8236
        %8301 = vst.msk [vmem:[%s1216 + $0x1e8] sm:$0xff] %vm1198, %v8237
        %8302 = vst.msk [vmem:[%s1216 + $0x1f0] sm:$0xff] %vm1198, %v8238
        %8303 = vst.msk [vmem:[%s1216 + $0x208] sm:$0xff] %vm1198, %v8239
        %8304 = vst.msk [vmem:[%s1216 + $0x210] sm:$0xff] %vm1198, %v8240
        %8305 = vst.msk [vmem:[%s1216 + $0x228] sm:$0xff] %vm1198, %v8241
        %8306 = vst.msk [vmem:[%s1216 + $0x230] sm:$0xff] %vm1198, %v8242
        %8307 = vst.msk [vmem:[%s1216 + $0x248] sm:$0xff] %vm1198, %v8243
        %8308 = vst.msk [vmem:[%s1216 + $0x250] sm:$0xff] %vm1198, %v8244
        %8309 = vst.msk [vmem:[%s1216 + $0x268] sm:$0xff] %vm1198, %v8245
        %8310 = vst.msk [vmem:[%s1216 + $0x270] sm:$0xff] %vm1198, %v8246
        %8311 = vst.msk [vmem:[%s1216 + $0x288] sm:$0xff] %vm1198, %v8247
        %8312 = vst.msk [vmem:[%s1216 + $0x290] sm:$0xff] %vm1198, %v8248
        %8313 = vst.msk [vmem:[%s1216 + $0x2a8] sm:$0xff] %vm1198, %v8249
        %8314 = vst.msk [vmem:[%s1216 + $0x2b0] sm:$0xff] %vm1198, %v8250
        %8315 = vst.msk [vmem:[%s1216 + $0x2c8] sm:$0xff] %vm1198, %v8251
        %8316 = vst.msk [vmem:[%s1216 + $0x2d0] sm:$0xff] %vm1198, %v8252
        %8317 = vst.msk [vmem:[%s1216 + $0x2e8] sm:$0xff] %vm1198, %v8253
        %8318 = vst.msk [vmem:[%s1216 + $0x2f0] sm:$0xff] %vm1198, %v8254
        %8319 = vst.msk [vmem:[%s1216 + $0x308] sm:$0xff] %vm1198, %v8255
        %8320 = vst.msk [vmem:[%s1216 + $0x310] sm:$0xff] %vm1198, %v8256
        %8321 = vst.msk [vmem:[%s1216 + $0x328] sm:$0xff] %vm1198, %v8257
        %8322 = vst.msk [vmem:[%s1216 + $0x330] sm:$0xff] %vm1198, %v8258
        %8323 = vst.msk [vmem:[%s1216 + $0x348] sm:$0xff] %vm1198, %v8259
        %8324 = vst.msk [vmem:[%s1216 + $0x350] sm:$0xff] %vm1198, %v8260
        %8325 = vst.msk [vmem:[%s1216 + $0x368] sm:$0xff] %vm1198, %v8261
        %8326 = vst.msk [vmem:[%s1216 + $0x370] sm:$0xff] %vm1198, %v8262
        %8327 = vst.msk [vmem:[%s1216 + $0x388] sm:$0xff] %vm1198, %v8263
        %8328 = vst.msk [vmem:[%s1216 + $0x390] sm:$0xff] %vm1198, %v8264
        %8329 = vst.msk [vmem:[%s1216 + $0x3a8] sm:$0xff] %vm1198, %v8265
        %8330 = vst.msk [vmem:[%s1216 + $0x3b0] sm:$0xff] %vm1198, %v8266
        %8331 = vst.msk [vmem:[%s1216 + $0x3c8] sm:$0xff] %vm1198, %v8267
        %8332 = vst.msk [vmem:[%s1216 + $0x3d0] sm:$0xff] %vm1198, %v8268
        %8333 = vst.msk [vmem:[%s1216 + $0x3e8] sm:$0xff] %vm1198, %v8269
        %8334 = vst.msk [vmem:[%s1216 + $0x3f0] sm:$0xff] %vm1198, %v8270
        %v8335 = vld [vmem:[%s1347 + $0x8] sm:$0xff]
        %v8336 = vld [vmem:[%s1347 + $0x10] sm:$0xff]
        %v8337 = vld [vmem:[%s1347 + $0x28] sm:$0xff]
        %v8338 = vld [vmem:[%s1347 + $0x30] sm:$0xff]
        %v8339 = vld [vmem:[%s1347 + $0x48] sm:$0xff]
        %v8340 = vld [vmem:[%s1347 + $0x50] sm:$0xff]
        %v8341 = vld [vmem:[%s1347 + $0x68] sm:$0xff]
        %v8342 = vld [vmem:[%s1347 + $0x70] sm:$0xff]
        %v8343 = vld [vmem:[%s1347 + $0x88] sm:$0xff]
        %v8344 = vld [vmem:[%s1347 + $0x90] sm:$0xff]
        %v8345 = vld [vmem:[%s1347 + $0xa8] sm:$0xff]
        %v8346 = vld [vmem:[%s1347 + $0xb0] sm:$0xff]
        %v8347 = vld [vmem:[%s1347 + $0xc8] sm:$0xff]
        %v8348 = vld [vmem:[%s1347 + $0xd0] sm:$0xff]
        %v8349 = vld [vmem:[%s1347 + $0xe8] sm:$0xff]
        %v8350 = vld [vmem:[%s1347 + $0xf0] sm:$0xff]
        %v8351 = vld [vmem:[%s1347 + $0x108] sm:$0xff]
        %v8352 = vld [vmem:[%s1347 + $0x110] sm:$0xff]
        %v8353 = vld [vmem:[%s1347 + $0x128] sm:$0xff]
        %v8354 = vld [vmem:[%s1347 + $0x130] sm:$0xff]
        %v8355 = vld [vmem:[%s1347 + $0x148] sm:$0xff]
        %v8356 = vld [vmem:[%s1347 + $0x150] sm:$0xff]
        %v8357 = vld [vmem:[%s1347 + $0x168] sm:$0xff]
        %v8358 = vld [vmem:[%s1347 + $0x170] sm:$0xff]
        %v8359 = vld [vmem:[%s1347 + $0x188] sm:$0xff]
        %v8360 = vld [vmem:[%s1347 + $0x190] sm:$0xff]
        %v8361 = vld [vmem:[%s1347 + $0x1a8] sm:$0xff]
        %v8362 = vld [vmem:[%s1347 + $0x1b0] sm:$0xff]
        %v8363 = vld [vmem:[%s1347 + $0x1c8] sm:$0xff]
        %v8364 = vld [vmem:[%s1347 + $0x1d0] sm:$0xff]
        %v8365 = vld [vmem:[%s1347 + $0x1e8] sm:$0xff]
        %v8366 = vld [vmem:[%s1347 + $0x1f0] sm:$0xff]
        %v8367 = vld [vmem:[%s1347 + $0x208] sm:$0xff]
        %v8368 = vld [vmem:[%s1347 + $0x210] sm:$0xff]
        %v8369 = vld [vmem:[%s1347 + $0x228] sm:$0xff]
        %v8370 = vld [vmem:[%s1347 + $0x230] sm:$0xff]
        %v8371 = vld [vmem:[%s1347 + $0x248] sm:$0xff]
        %v8372 = vld [vmem:[%s1347 + $0x250] sm:$0xff]
        %v8373 = vld [vmem:[%s1347 + $0x268] sm:$0xff]
        %v8374 = vld [vmem:[%s1347 + $0x270] sm:$0xff]
        %v8375 = vld [vmem:[%s1347 + $0x288] sm:$0xff]
        %v8376 = vld [vmem:[%s1347 + $0x290] sm:$0xff]
        %v8377 = vld [vmem:[%s1347 + $0x2a8] sm:$0xff]
        %v8378 = vld [vmem:[%s1347 + $0x2b0] sm:$0xff]
        %v8379 = vld [vmem:[%s1347 + $0x2c8] sm:$0xff]
        %v8380 = vld [vmem:[%s1347 + $0x2d0] sm:$0xff]
        %v8381 = vld [vmem:[%s1347 + $0x2e8] sm:$0xff]
        %v8382 = vld [vmem:[%s1347 + $0x2f0] sm:$0xff]
        %v8383 = vld [vmem:[%s1347 + $0x308] sm:$0xff]
        %v8384 = vld [vmem:[%s1347 + $0x310] sm:$0xff]
        %v8385 = vld [vmem:[%s1347 + $0x328] sm:$0xff]
        %v8386 = vld [vmem:[%s1347 + $0x330] sm:$0xff]
        %v8387 = vld [vmem:[%s1347 + $0x348] sm:$0xff]
        %v8388 = vld [vmem:[%s1347 + $0x350] sm:$0xff]
        %v8389 = vld [vmem:[%s1347 + $0x368] sm:$0xff]
        %v8390 = vld [vmem:[%s1347 + $0x370] sm:$0xff]
        %v8391 = vld [vmem:[%s1347 + $0x388] sm:$0xff]
        %v8392 = vld [vmem:[%s1347 + $0x390] sm:$0xff]
        %v8393 = vld [vmem:[%s1347 + $0x3a8] sm:$0xff]
        %v8394 = vld [vmem:[%s1347 + $0x3b0] sm:$0xff]
        %v8395 = vld [vmem:[%s1347 + $0x3c8] sm:$0xff]
        %v8396 = vld [vmem:[%s1347 + $0x3d0] sm:$0xff]
        %v8397 = vld [vmem:[%s1347 + $0x3e8] sm:$0xff]
        %v8398 = vld [vmem:[%s1347 + $0x3f0] sm:$0xff]
        %v8399 = vpack.c.bf16 %v8336, %v8335
        %v8400 = vpack.c.bf16 %v8338, %v8337
        %v8401 = vpack.c.bf16 %v8340, %v8339
        %v8402 = vpack.c.bf16 %v8342, %v8341
        %v8403 = vpack.c.bf16 %v8344, %v8343
        %v8404 = vpack.c.bf16 %v8346, %v8345
        %v8405 = vpack.c.bf16 %v8348, %v8347
        %v8406 = vpack.c.bf16 %v8350, %v8349
        %v8407 = vpack.c.bf16 %v8352, %v8351
        %v8408 = vpack.c.bf16 %v8354, %v8353
        %v8409 = vpack.c.bf16 %v8356, %v8355
        %v8410 = vpack.c.bf16 %v8358, %v8357
        %v8411 = vpack.c.bf16 %v8360, %v8359
        %v8412 = vpack.c.bf16 %v8362, %v8361
        %v8413 = vpack.c.bf16 %v8364, %v8363
        %v8414 = vpack.c.bf16 %v8366, %v8365
        %v8415 = vpack.c.bf16 %v8368, %v8367
        %v8416 = vpack.c.bf16 %v8370, %v8369
        %v8417 = vpack.c.bf16 %v8372, %v8371
        %v8418 = vpack.c.bf16 %v8374, %v8373
        %v8419 = vpack.c.bf16 %v8376, %v8375
        %v8420 = vpack.c.bf16 %v8378, %v8377
        %v8421 = vpack.c.bf16 %v8380, %v8379
        %v8422 = vpack.c.bf16 %v8382, %v8381
        %v8423 = vpack.c.bf16 %v8384, %v8383
        %v8424 = vpack.c.bf16 %v8386, %v8385
        %v8425 = vpack.c.bf16 %v8388, %v8387
        %v8426 = vpack.c.bf16 %v8390, %v8389
        %v8427 = vpack.c.bf16 %v8392, %v8391
        %v8428 = vpack.c.bf16 %v8394, %v8393
        %v8429 = vpack.c.bf16 %v8396, %v8395
        %v8430 = vpack.c.bf16 %v8398, %v8397
        %8463 = vrot.lane.b32.xlu0 %v8399, 12
        %v8464 = vpop.permute.xlu0 %8463
        %8465 = vrot.lane.b32.xlu0 %v8400, 12
        %v8466 = vpop.permute.xlu0 %8465
        %8467 = vrot.lane.b32.xlu0 %v8401, 12
        %v8468 = vpop.permute.xlu0 %8467
        %8469 = vrot.lane.b32.xlu0 %v8402, 12
        %v8470 = vpop.permute.xlu0 %8469
        %8471 = vrot.lane.b32.xlu0 %v8403, 12
        %v8472 = vpop.permute.xlu0 %8471
        %8473 = vrot.lane.b32.xlu0 %v8404, 12
        %v8474 = vpop.permute.xlu0 %8473
        %8475 = vrot.lane.b32.xlu0 %v8405, 12
        %v8476 = vpop.permute.xlu0 %8475
        %8477 = vrot.lane.b32.xlu0 %v8406, 12
        %v8478 = vpop.permute.xlu0 %8477
        %8479 = vrot.lane.b32.xlu0 %v8407, 12
        %v8480 = vpop.permute.xlu0 %8479
        %8481 = vrot.lane.b32.xlu0 %v8408, 12
        %v8482 = vpop.permute.xlu0 %8481
        %8483 = vrot.lane.b32.xlu0 %v8409, 12
        %v8484 = vpop.permute.xlu0 %8483
        %8485 = vrot.lane.b32.xlu0 %v8410, 12
        %v8486 = vpop.permute.xlu0 %8485
        %8487 = vrot.lane.b32.xlu0 %v8411, 12
        %v8488 = vpop.permute.xlu0 %8487
        %8489 = vrot.lane.b32.xlu0 %v8412, 12
        %v8490 = vpop.permute.xlu0 %8489
        %8491 = vrot.lane.b32.xlu0 %v8413, 12
        %v8492 = vpop.permute.xlu0 %8491
        %8493 = vrot.lane.b32.xlu0 %v8414, 12
        %v8494 = vpop.permute.xlu0 %8493
        %8495 = vrot.lane.b32.xlu0 %v8415, 12
        %v8496 = vpop.permute.xlu0 %8495
        %8497 = vrot.lane.b32.xlu0 %v8416, 12
        %v8498 = vpop.permute.xlu0 %8497
        %8499 = vrot.lane.b32.xlu0 %v8417, 12
        %v8500 = vpop.permute.xlu0 %8499
        %8501 = vrot.lane.b32.xlu0 %v8418, 12
        %v8502 = vpop.permute.xlu0 %8501
        %8503 = vrot.lane.b32.xlu0 %v8419, 12
        %v8504 = vpop.permute.xlu0 %8503
        %8505 = vrot.lane.b32.xlu0 %v8420, 12
        %v8506 = vpop.permute.xlu0 %8505
        %8507 = vrot.lane.b32.xlu0 %v8421, 12
        %v8508 = vpop.permute.xlu0 %8507
        %8509 = vrot.lane.b32.xlu0 %v8422, 12
        %v8510 = vpop.permute.xlu0 %8509
        %8511 = vrot.lane.b32.xlu0 %v8423, 12
        %v8512 = vpop.permute.xlu0 %8511
        %8513 = vrot.lane.b32.xlu0 %v8424, 12
        %v8514 = vpop.permute.xlu0 %8513
        %8515 = vrot.lane.b32.xlu0 %v8425, 12
        %v8516 = vpop.permute.xlu0 %8515
        %8517 = vrot.lane.b32.xlu0 %v8426, 12
        %v8518 = vpop.permute.xlu0 %8517
        %8519 = vrot.lane.b32.xlu0 %v8427, 12
        %v8520 = vpop.permute.xlu0 %8519
        %8521 = vrot.lane.b32.xlu0 %v8428, 12
        %v8522 = vpop.permute.xlu0 %8521
        %8523 = vrot.lane.b32.xlu0 %v8429, 12
        %v8524 = vpop.permute.xlu0 %8523
        %8525 = vrot.lane.b32.xlu0 %v8430, 12
        %v8526 = vpop.permute.xlu0 %8525
        %vm8559 = vcmask 130144
        %8560 = vst.msk [vmem:[#allocation3] sm:$0xff] %vm8559, %v8464
        %8561 = vst.msk [vmem:[#allocation3 + $0x8] sm:$0xff] %vm8559, %v8466
        %8562 = vst.msk [vmem:[#allocation3 + $0x10] sm:$0xff] %vm8559, %v8468
        %8563 = vst.msk [vmem:[#allocation3 + $0x18] sm:$0xff] %vm8559, %v8470
        %8564 = vst.msk [vmem:[#allocation3 + $0x20] sm:$0xff] %vm8559, %v8472
        %8565 = vst.msk [vmem:[#allocation3 + $0x28] sm:$0xff] %vm8559, %v8474
        %8566 = vst.msk [vmem:[#allocation3 + $0x30] sm:$0xff] %vm8559, %v8476
        %8567 = vst.msk [vmem:[#allocation3 + $0x38] sm:$0xff] %vm8559, %v8478
        %8568 = vst.msk [vmem:[#allocation3 + $0x40] sm:$0xff] %vm8559, %v8480
        %8569 = vst.msk [vmem:[#allocation3 + $0x48] sm:$0xff] %vm8559, %v8482
        %8570 = vst.msk [vmem:[#allocation3 + $0x50] sm:$0xff] %vm8559, %v8484
        %8571 = vst.msk [vmem:[#allocation3 + $0x58] sm:$0xff] %vm8559, %v8486
        %8572 = vst.msk [vmem:[#allocation3 + $0x60] sm:$0xff] %vm8559, %v8488
        %8573 = vst.msk [vmem:[#allocation3 + $0x68] sm:$0xff] %vm8559, %v8490
        %8574 = vst.msk [vmem:[#allocation3 + $0x70] sm:$0xff] %vm8559, %v8492
        %8575 = vst.msk [vmem:[#allocation3 + $0x78] sm:$0xff] %vm8559, %v8494
        %8576 = vst.msk [vmem:[#allocation3 + $0x80] sm:$0xff] %vm8559, %v8496
        %8577 = vst.msk [vmem:[#allocation3 + $0x88] sm:$0xff] %vm8559, %v8498
        %8578 = vst.msk [vmem:[#allocation3 + $0x90] sm:$0xff] %vm8559, %v8500
        %8579 = vst.msk [vmem:[#allocation3 + $0x98] sm:$0xff] %vm8559, %v8502
        %8580 = vst.msk [vmem:[#allocation3 + $0xa0] sm:$0xff] %vm8559, %v8504
        %8581 = vst.msk [vmem:[#allocation3 + $0xa8] sm:$0xff] %vm8559, %v8506
        %8582 = vst.msk [vmem:[#allocation3 + $0xb0] sm:$0xff] %vm8559, %v8508
        %8583 = vst.msk [vmem:[#allocation3 + $0xb8] sm:$0xff] %vm8559, %v8510
        %8584 = vst.msk [vmem:[#allocation3 + $0xc0] sm:$0xff] %vm8559, %v8512
        %8585 = vst.msk [vmem:[#allocation3 + $0xc8] sm:$0xff] %vm8559, %v8514
        %8586 = vst.msk [vmem:[#allocation3 + $0xd0] sm:$0xff] %vm8559, %v8516
        %8587 = vst.msk [vmem:[#allocation3 + $0xd8] sm:$0xff] %vm8559, %v8518
        %8588 = vst.msk [vmem:[#allocation3 + $0xe0] sm:$0xff] %vm8559, %v8520
        %8589 = vst.msk [vmem:[#allocation3 + $0xe8] sm:$0xff] %vm8559, %v8522
        %8590 = vst.msk [vmem:[#allocation3 + $0xf0] sm:$0xff] %vm8559, %v8524
        %8591 = vst.msk [vmem:[#allocation3 + $0xf8] sm:$0xff] %vm8559, %v8526
        %v8592 = vld [vmem:[#allocation3] sm:$0xff]
        %v8593 = vld [vmem:[#allocation3 + $0x8] sm:$0xff]
        %v8594 = vld [vmem:[#allocation3 + $0x10] sm:$0xff]
        %v8595 = vld [vmem:[#allocation3 + $0x18] sm:$0xff]
        %v8596 = vld [vmem:[#allocation3 + $0x20] sm:$0xff]
        %v8597 = vld [vmem:[#allocation3 + $0x28] sm:$0xff]
        %v8598 = vld [vmem:[#allocation3 + $0x30] sm:$0xff]
        %v8599 = vld [vmem:[#allocation3 + $0x38] sm:$0xff]
        %v8600 = vld [vmem:[#allocation3 + $0x40] sm:$0xff]
        %v8601 = vld [vmem:[#allocation3 + $0x48] sm:$0xff]
        %v8602 = vld [vmem:[#allocation3 + $0x50] sm:$0xff]
        %v8603 = vld [vmem:[#allocation3 + $0x58] sm:$0xff]
        %v8604 = vld [vmem:[#allocation3 + $0x60] sm:$0xff]
        %v8605 = vld [vmem:[#allocation3 + $0x68] sm:$0xff]
        %v8606 = vld [vmem:[#allocation3 + $0x70] sm:$0xff]
        %v8607 = vld [vmem:[#allocation3 + $0x78] sm:$0xff]
        %v8608 = vld [vmem:[#allocation3 + $0x80] sm:$0xff]
        %v8609 = vld [vmem:[#allocation3 + $0x88] sm:$0xff]
        %v8610 = vld [vmem:[#allocation3 + $0x90] sm:$0xff]
        %v8611 = vld [vmem:[#allocation3 + $0x98] sm:$0xff]
        %v8612 = vld [vmem:[#allocation3 + $0xa0] sm:$0xff]
        %v8613 = vld [vmem:[#allocation3 + $0xa8] sm:$0xff]
        %v8614 = vld [vmem:[#allocation3 + $0xb0] sm:$0xff]
        %v8615 = vld [vmem:[#allocation3 + $0xb8] sm:$0xff]
        %v8616 = vld [vmem:[#allocation3 + $0xc0] sm:$0xff]
        %v8617 = vld [vmem:[#allocation3 + $0xc8] sm:$0xff]
        %v8618 = vld [vmem:[#allocation3 + $0xd0] sm:$0xff]
        %v8619 = vld [vmem:[#allocation3 + $0xd8] sm:$0xff]
        %v8620 = vld [vmem:[#allocation3 + $0xe0] sm:$0xff]
        %v8621 = vld [vmem:[#allocation3 + $0xe8] sm:$0xff]
        %v8622 = vld [vmem:[#allocation3 + $0xf0] sm:$0xff]
        %v8623 = vld [vmem:[#allocation3 + $0xf8] sm:$0xff]
        %v8624 = vld [vmem:[#allocation10] sm:$0xf]
        %v8625 = vld [vmem:[#allocation10 + $0x4] sm:$0xf]
        %v8626 = vld [vmem:[#allocation12] sm:$0x1]
        %v8628 = vlaneseq
        %v8629 = vshrl.u32 %v8628, 7
        %v8630 = vsub.s32 0, %v8629
        %v8631 = vrot.slane %v8626, %v8630
        %v8635 = vunpack.c.l.b16 %v8624
        %v8636 = vunpack.c.l.b16 %v8625
        %v8637 = vpack.c.b16 %v8636, %v8635
        %vm8639 = vcmask 130048
        %v8641 = vsel %vm8639, %v8592, 0
        %v8644 = vsel %vm8639, %v8593, 0
        %v8647 = vsel %vm8639, %v8594, 0
        %v8650 = vsel %vm8639, %v8595, 0
        %v8653 = vsel %vm8639, %v8596, 0
        %v8656 = vsel %vm8639, %v8597, 0
        %v8659 = vsel %vm8639, %v8598, 0
        %v8662 = vsel %vm8639, %v8599, 0
        %v8665 = vsel %vm8639, %v8600, 0
        %v8668 = vsel %vm8639, %v8601, 0
        %v8671 = vsel %vm8639, %v8602, 0
        %v8674 = vsel %vm8639, %v8603, 0
        %v8677 = vsel %vm8639, %v8604, 0
        %v8680 = vsel %vm8639, %v8605, 0
        %v8683 = vsel %vm8639, %v8606, 0
        %v8686 = vsel %vm8639, %v8607, 0
        %v8689 = vsel %vm8639, %v8608, 0
        %v8692 = vsel %vm8639, %v8609, 0
        %v8695 = vsel %vm8639, %v8610, 0
        %v8698 = vsel %vm8639, %v8611, 0
        %v8701 = vsel %vm8639, %v8612, 0
        %v8704 = vsel %vm8639, %v8613, 0
        %v8707 = vsel %vm8639, %v8614, 0
        %v8710 = vsel %vm8639, %v8615, 0
        %v8713 = vsel %vm8639, %v8616, 0
        %v8716 = vsel %vm8639, %v8617, 0
        %v8719 = vsel %vm8639, %v8618, 0
        %v8722 = vsel %vm8639, %v8619, 0
        %v8725 = vsel %vm8639, %v8620, 0
        %v8728 = vsel %vm8639, %v8621, 0
        %v8731 = vsel %vm8639, %v8622, 0
        %v8734 = vsel %vm8639, %v8623, 0
        %8736 = vmatprep.subr.bf16.mxu0 0
        %8737 = vmatpush1.bf16.msra.mxu0 %v8637
        %8738 = vmatprep.subr.bf16.mxu0 0
        %8739 = vmatpush1.bf16.msra.mxu0 0
        %8740 = vmatprep.subr.bf16.mxu0 0
        %8741 = vmatpush1.bf16.msra.mxu0 0
        %8742 = vmatprep.subr.bf16.mxu0 0
        %8743 = vmatpush1.bf16.msra.mxu0 0
        %8744 = vmatprep.subr.bf16.mxu0 0
        %8745 = vmatpush1.bf16.msra.mxu0 0
        %8746 = vmatprep.subr.bf16.mxu0 0
        %8747 = vmatpush1.bf16.msra.mxu0 0
        %8748 = vmatprep.subr.bf16.mxu0 0
        %8749 = vmatpush1.bf16.msra.mxu0 0
        %8750 = vmatprep.subr.bf16.mxu0 0
        %8751 = vmatpush1.bf16.msra.mxu0 0
        %8752 = vmatprep.subr.bf16.mxu0 0
        %8753 = vmatpush1.bf16.msra.mxu0 0
        %8754 = vmatprep.subr.bf16.mxu0 0
        %8755 = vmatpush1.bf16.msra.mxu0 0
        %8756 = vmatprep.subr.bf16.mxu0 0
        %8757 = vmatpush1.bf16.msra.mxu0 0
        %8758 = vmatprep.subr.bf16.mxu0 0
        %8759 = vmatpush1.bf16.msra.mxu0 0
        %8760 = vmatprep.subr.bf16.mxu0 0
        %8761 = vmatpush1.bf16.msra.mxu0 0
        %8762 = vmatprep.subr.bf16.mxu0 0
        %8763 = vmatpush1.bf16.msra.mxu0 0
        %8764 = vmatprep.subr.bf16.mxu0 0
        %8765 = vmatpush1.bf16.msra.mxu0 0
        %8766 = vmatprep.subr.bf16.mxu0 0
        %8767 = vmatpush1.bf16.msra.mxu0 0
        %8768 = vmatprep.mubr.bf16.mxu0 0
        %8769 = vmatmul.mubr.bf16.gmra.mrb[0].mxu0 %v8641
        %v8770 = vpop.f32.mrb[0].mxu0
        %v8771 = vadd.f32 %v8631, %v8770
        %v8772 = vpop.f32.mrb[0].mxu0
        %v8773 = vpop.f32.mrb[0].mxu0
        %v8774 = vadd.f32 %v8631, %v8773
        %v8775 = vpop.f32.mrb[0].mxu0
        %8776 = vmatprep.mubr.bf16.mxu0 0
        %8777 = vmatmul.mubr.bf16.gmra.mrb[0].mxu0 %v8644
        %v8778 = vpop.f32.mrb[0].mxu0
        %v8779 = vadd.f32 %v8631, %v8778
        %v8780 = vpop.f32.mrb[0].mxu0
        %v8781 = vpop.f32.mrb[0].mxu0
        %v8782 = vadd.f32 %v8631, %v8781
        %v8783 = vpop.f32.mrb[0].mxu0
        %8784 = vmatprep.mubr.bf16.mxu0 0
        %8785 = vmatmul.mubr.bf16.gmra.mrb[0].mxu0 %v8647
        %v8786 = vpop.f32.mrb[0].mxu0
        %v8787 = vadd.f32 %v8631, %v8786
        %v8788 = vpop.f32.mrb[0].mxu0
        %v8789 = vpop.f32.mrb[0].mxu0
        %v8790 = vadd.f32 %v8631, %v8789
        %v8791 = vpop.f32.mrb[0].mxu0
        %8792 = vmatprep.mubr.bf16.mxu0 0
        %8793 = vmatmul.mubr.bf16.gmra.mrb[0].mxu0 %v8650
        %v8794 = vpop.f32.mrb[0].mxu0
        %v8795 = vadd.f32 %v8631, %v8794
        %v8796 = vpop.f32.mrb[0].mxu0
        %v8797 = vpop.f32.mrb[0].mxu0
        %v8798 = vadd.f32 %v8631, %v8797
        %v8799 = vpop.f32.mrb[0].mxu0
        %8800 = vmatprep.mubr.bf16.mxu0 0
        %8801 = vmatmul.mubr.bf16.gmra.mrb[0].mxu0 %v8653
        %v8802 = vpop.f32.mrb[0].mxu0
        %v8803 = vadd.f32 %v8631, %v8802
        %v8804 = vpop.f32.mrb[0].mxu0
        %v8805 = vpop.f32.mrb[0].mxu0
        %v8806 = vadd.f32 %v8631, %v8805
        %v8807 = vpop.f32.mrb[0].mxu0
        %8808 = vmatprep.mubr.bf16.mxu0 0
        %8809 = vmatmul.mubr.bf16.gmra.mrb[0].mxu0 %v8656
        %v8810 = vpop.f32.mrb[0].mxu0
        %v8811 = vadd.f32 %v8631, %v8810
        %v8812 = vpop.f32.mrb[0].mxu0
        %v8813 = vpop.f32.mrb[0].mxu0
        %v8814 = vadd.f32 %v8631, %v8813
        %v8815 = vpop.f32.mrb[0].mxu0
        %8816 = vmatprep.mubr.bf16.mxu0 0
        %8817 = vmatmul.mubr.bf16.gmra.mrb[0].mxu0 %v8659
        %v8818 = vpop.f32.mrb[0].mxu0
        %v8819 = vadd.f32 %v8631, %v8818
        %v8820 = vpop.f32.mrb[0].mxu0
        %v8821 = vpop.f32.mrb[0].mxu0
        %v8822 = vadd.f32 %v8631, %v8821
        %v8823 = vpop.f32.mrb[0].mxu0
        %8824 = vmatprep.mubr.bf16.mxu0 0
        %8825 = vmatmul.mubr.bf16.gmra.mrb[0].mxu0 %v8662
        %v8826 = vpop.f32.mrb[0].mxu0
        %v8827 = vadd.f32 %v8631, %v8826
        %v8828 = vpop.f32.mrb[0].mxu0
        %v8829 = vpop.f32.mrb[0].mxu0
        %v8830 = vadd.f32 %v8631, %v8829
        %v8831 = vpop.f32.mrb[0].mxu0
        %8832 = vmatprep.mubr.bf16.mxu0 0
        %8833 = vmatmul.mubr.bf16.gmra.mrb[0].mxu0 %v8665
        %v8834 = vpop.f32.mrb[0].mxu0
        %v8835 = vadd.f32 %v8631, %v8834
        %v8836 = vpop.f32.mrb[0].mxu0
        %v8837 = vpop.f32.mrb[0].mxu0
        %v8838 = vadd.f32 %v8631, %v8837
        %v8839 = vpop.f32.mrb[0].mxu0
        %8840 = vmatprep.mubr.bf16.mxu0 0
        %8841 = vmatmul.mubr.bf16.gmra.mrb[0].mxu0 %v8668
        %v8842 = vpop.f32.mrb[0].mxu0
        %v8843 = vadd.f32 %v8631, %v8842
        %v8844 = vpop.f32.mrb[0].mxu0
        %v8845 = vpop.f32.mrb[0].mxu0
        %v8846 = vadd.f32 %v8631, %v8845
        %v8847 = vpop.f32.mrb[0].mxu0
        %8848 = vmatprep.mubr.bf16.mxu0 0
        %8849 = vmatmul.mubr.bf16.gmra.mrb[0].mxu0 %v8671
        %v8850 = vpop.f32.mrb[0].mxu0
        %v8851 = vadd.f32 %v8631, %v8850
        %v8852 = vpop.f32.mrb[0].mxu0
        %v8853 = vpop.f32.mrb[0].mxu0
        %v8854 = vadd.f32 %v8631, %v8853
        %v8855 = vpop.f32.mrb[0].mxu0
        %8856 = vmatprep.mubr.bf16.mxu0 0
        %8857 = vmatmul.mubr.bf16.gmra.mrb[0].mxu0 %v8674
        %v8858 = vpop.f32.mrb[0].mxu0
        %v8859 = vadd.f32 %v8631, %v8858
        %v8860 = vpop.f32.mrb[0].mxu0
        %v8861 = vpop.f32.mrb[0].mxu0
        %v8862 = vadd.f32 %v8631, %v8861
        %v8863 = vpop.f32.mrb[0].mxu0
        %8864 = vmatprep.mubr.bf16.mxu0 0
        %8865 = vmatmul.mubr.bf16.gmra.mrb[0].mxu0 %v8677
        %v8866 = vpop.f32.mrb[0].mxu0
        %v8867 = vadd.f32 %v8631, %v8866
        %v8868 = vpop.f32.mrb[0].mxu0
        %v8869 = vpop.f32.mrb[0].mxu0
        %v8870 = vadd.f32 %v8631, %v8869
        %v8871 = vpop.f32.mrb[0].mxu0
        %8872 = vmatprep.mubr.bf16.mxu0 0
        %8873 = vmatmul.mubr.bf16.gmra.mrb[0].mxu0 %v8680
        %v8874 = vpop.f32.mrb[0].mxu0
        %v8875 = vadd.f32 %v8631, %v8874
        %v8876 = vpop.f32.mrb[0].mxu0
        %v8877 = vpop.f32.mrb[0].mxu0
        %v8878 = vadd.f32 %v8631, %v8877
        %v8879 = vpop.f32.mrb[0].mxu0
        %8880 = vmatprep.mubr.bf16.mxu0 0
        %8881 = vmatmul.mubr.bf16.gmra.mrb[0].mxu0 %v8683
        %v8882 = vpop.f32.mrb[0].mxu0
        %v8883 = vadd.f32 %v8631, %v8882
        %v8884 = vpop.f32.mrb[0].mxu0
        %v8885 = vpop.f32.mrb[0].mxu0
        %v8886 = vadd.f32 %v8631, %v8885
        %v8887 = vpop.f32.mrb[0].mxu0
        %8888 = vmatprep.mubr.bf16.mxu0 0
        %8889 = vmatmul.mubr.bf16.gmra.mrb[0].mxu0 %v8686
        %v8890 = vpop.f32.mrb[0].mxu0
        %v8891 = vadd.f32 %v8631, %v8890
        %v8892 = vpop.f32.mrb[0].mxu0
        %v8893 = vpop.f32.mrb[0].mxu0
        %v8894 = vadd.f32 %v8631, %v8893
        %v8895 = vpop.f32.mrb[0].mxu0
        %8896 = vmatprep.mubr.bf16.mxu0 0
        %8897 = vmatmul.mubr.bf16.gmra.mrb[0].mxu0 %v8689
        %v8898 = vpop.f32.mrb[0].mxu0
        %v8899 = vadd.f32 %v8631, %v8898
        %v8900 = vpop.f32.mrb[0].mxu0
        %v8901 = vpop.f32.mrb[0].mxu0
        %v8902 = vadd.f32 %v8631, %v8901
        %v8903 = vpop.f32.mrb[0].mxu0
        %8904 = vmatprep.mubr.bf16.mxu0 0
        %8905 = vmatmul.mubr.bf16.gmra.mrb[0].mxu0 %v8692
        %v8906 = vpop.f32.mrb[0].mxu0
        %v8907 = vadd.f32 %v8631, %v8906
        %v8908 = vpop.f32.mrb[0].mxu0
        %v8909 = vpop.f32.mrb[0].mxu0
        %v8910 = vadd.f32 %v8631, %v8909
        %v8911 = vpop.f32.mrb[0].mxu0
        %8912 = vmatprep.mubr.bf16.mxu0 0
        %8913 = vmatmul.mubr.bf16.gmra.mrb[0].mxu0 %v8695
        %v8914 = vpop.f32.mrb[0].mxu0
        %v8915 = vadd.f32 %v8631, %v8914
        %v8916 = vpop.f32.mrb[0].mxu0
        %v8917 = vpop.f32.mrb[0].mxu0
        %v8918 = vadd.f32 %v8631, %v8917
        %v8919 = vpop.f32.mrb[0].mxu0
        %8920 = vmatprep.mubr.bf16.mxu0 0
        %8921 = vmatmul.mubr.bf16.gmra.mrb[0].mxu0 %v8698
        %v8922 = vpop.f32.mrb[0].mxu0
        %v8923 = vadd.f32 %v8631, %v8922
        %v8924 = vpop.f32.mrb[0].mxu0
        %v8925 = vpop.f32.mrb[0].mxu0
        %v8926 = vadd.f32 %v8631, %v8925
        %v8927 = vpop.f32.mrb[0].mxu0
        %8928 = vmatprep.mubr.bf16.mxu0 0
        %8929 = vmatmul.mubr.bf16.gmra.mrb[0].mxu0 %v8701
        %v8930 = vpop.f32.mrb[0].mxu0
        %v8931 = vadd.f32 %v8631, %v8930
        %v8932 = vpop.f32.mrb[0].mxu0
        %v8933 = vpop.f32.mrb[0].mxu0
        %v8934 = vadd.f32 %v8631, %v8933
        %v8935 = vpop.f32.mrb[0].mxu0
        %8936 = vmatprep.mubr.bf16.mxu0 0
        %8937 = vmatmul.mubr.bf16.gmra.mrb[0].mxu0 %v8704
        %v8938 = vpop.f32.mrb[0].mxu0
        %v8939 = vadd.f32 %v8631, %v8938
        %v8940 = vpop.f32.mrb[0].mxu0
        %v8941 = vpop.f32.mrb[0].mxu0
        %v8942 = vadd.f32 %v8631, %v8941
        %v8943 = vpop.f32.mrb[0].mxu0
        %8944 = vmatprep.mubr.bf16.mxu0 0
        %8945 = vmatmul.mubr.bf16.gmra.mrb[0].mxu0 %v8707
        %v8946 = vpop.f32.mrb[0].mxu0
        %v8947 = vadd.f32 %v8631, %v8946
        %v8948 = vpop.f32.mrb[0].mxu0
        %v8949 = vpop.f32.mrb[0].mxu0
        %v8950 = vadd.f32 %v8631, %v8949
        %v8951 = vpop.f32.mrb[0].mxu0
        %8952 = vmatprep.mubr.bf16.mxu0 0
        %8953 = vmatmul.mubr.bf16.gmra.mrb[0].mxu0 %v8710
        %v8954 = vpop.f32.mrb[0].mxu0
        %v8955 = vadd.f32 %v8631, %v8954
        %v8956 = vpop.f32.mrb[0].mxu0
        %v8957 = vpop.f32.mrb[0].mxu0
        %v8958 = vadd.f32 %v8631, %v8957
        %v8959 = vpop.f32.mrb[0].mxu0
        %8960 = vmatprep.mubr.bf16.mxu0 0
        %8961 = vmatmul.mubr.bf16.gmra.mrb[0].mxu0 %v8713
        %v8962 = vpop.f32.mrb[0].mxu0
        %v8963 = vadd.f32 %v8631, %v8962
        %v8964 = vpop.f32.mrb[0].mxu0
        %v8965 = vpop.f32.mrb[0].mxu0
        %v8966 = vadd.f32 %v8631, %v8965
        %v8967 = vpop.f32.mrb[0].mxu0
        %8968 = vmatprep.mubr.bf16.mxu0 0
        %8969 = vmatmul.mubr.bf16.gmra.mrb[0].mxu0 %v8716
        %v8970 = vpop.f32.mrb[0].mxu0
        %v8971 = vadd.f32 %v8631, %v8970
        %v8972 = vpop.f32.mrb[0].mxu0
        %v8973 = vpop.f32.mrb[0].mxu0
        %v8974 = vadd.f32 %v8631, %v8973
        %v8975 = vpop.f32.mrb[0].mxu0
        %8976 = vmatprep.mubr.bf16.mxu0 0
        %8977 = vmatmul.mubr.bf16.gmra.mrb[0].mxu0 %v8719
        %v8978 = vpop.f32.mrb[0].mxu0
        %v8979 = vadd.f32 %v8631, %v8978
        %v8980 = vpop.f32.mrb[0].mxu0
        %v8981 = vpop.f32.mrb[0].mxu0
        %v8982 = vadd.f32 %v8631, %v8981
        %v8983 = vpop.f32.mrb[0].mxu0
        %8984 = vmatprep.mubr.bf16.mxu0 0
        %8985 = vmatmul.mubr.bf16.gmra.mrb[0].mxu0 %v8722
        %v8986 = vpop.f32.mrb[0].mxu0
        %v8987 = vadd.f32 %v8631, %v8986
        %v8988 = vpop.f32.mrb[0].mxu0
        %v8989 = vpop.f32.mrb[0].mxu0
        %v8990 = vadd.f32 %v8631, %v8989
        %v8991 = vpop.f32.mrb[0].mxu0
        %8992 = vmatprep.mubr.bf16.mxu0 0
        %8993 = vmatmul.mubr.bf16.gmra.mrb[0].mxu0 %v8725
        %v8994 = vpop.f32.mrb[0].mxu0
        %v8995 = vadd.f32 %v8631, %v8994
        %v8996 = vpop.f32.mrb[0].mxu0
        %v8997 = vpop.f32.mrb[0].mxu0
        %v8998 = vadd.f32 %v8631, %v8997
        %v8999 = vpop.f32.mrb[0].mxu0
        %9000 = vmatprep.mubr.bf16.mxu0 0
        %9001 = vmatmul.mubr.bf16.gmra.mrb[0].mxu0 %v8728
        %v9002 = vpop.f32.mrb[0].mxu0
        %v9003 = vadd.f32 %v8631, %v9002
        %v9004 = vpop.f32.mrb[0].mxu0
        %v9005 = vpop.f32.mrb[0].mxu0
        %v9006 = vadd.f32 %v8631, %v9005
        %v9007 = vpop.f32.mrb[0].mxu0
        %9008 = vmatprep.mubr.bf16.mxu0 0
        %9009 = vmatmul.mubr.bf16.gmra.mrb[0].mxu0 %v8731
        %v9010 = vpop.f32.mrb[0].mxu0
        %v9011 = vadd.f32 %v8631, %v9010
        %v9012 = vpop.f32.mrb[0].mxu0
        %v9013 = vpop.f32.mrb[0].mxu0
        %v9014 = vadd.f32 %v8631, %v9013
        %v9015 = vpop.f32.mrb[0].mxu0
        %9016 = vmatprep.mubr.bf16.mxu0 0
        %9017 = vmatmul.mubr.bf16.gmra.mrb[0].mxu0 %v8734
        %v9018 = vpop.f32.mrb[0].mxu0
        %v9019 = vadd.f32 %v8631, %v9018
        %v9020 = vpop.f32.mrb[0].mxu0
        %v9021 = vpop.f32.mrb[0].mxu0
        %v9022 = vadd.f32 %v8631, %v9021
        %v9023 = vpop.f32.mrb[0].mxu0
        %9024 = vdwg.mxu0
        %v9025 = vsub.f32 0.0, %v8771
        %v9026 = vsub.f32 0.0, %v8774
        %v9027 = vsub.f32 0.0, %v8779
        %v9028 = vsub.f32 0.0, %v8782
        %v9029 = vsub.f32 0.0, %v8787
        %v9030 = vsub.f32 0.0, %v8790
        %v9031 = vsub.f32 0.0, %v8795
        %v9032 = vsub.f32 0.0, %v8798
        %v9033 = vsub.f32 0.0, %v8803
        %v9034 = vsub.f32 0.0, %v8806
        %v9035 = vsub.f32 0.0, %v8811
        %v9036 = vsub.f32 0.0, %v8814
        %v9037 = vsub.f32 0.0, %v8819
        %v9038 = vsub.f32 0.0, %v8822
        %v9039 = vsub.f32 0.0, %v8827
        %v9040 = vsub.f32 0.0, %v8830
        %v9041 = vsub.f32 0.0, %v8835
        %v9042 = vsub.f32 0.0, %v8838
        %v9043 = vsub.f32 0.0, %v8843
        %v9044 = vsub.f32 0.0, %v8846
        %v9045 = vsub.f32 0.0, %v8851
        %v9046 = vsub.f32 0.0, %v8854
        %v9047 = vsub.f32 0.0, %v8859
        %v9048 = vsub.f32 0.0, %v8862
        %v9049 = vsub.f32 0.0, %v8867
        %v9050 = vsub.f32 0.0, %v8870
        %v9051 = vsub.f32 0.0, %v8875
        %v9052 = vsub.f32 0.0, %v8878
        %v9053 = vsub.f32 0.0, %v8883
        %v9054 = vsub.f32 0.0, %v8886
        %v9055 = vsub.f32 0.0, %v8891
        %v9056 = vsub.f32 0.0, %v8894
        %v9057 = vsub.f32 0.0, %v8899
        %v9058 = vsub.f32 0.0, %v8902
        %v9059 = vsub.f32 0.0, %v8907
        %v9060 = vsub.f32 0.0, %v8910
        %v9061 = vsub.f32 0.0, %v8915
        %v9062 = vsub.f32 0.0, %v8918
        %v9063 = vsub.f32 0.0, %v8923
        %v9064 = vsub.f32 0.0, %v8926
        %v9065 = vsub.f32 0.0, %v8931
        %v9066 = vsub.f32 0.0, %v8934
        %v9067 = vsub.f32 0.0, %v8939
        %v9068 = vsub.f32 0.0, %v8942
        %v9069 = vsub.f32 0.0, %v8947
        %v9070 = vsub.f32 0.0, %v8950
        %v9071 = vsub.f32 0.0, %v8955
        %v9072 = vsub.f32 0.0, %v8958
        %v9073 = vsub.f32 0.0, %v8963
        %v9074 = vsub.f32 0.0, %v8966
        %v9075 = vsub.f32 0.0, %v8971
        %v9076 = vsub.f32 0.0, %v8974
        %v9077 = vsub.f32 0.0, %v8979
        %v9078 = vsub.f32 0.0, %v8982
        %v9079 = vsub.f32 0.0, %v8987
        %v9080 = vsub.f32 0.0, %v8990
        %v9081 = vsub.f32 0.0, %v8995
        %v9082 = vsub.f32 0.0, %v8998
        %v9083 = vsub.f32 0.0, %v9003
        %v9084 = vsub.f32 0.0, %v9006
        %v9085 = vsub.f32 0.0, %v9011
        %v9086 = vsub.f32 0.0, %v9014
        %v9087 = vsub.f32 0.0, %v9019
        %v9088 = vsub.f32 0.0, %v9022
        %v9089 = vmul.f32 %v9025, 1.442695
        %v9090 = vpow.pop %v9089
        %v9091 = vmul.f32 %v9026, 1.442695
        %v9092 = vpow.pop %v9091
        %v9093 = vmul.f32 %v9027, 1.442695
        %v9094 = vpow.pop %v9093
        %v9095 = vmul.f32 %v9028, 1.442695
        %v9096 = vpow.pop %v9095
        %v9097 = vmul.f32 %v9029, 1.442695
        %v9098 = vpow.pop %v9097
        %v9099 = vmul.f32 %v9030, 1.442695
        %v9100 = vpow.pop %v9099
        %v9101 = vmul.f32 %v9031, 1.442695
        %v9102 = vpow.pop %v9101
        %v9103 = vmul.f32 %v9032, 1.442695
        %v9104 = vpow.pop %v9103
        %v9105 = vmul.f32 %v9033, 1.442695
        %v9106 = vpow.pop %v9105
        %v9107 = vmul.f32 %v9034, 1.442695
        %v9108 = vpow.pop %v9107
        %v9109 = vmul.f32 %v9035, 1.442695
        %v9110 = vpow.pop %v9109
        %v9111 = vmul.f32 %v9036, 1.442695
        %v9112 = vpow.pop %v9111
        %v9113 = vmul.f32 %v9037, 1.442695
        %v9114 = vpow.pop %v9113
        %v9115 = vmul.f32 %v9038, 1.442695
        %v9116 = vpow.pop %v9115
        %v9117 = vmul.f32 %v9039, 1.442695
        %v9118 = vpow.pop %v9117
        %v9119 = vmul.f32 %v9040, 1.442695
        %v9120 = vpow.pop %v9119
        %v9121 = vmul.f32 %v9041, 1.442695
        %v9122 = vpow.pop %v9121
        %v9123 = vmul.f32 %v9042, 1.442695
        %v9124 = vpow.pop %v9123
        %v9125 = vmul.f32 %v9043, 1.442695
        %v9126 = vpow.pop %v9125
        %v9127 = vmul.f32 %v9044, 1.442695
        %v9128 = vpow.pop %v9127
        %v9129 = vmul.f32 %v9045, 1.442695
        %v9130 = vpow.pop %v9129
        %v9131 = vmul.f32 %v9046, 1.442695
        %v9132 = vpow.pop %v9131
        %v9133 = vmul.f32 %v9047, 1.442695
        %v9134 = vpow.pop %v9133
        %v9135 = vmul.f32 %v9048, 1.442695
        %v9136 = vpow.pop %v9135
        %v9137 = vmul.f32 %v9049, 1.442695
        %v9138 = vpow.pop %v9137
        %v9139 = vmul.f32 %v9050, 1.442695
        %v9140 = vpow.pop %v9139
        %v9141 = vmul.f32 %v9051, 1.442695
        %v9142 = vpow.pop %v9141
        %v9143 = vmul.f32 %v9052, 1.442695
        %v9144 = vpow.pop %v9143
        %v9145 = vmul.f32 %v9053, 1.442695
        %v9146 = vpow.pop %v9145
        %v9147 = vmul.f32 %v9054, 1.442695
        %v9148 = vpow.pop %v9147
        %v9149 = vmul.f32 %v9055, 1.442695
        %v9150 = vpow.pop %v9149
        %v9151 = vmul.f32 %v9056, 1.442695
        %v9152 = vpow.pop %v9151
        %v9153 = vmul.f32 %v9057, 1.442695
        %v9154 = vpow.pop %v9153
        %v9155 = vmul.f32 %v9058, 1.442695
        %v9156 = vpow.pop %v9155
        %v9157 = vmul.f32 %v9059, 1.442695
        %v9158 = vpow.pop %v9157
        %v9159 = vmul.f32 %v9060, 1.442695
        %v9160 = vpow.pop %v9159
        %v9161 = vmul.f32 %v9061, 1.442695
        %v9162 = vpow.pop %v9161
        %v9163 = vmul.f32 %v9062, 1.442695
        %v9164 = vpow.pop %v9163
        %v9165 = vmul.f32 %v9063, 1.442695
        %v9166 = vpow.pop %v9165
        %v9167 = vmul.f32 %v9064, 1.442695
        %v9168 = vpow.pop %v9167
        %v9169 = vmul.f32 %v9065, 1.442695
        %v9170 = vpow.pop %v9169
        %v9171 = vmul.f32 %v9066, 1.442695
        %v9172 = vpow.pop %v9171
        %v9173 = vmul.f32 %v9067, 1.442695
        %v9174 = vpow.pop %v9173
        %v9175 = vmul.f32 %v9068, 1.442695
        %v9176 = vpow.pop %v9175
        %v9177 = vmul.f32 %v9069, 1.442695
        %v9178 = vpow.pop %v9177
        %v9179 = vmul.f32 %v9070, 1.442695
        %v9180 = vpow.pop %v9179
        %v9181 = vmul.f32 %v9071, 1.442695
        %v9182 = vpow.pop %v9181
        %v9183 = vmul.f32 %v9072, 1.442695
        %v9184 = vpow.pop %v9183
        %v9185 = vmul.f32 %v9073, 1.442695
        %v9186 = vpow.pop %v9185
        %v9187 = vmul.f32 %v9074, 1.442695
        %v9188 = vpow.pop %v9187
        %v9189 = vmul.f32 %v9075, 1.442695
        %v9190 = vpow.pop %v9189
        %v9191 = vmul.f32 %v9076, 1.442695
        %v9192 = vpow.pop %v9191
        %v9193 = vmul.f32 %v9077, 1.442695
        %v9194 = vpow.pop %v9193
        %v9195 = vmul.f32 %v9078, 1.442695
        %v9196 = vpow.pop %v9195
        %v9197 = vmul.f32 %v9079, 1.442695
        %v9198 = vpow.pop %v9197
        %v9199 = vmul.f32 %v9080, 1.442695
        %v9200 = vpow.pop %v9199
        %v9201 = vmul.f32 %v9081, 1.442695
        %v9202 = vpow.pop %v9201
        %v9203 = vmul.f32 %v9082, 1.442695
        %v9204 = vpow.pop %v9203
        %v9205 = vmul.f32 %v9083, 1.442695
        %v9206 = vpow.pop %v9205
        %v9207 = vmul.f32 %v9084, 1.442695
        %v9208 = vpow.pop %v9207
        %v9209 = vmul.f32 %v9085, 1.442695
        %v9210 = vpow.pop %v9209
        %v9211 = vmul.f32 %v9086, 1.442695
        %v9212 = vpow.pop %v9211
        %v9213 = vmul.f32 %v9087, 1.442695
        %v9214 = vpow.pop %v9213
        %v9215 = vmul.f32 %v9088, 1.442695
        %v9216 = vpow.pop %v9215
        %v9217 = vadd.f32 %v9090, 1.0
        %v9218 = vadd.f32 %v9092, 1.0
        %v9219 = vadd.f32 %v9094, 1.0
        %v9220 = vadd.f32 %v9096, 1.0
        %v9221 = vadd.f32 %v9098, 1.0
        %v9222 = vadd.f32 %v9100, 1.0
        %v9223 = vadd.f32 %v9102, 1.0
        %v9224 = vadd.f32 %v9104, 1.0
        %v9225 = vadd.f32 %v9106, 1.0
        %v9226 = vadd.f32 %v9108, 1.0
        %v9227 = vadd.f32 %v9110, 1.0
        %v9228 = vadd.f32 %v9112, 1.0
        %v9229 = vadd.f32 %v9114, 1.0
        %v9230 = vadd.f32 %v9116, 1.0
        %v9231 = vadd.f32 %v9118, 1.0
        %v9232 = vadd.f32 %v9120, 1.0
        %v9233 = vadd.f32 %v9122, 1.0
        %v9234 = vadd.f32 %v9124, 1.0
        %v9235 = vadd.f32 %v9126, 1.0
        %v9236 = vadd.f32 %v9128, 1.0
        %v9237 = vadd.f32 %v9130, 1.0
        %v9238 = vadd.f32 %v9132, 1.0
        %v9239 = vadd.f32 %v9134, 1.0
        %v9240 = vadd.f32 %v9136, 1.0
        %v9241 = vadd.f32 %v9138, 1.0
        %v9242 = vadd.f32 %v9140, 1.0
        %v9243 = vadd.f32 %v9142, 1.0
        %v9244 = vadd.f32 %v9144, 1.0
        %v9245 = vadd.f32 %v9146, 1.0
        %v9246 = vadd.f32 %v9148, 1.0
        %v9247 = vadd.f32 %v9150, 1.0
        %v9248 = vadd.f32 %v9152, 1.0
        %v9249 = vadd.f32 %v9154, 1.0
        %v9250 = vadd.f32 %v9156, 1.0
        %v9251 = vadd.f32 %v9158, 1.0
        %v9252 = vadd.f32 %v9160, 1.0
        %v9253 = vadd.f32 %v9162, 1.0
        %v9254 = vadd.f32 %v9164, 1.0
        %v9255 = vadd.f32 %v9166, 1.0
        %v9256 = vadd.f32 %v9168, 1.0
        %v9257 = vadd.f32 %v9170, 1.0
        %v9258 = vadd.f32 %v9172, 1.0
        %v9259 = vadd.f32 %v9174, 1.0
        %v9260 = vadd.f32 %v9176, 1.0
        %v9261 = vadd.f32 %v9178, 1.0
        %v9262 = vadd.f32 %v9180, 1.0
        %v9263 = vadd.f32 %v9182, 1.0
        %v9264 = vadd.f32 %v9184, 1.0
        %v9265 = vadd.f32 %v9186, 1.0
        %v9266 = vadd.f32 %v9188, 1.0
        %v9267 = vadd.f32 %v9190, 1.0
        %v9268 = vadd.f32 %v9192, 1.0
        %v9269 = vadd.f32 %v9194, 1.0
        %v9270 = vadd.f32 %v9196, 1.0
        %v9271 = vadd.f32 %v9198, 1.0
        %v9272 = vadd.f32 %v9200, 1.0
        %v9273 = vadd.f32 %v9202, 1.0
        %v9274 = vadd.f32 %v9204, 1.0
        %v9275 = vadd.f32 %v9206, 1.0
        %v9276 = vadd.f32 %v9208, 1.0
        %v9277 = vadd.f32 %v9210, 1.0
        %v9278 = vadd.f32 %v9212, 1.0
        %v9279 = vadd.f32 %v9214, 1.0
        %v9280 = vadd.f32 %v9216, 1.0
        %v9281 = vrcp.pop %v9217
        %v9282 = vrcp.pop %v9218
        %v9283 = vrcp.pop %v9219
        %v9284 = vrcp.pop %v9220
        %v9285 = vrcp.pop %v9221
        %v9286 = vrcp.pop %v9222
        %v9287 = vrcp.pop %v9223
        %v9288 = vrcp.pop %v9224
        %v9289 = vrcp.pop %v9225
        %v9290 = vrcp.pop %v9226
        %v9291 = vrcp.pop %v9227
        %v9292 = vrcp.pop %v9228
        %v9293 = vrcp.pop %v9229
        %v9294 = vrcp.pop %v9230
        %v9295 = vrcp.pop %v9231
        %v9296 = vrcp.pop %v9232
        %v9297 = vrcp.pop %v9233
        %v9298 = vrcp.pop %v9234
        %v9299 = vrcp.pop %v9235
        %v9300 = vrcp.pop %v9236
        %v9301 = vrcp.pop %v9237
        %v9302 = vrcp.pop %v9238
        %v9303 = vrcp.pop %v9239
        %v9304 = vrcp.pop %v9240
        %v9305 = vrcp.pop %v9241
        %v9306 = vrcp.pop %v9242
        %v9307 = vrcp.pop %v9243
        %v9308 = vrcp.pop %v9244
        %v9309 = vrcp.pop %v9245
        %v9310 = vrcp.pop %v9246
        %v9311 = vrcp.pop %v9247
        %v9312 = vrcp.pop %v9248
        %v9313 = vrcp.pop %v9249
        %v9314 = vrcp.pop %v9250
        %v9315 = vrcp.pop %v9251
        %v9316 = vrcp.pop %v9252
        %v9317 = vrcp.pop %v9253
        %v9318 = vrcp.pop %v9254
        %v9319 = vrcp.pop %v9255
        %v9320 = vrcp.pop %v9256
        %v9321 = vrcp.pop %v9257
        %v9322 = vrcp.pop %v9258
        %v9323 = vrcp.pop %v9259
        %v9324 = vrcp.pop %v9260
        %v9325 = vrcp.pop %v9261
        %v9326 = vrcp.pop %v9262
        %v9327 = vrcp.pop %v9263
        %v9328 = vrcp.pop %v9264
        %v9329 = vrcp.pop %v9265
        %v9330 = vrcp.pop %v9266
        %v9331 = vrcp.pop %v9267
        %v9332 = vrcp.pop %v9268
        %v9333 = vrcp.pop %v9269
        %v9334 = vrcp.pop %v9270
        %v9335 = vrcp.pop %v9271
        %v9336 = vrcp.pop %v9272
        %v9337 = vrcp.pop %v9273
        %v9338 = vrcp.pop %v9274
        %v9339 = vrcp.pop %v9275
        %v9340 = vrcp.pop %v9276
        %v9341 = vrcp.pop %v9277
        %v9342 = vrcp.pop %v9278
        %v9343 = vrcp.pop %v9279
        %v9344 = vrcp.pop %v9280
        %v9345 = vmul.f32 %v8771, %v9281
        %v9346 = vmul.f32 %v8774, %v9282
        %v9347 = vmul.f32 %v8779, %v9283
        %v9348 = vmul.f32 %v8782, %v9284
        %v9349 = vmul.f32 %v8787, %v9285
        %v9350 = vmul.f32 %v8790, %v9286
        %v9351 = vmul.f32 %v8795, %v9287
        %v9352 = vmul.f32 %v8798, %v9288
        %v9353 = vmul.f32 %v8803, %v9289
        %v9354 = vmul.f32 %v8806, %v9290
        %v9355 = vmul.f32 %v8811, %v9291
        %v9356 = vmul.f32 %v8814, %v9292
        %v9357 = vmul.f32 %v8819, %v9293
        %v9358 = vmul.f32 %v8822, %v9294
        %v9359 = vmul.f32 %v8827, %v9295
        %v9360 = vmul.f32 %v8830, %v9296
        %v9361 = vmul.f32 %v8835, %v9297
        %v9362 = vmul.f32 %v8838, %v9298
        %v9363 = vmul.f32 %v8843, %v9299
        %v9364 = vmul.f32 %v8846, %v9300
        %v9365 = vmul.f32 %v8851, %v9301
        %v9366 = vmul.f32 %v8854, %v9302
        %v9367 = vmul.f32 %v8859, %v9303
        %v9368 = vmul.f32 %v8862, %v9304
        %v9369 = vmul.f32 %v8867, %v9305
        %v9370 = vmul.f32 %v8870, %v9306
        %v9371 = vmul.f32 %v8875, %v9307
        %v9372 = vmul.f32 %v8878, %v9308
        %v9373 = vmul.f32 %v8883, %v9309
        %v9374 = vmul.f32 %v8886, %v9310
        %v9375 = vmul.f32 %v8891, %v9311
        %v9376 = vmul.f32 %v8894, %v9312
        %v9377 = vmul.f32 %v8899, %v9313
        %v9378 = vmul.f32 %v8902, %v9314
        %v9379 = vmul.f32 %v8907, %v9315
        %v9380 = vmul.f32 %v8910, %v9316
        %v9381 = vmul.f32 %v8915, %v9317
        %v9382 = vmul.f32 %v8918, %v9318
        %v9383 = vmul.f32 %v8923, %v9319
        %v9384 = vmul.f32 %v8926, %v9320
        %v9385 = vmul.f32 %v8931, %v9321
        %v9386 = vmul.f32 %v8934, %v9322
        %v9387 = vmul.f32 %v8939, %v9323
        %v9388 = vmul.f32 %v8942, %v9324
        %v9389 = vmul.f32 %v8947, %v9325
        %v9390 = vmul.f32 %v8950, %v9326
        %v9391 = vmul.f32 %v8955, %v9327
        %v9392 = vmul.f32 %v8958, %v9328
        %v9393 = vmul.f32 %v8963, %v9329
        %v9394 = vmul.f32 %v8966, %v9330
        %v9395 = vmul.f32 %v8971, %v9331
        %v9396 = vmul.f32 %v8974, %v9332
        %v9397 = vmul.f32 %v8979, %v9333
        %v9398 = vmul.f32 %v8982, %v9334
        %v9399 = vmul.f32 %v8987, %v9335
        %v9400 = vmul.f32 %v8990, %v9336
        %v9401 = vmul.f32 %v8995, %v9337
        %v9402 = vmul.f32 %v8998, %v9338
        %v9403 = vmul.f32 %v9003, %v9339
        %v9404 = vmul.f32 %v9006, %v9340
        %v9405 = vmul.f32 %v9011, %v9341
        %v9406 = vmul.f32 %v9014, %v9342
        %v9407 = vmul.f32 %v9019, %v9343
        %v9408 = vmul.f32 %v9022, %v9344
        %9409 = vst.msk [vmem:[%s308] sm:$0xff] %vm424, %v9345
        %9410 = vst.msk [vmem:[%s308 + $0x8] sm:$0xff] %vm424, %v9346
        %9411 = vst.msk [vmem:[%s308 + $0x10] sm:$0xff] %vm424, %v9347
        %9412 = vst.msk [vmem:[%s308 + $0x18] sm:$0xff] %vm424, %v9348
        %9413 = vst.msk [vmem:[%s308 + $0x20] sm:$0xff] %vm424, %v9349
        %9414 = vst.msk [vmem:[%s308 + $0x28] sm:$0xff] %vm424, %v9350
        %9415 = vst.msk [vmem:[%s308 + $0x30] sm:$0xff] %vm424, %v9351
        %9416 = vst.msk [vmem:[%s308 + $0x38] sm:$0xff] %vm424, %v9352
        %9417 = vst.msk [vmem:[%s308 + $0x40] sm:$0xff] %vm424, %v9353
        %9418 = vst.msk [vmem:[%s308 + $0x48] sm:$0xff] %vm424, %v9354
        %9419 = vst.msk [vmem:[%s308 + $0x50] sm:$0xff] %vm424, %v9355
        %9420 = vst.msk [vmem:[%s308 + $0x58] sm:$0xff] %vm424, %v9356
        %9421 = vst.msk [vmem:[%s308 + $0x60] sm:$0xff] %vm424, %v9357
        %9422 = vst.msk [vmem:[%s308 + $0x68] sm:$0xff] %vm424, %v9358
        %9423 = vst.msk [vmem:[%s308 + $0x70] sm:$0xff] %vm424, %v9359
        %9424 = vst.msk [vmem:[%s308 + $0x78] sm:$0xff] %vm424, %v9360
        %9425 = vst.msk [vmem:[%s308 + $0x80] sm:$0xff] %vm424, %v9361
        %9426 = vst.msk [vmem:[%s308 + $0x88] sm:$0xff] %vm424, %v9362
        %9427 = vst.msk [vmem:[%s308 + $0x90] sm:$0xff] %vm424, %v9363
        %9428 = vst.msk [vmem:[%s308 + $0x98] sm:$0xff] %vm424, %v9364
        %9429 = vst.msk [vmem:[%s308 + $0xa0] sm:$0xff] %vm424, %v9365
        %9430 = vst.msk [vmem:[%s308 + $0xa8] sm:$0xff] %vm424, %v9366
        %9431 = vst.msk [vmem:[%s308 + $0xb0] sm:$0xff] %vm424, %v9367
        %9432 = vst.msk [vmem:[%s308 + $0xb8] sm:$0xff] %vm424, %v9368
        %9433 = vst.msk [vmem:[%s308 + $0xc0] sm:$0xff] %vm424, %v9369
        %9434 = vst.msk [vmem:[%s308 + $0xc8] sm:$0xff] %vm424, %v9370
        %9435 = vst.msk [vmem:[%s308 + $0xd0] sm:$0xff] %vm424, %v9371
        %9436 = vst.msk [vmem:[%s308 + $0xd8] sm:$0xff] %vm424, %v9372
        %9437 = vst.msk [vmem:[%s308 + $0xe0] sm:$0xff] %vm424, %v9373
        %9438 = vst.msk [vmem:[%s308 + $0xe8] sm:$0xff] %vm424, %v9374
        %9439 = vst.msk [vmem:[%s308 + $0xf0] sm:$0xff] %vm424, %v9375
        %9440 = vst.msk [vmem:[%s308 + $0xf8] sm:$0xff] %vm424, %v9376
        %9441 = vst.msk [vmem:[%s308 + $0x100] sm:$0xff] %vm424, %v9377
        %9442 = vst.msk [vmem:[%s308 + $0x108] sm:$0xff] %vm424, %v9378
        %9443 = vst.msk [vmem:[%s308 + $0x110] sm:$0xff] %vm424, %v9379
        %9444 = vst.msk [vmem:[%s308 + $0x118] sm:$0xff] %vm424, %v9380
        %9445 = vst.msk [vmem:[%s308 + $0x120] sm:$0xff] %vm424, %v9381
        %9446 = vst.msk [vmem:[%s308 + $0x128] sm:$0xff] %vm424, %v9382
        %9447 = vst.msk [vmem:[%s308 + $0x130] sm:$0xff] %vm424, %v9383
        %9448 = vst.msk [vmem:[%s308 + $0x138] sm:$0xff] %vm424, %v9384
        %9449 = vst.msk [vmem:[%s308 + $0x140] sm:$0xff] %vm424, %v9385
        %9450 = vst.msk [vmem:[%s308 + $0x148] sm:$0xff] %vm424, %v9386
        %9451 = vst.msk [vmem:[%s308 + $0x150] sm:$0xff] %vm424, %v9387
        %9452 = vst.msk [vmem:[%s308 + $0x158] sm:$0xff] %vm424, %v9388
        %9453 = vst.msk [vmem:[%s308 + $0x160] sm:$0xff] %vm424, %v9389
        %9454 = vst.msk [vmem:[%s308 + $0x168] sm:$0xff] %vm424, %v9390
        %9455 = vst.msk [vmem:[%s308 + $0x170] sm:$0xff] %vm424, %v9391
        %9456 = vst.msk [vmem:[%s308 + $0x178] sm:$0xff] %vm424, %v9392
        %9457 = vst.msk [vmem:[%s308 + $0x180] sm:$0xff] %vm424, %v9393
        %9458 = vst.msk [vmem:[%s308 + $0x188] sm:$0xff] %vm424, %v9394
        %9459 = vst.msk [vmem:[%s308 + $0x190] sm:$0xff] %vm424, %v9395
        %9460 = vst.msk [vmem:[%s308 + $0x198] sm:$0xff] %vm424, %v9396
        %9461 = vst.msk [vmem:[%s308 + $0x1a0] sm:$0xff] %vm424, %v9397
        %9462 = vst.msk [vmem:[%s308 + $0x1a8] sm:$0xff] %vm424, %v9398
        %9463 = vst.msk [vmem:[%s308 + $0x1b0] sm:$0xff] %vm424, %v9399
        %9464 = vst.msk [vmem:[%s308 + $0x1b8] sm:$0xff] %vm424, %v9400
        %9465 = vst.msk [vmem:[%s308 + $0x1c0] sm:$0xff] %vm424, %v9401
        %9466 = vst.msk [vmem:[%s308 + $0x1c8] sm:$0xff] %vm424, %v9402
        %9467 = vst.msk [vmem:[%s308 + $0x1d0] sm:$0xff] %vm424, %v9403
        %9468 = vst.msk [vmem:[%s308 + $0x1d8] sm:$0xff] %vm424, %v9404
        %9469 = vst.msk [vmem:[%s308 + $0x1e0] sm:$0xff] %vm424, %v9405
        %9470 = vst.msk [vmem:[%s308 + $0x1e8] sm:$0xff] %vm424, %v9406
        %9471 = vst.msk [vmem:[%s308 + $0x1f0] sm:$0xff] %vm424, %v9407
        %9472 = vst.msk [vmem:[%s308 + $0x1f8] sm:$0xff] %vm424, %v9408
        %s9473 = sand.u32 %s156, 1
        %s9474 = scalar_lea.sflag [#allocation6], %s9473
        %s9475 = sand.u32 %s156, 1
        %s9476 = smul.addr %s9475, 512
        %s9477 = scalar_lea.vmem [#allocation13], %s9476
        // Predicated region
        $region61: #{tpu_custom_call.1} parent=39 // pred_check
          %p9478 = pneg %p166
        $region62: #{tpu_custom_call.1} parent=39 // pred_check_branch
          %9480 = sbr.rel (%p9478) target = $region64
        $region63: #{tpu_custom_call.1} parent=39 // pred_region
          %s9481 = smul.u32 32, %s29
          %s9483 = ssub.s32 8192, 8192
          %9484 = vsyncadd %s9474, %s9483
          %s9485 = smul.addr %s9481, 2
          %s9486 = smul.addr %s28, 64
          %s9487 = sadd.s32 %s9485, %s9486
          %s9488 = smul.addr %s9487, 128
          %s9489 = scalar_lea.hbm %s5, %s9488
          %s9490 = sshll.u32 %s9477, 4
          %s9491 = int_to_ptr.vmem [resolvable:$true] %s9490
          %9496 = dma.vmem_to_hbm [thread:$0]  %s9491, 8192, %s9489, %s9474, 128, 128, 8
        $region64: #{tpu_custom_call.1} parent=39 // pred_fallthru
          _
      $region40: #{tpu_custom_call.1} parent=5 // pred_fallthru
        _
      %p9497 = scmp.le.s32.totalorder 2, %s19
      // Predicated region
      $region65: #{tpu_custom_call.1} parent=5 // pred_check
        %p9498 = pneg %p9497
      $region66: #{tpu_custom_call.1} parent=5 // pred_check_branch
        %9500 = sbr.rel (%p9498) target = $region68
      $region67: #{tpu_custom_call.1} parent=5 // pred_region
        %s9501 = ssub.s32 %s19, 2
        // Predicated region
        $region69: #{tpu_custom_call.1} parent=67 // pred_check
          %p9502 = pneg %p172
        $region70: #{tpu_custom_call.1} parent=67 // pred_check_branch
          %9504 = sbr.rel (%p9502) target = $region72
        $region71: #{tpu_custom_call.1} parent=67 // pred_region
          %s9505 = sand.u32 %s157, 1
          %s9506 = scalar_lea.sflag [#allocation6], %s9505
          %s9507 = sand.u32 %s157, 1
          %s9508 = smul.addr %s9507, 512
          %s9509 = scalar_lea.vmem [#allocation13], %s9508
          %9510 = dma.done %s9506, 8192
        $region72: #{tpu_custom_call.1} parent=67 // pred_fallthru
          _
      $region68: #{tpu_custom_call.1} parent=5 // pred_fallthru
        _
    $region6: #{tpu_custom_call.1} parent=1 // loop_footer
      %s23 = sadd.s32 1, %s19
    $region7: #{tpu_custom_call.1} parent=1 // loop_footer_branch
      %18 = sbr.rel target = $region3
    $region8: #{tpu_custom_call.1} parent=1 // loop_exit
      _
    %9511 = vsyncpa [#allocation5], 1
    %s9512 = scalar_lea.sflag [#allocation5], 1
    %9513 = vsyncpa %s9512, 1
    %9514 = vsyncpa [#allocation8], 1
    %9515 = vsyncpa [#allocation11], 1
    %9516 = vsyncpa [#allocation6], 1
    %s9517 = scalar_lea.sflag [#allocation6], 1
    %9518 = vsyncpa %s9517, 1

</llo_original>
